<compile_context>
chip_gen: v5e
topology: v5e:2x2
jax: 0.10.0
libtpu: 0.0.40
codegen_flags: <defaults>
</compile_context>

<pallas_src>
import jax
import jax.numpy as jnp
from jax import lax
from jax.experimental import pallas as pl
from jax.experimental.pallas import tpu as pltpu

CIN1_PAD = 16  # pad the 3 RGB channels to 16 = one full bf16 sublane tile


# ---------------------------------------------------------------------------
# Fused Conv2d(3x3, stride 1, valid) + bias + ReLU + vertical half of MaxPool(2)
# ---------------------------------------------------------------------------
def _make_conv_kernel(Ho2, Wo):
    def kernel(x_ref, w_ref, b_ref, o_ref):
        # x_ref: (H, Cin, W) bf16      w_ref: (Cout, 9*Cin) bf16
        # b_ref: (Cout, 1) f32         o_ref: (Ho2, Cout, Wo) bf16
        w = w_ref[...]
        b = b_ref[...]

        def conv_row(s0, s1, s2):
            # build the (9*Cin, Wo) im2col patch for one conv output row in VMEM
            pieces = [s[:, kw:kw + Wo] for s in (s0, s1, s2) for kw in range(3)]
            patch = jnp.concatenate(pieces, axis=0)                    # (9*Cin, Wo)
            z = jnp.dot(w, patch, preferred_element_type=jnp.float32)  # (Cout, Wo)
            return jnp.maximum(z + b, 0.0)

        def body(p, carry):
            r = 2 * p
            s0 = x_ref[r]          # (Cin, W) input row slabs (shared between rows)
            s1 = x_ref[r + 1]
            s2 = x_ref[r + 2]
            s3 = x_ref[r + 3]
            m = jnp.maximum(conv_row(s0, s1, s2), conv_row(s1, s2, s3))  # H-pool
            o_ref[p] = m.astype(o_ref.dtype)
            return carry

        lax.fori_loop(0, Ho2, body, 0)

    return kernel


def conv3x3_relu_hpool(x, wmat, b):
    """x: (B, H, Cin, W) bf16 -> (B, (H-2)//2, Cout, W-2) bf16 (rows pooled)."""
    B, H, Cin, W = x.shape
    Cout, K9 = wmat.shape
    assert K9 == 9 * Cin
    Wo = W - 2
    Ho2 = (H - 2) // 2
    return pl.pallas_call(
        _make_conv_kernel(Ho2, Wo),
        out_shape=jax.ShapeDtypeStruct((B, Ho2, Cout, Wo), jnp.bfloat16),
        grid_spec=pltpu.PrefetchScalarGridSpec(
            num_scalar_prefetch=0,
            grid=(B,),
            in_specs=[
                pl.BlockSpec((None, H, Cin, W), lambda bb: (bb, 0, 0, 0)),
                pl.BlockSpec((Cout, K9), lambda bb: (0, 0)),
                pl.BlockSpec((Cout, 1), lambda bb: (0, 0)),
            ],
            out_specs=pl.BlockSpec((None, Ho2, Cout, Wo), lambda bb: (bb, 0, 0, 0)),
        ),
        compiler_params=pltpu.CompilerParams(
            dimension_semantics=("parallel",),
            vmem_limit_bytes=32 * 1024 * 1024,
        ),
    )(x, wmat, b)


def wpool2(y):
    """Horizontal half of MaxPool2d(2): (B, H2, C, Wo) -> (B, H2, C, Wo//2)."""
    W2 = y.shape[-1] // 2
    return jnp.maximum(y[..., 0:2 * W2:2], y[..., 1:2 * W2:2])


# ---------------------------------------------------------------------------
# FC1: K-tiled matmul, bf16 weight streaming, 2-way parallel K split (v7x cores)
# ---------------------------------------------------------------------------
def _fc1_kernel(x_ref, w_ref, o_ref, acc_ref):
    k = pl.program_id(1)

    @pl.when(k == 0)
    def _():
        acc_ref[...] = jnp.zeros_like(acc_ref)

    acc_ref[...] += jnp.dot(x_ref[...], w_ref[...],
                            preferred_element_type=jnp.float32)

    @pl.when(k == pl.num_programs(1) - 1)
    def _():
        o_ref[...] = acc_ref[...]


def linear_ksplit(x, w, *, ksplit=2, tk=9600):
    """x: (M, K) bf16, w: (K, N) bf16 -> (ksplit, M, N) f32 partial sums."""
    M, K = x.shape
    Kw, N = w.shape
    assert K == Kw and K % (ksplit * tk) == 0
    kin = K // (ksplit * tk)
    return pl.pallas_call(
        _fc1_kernel,
        out_shape=jax.ShapeDtypeStruct((ksplit, M, N), jnp.float32),
        grid_spec=pltpu.PrefetchScalarGridSpec(
            num_scalar_prefetch=0,
            grid=(ksplit, kin),
            in_specs=[
                pl.BlockSpec((M, tk), lambda h, k: (0, h * kin + k)),
                pl.BlockSpec((tk, N), lambda h, k: (h * kin + k, 0)),
            ],
            out_specs=pl.BlockSpec((None, M, N), lambda h, k: (h, 0, 0)),
            scratch_shapes=[pltpu.VMEM((M, N), jnp.float32)],
        ),
        compiler_params=pltpu.CompilerParams(
            dimension_semantics=("parallel", "arbitrary"),
            vmem_limit_bytes=32 * 1024 * 1024,
        ),
    )(x, w)


# ---------------------------------------------------------------------------
# FC2 + softmax: single-step fused kernel (no accumulator scratch needed)
# ---------------------------------------------------------------------------
def _fc2_softmax_kernel(x_ref, w_ref, b_ref, o_ref):
    z = jnp.dot(x_ref[...], w_ref[...], preferred_element_type=jnp.float32)
    z = z + b_ref[...]
    z = z - jnp.max(z, axis=-1, keepdims=True)
    e = jnp.exp(z)
    o_ref[...] = e / jnp.sum(e, axis=-1, keepdims=True)


def linear_softmax(x, w, b):
    M, K = x.shape
    _, N = w.shape
    return pl.pallas_call(
        _fc2_softmax_kernel,
        out_shape=jax.ShapeDtypeStruct((M, N), jnp.float32),
        grid_spec=pltpu.PrefetchScalarGridSpec(
            num_scalar_prefetch=0,
            grid=(1,),
            in_specs=[
                pl.BlockSpec((M, K), lambda i: (0, 0)),
                pl.BlockSpec((K, N), lambda i: (0, 0)),
                pl.BlockSpec((1, N), lambda i: (0, 0)),
            ],
            out_specs=pl.BlockSpec((M, N), lambda i: (0, 0)),
        ),
        compiler_params=pltpu.CompilerParams(dimension_semantics=("arbitrary",)),
    )(x, w, b)


# ---------------------------------------------------------------------------
# Parameters (deterministic synthetic init, shapes per My_model.__init__),
# stored in kernel-ready layouts.
# ---------------------------------------------------------------------------
def init_params(key):
    ks = jax.random.split(key, 10)

    def conv_w(k, ci, co):
        fan_in = 3 * 3 * ci
        return jax.random.normal(k, (3, 3, ci, co), jnp.float32) / jnp.sqrt(fan_in)

    def lin_w(k, fi, fo):
        return jax.random.normal(k, (fi, fo), jnp.float32) / jnp.sqrt(fi)

    def conv_wmat(w, cin_pad):
        kh, kw, ci, co = w.shape
        w = jnp.pad(w, ((0, 0), (0, 0), (0, cin_pad - ci), (0, 0)))
        # K ordering (kh, kw, ci) matches the in-kernel patch concatenation order.
        return jnp.transpose(w.reshape(9 * cin_pad, co)).astype(jnp.bfloat16)

    return {
        "w1": conv_wmat(conv_w(ks[0], 3, 32), CIN1_PAD),                 # (32, 144)
        "b1": (jax.random.normal(ks[1], (32,), jnp.float32) * 0.01).reshape(32, 1),
        "w2": conv_wmat(conv_w(ks[2], 32, 32), 32),                      # (32, 288)
        "b2": (jax.random.normal(ks[3], (32,), jnp.float32) * 0.01).reshape(32, 1),
        "w3": conv_wmat(conv_w(ks[4], 32, 64), 32),                      # (64, 288)
        "b3": (jax.random.normal(ks[5], (64,), jnp.float32) * 0.01).reshape(64, 1),
        "wf1": lin_w(ks[6], 57600, 128).astype(jnp.bfloat16),
        "bf1": jax.random.normal(ks[7], (128,), jnp.float32) * 0.01,
        "wf2": lin_w(ks[8], 128, 2),
        "bf2": (jax.random.normal(ks[9], (2,), jnp.float32) * 0.01).reshape(1, 2),
    }


# ---------------------------------------------------------------------------
# Full forward pass equivalent to My_model.forward (eval mode)
# ---------------------------------------------------------------------------
@jax.jit
def my_model_forward(x_nchw, params):
    B = x_nchw.shape[0]
    # NCHW -> (B, H, C, W); pad channels 3 -> 16 (zero-weighted) and cast to bf16.
    x = jnp.transpose(x_nchw.astype(jnp.float32), (0, 2, 1, 3))
    x = jnp.pad(x, ((0, 0), (0, 0), (0, CIN1_PAD - x.shape[2]), (0, 0)))
    x = x.astype(jnp.bfloat16)                                   # (B, 256, 16, 256)

    x = conv3x3_relu_hpool(x, params["w1"], params["b1"])        # (B, 127, 32, 254)
    x = wpool2(x)                                                # (B, 127, 32, 127)
    x = conv3x3_relu_hpool(x, params["w2"], params["b2"])        # (B,  62, 32, 125)
    x = wpool2(x)                                                # (B,  62, 32,  62)
    x = conv3x3_relu_hpool(x, params["w3"], params["b3"])        # (B,  30, 64,  60)
    x = wpool2(x)                                                # (B,  30, 64,  30)

    # Dropout(0.25): identity in eval mode.
    # Flatten in PyTorch NCHW order: (B, C, H, W) -> (B, 57600)
    x = jnp.transpose(x, (0, 2, 1, 3)).reshape(B, -1)            # (B, 57600) bf16

    partial = linear_ksplit(x, params["wf1"])                    # (2, B, 128) f32
    x = jnp.maximum(partial.sum(axis=0) + params["bf1"], 0.0)    # bias + ReLU
    # Dropout(0.5): identity in eval mode.
    return linear_softmax(x, params["wf2"], params["bf2"])       # (B, 2)


if __name__ == "__main__":
    key = jax.random.PRNGKey(0)
    pkey, xkey = jax.random.split(key)
    params = init_params(pkey)
    x = jax.random.normal(xkey, (2, 3, 256, 256), jnp.float32)

    out = my_model_forward(x, params)
    out = jax.block_until_ready(out)

    assert out.shape == (2, 2)
    assert bool(jnp.all(jnp.isfinite(out)))
    assert bool(jnp.all(jnp.abs(jnp.sum(out, axis=1) - 1.0) < 1e-4))
    print("KERNEL_OK")
</pallas_src>

<mosaic_0001>
module attributes {stable_mosaic.version = 11 : i64} {
  func.func @kernel(%arg0: i32, %arg1: memref<1x256x16x256xbf16, #tpu.memory_space<vmem>>, %arg2: memref<32x144xbf16, #tpu.memory_space<vmem>>, %arg3: memref<32x1xf32, #tpu.memory_space<vmem>>, %arg4: memref<1x127x32x254xbf16, #tpu.memory_space<vmem>>) attributes {dimension_semantics = [#tpu.dimension_semantics<parallel>], iteration_bounds = array<i64: 2>, scalar_prefetch = 0 : i64, scratch_operands = 0 : i64, tpu.core_type = #tpu.core_type<tc>, window_params = [{transform_indices = @transform_0, window_bounds = array<i64: 1, 256, 16, 256>}, {pipeline_mode = #tpu.pipeline_mode<synchronous>, transform_indices = @transform_1, window_bounds = array<i64: 32, 144>}, {pipeline_mode = #tpu.pipeline_mode<synchronous>, transform_indices = @transform_2, window_bounds = array<i64: 32, 1>}, {transform_indices = @transform_3, window_bounds = array<i64: 1, 127, 32, 254>}]} {
    %c0 = arith.constant 0 : index
    %c0_0 = arith.constant 0 : index
    %0 = vector.load %arg2[%c0, %c0_0] : memref<32x144xbf16, #tpu.memory_space<vmem>>, vector<32x144xbf16>
    %c0_1 = arith.constant 0 : index
    %c0_2 = arith.constant 0 : index
    %1 = vector.load %arg3[%c0_1, %c0_2] : memref<32x1xf32, #tpu.memory_space<vmem>>, vector<32x1xf32>
    %c0_i32 = arith.constant 0 : i32
    %c127_i32 = arith.constant 127 : i32
    %2 = arith.addi %c0_i32, %c127_i32 : i32
    %c1_i32 = arith.constant 1 : i32
    scf.for %arg5 = %c0_i32 to %2 step %c1_i32  : i32 {
      %c2_i32 = arith.constant 2 : i32
      %3 = arith.muli %c2_i32, %arg5 : i32
      %c0_4 = arith.constant 0 : index
      %4 = arith.index_cast %3 : i32 to index
      %c0_5 = arith.constant 0 : index
      %c0_6 = arith.constant 0 : index
      %5 = vector.load %arg1[%c0_4, %4, %c0_5, %c0_6] : memref<1x256x16x256xbf16, #tpu.memory_space<vmem>>, vector<1x1x16x256xbf16>
      %6 = vector.shape_cast %5 : vector<1x1x16x256xbf16> to vector<16x256xbf16>
      %c1_i32_7 = arith.constant 1 : i32
      %7 = arith.addi %3, %c1_i32_7 : i32
      %c0_8 = arith.constant 0 : index
      %8 = arith.index_cast %7 : i32 to index
      %c0_9 = arith.constant 0 : index
      %c0_10 = arith.constant 0 : index
      %9 = vector.load %arg1[%c0_8, %8, %c0_9, %c0_10] : memref<1x256x16x256xbf16, #tpu.memory_space<vmem>>, vector<1x1x16x256xbf16>
      %10 = vector.shape_cast %9 : vector<1x1x16x256xbf16> to vector<16x256xbf16>
      %c2_i32_11 = arith.constant 2 : i32
      %11 = arith.addi %3, %c2_i32_11 : i32
      %c0_12 = arith.constant 0 : index
      %12 = arith.index_cast %11 : i32 to index
      %c0_13 = arith.constant 0 : index
      %c0_14 = arith.constant 0 : index
      %13 = vector.load %arg1[%c0_12, %12, %c0_13, %c0_14] : memref<1x256x16x256xbf16, #tpu.memory_space<vmem>>, vector<1x1x16x256xbf16>
      %14 = vector.shape_cast %13 : vector<1x1x16x256xbf16> to vector<16x256xbf16>
      %c3_i32 = arith.constant 3 : i32
      %15 = arith.addi %3, %c3_i32 : i32
      %c0_15 = arith.constant 0 : index
      %16 = arith.index_cast %15 : i32 to index
      %c0_16 = arith.constant 0 : index
      %c0_17 = arith.constant 0 : index
      %17 = vector.load %arg1[%c0_15, %16, %c0_16, %c0_17] : memref<1x256x16x256xbf16, #tpu.memory_space<vmem>>, vector<1x1x16x256xbf16>
      %18 = vector.shape_cast %17 : vector<1x1x16x256xbf16> to vector<16x256xbf16>
      %19 = vector.extract_strided_slice %6 {offsets = [0, 0], sizes = [16, 254], strides = [1, 1]} : vector<16x256xbf16> to vector<16x254xbf16>
      %20 = vector.extract_strided_slice %6 {offsets = [0, 1], sizes = [16, 254], strides = [1, 1]} : vector<16x256xbf16> to vector<16x254xbf16>
      %21 = vector.extract_strided_slice %6 {offsets = [0, 2], sizes = [16, 254], strides = [1, 1]} : vector<16x256xbf16> to vector<16x254xbf16>
      %22 = vector.extract_strided_slice %10 {offsets = [0, 0], sizes = [16, 254], strides = [1, 1]} : vector<16x256xbf16> to vector<16x254xbf16>
      %23 = vector.extract_strided_slice %10 {offsets = [0, 1], sizes = [16, 254], strides = [1, 1]} : vector<16x256xbf16> to vector<16x254xbf16>
      %24 = vector.extract_strided_slice %10 {offsets = [0, 2], sizes = [16, 254], strides = [1, 1]} : vector<16x256xbf16> to vector<16x254xbf16>
      %25 = vector.extract_strided_slice %14 {offsets = [0, 0], sizes = [16, 254], strides = [1, 1]} : vector<16x256xbf16> to vector<16x254xbf16>
      %26 = vector.extract_strided_slice %14 {offsets = [0, 1], sizes = [16, 254], strides = [1, 1]} : vector<16x256xbf16> to vector<16x254xbf16>
      %27 = vector.extract_strided_slice %14 {offsets = [0, 2], sizes = [16, 254], strides = [1, 1]} : vector<16x256xbf16> to vector<16x254xbf16>
      %28 = tpu.concatenate %19, %20, %21, %22, %23, %24, %25, %26, %27 in 0 : vector<16x254xbf16>, vector<16x254xbf16>, vector<16x254xbf16>, vector<16x254xbf16>, vector<16x254xbf16>, vector<16x254xbf16>, vector<16x254xbf16>, vector<16x254xbf16>, vector<16x254xbf16> -> vector<144x254xbf16>
      %cst = arith.constant dense<0.000000e+00> : vector<32x254xf32>
      %29 = tpu.matmul %0, %28, %cst {dimension_numbers = #tpu.dot_dimension_numbers<[1], [0], [0], [1], [0, 0, 1, 1], [], []>} : vector<32x144xbf16>, vector<144x254xbf16>, vector<32x254xf32> -> vector<32x254xf32>
      %30 = vector.broadcast %1 : vector<32x1xf32> to vector<32x254xf32>
      %31 = arith.addf %29, %30 : vector<32x254xf32>
      %cst_18 = arith.constant 0.000000e+00 : f32
      %32 = vector.broadcast %cst_18 : f32 to vector<32x254xf32>
      %33 = arith.maximumf %31, %32 : vector<32x254xf32>
      %34 = vector.extract_strided_slice %10 {offsets = [0, 0], sizes = [16, 254], strides = [1, 1]} : vector<16x256xbf16> to vector<16x254xbf16>
      %35 = vector.extract_strided_slice %10 {offsets = [0, 1], sizes = [16, 254], strides = [1, 1]} : vector<16x256xbf16> to vector<16x254xbf16>
      %36 = vector.extract_strided_slice %10 {offsets = [0, 2], sizes = [16, 254], strides = [1, 1]} : vector<16x256xbf16> to vector<16x254xbf16>
      %37 = vector.extract_strided_slice %14 {offsets = [0, 0], sizes = [16, 254], strides = [1, 1]} : vector<16x256xbf16> to vector<16x254xbf16>
      %38 = vector.extract_strided_slice %14 {offsets = [0, 1], sizes = [16, 254], strides = [1, 1]} : vector<16x256xbf16> to vector<16x254xbf16>
      %39 = vector.extract_strided_slice %14 {offsets = [0, 2], sizes = [16, 254], strides = [1, 1]} : vector<16x256xbf16> to vector<16x254xbf16>
      %40 = vector.extract_strided_slice %18 {offsets = [0, 0], sizes = [16, 254], strides = [1, 1]} : vector<16x256xbf16> to vector<16x254xbf16>
      %41 = vector.extract_strided_slice %18 {offsets = [0, 1], sizes = [16, 254], strides = [1, 1]} : vector<16x256xbf16> to vector<16x254xbf16>
      %42 = vector.extract_strided_slice %18 {offsets = [0, 2], sizes = [16, 254], strides = [1, 1]} : vector<16x256xbf16> to vector<16x254xbf16>
      %43 = tpu.concatenate %34, %35, %36, %37, %38, %39, %40, %41, %42 in 0 : vector<16x254xbf16>, vector<16x254xbf16>, vector<16x254xbf16>, vector<16x254xbf16>, vector<16x254xbf16>, vector<16x254xbf16>, vector<16x254xbf16>, vector<16x254xbf16>, vector<16x254xbf16> -> vector<144x254xbf16>
      %cst_19 = arith.constant dense<0.000000e+00> : vector<32x254xf32>
      %44 = tpu.matmul %0, %43, %cst_19 {dimension_numbers = #tpu.dot_dimension_numbers<[1], [0], [0], [1], [0, 0, 1, 1], [], []>} : vector<32x144xbf16>, vector<144x254xbf16>, vector<32x254xf32> -> vector<32x254xf32>
      %45 = vector.broadcast %1 : vector<32x1xf32> to vector<32x254xf32>
      %46 = arith.addf %44, %45 : vector<32x254xf32>
      %cst_20 = arith.constant 0.000000e+00 : f32
      %47 = vector.broadcast %cst_20 : f32 to vector<32x254xf32>
      %48 = arith.maximumf %46, %47 : vector<32x254xf32>
      %49 = arith.maximumf %33, %48 : vector<32x254xf32>
      %50 = arith.truncf %49 : vector<32x254xf32> to vector<32x254xbf16>
      %c0_21 = arith.constant 0 : index
      %51 = arith.index_cast %arg5 : i32 to index
      %c0_22 = arith.constant 0 : index
      %c0_23 = arith.constant 0 : index
      %52 = vector.load %arg4[%c0_21, %51, %c0_22, %c0_23] : memref<1x127x32x254xbf16, #tpu.memory_space<vmem>>, vector<1x1x32x254xbf16>
      %53 = vector.shape_cast %52 : vector<1x1x32x254xbf16> to vector<32x254xbf16>
      %54 = vector.shape_cast %50 : vector<32x254xbf16> to vector<1x1x32x254xbf16>
      tpu.vector_store %arg4[%c0_21, %51, %c0_22, %c0_23], %54 {strides = array<i32>} : memref<1x127x32x254xbf16, #tpu.memory_space<vmem>>, vector<1x1x32x254xbf16>,
    }
    %c127_i32_3 = arith.constant 127 : i32
    return
  }
  func.func @transform_0(%arg0: i32) -> (i32, i32, i32, i32) {
    %c0_i32 = arith.constant 0 : i32
    %c0_i32_0 = arith.constant 0 : i32
    %c0_i32_1 = arith.constant 0 : i32
    %c0_i32_2 = arith.constant 0 : i32
    return %arg0, %c0_i32, %c0_i32_0, %c0_i32_1 : i32, i32, i32, i32
  }
  func.func @transform_1(%arg0: i32) -> (i32, i32) {
    %c0_i32 = arith.constant 0 : i32
    %c0_i32_0 = arith.constant 0 : i32
    %c0_i32_1 = arith.constant 0 : i32
    return %c0_i32, %c0_i32_0 : i32, i32
  }
  func.func @transform_2(%arg0: i32) -> (i32, i32) {
    %c0_i32 = arith.constant 0 : i32
    %c0_i32_0 = arith.constant 0 : i32
    %c0_i32_1 = arith.constant 0 : i32
    return %c0_i32, %c0_i32_0 : i32, i32
  }
  func.func @transform_3(%arg0: i32) -> (i32, i32, i32, i32) {
    %c0_i32 = arith.constant 0 : i32
    %c0_i32_0 = arith.constant 0 : i32
    %c0_i32_1 = arith.constant 0 : i32
    %c0_i32_2 = arith.constant 0 : i32
    return %arg0, %c0_i32, %c0_i32_0, %c0_i32_1 : i32, i32, i32, i32
  }
}

module attributes {stable_mosaic.version = 11 : i64} {
  func.func @kernel(%arg0: i32, %arg1: memref<1x127x32x127xbf16, #tpu.memory_space<vmem>>, %arg2: memref<32x288xbf16, #tpu.memory_space<vmem>>, %arg3: memref<32x1xf32, #tpu.memory_space<vmem>>, %arg4: memref<1x62x32x125xbf16, #tpu.memory_space<vmem>>) attributes {dimension_semantics = [#tpu.dimension_semantics<parallel>], iteration_bounds = array<i64: 2>, scalar_prefetch = 0 : i64, scratch_operands = 0 : i64, tpu.core_type = #tpu.core_type<tc>, window_params = [{transform_indices = @transform_0, window_bounds = array<i64: 1, 127, 32, 127>}, {pipeline_mode = #tpu.pipeline_mode<synchronous>, transform_indices = @transform_1, window_bounds = array<i64: 32, 288>}, {pipeline_mode = #tpu.pipeline_mode<synchronous>, transform_indices = @transform_2, window_bounds = array<i64: 32, 1>}, {transform_indices = @transform_3, window_bounds = array<i64: 1, 62, 32, 125>}]} {
    %c0 = arith.constant 0 : index
    %c0_0 = arith.constant 0 : index
    %0 = vector.load %arg2[%c0, %c0_0] : memref<32x288xbf16, #tpu.memory_space<vmem>>, vector<32x288xbf16>
    %c0_1 = arith.constant 0 : index
    %c0_2 = arith.constant 0 : index
    %1 = vector.load %arg3[%c0_1, %c0_2] : memref<32x1xf32, #tpu.memory_space<vmem>>, vector<32x1xf32>
    %c0_i32 = arith.constant 0 : i32
    %c62_i32 = arith.constant 62 : i32
    %2 = arith.addi %c0_i32, %c62_i32 : i32
    %c1_i32 = arith.constant 1 : i32
    scf.for %arg5 = %c0_i32 to %2 step %c1_i32  : i32 {
      %c2_i32 = arith.constant 2 : i32
      %3 = arith.muli %c2_i32, %arg5 : i32
      %c0_4 = arith.constant 0 : index
      %4 = arith.index_cast %3 : i32 to index
      %c0_5 = arith.constant 0 : index
      %c0_6 = arith.constant 0 : index
      %5 = vector.load %arg1[%c0_4, %4, %c0_5, %c0_6] : memref<1x127x32x127xbf16, #tpu.memory_space<vmem>>, vector<1x1x32x127xbf16>
      %6 = vector.shape_cast %5 : vector<1x1x32x127xbf16> to vector<32x127xbf16>
      %c1_i32_7 = arith.constant 1 : i32
      %7 = arith.addi %3, %c1_i32_7 : i32
      %c0_8 = arith.constant 0 : index
      %8 = arith.index_cast %7 : i32 to index
      %c0_9 = arith.constant 0 : index
      %c0_10 = arith.constant 0 : index
      %9 = vector.load %arg1[%c0_8, %8, %c0_9, %c0_10] : memref<1x127x32x127xbf16, #tpu.memory_space<vmem>>, vector<1x1x32x127xbf16>
      %10 = vector.shape_cast %9 : vector<1x1x32x127xbf16> to vector<32x127xbf16>
      %c2_i32_11 = arith.constant 2 : i32
      %11 = arith.addi %3, %c2_i32_11 : i32
      %c0_12 = arith.constant 0 : index
      %12 = arith.index_cast %11 : i32 to index
      %c0_13 = arith.constant 0 : index
      %c0_14 = arith.constant 0 : index
      %13 = vector.load %arg1[%c0_12, %12, %c0_13, %c0_14] : memref<1x127x32x127xbf16, #tpu.memory_space<vmem>>, vector<1x1x32x127xbf16>
      %14 = vector.shape_cast %13 : vector<1x1x32x127xbf16> to vector<32x127xbf16>
      %c3_i32 = arith.constant 3 : i32
      %15 = arith.addi %3, %c3_i32 : i32
      %c0_15 = arith.constant 0 : index
      %16 = arith.index_cast %15 : i32 to index
      %c0_16 = arith.constant 0 : index
      %c0_17 = arith.constant 0 : index
      %17 = vector.load %arg1[%c0_15, %16, %c0_16, %c0_17] : memref<1x127x32x127xbf16, #tpu.memory_space<vmem>>, vector<1x1x32x127xbf16>
      %18 = vector.shape_cast %17 : vector<1x1x32x127xbf16> to vector<32x127xbf16>
      %19 = vector.extract_strided_slice %6 {offsets = [0, 0], sizes = [32, 125], strides = [1, 1]} : vector<32x127xbf16> to vector<32x125xbf16>
      %20 = vector.extract_strided_slice %6 {offsets = [0, 1], sizes = [32, 125], strides = [1, 1]} : vector<32x127xbf16> to vector<32x125xbf16>
      %21 = vector.extract_strided_slice %6 {offsets = [0, 2], sizes = [32, 125], strides = [1, 1]} : vector<32x127xbf16> to vector<32x125xbf16>
      %22 = vector.extract_strided_slice %10 {offsets = [0, 0], sizes = [32, 125], strides = [1, 1]} : vector<32x127xbf16> to vector<32x125xbf16>
      %23 = vector.extract_strided_slice %10 {offsets = [0, 1], sizes = [32, 125], strides = [1, 1]} : vector<32x127xbf16> to vector<32x125xbf16>
      %24 = vector.extract_strided_slice %10 {offsets = [0, 2], sizes = [32, 125], strides = [1, 1]} : vector<32x127xbf16> to vector<32x125xbf16>
      %25 = vector.extract_strided_slice %14 {offsets = [0, 0], sizes = [32, 125], strides = [1, 1]} : vector<32x127xbf16> to vector<32x125xbf16>
      %26 = vector.extract_strided_slice %14 {offsets = [0, 1], sizes = [32, 125], strides = [1, 1]} : vector<32x127xbf16> to vector<32x125xbf16>
      %27 = vector.extract_strided_slice %14 {offsets = [0, 2], sizes = [32, 125], strides = [1, 1]} : vector<32x127xbf16> to vector<32x125xbf16>
      %28 = tpu.concatenate %19, %20, %21, %22, %23, %24, %25, %26, %27 in 0 : vector<32x125xbf16>, vector<32x125xbf16>, vector<32x125xbf16>, vector<32x125xbf16>, vector<32x125xbf16>, vector<32x125xbf16>, vector<32x125xbf16>, vector<32x125xbf16>, vector<32x125xbf16> -> vector<288x125xbf16>
      %cst = arith.constant dense<0.000000e+00> : vector<32x125xf32>
      %29 = tpu.matmul %0, %28, %cst {dimension_numbers = #tpu.dot_dimension_numbers<[1], [0], [0], [1], [0, 0, 1, 1], [], []>} : vector<32x288xbf16>, vector<288x125xbf16>, vector<32x125xf32> -> vector<32x125xf32>
      %30 = vector.broadcast %1 : vector<32x1xf32> to vector<32x125xf32>
      %31 = arith.addf %29, %30 : vector<32x125xf32>
      %cst_18 = arith.constant 0.000000e+00 : f32
      %32 = vector.broadcast %cst_18 : f32 to vector<32x125xf32>
      %33 = arith.maximumf %31, %32 : vector<32x125xf32>
      %34 = vector.extract_strided_slice %10 {offsets = [0, 0], sizes = [32, 125], strides = [1, 1]} : vector<32x127xbf16> to vector<32x125xbf16>
      %35 = vector.extract_strided_slice %10 {offsets = [0, 1], sizes = [32, 125], strides = [1, 1]} : vector<32x127xbf16> to vector<32x125xbf16>
      %36 = vector.extract_strided_slice %10 {offsets = [0, 2], sizes = [32, 125], strides = [1, 1]} : vector<32x127xbf16> to vector<32x125xbf16>
      %37 = vector.extract_strided_slice %14 {offsets = [0, 0], sizes = [32, 125], strides = [1, 1]} : vector<32x127xbf16> to vector<32x125xbf16>
      %38 = vector.extract_strided_slice %14 {offsets = [0, 1], sizes = [32, 125], strides = [1, 1]} : vector<32x127xbf16> to vector<32x125xbf16>
      %39 = vector.extract_strided_slice %14 {offsets = [0, 2], sizes = [32, 125], strides = [1, 1]} : vector<32x127xbf16> to vector<32x125xbf16>
      %40 = vector.extract_strided_slice %18 {offsets = [0, 0], sizes = [32, 125], strides = [1, 1]} : vector<32x127xbf16> to vector<32x125xbf16>
      %41 = vector.extract_strided_slice %18 {offsets = [0, 1], sizes = [32, 125], strides = [1, 1]} : vector<32x127xbf16> to vector<32x125xbf16>
      %42 = vector.extract_strided_slice %18 {offsets = [0, 2], sizes = [32, 125], strides = [1, 1]} : vector<32x127xbf16> to vector<32x125xbf16>
      %43 = tpu.concatenate %34, %35, %36, %37, %38, %39, %40, %41, %42 in 0 : vector<32x125xbf16>, vector<32x125xbf16>, vector<32x125xbf16>, vector<32x125xbf16>, vector<32x125xbf16>, vector<32x125xbf16>, vector<32x125xbf16>, vector<32x125xbf16>, vector<32x125xbf16> -> vector<288x125xbf16>
      %cst_19 = arith.constant dense<0.000000e+00> : vector<32x125xf32>
      %44 = tpu.matmul %0, %43, %cst_19 {dimension_numbers = #tpu.dot_dimension_numbers<[1], [0], [0], [1], [0, 0, 1, 1], [], []>} : vector<32x288xbf16>, vector<288x125xbf16>, vector<32x125xf32> -> vector<32x125xf32>
      %45 = vector.broadcast %1 : vector<32x1xf32> to vector<32x125xf32>
      %46 = arith.addf %44, %45 : vector<32x125xf32>
      %cst_20 = arith.constant 0.000000e+00 : f32
      %47 = vector.broadcast %cst_20 : f32 to vector<32x125xf32>
      %48 = arith.maximumf %46, %47 : vector<32x125xf32>
      %49 = arith.maximumf %33, %48 : vector<32x125xf32>
      %50 = arith.truncf %49 : vector<32x125xf32> to vector<32x125xbf16>
      %c0_21 = arith.constant 0 : index
      %51 = arith.index_cast %arg5 : i32 to index
      %c0_22 = arith.constant 0 : index
      %c0_23 = arith.constant 0 : index
      %52 = vector.load %arg4[%c0_21, %51, %c0_22, %c0_23] : memref<1x62x32x125xbf16, #tpu.memory_space<vmem>>, vector<1x1x32x125xbf16>
      %53 = vector.shape_cast %52 : vector<1x1x32x125xbf16> to vector<32x125xbf16>
      %54 = vector.shape_cast %50 : vector<32x125xbf16> to vector<1x1x32x125xbf16>
      tpu.vector_store %arg4[%c0_21, %51, %c0_22, %c0_23], %54 {strides = array<i32>} : memref<1x62x32x125xbf16, #tpu.memory_space<vmem>>, vector<1x1x32x125xbf16>,
    }
    %c62_i32_3 = arith.constant 62 : i32
    return
  }
  func.func @transform_0(%arg0: i32) -> (i32, i32, i32, i32) {
    %c0_i32 = arith.constant 0 : i32
    %c0_i32_0 = arith.constant 0 : i32
    %c0_i32_1 = arith.constant 0 : i32
    %c0_i32_2 = arith.constant 0 : i32
    return %arg0, %c0_i32, %c0_i32_0, %c0_i32_1 : i32, i32, i32, i32
  }
  func.func @transform_1(%arg0: i32) -> (i32, i32) {
    %c0_i32 = arith.constant 0 : i32
    %c0_i32_0 = arith.constant 0 : i32
    %c0_i32_1 = arith.constant 0 : i32
    return %c0_i32, %c0_i32_0 : i32, i32
  }
  func.func @transform_2(%arg0: i32) -> (i32, i32) {
    %c0_i32 = arith.constant 0 : i32
    %c0_i32_0 = arith.constant 0 : i32
    %c0_i32_1 = arith.constant 0 : i32
    return %c0_i32, %c0_i32_0 : i32, i32
  }
  func.func @transform_3(%arg0: i32) -> (i32, i32, i32, i32) {
    %c0_i32 = arith.constant 0 : i32
    %c0_i32_0 = arith.constant 0 : i32
    %c0_i32_1 = arith.constant 0 : i32
    %c0_i32_2 = arith.constant 0 : i32
    return %arg0, %c0_i32, %c0_i32_0, %c0_i32_1 : i32, i32, i32, i32
  }
}

module attributes {stable_mosaic.version = 11 : i64} {
  func.func @kernel(%arg0: i32, %arg1: memref<1x62x32x62xbf16, #tpu.memory_space<vmem>>, %arg2: memref<64x288xbf16, #tpu.memory_space<vmem>>, %arg3: memref<64x1xf32, #tpu.memory_space<vmem>>, %arg4: memref<1x30x64x60xbf16, #tpu.memory_space<vmem>>) attributes {dimension_semantics = [#tpu.dimension_semantics<parallel>], iteration_bounds = array<i64: 2>, scalar_prefetch = 0 : i64, scratch_operands = 0 : i64, tpu.core_type = #tpu.core_type<tc>, window_params = [{transform_indices = @transform_0, window_bounds = array<i64: 1, 62, 32, 62>}, {pipeline_mode = #tpu.pipeline_mode<synchronous>, transform_indices = @transform_1, window_bounds = array<i64: 64, 288>}, {pipeline_mode = #tpu.pipeline_mode<synchronous>, transform_indices = @transform_2, window_bounds = array<i64: 64, 1>}, {transform_indices = @transform_3, window_bounds = array<i64: 1, 30, 64, 60>}]} {
    %c0 = arith.constant 0 : index
    %c0_0 = arith.constant 0 : index
    %0 = vector.load %arg2[%c0, %c0_0] : memref<64x288xbf16, #tpu.memory_space<vmem>>, vector<64x288xbf16>
    %c0_1 = arith.constant 0 : index
    %c0_2 = arith.constant 0 : index
    %1 = vector.load %arg3[%c0_1, %c0_2] : memref<64x1xf32, #tpu.memory_space<vmem>>, vector<64x1xf32>
    %c0_i32 = arith.constant 0 : i32
    %c30_i32 = arith.constant 30 : i32
    %2 = arith.addi %c0_i32, %c30_i32 : i32
    %c1_i32 = arith.constant 1 : i32
    scf.for %arg5 = %c0_i32 to %2 step %c1_i32  : i32 {
      %c2_i32 = arith.constant 2 : i32
      %3 = arith.muli %c2_i32, %arg5 : i32
      %c0_4 = arith.constant 0 : index
      %4 = arith.index_cast %3 : i32 to index
      %c0_5 = arith.constant 0 : index
      %c0_6 = arith.constant 0 : index
      %5 = vector.load %arg1[%c0_4, %4, %c0_5, %c0_6] : memref<1x62x32x62xbf16, #tpu.memory_space<vmem>>, vector<1x1x32x62xbf16>
      %6 = vector.shape_cast %5 : vector<1x1x32x62xbf16> to vector<32x62xbf16>
      %c1_i32_7 = arith.constant 1 : i32
      %7 = arith.addi %3, %c1_i32_7 : i32
      %c0_8 = arith.constant 0 : index
      %8 = arith.index_cast %7 : i32 to index
      %c0_9 = arith.constant 0 : index
      %c0_10 = arith.constant 0 : index
      %9 = vector.load %arg1[%c0_8, %8, %c0_9, %c0_10] : memref<1x62x32x62xbf16, #tpu.memory_space<vmem>>, vector<1x1x32x62xbf16>
      %10 = vector.shape_cast %9 : vector<1x1x32x62xbf16> to vector<32x62xbf16>
      %c2_i32_11 = arith.constant 2 : i32
      %11 = arith.addi %3, %c2_i32_11 : i32
      %c0_12 = arith.constant 0 : index
      %12 = arith.index_cast %11 : i32 to index
      %c0_13 = arith.constant 0 : index
      %c0_14 = arith.constant 0 : index
      %13 = vector.load %arg1[%c0_12, %12, %c0_13, %c0_14] : memref<1x62x32x62xbf16, #tpu.memory_space<vmem>>, vector<1x1x32x62xbf16>
      %14 = vector.shape_cast %13 : vector<1x1x32x62xbf16> to vector<32x62xbf16>
      %c3_i32 = arith.constant 3 : i32
      %15 = arith.addi %3, %c3_i32 : i32
      %c0_15 = arith.constant 0 : index
      %16 = arith.index_cast %15 : i32 to index
      %c0_16 = arith.constant 0 : index
      %c0_17 = arith.constant 0 : index
      %17 = vector.load %arg1[%c0_15, %16, %c0_16, %c0_17] : memref<1x62x32x62xbf16, #tpu.memory_space<vmem>>, vector<1x1x32x62xbf16>
      %18 = vector.shape_cast %17 : vector<1x1x32x62xbf16> to vector<32x62xbf16>
      %19 = vector.extract_strided_slice %6 {offsets = [0, 0], sizes = [32, 60], strides = [1, 1]} : vector<32x62xbf16> to vector<32x60xbf16>
      %20 = vector.extract_strided_slice %6 {offsets = [0, 1], sizes = [32, 60], strides = [1, 1]} : vector<32x62xbf16> to vector<32x60xbf16>
      %21 = vector.extract_strided_slice %6 {offsets = [0, 2], sizes = [32, 60], strides = [1, 1]} : vector<32x62xbf16> to vector<32x60xbf16>
      %22 = vector.extract_strided_slice %10 {offsets = [0, 0], sizes = [32, 60], strides = [1, 1]} : vector<32x62xbf16> to vector<32x60xbf16>
      %23 = vector.extract_strided_slice %10 {offsets = [0, 1], sizes = [32, 60], strides = [1, 1]} : vector<32x62xbf16> to vector<32x60xbf16>
      %24 = vector.extract_strided_slice %10 {offsets = [0, 2], sizes = [32, 60], strides = [1, 1]} : vector<32x62xbf16> to vector<32x60xbf16>
      %25 = vector.extract_strided_slice %14 {offsets = [0, 0], sizes = [32, 60], strides = [1, 1]} : vector<32x62xbf16> to vector<32x60xbf16>
      %26 = vector.extract_strided_slice %14 {offsets = [0, 1], sizes = [32, 60], strides = [1, 1]} : vector<32x62xbf16> to vector<32x60xbf16>
      %27 = vector.extract_strided_slice %14 {offsets = [0, 2], sizes = [32, 60], strides = [1, 1]} : vector<32x62xbf16> to vector<32x60xbf16>
      %28 = tpu.concatenate %19, %20, %21, %22, %23, %24, %25, %26, %27 in 0 : vector<32x60xbf16>, vector<32x60xbf16>, vector<32x60xbf16>, vector<32x60xbf16>, vector<32x60xbf16>, vector<32x60xbf16>, vector<32x60xbf16>, vector<32x60xbf16>, vector<32x60xbf16> -> vector<288x60xbf16>
      %cst = arith.constant dense<0.000000e+00> : vector<64x60xf32>
      %29 = tpu.matmul %0, %28, %cst {dimension_numbers = #tpu.dot_dimension_numbers<[1], [0], [0], [1], [0, 0, 1, 1], [], []>} : vector<64x288xbf16>, vector<288x60xbf16>, vector<64x60xf32> -> vector<64x60xf32>
      %30 = vector.broadcast %1 : vector<64x1xf32> to vector<64x60xf32>
      %31 = arith.addf %29, %30 : vector<64x60xf32>
      %cst_18 = arith.constant 0.000000e+00 : f32
      %32 = vector.broadcast %cst_18 : f32 to vector<64x60xf32>
      %33 = arith.maximumf %31, %32 : vector<64x60xf32>
      %34 = vector.extract_strided_slice %10 {offsets = [0, 0], sizes = [32, 60], strides = [1, 1]} : vector<32x62xbf16> to vector<32x60xbf16>
      %35 = vector.extract_strided_slice %10 {offsets = [0, 1], sizes = [32, 60], strides = [1, 1]} : vector<32x62xbf16> to vector<32x60xbf16>
      %36 = vector.extract_strided_slice %10 {offsets = [0, 2], sizes = [32, 60], strides = [1, 1]} : vector<32x62xbf16> to vector<32x60xbf16>
      %37 = vector.extract_strided_slice %14 {offsets = [0, 0], sizes = [32, 60], strides = [1, 1]} : vector<32x62xbf16> to vector<32x60xbf16>
      %38 = vector.extract_strided_slice %14 {offsets = [0, 1], sizes = [32, 60], strides = [1, 1]} : vector<32x62xbf16> to vector<32x60xbf16>
      %39 = vector.extract_strided_slice %14 {offsets = [0, 2], sizes = [32, 60], strides = [1, 1]} : vector<32x62xbf16> to vector<32x60xbf16>
      %40 = vector.extract_strided_slice %18 {offsets = [0, 0], sizes = [32, 60], strides = [1, 1]} : vector<32x62xbf16> to vector<32x60xbf16>
      %41 = vector.extract_strided_slice %18 {offsets = [0, 1], sizes = [32, 60], strides = [1, 1]} : vector<32x62xbf16> to vector<32x60xbf16>
      %42 = vector.extract_strided_slice %18 {offsets = [0, 2], sizes = [32, 60], strides = [1, 1]} : vector<32x62xbf16> to vector<32x60xbf16>
      %43 = tpu.concatenate %34, %35, %36, %37, %38, %39, %40, %41, %42 in 0 : vector<32x60xbf16>, vector<32x60xbf16>, vector<32x60xbf16>, vector<32x60xbf16>, vector<32x60xbf16>, vector<32x60xbf16>, vector<32x60xbf16>, vector<32x60xbf16>, vector<32x60xbf16> -> vector<288x60xbf16>
      %cst_19 = arith.constant dense<0.000000e+00> : vector<64x60xf32>
      %44 = tpu.matmul %0, %43, %cst_19 {dimension_numbers = #tpu.dot_dimension_numbers<[1], [0], [0], [1], [0, 0, 1, 1], [], []>} : vector<64x288xbf16>, vector<288x60xbf16>, vector<64x60xf32> -> vector<64x60xf32>
      %45 = vector.broadcast %1 : vector<64x1xf32> to vector<64x60xf32>
      %46 = arith.addf %44, %45 : vector<64x60xf32>
      %cst_20 = arith.constant 0.000000e+00 : f32
      %47 = vector.broadcast %cst_20 : f32 to vector<64x60xf32>
      %48 = arith.maximumf %46, %47 : vector<64x60xf32>
      %49 = arith.maximumf %33, %48 : vector<64x60xf32>
      %50 = arith.truncf %49 : vector<64x60xf32> to vector<64x60xbf16>
      %c0_21 = arith.constant 0 : index
      %51 = arith.index_cast %arg5 : i32 to index
      %c0_22 = arith.constant 0 : index
      %c0_23 = arith.constant 0 : index
      %52 = vector.load %arg4[%c0_21, %51, %c0_22, %c0_23] : memref<1x30x64x60xbf16, #tpu.memory_space<vmem>>, vector<1x1x64x60xbf16>
      %53 = vector.shape_cast %52 : vector<1x1x64x60xbf16> to vector<64x60xbf16>
      %54 = vector.shape_cast %50 : vector<64x60xbf16> to vector<1x1x64x60xbf16>
      tpu.vector_store %arg4[%c0_21, %51, %c0_22, %c0_23], %54 {strides = array<i32>} : memref<1x30x64x60xbf16, #tpu.memory_space<vmem>>, vector<1x1x64x60xbf16>,
    }
    %c30_i32_3 = arith.constant 30 : i32
    return
  }
  func.func @transform_0(%arg0: i32) -> (i32, i32, i32, i32) {
    %c0_i32 = arith.constant 0 : i32
    %c0_i32_0 = arith.constant 0 : i32
    %c0_i32_1 = arith.constant 0 : i32
    %c0_i32_2 = arith.constant 0 : i32
    return %arg0, %c0_i32, %c0_i32_0, %c0_i32_1 : i32, i32, i32, i32
  }
  func.func @transform_1(%arg0: i32) -> (i32, i32) {
    %c0_i32 = arith.constant 0 : i32
    %c0_i32_0 = arith.constant 0 : i32
    %c0_i32_1 = arith.constant 0 : i32
    return %c0_i32, %c0_i32_0 : i32, i32
  }
  func.func @transform_2(%arg0: i32) -> (i32, i32) {
    %c0_i32 = arith.constant 0 : i32
    %c0_i32_0 = arith.constant 0 : i32
    %c0_i32_1 = arith.constant 0 : i32
    return %c0_i32, %c0_i32_0 : i32, i32
  }
  func.func @transform_3(%arg0: i32) -> (i32, i32, i32, i32) {
    %c0_i32 = arith.constant 0 : i32
    %c0_i32_0 = arith.constant 0 : i32
    %c0_i32_1 = arith.constant 0 : i32
    %c0_i32_2 = arith.constant 0 : i32
    return %arg0, %c0_i32, %c0_i32_0, %c0_i32_1 : i32, i32, i32, i32
  }
}

module attributes {stable_mosaic.version = 11 : i64} {
  func.func @_fc1_kernel(%arg0: i32, %arg1: i32, %arg2: memref<2x9600xbf16, #tpu.memory_space<vmem>>, %arg3: memref<9600x128xbf16, #tpu.memory_space<vmem>>, %arg4: memref<1x2x128xf32, #tpu.memory_space<vmem>>, %arg5: memref<2x128xf32, #tpu.memory_space<vmem>>) attributes {dimension_semantics = [#tpu.dimension_semantics<parallel>, #tpu.dimension_semantics<arbitrary>], iteration_bounds = array<i64: 2, 3>, scalar_prefetch = 0 : i64, scratch_operands = 1 : i64, tpu.core_type = #tpu.core_type<tc>, window_params = [{transform_indices = @transform_0, window_bounds = array<i64: 2, 9600>}, {transform_indices = @transform_1, window_bounds = array<i64: 9600, 128>}, {transform_indices = @transform_2, window_bounds = array<i64: 1, 2, 128>}]} {
    %c0_i32 = arith.constant 0 : i32
    %0 = arith.cmpi eq, %arg1, %c0_i32 : i32
    %1 = arith.extui %0 : i1 to i32
    %c0_i32_0 = arith.constant 0 : i32
    %2 = arith.cmpi ne, %1, %c0_i32_0 : i32
    scf.if %2 {
      %cst_9 = arith.constant 0.000000e+00 : f32
      %12 = vector.broadcast %cst_9 : f32 to vector<2x128xf32>
      %c0_10 = arith.constant 0 : index
      %c0_11 = arith.constant 0 : index
      %13 = vector.load %arg5[%c0_10, %c0_11] : memref<2x128xf32, #tpu.memory_space<vmem>>, vector<2x128xf32>
      tpu.vector_store %arg5[%c0_10, %c0_11], %12 {strides = array<i32>} : memref<2x128xf32, #tpu.memory_space<vmem>>, vector<2x128xf32>,
    } else {
    }
    %c0 = arith.constant 0 : index
    %c0_1 = arith.constant 0 : index
    %3 = vector.load %arg5[%c0, %c0_1] : memref<2x128xf32, #tpu.memory_space<vmem>>, vector<2x128xf32>
    %c0_2 = arith.constant 0 : index
    %c0_3 = arith.constant 0 : index
    %4 = vector.load %arg2[%c0_2, %c0_3] : memref<2x9600xbf16, #tpu.memory_space<vmem>>, vector<2x9600xbf16>
    %c0_4 = arith.constant 0 : index
    %c0_5 = arith.constant 0 : index
    %5 = vector.load %arg3[%c0_4, %c0_5] : memref<9600x128xbf16, #tpu.memory_space<vmem>>, vector<9600x128xbf16>
    %cst = arith.constant dense<0.000000e+00> : vector<2x128xf32>
    %6 = tpu.matmul %4, %5, %cst {dimension_numbers = #tpu.dot_dimension_numbers<[1], [0], [0], [1], [0, 0, 1, 1], [], []>} : vector<2x9600xbf16>, vector<9600x128xbf16>, vector<2x128xf32> -> vector<2x128xf32>
    %7 = arith.addf %3, %6 : vector<2x128xf32>
    %c0_6 = arith.constant 0 : index
    %c0_7 = arith.constant 0 : index
    %8 = vector.load %arg5[%c0_6, %c0_7] : memref<2x128xf32, #tpu.memory_space<vmem>>, vector<2x128xf32>
    tpu.vector_store %arg5[%c0_6, %c0_7], %7 {strides = array<i32>} : memref<2x128xf32, #tpu.memory_space<vmem>>, vector<2x128xf32>,
    %c2_i32 = arith.constant 2 : i32
    %9 = arith.cmpi eq, %arg1, %c2_i32 : i32
    %10 = arith.extui %9 : i1 to i32
    %c0_i32_8 = arith.constant 0 : i32
    %11 = arith.cmpi ne, %10, %c0_i32_8 : i32
    scf.if %11 {
      %c0_9 = arith.constant 0 : index
      %c0_10 = arith.constant 0 : index
      %12 = vector.load %arg5[%c0_9, %c0_10] : memref<2x128xf32, #tpu.memory_space<vmem>>, vector<2x128xf32>
      %c0_11 = arith.constant 0 : index
      %c0_12 = arith.constant 0 : index
      %c0_13 = arith.constant 0 : index
      %13 = vector.load %arg4[%c0_11, %c0_12, %c0_13] : memref<1x2x128xf32, #tpu.memory_space<vmem>>, vector<1x2x128xf32>
      %14 = vector.shape_cast %13 : vector<1x2x128xf32> to vector<2x128xf32>
      %15 = vector.shape_cast %12 : vector<2x128xf32> to vector<1x2x128xf32>
      tpu.vector_store %arg4[%c0_11, %c0_12, %c0_13], %15 {strides = array<i32>} : memref<1x2x128xf32, #tpu.memory_space<vmem>>, vector<1x2x128xf32>,
    } else {
    }
    return
  }
  func.func @transform_0(%arg0: i32, %arg1: i32) -> (i32, i32) {
    %c3_i32 = arith.constant 3 : i32
    %0 = arith.muli %arg0, %c3_i32 : i32
    %1 = arith.addi %0, %arg1 : i32
    %c0_i32 = arith.constant 0 : i32
    %c0_i32_0 = arith.constant 0 : i32
    return %c0_i32, %1 : i32, i32
  }
  func.func @transform_1(%arg0: i32, %arg1: i32) -> (i32, i32) {
    %c3_i32 = arith.constant 3 : i32
    %0 = arith.muli %arg0, %c3_i32 : i32
    %1 = arith.addi %0, %arg1 : i32
    %c0_i32 = arith.constant 0 : i32
    %c0_i32_0 = arith.constant 0 : i32
    return %1, %c0_i32 : i32, i32
  }
  func.func @transform_2(%arg0: i32, %arg1: i32) -> (i32, i32, i32) {
    %c0_i32 = arith.constant 0 : i32
    %c0_i32_0 = arith.constant 0 : i32
    %c0_i32_1 = arith.constant 0 : i32
    return %arg0, %c0_i32, %c0_i32_0 : i32, i32, i32
  }
}

module attributes {stable_mosaic.version = 11 : i64} {
  func.func @_fc2_softmax_kernel(%arg0: i32, %arg1: memref<2x128xf32, #tpu.memory_space<vmem>>, %arg2: memref<128x2xf32, #tpu.memory_space<vmem>>, %arg3: memref<1x2xf32, #tpu.memory_space<vmem>>, %arg4: memref<2x2xf32, #tpu.memory_space<vmem>>) attributes {dimension_semantics = [#tpu.dimension_semantics<arbitrary>], iteration_bounds = array<i64: 1>, scalar_prefetch = 0 : i64, scratch_operands = 0 : i64, tpu.core_type = #tpu.core_type<tc>, window_params = [{pipeline_mode = #tpu.pipeline_mode<synchronous>, transform_indices = @transform_0, window_bounds = array<i64: 2, 128>}, {pipeline_mode = #tpu.pipeline_mode<synchronous>, transform_indices = @transform_1, window_bounds = array<i64: 128, 2>}, {pipeline_mode = #tpu.pipeline_mode<synchronous>, transform_indices = @transform_2, window_bounds = array<i64: 1, 2>}, {pipeline_mode = #tpu.pipeline_mode<synchronous>, transform_indices = @transform_3, window_bounds = array<i64: 2, 2>}]} {
    %c0 = arith.constant 0 : index
    %c0_0 = arith.constant 0 : index
    %0 = vector.load %arg1[%c0, %c0_0] : memref<2x128xf32, #tpu.memory_space<vmem>>, vector<2x128xf32>
    %c0_1 = arith.constant 0 : index
    %c0_2 = arith.constant 0 : index
    %1 = vector.load %arg2[%c0_1, %c0_2] : memref<128x2xf32, #tpu.memory_space<vmem>>, vector<128x2xf32>
    %cst = arith.constant dense<0.000000e+00> : vector<2x2xf32>
    %2 = tpu.matmul %0, %1, %cst {dimension_numbers = #tpu.dot_dimension_numbers<[1], [0], [0], [1], [0, 0, 1, 1], [], []>} : vector<2x128xf32>, vector<128x2xf32>, vector<2x2xf32> -> vector<2x2xf32>
    %c0_3 = arith.constant 0 : index
    %c0_4 = arith.constant 0 : index
    %3 = vector.load %arg3[%c0_3, %c0_4] : memref<1x2xf32, #tpu.memory_space<vmem>>, vector<1x2xf32>
    %4 = vector.broadcast %3 : vector<1x2xf32> to vector<2x2xf32>
    %5 = arith.addf %2, %4 : vector<2x2xf32>
    %cst_5 = arith.constant dense<0xFF800000> : vector<2xf32>
    %6 = vector.multi_reduction <maximumf>, %5, %cst_5 [1] : vector<2x2xf32> to vector<2xf32>
    %7 = vector.shape_cast %6 : vector<2xf32> to vector<2x1xf32>
    %8 = vector.broadcast %7 : vector<2x1xf32> to vector<2x2xf32>
    %9 = arith.subf %5, %8 : vector<2x2xf32>
    %10 = math.exp %9 : vector<2x2xf32>
    %cst_6 = arith.constant dense<0.000000e+00> : vector<2xf32>
    %11 = vector.multi_reduction <add>, %10, %cst_6 [1] : vector<2x2xf32> to vector<2xf32>
    %12 = vector.shape_cast %11 : vector<2xf32> to vector<2x1xf32>
    %13 = vector.broadcast %12 : vector<2x1xf32> to vector<2x2xf32>
    %14 = arith.divf %10, %13 : vector<2x2xf32>
    %c0_7 = arith.constant 0 : index
    %c0_8 = arith.constant 0 : index
    %15 = vector.load %arg4[%c0_7, %c0_8] : memref<2x2xf32, #tpu.memory_space<vmem>>, vector<2x2xf32>
    tpu.vector_store %arg4[%c0_7, %c0_8], %14 {strides = array<i32>} : memref<2x2xf32, #tpu.memory_space<vmem>>, vector<2x2xf32>,
    return
  }
  func.func @transform_0(%arg0: i32) -> (i32, i32) {
    %c0_i32 = arith.constant 0 : i32
    %c0_i32_0 = arith.constant 0 : i32
    %c0_i32_1 = arith.constant 0 : i32
    return %c0_i32, %c0_i32_0 : i32, i32
  }
  func.func @transform_1(%arg0: i32) -> (i32, i32) {
    %c0_i32 = arith.constant 0 : i32
    %c0_i32_0 = arith.constant 0 : i32
    %c0_i32_1 = arith.constant 0 : i32
    return %c0_i32, %c0_i32_0 : i32, i32
  }
  func.func @transform_2(%arg0: i32) -> (i32, i32) {
    %c0_i32 = arith.constant 0 : i32
    %c0_i32_0 = arith.constant 0 : i32
    %c0_i32_1 = arith.constant 0 : i32
    return %c0_i32, %c0_i32_0 : i32, i32
  }
  func.func @transform_3(%arg0: i32) -> (i32, i32) {
    %c0_i32 = arith.constant 0 : i32
    %c0_i32_0 = arith.constant 0 : i32
    %c0_i32_1 = arith.constant 0 : i32
    return %c0_i32, %c0_i32_0 : i32, i32
  }
}

</mosaic_0001>

<llo_original>
// kernel: my_model_forward.5
$region0: #{my_model_forward.5}
  #allocation0 [shape = 'u32[]', space=smem, size = 0x4, offset = 0x4, fixed_abs, tag = 'smem constant byte address 0x4 - core index']
  #allocation1 [shape = 'u32[72,128]{1,0:T(1,128)}', space=vmem, size = 0x9000, scoped, tag = 'internal scratch']
  %s0 = inlined_call_operand.vmem [shape: bf16[2,256,16,256], index: 0, kind: input, shape index: {}]
  %s1 = inlined_call_operand.vmem [shape: bf16[32,144], index: 1, kind: input, shape index: {}]
  %s2 = inlined_call_operand.vmem [shape: f32[32,1], index: 2, kind: input, shape index: {}]
  %s3 = inlined_call_operand.vmem [shape: bf16[2,127,32,254], index: 3, kind: output, shape index: {}]
  %s4 = sld [smem:[#allocation0]]
  $region52: #{my_model_forward.5} parent=0
    _
  %s6 = ssub.s32 1, %s4
  %s7 = scalar_select 0, %s6, %s4
  loop: start=0, step=1, limit=4
  $region2: #{my_model_forward.5} parent=0 // loop_pre_header
    _
  $region3: #{my_model_forward.5} parent=0 // loop_header
    %s9 = sphi 0, %s13
    %p10 = scmp.ge.s32.totalorder %s9, 4
    %s19 = sphi 0, %s21
    %s22 = sphi 0, %s19
    %s23 = sphi 0, %s22
    %s39 = sphi 0, %s23
    %s43 = sphi 0, %s43
    %s45 = sphi 0, %s43
    %s46 = sphi 0, %s45
    %s60 = sphi 0, %s46
    %s64 = sphi 0, %s64
    %s66 = sphi 0, %s64
    %s67 = sphi 0, %s66
    %s81 = sphi 0, %s67
    %s87 = sphi 0, %s89
    %s90 = sphi 0, %s87
    %s91 = sphi 0, %s90
    %s107 = sphi 0, %s91
  $region4: #{my_model_forward.5} parent=0 // loop_header_branch
    %12 = sbr.rel (%p10) target = $region8
  $region5: #{my_model_forward.5} parent=0 // loop_body
    %s14 = ssub.s32 %s9, 1
    %s15 = ssub.s32 %s9, 2
    %s16 = sadd.s32 %s9, 1
    %s17 = ssub.s32 %s9, %s16
    %p18 = scmp.eq.s32.totalorder %s17, 0
    %s20 = sadd.s32 %s19, 1
    %s21 = scalar_select %p18, %s19, %s20
    %p24 = pneg %p18
    %p25 = scmp.eq.s32.totalorder %s9, 1
    %p26 = por %p24, %p25
    %p27 = scmp.ne.s32.totalorder %s19, %s22
    %p28 = scmp.eq.s32.totalorder %s9, 0
    %p29 = por %p27, %p28
    %p30 = scmp.ne.s32.totalorder %s19, %s22
    %p31 = scmp.eq.s32.totalorder %s14, 1
    %p32 = por %p30, %p31
    %p33 = scmp.ne.s32.totalorder %s22, %s23
    %p34 = scmp.eq.s32.totalorder %s14, 0
    %p35 = por %p33, %p34
    %p36 = scmp.ne.s32.totalorder %s22, %s23
    %p37 = scmp.eq.s32.totalorder %s15, 1
    %p38 = por %p36, %p37
    %p40 = scmp.ne.s32.totalorder %s23, %s39
    %p41 = scmp.eq.s32.totalorder %s15, 0
    %p42 = por %p40, %p41
    %s44 = sadd.s32 %s43, 1
    %p47 = scmp.eq.s32.totalorder %s9, 1
    %p48 = scmp.ne.s32.totalorder %s43, %s45
    %p49 = scmp.eq.s32.totalorder %s9, 0
    %p50 = por %p48, %p49
    %p51 = scmp.ne.s32.totalorder %s43, %s45
    %p52 = scmp.eq.s32.totalorder %s14, 1
    %p53 = por %p51, %p52
    %p54 = scmp.ne.s32.totalorder %s45, %s46
    %p55 = scmp.eq.s32.totalorder %s14, 0
    %p56 = por %p54, %p55
    %p57 = scmp.ne.s32.totalorder %s45, %s46
    %p58 = scmp.eq.s32.totalorder %s15, 1
    %p59 = por %p57, %p58
    %p61 = scmp.ne.s32.totalorder %s46, %s60
    %p62 = scmp.eq.s32.totalorder %s15, 0
    %p63 = por %p61, %p62
    %s65 = sadd.s32 %s64, 1
    %p68 = scmp.eq.s32.totalorder %s9, 1
    %p69 = scmp.ne.s32.totalorder %s64, %s66
    %p70 = scmp.eq.s32.totalorder %s9, 0
    %p71 = por %p69, %p70
    %p72 = scmp.ne.s32.totalorder %s64, %s66
    %p73 = scmp.eq.s32.totalorder %s14, 1
    %p74 = por %p72, %p73
    %p75 = scmp.ne.s32.totalorder %s66, %s67
    %p76 = scmp.eq.s32.totalorder %s14, 0
    %p77 = por %p75, %p76
    %p78 = scmp.ne.s32.totalorder %s66, %s67
    %p79 = scmp.eq.s32.totalorder %s15, 1
    %p80 = por %p78, %p79
    %p82 = scmp.ne.s32.totalorder %s67, %s81
    %p83 = scmp.eq.s32.totalorder %s15, 0
    %p84 = por %p82, %p83
    %s85 = ssub.s32 %s9, %s16
    %p86 = scmp.eq.s32.totalorder %s85, 0
    %s88 = sadd.s32 %s87, 1
    %s89 = scalar_select %p86, %s87, %s88
    %p92 = pneg %p86
    %p93 = scmp.eq.s32.totalorder %s9, 1
    %p94 = por %p92, %p93
    %p95 = scmp.ne.s32.totalorder %s87, %s90
    %p96 = scmp.eq.s32.totalorder %s9, 0
    %p97 = por %p95, %p96
    %p98 = scmp.ne.s32.totalorder %s87, %s90
    %p99 = scmp.eq.s32.totalorder %s14, 1
    %p100 = por %p98, %p99
    %p101 = scmp.ne.s32.totalorder %s90, %s91
    %p102 = scmp.eq.s32.totalorder %s14, 0
    %p103 = por %p101, %p102
    %p104 = scmp.ne.s32.totalorder %s90, %s91
    %p105 = scmp.eq.s32.totalorder %s15, 1
    %p106 = por %p104, %p105
    %p108 = scmp.ne.s32.totalorder %s91, %s107
    %p109 = scmp.eq.s32.totalorder %s15, 0
    %p110 = por %p108, %p109
    %p111 = scmp.le.s32.totalorder 1, %s9
    %p112 = scmp.lt.s32.totalorder %s9, 3
    %p113 = pnand %p111, %p112
    %p114 = pneg %p113
    // Predicated region
    $region9: #{my_model_forward.5} parent=5 // pred_check
      _
    $region10: #{my_model_forward.5} parent=5 // pred_check_branch
      %116 = sbr.rel (%p113) target = $region12
    $region11: #{my_model_forward.5} parent=5 // pred_region
      %s117 = ssub.s32 %s9, 1
      // Predicated region
      $region13: #{my_model_forward.5} parent=11 // pred_check
        %p118 = pneg %p56
      $region14: #{my_model_forward.5} parent=11 // pred_check_branch
        %120 = sbr.rel (%p118) target = $region16
      $region15: #{my_model_forward.5} parent=11 // pred_region
        _
      $region16: #{my_model_forward.5} parent=11 // pred_fallthru
        _
      // Predicated region
      $region17: #{my_model_forward.5} parent=11 // pred_check
        %p121 = pneg %p77
      $region18: #{my_model_forward.5} parent=11 // pred_check_branch
        %123 = sbr.rel (%p121) target = $region20
      $region19: #{my_model_forward.5} parent=11 // pred_region
        _
      $region20: #{my_model_forward.5} parent=11 // pred_fallthru
        _
    $region12: #{my_model_forward.5} parent=5 // pred_fallthru
      _
    %p124 = scmp.lt.s32.totalorder %s9, 2
    // Predicated region
    $region21: #{my_model_forward.5} parent=5 // pred_check
      %p125 = pneg %p124
    $region22: #{my_model_forward.5} parent=5 // pred_check_branch
      %127 = sbr.rel (%p125) target = $region24
    $region23: #{my_model_forward.5} parent=5 // pred_region
      // Predicated region
      $region25: #{my_model_forward.5} parent=23 // pred_check
        %p128 = pneg %p29
      $region26: #{my_model_forward.5} parent=23 // pred_check_branch
        %130 = sbr.rel (%p128) target = $region28
      $region27: #{my_model_forward.5} parent=23 // pred_region
        %p131 = scmp.lt.s32.totalorder %s9, 1
        %s132 = scalar_select %p131, %s9, 1
        %s133 = smul.addr %s132, 1024
        %s134 = smul.addr %s133, 4
        %s135 = scalar_lea.vmem %s0, %s134
      $region28: #{my_model_forward.5} parent=23 // pred_fallthru
        _
    $region24: #{my_model_forward.5} parent=5 // pred_fallthru
      _
    %p136 = scmp.le.s32.totalorder 1, %s9
    %p137 = scmp.lt.s32.totalorder %s9, 3
    %p138 = pnand %p136, %p137
    %p139 = pneg %p138
    // Predicated region
    $region29: #{my_model_forward.5} parent=5 // pred_check
      _
    $region30: #{my_model_forward.5} parent=5 // pred_check_branch
      %141 = sbr.rel (%p138) target = $region32
    $region31: #{my_model_forward.5} parent=5 // pred_region
      %s142 = ssub.s32 %s9, 1
      %p143 = scmp.lt.s32.totalorder %s14, 1
      %s144 = scalar_select %p143, %s14, 1
      %s145 = smul.addr %s144, 1024
      %s146 = smul.addr %s145, 4
      %s147 = scalar_lea.vmem %s0, %s146
      %p148 = pneg %p35
      %p149 = pneg %p32
      %p150 = pneg %p56
      %p151 = pneg %p53
      %p152 = pneg %p77
      %p153 = pneg %p74
      %p154 = pneg %p103
      %p155 = pneg %p100
      %p156 = scmp.lt.s32.totalorder %s14, 1
      %s157 = scalar_select %p156, %s14, 1
      %s158 = smul.addr %s157, 1016
      %s159 = smul.addr %s158, 4
      %s160 = scalar_lea.vmem %s3, %s159
      %p161 = scmp.lt.s32.totalorder %s14, 1
      %s162 = scalar_select %p161, %s14, 1
      %s163 = smul.addr %s162, 1024
      %s164 = smul.addr %s163, 4
      %s165 = scalar_lea.vmem %s0, %s164
      %p166 = scmp.lt.s32.totalorder %s14, 1
      %s167 = scalar_select %p166, %s14, 1
      %s168 = smul.addr %s167, 1016
      %s169 = smul.addr %s168, 4
      %s170 = scalar_lea.vmem %s3, %s169
      %v172 = vld [vmem:[%s1] sm:$0xff]
      %v173 = vld [vmem:[%s1 + $0x8] sm:$0xff]
      %v174 = vld [vmem:[%s1 + $0x10] sm:$0xff]
      %v175 = vld [vmem:[%s1 + $0x18] sm:$0xff]
      %v176 = vld [vmem:[%s2] sm:$0xff]
      %v177 = vld [vmem:[%s2 + $0x8] sm:$0xff]
      %v178 = vld [vmem:[%s2 + $0x10] sm:$0xff]
      %v179 = vld [vmem:[%s2 + $0x18] sm:$0xff]
      loop: start=0, step=1, limit=127
      $region33: #{my_model_forward.5} parent=31 // loop_pre_header
        _
      $region34: #{my_model_forward.5} parent=31 // loop_header
        %s181 = sphi 0, %s185
        %p182 = scmp.ge.s32.totalorder %s181, 127
      $region35: #{my_model_forward.5} parent=31 // loop_header_branch
        %184 = sbr.rel (%p182) target = $region39
      $region36: #{my_model_forward.5} parent=31 // loop_body
        %s186 = smul.u32 %s181, 2
        %s187 = smul.u32 %s186, 4
        %s188 = smul.addr %s187, 4
        %s189 = scalar_lea.vmem %s165, %s188
        %v190 = vld [vmem:[%s189] sm:$0xff]
        %v191 = vld [vmem:[%s189 + $0x8] sm:$0xff]
        %s192 = sadd.s32 %s186, 1
        %s193 = smul.u32 %s192, 4
        %s194 = smul.addr %s193, 4
        %s195 = scalar_lea.vmem %s165, %s194
        %v196 = vld [vmem:[%s195] sm:$0xff]
        %v197 = vld [vmem:[%s195 + $0x8] sm:$0xff]
        %s198 = sadd.s32 %s186, 2
        %s199 = smul.u32 %s198, 4
        %s200 = smul.addr %s199, 4
        %s201 = scalar_lea.vmem %s165, %s200
        %v202 = vld [vmem:[%s201] sm:$0xff]
        %v203 = vld [vmem:[%s201 + $0x8] sm:$0xff]
        %s204 = sadd.s32 %s186, 3
        %s205 = smul.u32 %s204, 4
        %s206 = smul.addr %s205, 4
        %s207 = scalar_lea.vmem %s165, %s206
        %v208 = vld [vmem:[%s207] sm:$0xff]
        %v209 = vld [vmem:[%s207 + $0x8] sm:$0xff]
        %v212 = vunpack.c.l.b16 %v190
        %v213 = vunpack.c.h.b16 %v190
        %v214 = vunpack.c.l.b16 %v191
        %v215 = vunpack.c.h.b16 %v191
        %v216 = vpack.c.b16 %v214, %v212
        %v217 = vpack.c.b16 %v215, %v213
        %220 = vrot.lane.b32.xlu0 %v216, 127
        %v221 = vpop.permute.xlu0 %220
        %222 = vrot.lane.b32.xlu0 %v217, 127
        %v223 = vpop.permute.xlu0 %222
        %vm224 = vcmask 1039360
        %v225 = vsel %vm224, %v221, %v223
        %228 = vrot.lane.b32.xlu0 %v216, 126
        %v229 = vpop.permute.xlu0 %228
        %230 = vrot.lane.b32.xlu0 %v217, 126
        %v231 = vpop.permute.xlu0 %230
        %vm232 = vcmask 1031168
        %v233 = vsel %vm232, %v229, %v231
        %v238 = vunpack.c.l.b16 %v196
        %v239 = vunpack.c.h.b16 %v196
        %v240 = vunpack.c.l.b16 %v197
        %v241 = vunpack.c.h.b16 %v197
        %v242 = vpack.c.b16 %v240, %v238
        %v243 = vpack.c.b16 %v241, %v239
        %246 = vrot.lane.b32.xlu0 %v242, 127
        %v247 = vpop.permute.xlu0 %246
        %248 = vrot.lane.b32.xlu0 %v243, 127
        %v249 = vpop.permute.xlu0 %248
        %v250 = vsel %vm224, %v247, %v249
        %253 = vrot.lane.b32.xlu0 %v242, 126
        %v254 = vpop.permute.xlu0 %253
        %255 = vrot.lane.b32.xlu0 %v243, 126
        %v256 = vpop.permute.xlu0 %255
        %v257 = vsel %vm232, %v254, %v256
        %v262 = vunpack.c.l.b16 %v202
        %v263 = vunpack.c.h.b16 %v202
        %v264 = vunpack.c.l.b16 %v203
        %v265 = vunpack.c.h.b16 %v203
        %v266 = vpack.c.b16 %v264, %v262
        %v267 = vpack.c.b16 %v265, %v263
        %270 = vrot.lane.b32.xlu0 %v266, 127
        %v271 = vpop.permute.xlu0 %270
        %272 = vrot.lane.b32.xlu0 %v267, 127
        %v273 = vpop.permute.xlu0 %272
        %v274 = vsel %vm224, %v271, %v273
        %277 = vrot.lane.b32.xlu0 %v266, 126
        %v278 = vpop.permute.xlu0 %277
        %279 = vrot.lane.b32.xlu0 %v267, 126
        %v280 = vpop.permute.xlu0 %279
        %v281 = vsel %vm232, %v278, %v280
        %285 = vset.pattern.permute.xlu0 0
        %286 = vperm.xlu0 %285, %v176
        %v287 = vpop.permute.xlu0 %286
        %290 = vset.pattern.permute.xlu0 0
        %291 = vperm.xlu0 %290, %v177
        %v292 = vpop.permute.xlu0 %291
        %295 = vset.pattern.permute.xlu0 0
        %296 = vperm.xlu0 %295, %v178
        %v297 = vpop.permute.xlu0 %296
        %300 = vset.pattern.permute.xlu0 0
        %301 = vperm.xlu0 %300, %v179
        %v302 = vpop.permute.xlu0 %301
        %v308 = vunpack.c.l.b16 %v172
        %v309 = vunpack.c.h.b16 %v172
        %v310 = vunpack.c.l.b16 %v173
        %v311 = vunpack.c.h.b16 %v173
        %v312 = vunpack.c.l.b16 %v174
        %v313 = vunpack.c.h.b16 %v174
        %v314 = vunpack.c.l.b16 %v175
        %v315 = vunpack.c.h.b16 %v175
        %v316 = vpack.c.b16 %v310, %v308
        %v317 = vpack.c.b16 %v311, %v309
        %v318 = vpack.c.b16 %v314, %v312
        %v319 = vpack.c.b16 %v315, %v313
        %vm322 = vcmask 130048
        %v324 = vsel %vm322, %v317, 0
        %v327 = vsel %vm322, %v319, 0
        %329 = vmatpush.bf16.msra.mxu0 %v274
        %330 = vmatpush.bf16.msra.mxu0 %v266
        %331 = vmatpush.bf16.msra.mxu0 %v257
        %332 = vmatpush.bf16.msra.mxu0 %v250
        %333 = vmatpush.bf16.msra.mxu0 %v242
        %334 = vmatpush.bf16.msra.mxu0 %v233
        %335 = vmatpush.bf16.msra.mxu0 %v225
        %336 = vmatpush.bf16.msra.mxu0 %v216
        %337 = vmatmul.bf16.gmra.mxu0 %v316
        %v338 = vpop.f32.mrf.mxu0
        %v339 = vadd.f32 %v287, %v338
        %v340 = vpop.f32.mrf.mxu0
        %v341 = vadd.f32 %v292, %v340
        %342 = vmatmul.bf16.gmra.mxu0 %v318
        %v343 = vpop.f32.mrf.mxu0
        %v344 = vadd.f32 %v297, %v343
        %v345 = vpop.f32.mrf.mxu0
        %v346 = vadd.f32 %v302, %v345
        %347 = vdwg.mxu0
        %348 = vmatpush.bf16.msra.mxu0 0
        %349 = vmatpush.bf16.msra.mxu0 0
        %350 = vmatpush.bf16.msra.mxu0 0
        %351 = vmatpush.bf16.msra.mxu0 0
        %352 = vmatpush.bf16.msra.mxu0 0
        %353 = vmatpush.bf16.msra.mxu0 0
        %354 = vmatpush.bf16.msra.mxu0 0
        %355 = vmatpush.bf16.msra.mxu0 %v281
        %356 = vmatmul.bf16.gmra.mxu0 %v324
        %v357 = vpop.f32.mrf.mxu0
        %v358 = vadd.f32 %v339, %v357
        %v359 = vpop.f32.mrf.mxu0
        %v360 = vadd.f32 %v341, %v359
        %361 = vmatmul.bf16.gmra.mxu0 %v327
        %v362 = vpop.f32.mrf.mxu0
        %v363 = vadd.f32 %v344, %v362
        %v364 = vpop.f32.mrf.mxu0
        %v365 = vadd.f32 %v346, %v364
        %366 = vdwg.mxu0
        %367 = vmatpush.bf16.msra.mxu0 %v273
        %368 = vmatpush.bf16.msra.mxu0 %v267
        %369 = vmatpush.bf16.msra.mxu0 %v256
        %370 = vmatpush.bf16.msra.mxu0 %v249
        %371 = vmatpush.bf16.msra.mxu0 %v243
        %372 = vmatpush.bf16.msra.mxu0 %v231
        %373 = vmatpush.bf16.msra.mxu0 %v223
        %374 = vmatpush.bf16.msra.mxu0 %v217
        %375 = vmatmul.bf16.gmra.mxu0 %v316
        %v376 = vpop.f32.mrf.mxu0
        %v377 = vadd.f32 %v287, %v376
        %v378 = vpop.f32.mrf.mxu0
        %v379 = vadd.f32 %v292, %v378
        %380 = vmatmul.bf16.gmra.mxu0 %v318
        %v381 = vpop.f32.mrf.mxu0
        %v382 = vadd.f32 %v297, %v381
        %v383 = vpop.f32.mrf.mxu0
        %v384 = vadd.f32 %v302, %v383
        %385 = vdwg.mxu0
        %386 = vmatpush.bf16.msra.mxu0 0
        %387 = vmatpush.bf16.msra.mxu0 0
        %388 = vmatpush.bf16.msra.mxu0 0
        %389 = vmatpush.bf16.msra.mxu0 0
        %390 = vmatpush.bf16.msra.mxu0 0
        %391 = vmatpush.bf16.msra.mxu0 0
        %392 = vmatpush.bf16.msra.mxu0 0
        %393 = vmatpush.bf16.msra.mxu0 %v280
        %394 = vmatmul.bf16.gmra.mxu0 %v324
        %v395 = vpop.f32.mrf.mxu0
        %v396 = vadd.f32 %v377, %v395
        %v397 = vpop.f32.mrf.mxu0
        %v398 = vadd.f32 %v379, %v397
        %399 = vmatmul.bf16.gmra.mxu0 %v327
        %v400 = vpop.f32.mrf.mxu0
        %v401 = vadd.f32 %v382, %v400
        %v402 = vpop.f32.mrf.mxu0
        %v403 = vadd.f32 %v384, %v402
        %404 = vdwg.mxu0
        %v405 = vmax.f32 %v358, 0.0
        %v406 = vmax.f32 %v396, 0.0
        %v407 = vmax.f32 %v360, 0.0
        %v408 = vmax.f32 %v398, 0.0
        %v409 = vmax.f32 %v363, 0.0
        %v410 = vmax.f32 %v401, 0.0
        %v411 = vmax.f32 %v365, 0.0
        %v412 = vmax.f32 %v403, 0.0
        %v415 = vunpack.c.l.b16 %v208
        %v416 = vunpack.c.h.b16 %v208
        %v417 = vunpack.c.l.b16 %v209
        %v418 = vunpack.c.h.b16 %v209
        %v419 = vpack.c.b16 %v417, %v415
        %v420 = vpack.c.b16 %v418, %v416
        %423 = vrot.lane.b32.xlu0 %v419, 127
        %v424 = vpop.permute.xlu0 %423
        %425 = vrot.lane.b32.xlu0 %v420, 127
        %v426 = vpop.permute.xlu0 %425
        %v427 = vsel %vm224, %v424, %v426
        %430 = vrot.lane.b32.xlu0 %v419, 126
        %v431 = vpop.permute.xlu0 %430
        %432 = vrot.lane.b32.xlu0 %v420, 126
        %v433 = vpop.permute.xlu0 %432
        %v434 = vsel %vm232, %v431, %v433
        %437 = vmatpush.bf16.msra.mxu0 %v427
        %438 = vmatpush.bf16.msra.mxu0 %v419
        %439 = vmatpush.bf16.msra.mxu0 %v281
        %440 = vmatpush.bf16.msra.mxu0 %v274
        %441 = vmatpush.bf16.msra.mxu0 %v266
        %442 = vmatpush.bf16.msra.mxu0 %v257
        %443 = vmatpush.bf16.msra.mxu0 %v250
        %444 = vmatpush.bf16.msra.mxu0 %v242
        %445 = vmatmul.bf16.gmra.mxu0 %v316
        %v446 = vpop.f32.mrf.mxu0
        %v447 = vadd.f32 %v287, %v446
        %v448 = vpop.f32.mrf.mxu0
        %v449 = vadd.f32 %v292, %v448
        %450 = vmatmul.bf16.gmra.mxu0 %v318
        %v451 = vpop.f32.mrf.mxu0
        %v452 = vadd.f32 %v297, %v451
        %v453 = vpop.f32.mrf.mxu0
        %v454 = vadd.f32 %v302, %v453
        %455 = vdwg.mxu0
        %456 = vmatpush.bf16.msra.mxu0 0
        %457 = vmatpush.bf16.msra.mxu0 0
        %458 = vmatpush.bf16.msra.mxu0 0
        %459 = vmatpush.bf16.msra.mxu0 0
        %460 = vmatpush.bf16.msra.mxu0 0
        %461 = vmatpush.bf16.msra.mxu0 0
        %462 = vmatpush.bf16.msra.mxu0 0
        %463 = vmatpush.bf16.msra.mxu0 %v434
        %464 = vmatmul.bf16.gmra.mxu0 %v324
        %v465 = vpop.f32.mrf.mxu0
        %v466 = vadd.f32 %v447, %v465
        %v467 = vpop.f32.mrf.mxu0
        %v468 = vadd.f32 %v449, %v467
        %469 = vmatmul.bf16.gmra.mxu0 %v327
        %v470 = vpop.f32.mrf.mxu0
        %v471 = vadd.f32 %v452, %v470
        %v472 = vpop.f32.mrf.mxu0
        %v473 = vadd.f32 %v454, %v472
        %474 = vdwg.mxu0
        %475 = vmatpush.bf16.msra.mxu0 %v426
        %476 = vmatpush.bf16.msra.mxu0 %v420
        %477 = vmatpush.bf16.msra.mxu0 %v280
        %478 = vmatpush.bf16.msra.mxu0 %v273
        %479 = vmatpush.bf16.msra.mxu0 %v267
        %480 = vmatpush.bf16.msra.mxu0 %v256
        %481 = vmatpush.bf16.msra.mxu0 %v249
        %482 = vmatpush.bf16.msra.mxu0 %v243
        %483 = vmatmul.bf16.gmra.mxu0 %v316
        %v484 = vpop.f32.mrf.mxu0
        %v485 = vadd.f32 %v287, %v484
        %v486 = vpop.f32.mrf.mxu0
        %v487 = vadd.f32 %v292, %v486
        %488 = vmatmul.bf16.gmra.mxu0 %v318
        %v489 = vpop.f32.mrf.mxu0
        %v490 = vadd.f32 %v297, %v489
        %v491 = vpop.f32.mrf.mxu0
        %v492 = vadd.f32 %v302, %v491
        %493 = vdwg.mxu0
        %494 = vmatpush.bf16.msra.mxu0 0
        %495 = vmatpush.bf16.msra.mxu0 0
        %496 = vmatpush.bf16.msra.mxu0 0
        %497 = vmatpush.bf16.msra.mxu0 0
        %498 = vmatpush.bf16.msra.mxu0 0
        %499 = vmatpush.bf16.msra.mxu0 0
        %500 = vmatpush.bf16.msra.mxu0 0
        %501 = vmatpush.bf16.msra.mxu0 %v433
        %502 = vmatmul.bf16.gmra.mxu0 %v324
        %v503 = vpop.f32.mrf.mxu0
        %v504 = vadd.f32 %v485, %v503
        %v505 = vpop.f32.mrf.mxu0
        %v506 = vadd.f32 %v487, %v505
        %507 = vmatmul.bf16.gmra.mxu0 %v327
        %v508 = vpop.f32.mrf.mxu0
        %v509 = vadd.f32 %v490, %v508
        %v510 = vpop.f32.mrf.mxu0
        %v511 = vadd.f32 %v492, %v510
        %512 = vdwg.mxu0
        %v513 = vmax.f32 %v466, 0.0
        %v514 = vmax.f32 %v504, 0.0
        %v515 = vmax.f32 %v468, 0.0
        %v516 = vmax.f32 %v506, 0.0
        %v517 = vmax.f32 %v471, 0.0
        %v518 = vmax.f32 %v509, 0.0
        %v519 = vmax.f32 %v473, 0.0
        %v520 = vmax.f32 %v511, 0.0
        %v521 = vmax.f32 %v405, %v513
        %v522 = vmax.f32 %v406, %v514
        %v523 = vmax.f32 %v407, %v515
        %v524 = vmax.f32 %v408, %v516
        %v525 = vmax.f32 %v409, %v517
        %v526 = vmax.f32 %v410, %v518
        %v527 = vmax.f32 %v411, %v519
        %v528 = vmax.f32 %v412, %v520
        %v529 = vpack.c.bf16 %v522, %v521
        %v530 = vpack.c.bf16 %v524, %v523
        %v531 = vpack.c.bf16 %v526, %v525
        %v532 = vpack.c.bf16 %v528, %v527
        %s533 = smul.u32 %s181, 8
        %s534 = smul.addr %s533, 4
        %s535 = scalar_lea.vmem %s170, %s534
        %vm536 = vcmask 1043456
        %vm537 = vcmask 1031172
        %vm538 = vmor %vm537, %vm536
        %539 = vst.msk [vmem:[%s535] sm:$0xff] %vm538, %v529
        %540 = vst.msk [vmem:[%s535 + $0x8] sm:$0xff] %vm538, %v530
        %541 = vst.msk [vmem:[%s535 + $0x10] sm:$0xff] %vm538, %v531
        %542 = vst.msk [vmem:[%s535 + $0x18] sm:$0xff] %vm538, %v532
      $region37: #{my_model_forward.5} parent=31 // loop_footer
        %s185 = sadd.s32 1, %s181
      $region38: #{my_model_forward.5} parent=31 // loop_footer_branch
        %180 = sbr.rel target = $region34
      $region39: #{my_model_forward.5} parent=31 // loop_exit
        _
      %p543 = scmp.lt.s32.totalorder %s14, 1
      %s544 = scalar_select %p543, %s14, 1
      %s545 = smul.addr %s544, 1016
      %s546 = smul.addr %s545, 4
      %s547 = scalar_lea.vmem %s3, %s546
      // Predicated region
      $region40: #{my_model_forward.5} parent=31 // pred_check
        %p548 = pneg %p100
      $region41: #{my_model_forward.5} parent=31 // pred_check_branch
        %550 = sbr.rel (%p548) target = $region43
      $region42: #{my_model_forward.5} parent=31 // pred_region
        _
      $region43: #{my_model_forward.5} parent=31 // pred_fallthru
        _
    $region32: #{my_model_forward.5} parent=5 // pred_fallthru
      _
    %p551 = scmp.le.s32.totalorder 2, %s9
    // Predicated region
    $region44: #{my_model_forward.5} parent=5 // pred_check
      %p552 = pneg %p551
    $region45: #{my_model_forward.5} parent=5 // pred_check_branch
      %554 = sbr.rel (%p552) target = $region47
    $region46: #{my_model_forward.5} parent=5 // pred_region
      %s555 = ssub.s32 %s9, 2
      // Predicated region
      $region48: #{my_model_forward.5} parent=46 // pred_check
        %p556 = pneg %p106
      $region49: #{my_model_forward.5} parent=46 // pred_check_branch
        %558 = sbr.rel (%p556) target = $region51
      $region50: #{my_model_forward.5} parent=46 // pred_region
        %p559 = scmp.lt.s32.totalorder %s15, 1
        %s560 = scalar_select %p559, %s15, 1
        %s561 = smul.addr %s560, 1016
        %s562 = smul.addr %s561, 4
        %s563 = scalar_lea.vmem %s3, %s562
      $region51: #{my_model_forward.5} parent=46 // pred_fallthru
        _
    $region47: #{my_model_forward.5} parent=5 // pred_fallthru
      _
  $region6: #{my_model_forward.5} parent=0 // loop_footer
    %s13 = sadd.s32 1, %s9
  $region7: #{my_model_forward.5} parent=0 // loop_footer_branch
    %8 = sbr.rel target = $region3
  $region8: #{my_model_forward.5} parent=0 // loop_exit
    _

// kernel: my_model_forward.6
$region0: #{my_model_forward.6}
  #allocation0 [shape = 'u32[]', space=smem, size = 0x4, offset = 0x4, fixed_abs, tag = 'smem constant byte address 0x4 - core index']
  #allocation1 [shape = 'u32[72,128]{1,0:T(1,128)}', space=vmem, size = 0x9000, scoped, tag = 'internal scratch']
  %s0 = inlined_call_operand.vmem [shape: bf16[2,127,32,127], index: 0, kind: input, shape index: {}]
  %s1 = inlined_call_operand.vmem [shape: bf16[32,288], index: 1, kind: input, shape index: {}]
  %s2 = inlined_call_operand.vmem [shape: f32[32,1], index: 2, kind: input, shape index: {}]
  %s3 = inlined_call_operand.vmem [shape: bf16[2,62,32,125], index: 3, kind: output, shape index: {}]
  %s4 = sld [smem:[#allocation0]]
  $region52: #{my_model_forward.6} parent=0
    _
  %s6 = ssub.s32 1, %s4
  %s7 = scalar_select 0, %s6, %s4
  loop: start=0, step=1, limit=4
  $region2: #{my_model_forward.6} parent=0 // loop_pre_header
    _
  $region3: #{my_model_forward.6} parent=0 // loop_header
    %s9 = sphi 0, %s13
    %p10 = scmp.ge.s32.totalorder %s9, 4
    %s19 = sphi 0, %s21
    %s22 = sphi 0, %s19
    %s23 = sphi 0, %s22
    %s39 = sphi 0, %s23
    %s43 = sphi 0, %s43
    %s45 = sphi 0, %s43
    %s46 = sphi 0, %s45
    %s60 = sphi 0, %s46
    %s64 = sphi 0, %s64
    %s66 = sphi 0, %s64
    %s67 = sphi 0, %s66
    %s81 = sphi 0, %s67
    %s87 = sphi 0, %s89
    %s90 = sphi 0, %s87
    %s91 = sphi 0, %s90
    %s107 = sphi 0, %s91
  $region4: #{my_model_forward.6} parent=0 // loop_header_branch
    %12 = sbr.rel (%p10) target = $region8
  $region5: #{my_model_forward.6} parent=0 // loop_body
    %s14 = ssub.s32 %s9, 1
    %s15 = ssub.s32 %s9, 2
    %s16 = sadd.s32 %s9, 1
    %s17 = ssub.s32 %s9, %s16
    %p18 = scmp.eq.s32.totalorder %s17, 0
    %s20 = sadd.s32 %s19, 1
    %s21 = scalar_select %p18, %s19, %s20
    %p24 = pneg %p18
    %p25 = scmp.eq.s32.totalorder %s9, 1
    %p26 = por %p24, %p25
    %p27 = scmp.ne.s32.totalorder %s19, %s22
    %p28 = scmp.eq.s32.totalorder %s9, 0
    %p29 = por %p27, %p28
    %p30 = scmp.ne.s32.totalorder %s19, %s22
    %p31 = scmp.eq.s32.totalorder %s14, 1
    %p32 = por %p30, %p31
    %p33 = scmp.ne.s32.totalorder %s22, %s23
    %p34 = scmp.eq.s32.totalorder %s14, 0
    %p35 = por %p33, %p34
    %p36 = scmp.ne.s32.totalorder %s22, %s23
    %p37 = scmp.eq.s32.totalorder %s15, 1
    %p38 = por %p36, %p37
    %p40 = scmp.ne.s32.totalorder %s23, %s39
    %p41 = scmp.eq.s32.totalorder %s15, 0
    %p42 = por %p40, %p41
    %s44 = sadd.s32 %s43, 1
    %p47 = scmp.eq.s32.totalorder %s9, 1
    %p48 = scmp.ne.s32.totalorder %s43, %s45
    %p49 = scmp.eq.s32.totalorder %s9, 0
    %p50 = por %p48, %p49
    %p51 = scmp.ne.s32.totalorder %s43, %s45
    %p52 = scmp.eq.s32.totalorder %s14, 1
    %p53 = por %p51, %p52
    %p54 = scmp.ne.s32.totalorder %s45, %s46
    %p55 = scmp.eq.s32.totalorder %s14, 0
    %p56 = por %p54, %p55
    %p57 = scmp.ne.s32.totalorder %s45, %s46
    %p58 = scmp.eq.s32.totalorder %s15, 1
    %p59 = por %p57, %p58
    %p61 = scmp.ne.s32.totalorder %s46, %s60
    %p62 = scmp.eq.s32.totalorder %s15, 0
    %p63 = por %p61, %p62
    %s65 = sadd.s32 %s64, 1
    %p68 = scmp.eq.s32.totalorder %s9, 1
    %p69 = scmp.ne.s32.totalorder %s64, %s66
    %p70 = scmp.eq.s32.totalorder %s9, 0
    %p71 = por %p69, %p70
    %p72 = scmp.ne.s32.totalorder %s64, %s66
    %p73 = scmp.eq.s32.totalorder %s14, 1
    %p74 = por %p72, %p73
    %p75 = scmp.ne.s32.totalorder %s66, %s67
    %p76 = scmp.eq.s32.totalorder %s14, 0
    %p77 = por %p75, %p76
    %p78 = scmp.ne.s32.totalorder %s66, %s67
    %p79 = scmp.eq.s32.totalorder %s15, 1
    %p80 = por %p78, %p79
    %p82 = scmp.ne.s32.totalorder %s67, %s81
    %p83 = scmp.eq.s32.totalorder %s15, 0
    %p84 = por %p82, %p83
    %s85 = ssub.s32 %s9, %s16
    %p86 = scmp.eq.s32.totalorder %s85, 0
    %s88 = sadd.s32 %s87, 1
    %s89 = scalar_select %p86, %s87, %s88
    %p92 = pneg %p86
    %p93 = scmp.eq.s32.totalorder %s9, 1
    %p94 = por %p92, %p93
    %p95 = scmp.ne.s32.totalorder %s87, %s90
    %p96 = scmp.eq.s32.totalorder %s9, 0
    %p97 = por %p95, %p96
    %p98 = scmp.ne.s32.totalorder %s87, %s90
    %p99 = scmp.eq.s32.totalorder %s14, 1
    %p100 = por %p98, %p99
    %p101 = scmp.ne.s32.totalorder %s90, %s91
    %p102 = scmp.eq.s32.totalorder %s14, 0
    %p103 = por %p101, %p102
    %p104 = scmp.ne.s32.totalorder %s90, %s91
    %p105 = scmp.eq.s32.totalorder %s15, 1
    %p106 = por %p104, %p105
    %p108 = scmp.ne.s32.totalorder %s91, %s107
    %p109 = scmp.eq.s32.totalorder %s15, 0
    %p110 = por %p108, %p109
    %p111 = scmp.le.s32.totalorder 1, %s9
    %p112 = scmp.lt.s32.totalorder %s9, 3
    %p113 = pnand %p111, %p112
    %p114 = pneg %p113
    // Predicated region
    $region9: #{my_model_forward.6} parent=5 // pred_check
      _
    $region10: #{my_model_forward.6} parent=5 // pred_check_branch
      %116 = sbr.rel (%p113) target = $region12
    $region11: #{my_model_forward.6} parent=5 // pred_region
      %s117 = ssub.s32 %s9, 1
      // Predicated region
      $region13: #{my_model_forward.6} parent=11 // pred_check
        %p118 = pneg %p56
      $region14: #{my_model_forward.6} parent=11 // pred_check_branch
        %120 = sbr.rel (%p118) target = $region16
      $region15: #{my_model_forward.6} parent=11 // pred_region
        _
      $region16: #{my_model_forward.6} parent=11 // pred_fallthru
        _
      // Predicated region
      $region17: #{my_model_forward.6} parent=11 // pred_check
        %p121 = pneg %p77
      $region18: #{my_model_forward.6} parent=11 // pred_check_branch
        %123 = sbr.rel (%p121) target = $region20
      $region19: #{my_model_forward.6} parent=11 // pred_region
        _
      $region20: #{my_model_forward.6} parent=11 // pred_fallthru
        _
    $region12: #{my_model_forward.6} parent=5 // pred_fallthru
      _
    %p124 = scmp.lt.s32.totalorder %s9, 2
    // Predicated region
    $region21: #{my_model_forward.6} parent=5 // pred_check
      %p125 = pneg %p124
    $region22: #{my_model_forward.6} parent=5 // pred_check_branch
      %127 = sbr.rel (%p125) target = $region24
    $region23: #{my_model_forward.6} parent=5 // pred_region
      // Predicated region
      $region25: #{my_model_forward.6} parent=23 // pred_check
        %p128 = pneg %p29
      $region26: #{my_model_forward.6} parent=23 // pred_check_branch
        %130 = sbr.rel (%p128) target = $region28
      $region27: #{my_model_forward.6} parent=23 // pred_region
        %p131 = scmp.lt.s32.totalorder %s9, 1
        %s132 = scalar_select %p131, %s9, 1
        %s133 = smul.addr %s132, 508
        %s134 = smul.addr %s133, 4
        %s135 = scalar_lea.vmem %s0, %s134
      $region28: #{my_model_forward.6} parent=23 // pred_fallthru
        _
    $region24: #{my_model_forward.6} parent=5 // pred_fallthru
      _
    %p136 = scmp.le.s32.totalorder 1, %s9
    %p137 = scmp.lt.s32.totalorder %s9, 3
    %p138 = pnand %p136, %p137
    %p139 = pneg %p138
    // Predicated region
    $region29: #{my_model_forward.6} parent=5 // pred_check
      _
    $region30: #{my_model_forward.6} parent=5 // pred_check_branch
      %141 = sbr.rel (%p138) target = $region32
    $region31: #{my_model_forward.6} parent=5 // pred_region
      %s142 = ssub.s32 %s9, 1
      %p143 = scmp.lt.s32.totalorder %s14, 1
      %s144 = scalar_select %p143, %s14, 1
      %s145 = smul.addr %s144, 508
      %s146 = smul.addr %s145, 4
      %s147 = scalar_lea.vmem %s0, %s146
      %p148 = pneg %p35
      %p149 = pneg %p32
      %p150 = pneg %p56
      %p151 = pneg %p53
      %p152 = pneg %p77
      %p153 = pneg %p74
      %p154 = pneg %p103
      %p155 = pneg %p100
      %p156 = scmp.lt.s32.totalorder %s14, 1
      %s157 = scalar_select %p156, %s14, 1
      %s158 = smul.addr %s157, 248
      %s159 = smul.addr %s158, 4
      %s160 = scalar_lea.vmem %s3, %s159
      %p161 = scmp.lt.s32.totalorder %s14, 1
      %s162 = scalar_select %p161, %s14, 1
      %s163 = smul.addr %s162, 508
      %s164 = smul.addr %s163, 4
      %s165 = scalar_lea.vmem %s0, %s164
      %p166 = scmp.lt.s32.totalorder %s14, 1
      %s167 = scalar_select %p166, %s14, 1
      %s168 = smul.addr %s167, 248
      %s169 = smul.addr %s168, 4
      %s170 = scalar_lea.vmem %s3, %s169
      %v172 = vld [vmem:[%s1] sm:$0xff]
      %v173 = vld [vmem:[%s1 + $0x8] sm:$0xf]
      %v174 = vld [vmem:[%s1 + $0xc] sm:$0xff]
      %v175 = vld [vmem:[%s1 + $0x14] sm:$0xf]
      %v176 = vld [vmem:[%s1 + $0x18] sm:$0xff]
      %v177 = vld [vmem:[%s1 + $0x20] sm:$0xf]
      %v178 = vld [vmem:[%s1 + $0x24] sm:$0xff]
      %v179 = vld [vmem:[%s1 + $0x2c] sm:$0xf]
      %v180 = vld [vmem:[%s2] sm:$0xff]
      %v181 = vld [vmem:[%s2 + $0x8] sm:$0xff]
      %v182 = vld [vmem:[%s2 + $0x10] sm:$0xff]
      %v183 = vld [vmem:[%s2 + $0x18] sm:$0xff]
      loop: start=0, step=1, limit=62
      $region33: #{my_model_forward.6} parent=31 // loop_pre_header
        _
      $region34: #{my_model_forward.6} parent=31 // loop_header
        %s185 = sphi 0, %s189
        %p186 = scmp.ge.s32.totalorder %s185, 62
      $region35: #{my_model_forward.6} parent=31 // loop_header_branch
        %188 = sbr.rel (%p186) target = $region39
      $region36: #{my_model_forward.6} parent=31 // loop_body
        %s190 = smul.u32 %s185, 2
        %s191 = smul.u32 %s190, 4
        %s192 = smul.addr %s191, 4
        %s193 = scalar_lea.vmem %s165, %s192
        %v194 = vld [vmem:[%s193] sm:$0xf]
        %v195 = vld [vmem:[%s193 + $0x4] sm:$0xf]
        %v196 = vld [vmem:[%s193 + $0x8] sm:$0xf]
        %v197 = vld [vmem:[%s193 + $0xc] sm:$0xf]
        %s198 = sadd.s32 %s190, 1
        %s199 = smul.u32 %s198, 4
        %s200 = smul.addr %s199, 4
        %s201 = scalar_lea.vmem %s165, %s200
        %v202 = vld [vmem:[%s201] sm:$0xf]
        %v203 = vld [vmem:[%s201 + $0x4] sm:$0xf]
        %v204 = vld [vmem:[%s201 + $0x8] sm:$0xf]
        %v205 = vld [vmem:[%s201 + $0xc] sm:$0xf]
        %s206 = sadd.s32 %s190, 2
        %s207 = smul.u32 %s206, 4
        %s208 = smul.addr %s207, 4
        %s209 = scalar_lea.vmem %s165, %s208
        %v210 = vld [vmem:[%s209] sm:$0xf]
        %v211 = vld [vmem:[%s209 + $0x4] sm:$0xf]
        %v212 = vld [vmem:[%s209 + $0x8] sm:$0xf]
        %v213 = vld [vmem:[%s209 + $0xc] sm:$0xf]
        %s214 = sadd.s32 %s190, 3
        %s215 = smul.u32 %s214, 4
        %s216 = smul.addr %s215, 4
        %s217 = scalar_lea.vmem %s165, %s216
        %v218 = vld [vmem:[%s217] sm:$0xf]
        %v219 = vld [vmem:[%s217 + $0x4] sm:$0xf]
        %v220 = vld [vmem:[%s217 + $0x8] sm:$0xf]
        %v221 = vld [vmem:[%s217 + $0xc] sm:$0xf]
        %v226 = vunpack.c.l.b16 %v194
        %v227 = vunpack.c.l.b16 %v195
        %v228 = vunpack.c.l.b16 %v196
        %v229 = vunpack.c.l.b16 %v197
        %v230 = vpack.c.b16 %v227, %v226
        %v231 = vpack.c.b16 %v229, %v228
        %234 = vrot.lane.b32.xlu0 %v230, 127
        %v235 = vpop.permute.xlu0 %234
        %236 = vrot.lane.b32.xlu0 %v231, 127
        %v237 = vpop.permute.xlu0 %236
        %240 = vrot.lane.b32.xlu0 %v230, 126
        %v241 = vpop.permute.xlu0 %240
        %242 = vrot.lane.b32.xlu0 %v231, 126
        %v243 = vpop.permute.xlu0 %242
        %v250 = vunpack.c.l.b16 %v202
        %v251 = vunpack.c.l.b16 %v203
        %v252 = vunpack.c.l.b16 %v204
        %v253 = vunpack.c.l.b16 %v205
        %v254 = vpack.c.b16 %v251, %v250
        %v255 = vpack.c.b16 %v253, %v252
        %258 = vrot.lane.b32.xlu0 %v254, 127
        %v259 = vpop.permute.xlu0 %258
        %260 = vrot.lane.b32.xlu0 %v255, 127
        %v261 = vpop.permute.xlu0 %260
        %264 = vrot.lane.b32.xlu0 %v254, 126
        %v265 = vpop.permute.xlu0 %264
        %266 = vrot.lane.b32.xlu0 %v255, 126
        %v267 = vpop.permute.xlu0 %266
        %v274 = vunpack.c.l.b16 %v210
        %v275 = vunpack.c.l.b16 %v211
        %v276 = vunpack.c.l.b16 %v212
        %v277 = vunpack.c.l.b16 %v213
        %v278 = vpack.c.b16 %v275, %v274
        %v279 = vpack.c.b16 %v277, %v276
        %282 = vrot.lane.b32.xlu0 %v278, 127
        %v283 = vpop.permute.xlu0 %282
        %284 = vrot.lane.b32.xlu0 %v279, 127
        %v285 = vpop.permute.xlu0 %284
        %288 = vrot.lane.b32.xlu0 %v278, 126
        %v289 = vpop.permute.xlu0 %288
        %290 = vrot.lane.b32.xlu0 %v279, 126
        %v291 = vpop.permute.xlu0 %290
        %295 = vset.pattern.permute.xlu0 0
        %296 = vperm.xlu0 %295, %v180
        %v297 = vpop.permute.xlu0 %296
        %300 = vset.pattern.permute.xlu0 0
        %301 = vperm.xlu0 %300, %v181
        %v302 = vpop.permute.xlu0 %301
        %305 = vset.pattern.permute.xlu0 0
        %306 = vperm.xlu0 %305, %v182
        %v307 = vpop.permute.xlu0 %306
        %310 = vset.pattern.permute.xlu0 0
        %311 = vperm.xlu0 %310, %v183
        %v312 = vpop.permute.xlu0 %311
        %v322 = vunpack.c.l.b16 %v172
        %v323 = vunpack.c.h.b16 %v172
        %v324 = vunpack.c.l.b16 %v173
        %v325 = vunpack.c.l.b16 %v174
        %v326 = vunpack.c.h.b16 %v174
        %v327 = vunpack.c.l.b16 %v175
        %v328 = vunpack.c.l.b16 %v176
        %v329 = vunpack.c.h.b16 %v176
        %v330 = vunpack.c.l.b16 %v177
        %v331 = vunpack.c.l.b16 %v178
        %v332 = vunpack.c.h.b16 %v178
        %v333 = vunpack.c.l.b16 %v179
        %v334 = vpack.c.b16 %v325, %v322
        %v335 = vpack.c.b16 %v326, %v323
        %v336 = vpack.c.b16 %v327, %v324
        %v337 = vpack.c.b16 %v331, %v328
        %v338 = vpack.c.b16 %v332, %v329
        %v339 = vpack.c.b16 %v333, %v330
        %vm344 = vcmask 261120
        %v346 = vsel %vm344, %v336, 0
        %v349 = vsel %vm344, %v339, 0
        %351 = vmatpush.bf16.msra.mxu0 %v255
        %352 = vmatpush.bf16.msra.mxu0 %v254
        %353 = vmatpush.bf16.msra.mxu0 %v243
        %354 = vmatpush.bf16.msra.mxu0 %v241
        %355 = vmatpush.bf16.msra.mxu0 %v237
        %356 = vmatpush.bf16.msra.mxu0 %v235
        %357 = vmatpush.bf16.msra.mxu0 %v231
        %358 = vmatpush.bf16.msra.mxu0 %v230
        %359 = vmatmul.bf16.gmra.mxu0 %v334
        %v360 = vpop.f32.mrf.mxu0
        %v361 = vadd.f32 %v297, %v360
        %v362 = vpop.f32.mrf.mxu0
        %v363 = vadd.f32 %v302, %v362
        %364 = vmatmul.bf16.gmra.mxu0 %v337
        %v365 = vpop.f32.mrf.mxu0
        %v366 = vadd.f32 %v307, %v365
        %v367 = vpop.f32.mrf.mxu0
        %v368 = vadd.f32 %v312, %v367
        %369 = vdwg.mxu0
        %370 = vmatpush.bf16.msra.mxu0 %v285
        %371 = vmatpush.bf16.msra.mxu0 %v283
        %372 = vmatpush.bf16.msra.mxu0 %v279
        %373 = vmatpush.bf16.msra.mxu0 %v278
        %374 = vmatpush.bf16.msra.mxu0 %v267
        %375 = vmatpush.bf16.msra.mxu0 %v265
        %376 = vmatpush.bf16.msra.mxu0 %v261
        %377 = vmatpush.bf16.msra.mxu0 %v259
        %378 = vmatmul.bf16.gmra.mxu0 %v335
        %v379 = vpop.f32.mrf.mxu0
        %v380 = vadd.f32 %v361, %v379
        %v381 = vpop.f32.mrf.mxu0
        %v382 = vadd.f32 %v363, %v381
        %383 = vmatmul.bf16.gmra.mxu0 %v338
        %v384 = vpop.f32.mrf.mxu0
        %v385 = vadd.f32 %v366, %v384
        %v386 = vpop.f32.mrf.mxu0
        %v387 = vadd.f32 %v368, %v386
        %388 = vdwg.mxu0
        %389 = vmatpush.bf16.msra.mxu0 0
        %390 = vmatpush.bf16.msra.mxu0 0
        %391 = vmatpush.bf16.msra.mxu0 0
        %392 = vmatpush.bf16.msra.mxu0 0
        %393 = vmatpush.bf16.msra.mxu0 0
        %394 = vmatpush.bf16.msra.mxu0 0
        %395 = vmatpush.bf16.msra.mxu0 %v291
        %396 = vmatpush.bf16.msra.mxu0 %v289
        %397 = vmatmul.bf16.gmra.mxu0 %v346
        %v398 = vpop.f32.mrf.mxu0
        %v399 = vadd.f32 %v380, %v398
        %v400 = vpop.f32.mrf.mxu0
        %v401 = vadd.f32 %v382, %v400
        %402 = vmatmul.bf16.gmra.mxu0 %v349
        %v403 = vpop.f32.mrf.mxu0
        %v404 = vadd.f32 %v385, %v403
        %v405 = vpop.f32.mrf.mxu0
        %v406 = vadd.f32 %v387, %v405
        %407 = vdwg.mxu0
        %v408 = vmax.f32 %v399, 0.0
        %v409 = vmax.f32 %v401, 0.0
        %v410 = vmax.f32 %v404, 0.0
        %v411 = vmax.f32 %v406, 0.0
        %v416 = vunpack.c.l.b16 %v218
        %v417 = vunpack.c.l.b16 %v219
        %v418 = vunpack.c.l.b16 %v220
        %v419 = vunpack.c.l.b16 %v221
        %v420 = vpack.c.b16 %v417, %v416
        %v421 = vpack.c.b16 %v419, %v418
        %424 = vrot.lane.b32.xlu0 %v420, 127
        %v425 = vpop.permute.xlu0 %424
        %426 = vrot.lane.b32.xlu0 %v421, 127
        %v427 = vpop.permute.xlu0 %426
        %430 = vrot.lane.b32.xlu0 %v420, 126
        %v431 = vpop.permute.xlu0 %430
        %432 = vrot.lane.b32.xlu0 %v421, 126
        %v433 = vpop.permute.xlu0 %432
        %436 = vmatpush.bf16.msra.mxu0 %v279
        %437 = vmatpush.bf16.msra.mxu0 %v278
        %438 = vmatpush.bf16.msra.mxu0 %v267
        %439 = vmatpush.bf16.msra.mxu0 %v265
        %440 = vmatpush.bf16.msra.mxu0 %v261
        %441 = vmatpush.bf16.msra.mxu0 %v259
        %442 = vmatpush.bf16.msra.mxu0 %v255
        %443 = vmatpush.bf16.msra.mxu0 %v254
        %444 = vmatmul.bf16.gmra.mxu0 %v334
        %v445 = vpop.f32.mrf.mxu0
        %v446 = vadd.f32 %v297, %v445
        %v447 = vpop.f32.mrf.mxu0
        %v448 = vadd.f32 %v302, %v447
        %449 = vmatmul.bf16.gmra.mxu0 %v337
        %v450 = vpop.f32.mrf.mxu0
        %v451 = vadd.f32 %v307, %v450
        %v452 = vpop.f32.mrf.mxu0
        %v453 = vadd.f32 %v312, %v452
        %454 = vdwg.mxu0
        %455 = vmatpush.bf16.msra.mxu0 %v427
        %456 = vmatpush.bf16.msra.mxu0 %v425
        %457 = vmatpush.bf16.msra.mxu0 %v421
        %458 = vmatpush.bf16.msra.mxu0 %v420
        %459 = vmatpush.bf16.msra.mxu0 %v291
        %460 = vmatpush.bf16.msra.mxu0 %v289
        %461 = vmatpush.bf16.msra.mxu0 %v285
        %462 = vmatpush.bf16.msra.mxu0 %v283
        %463 = vmatmul.bf16.gmra.mxu0 %v335
        %v464 = vpop.f32.mrf.mxu0
        %v465 = vadd.f32 %v446, %v464
        %v466 = vpop.f32.mrf.mxu0
        %v467 = vadd.f32 %v448, %v466
        %468 = vmatmul.bf16.gmra.mxu0 %v338
        %v469 = vpop.f32.mrf.mxu0
        %v470 = vadd.f32 %v451, %v469
        %v471 = vpop.f32.mrf.mxu0
        %v472 = vadd.f32 %v453, %v471
        %473 = vdwg.mxu0
        %474 = vmatpush.bf16.msra.mxu0 0
        %475 = vmatpush.bf16.msra.mxu0 0
        %476 = vmatpush.bf16.msra.mxu0 0
        %477 = vmatpush.bf16.msra.mxu0 0
        %478 = vmatpush.bf16.msra.mxu0 0
        %479 = vmatpush.bf16.msra.mxu0 0
        %480 = vmatpush.bf16.msra.mxu0 %v433
        %481 = vmatpush.bf16.msra.mxu0 %v431
        %482 = vmatmul.bf16.gmra.mxu0 %v346
        %v483 = vpop.f32.mrf.mxu0
        %v484 = vadd.f32 %v465, %v483
        %v485 = vpop.f32.mrf.mxu0
        %v486 = vadd.f32 %v467, %v485
        %487 = vmatmul.bf16.gmra.mxu0 %v349
        %v488 = vpop.f32.mrf.mxu0
        %v489 = vadd.f32 %v470, %v488
        %v490 = vpop.f32.mrf.mxu0
        %v491 = vadd.f32 %v472, %v490
        %492 = vdwg.mxu0
        %v493 = vmax.f32 %v484, 0.0
        %v494 = vmax.f32 %v486, 0.0
        %v495 = vmax.f32 %v489, 0.0
        %v496 = vmax.f32 %v491, 0.0
        %v497 = vmax.f32 %v408, %v493
        %v498 = vmax.f32 %v409, %v494
        %v499 = vmax.f32 %v410, %v495
        %v500 = vmax.f32 %v411, %v496
        %v501 = vpack.c.bf16 %v497, %v497
        %v502 = vpack.c.bf16 %v498, %v498
        %v503 = vpack.c.bf16 %v499, %v499
        %v504 = vpack.c.bf16 %v500, %v500
        %s505 = smul.u32 %s185, 4
        %s506 = smul.addr %s505, 4
        %s507 = scalar_lea.vmem %s170, %s506
        %vm508 = vcmask 1018880
        %509 = vst.msk [vmem:[%s507] sm:$0xf] %vm508, %v501
        %510 = vst.msk [vmem:[%s507 + $0x4] sm:$0xf] %vm508, %v502
        %511 = vst.msk [vmem:[%s507 + $0x8] sm:$0xf] %vm508, %v503
        %512 = vst.msk [vmem:[%s507 + $0xc] sm:$0xf] %vm508, %v504
      $region37: #{my_model_forward.6} parent=31 // loop_footer
        %s189 = sadd.s32 1, %s185
      $region38: #{my_model_forward.6} parent=31 // loop_footer_branch
        %184 = sbr.rel target = $region34
      $region39: #{my_model_forward.6} parent=31 // loop_exit
        _
      %p513 = scmp.lt.s32.totalorder %s14, 1
      %s514 = scalar_select %p513, %s14, 1
      %s515 = smul.addr %s514, 248
      %s516 = smul.addr %s515, 4
      %s517 = scalar_lea.vmem %s3, %s516
      // Predicated region
      $region40: #{my_model_forward.6} parent=31 // pred_check
        %p518 = pneg %p100
      $region41: #{my_model_forward.6} parent=31 // pred_check_branch
        %520 = sbr.rel (%p518) target = $region43
      $region42: #{my_model_forward.6} parent=31 // pred_region
        _
      $region43: #{my_model_forward.6} parent=31 // pred_fallthru
        _
    $region32: #{my_model_forward.6} parent=5 // pred_fallthru
      _
    %p521 = scmp.le.s32.totalorder 2, %s9
    // Predicated region
    $region44: #{my_model_forward.6} parent=5 // pred_check
      %p522 = pneg %p521
    $region45: #{my_model_forward.6} parent=5 // pred_check_branch
      %524 = sbr.rel (%p522) target = $region47
    $region46: #{my_model_forward.6} parent=5 // pred_region
      %s525 = ssub.s32 %s9, 2
      // Predicated region
      $region48: #{my_model_forward.6} parent=46 // pred_check
        %p526 = pneg %p106
      $region49: #{my_model_forward.6} parent=46 // pred_check_branch
        %528 = sbr.rel (%p526) target = $region51
      $region50: #{my_model_forward.6} parent=46 // pred_region
        %p529 = scmp.lt.s32.totalorder %s15, 1
        %s530 = scalar_select %p529, %s15, 1
        %s531 = smul.addr %s530, 248
        %s532 = smul.addr %s531, 4
        %s533 = scalar_lea.vmem %s3, %s532
      $region51: #{my_model_forward.6} parent=46 // pred_fallthru
        _
    $region47: #{my_model_forward.6} parent=5 // pred_fallthru
      _
  $region6: #{my_model_forward.6} parent=0 // loop_footer
    %s13 = sadd.s32 1, %s9
  $region7: #{my_model_forward.6} parent=0 // loop_footer_branch
    %8 = sbr.rel target = $region3
  $region8: #{my_model_forward.6} parent=0 // loop_exit
    _

// kernel: my_model_forward.7
$region0: #{my_model_forward.7}
  #allocation0 [shape = 'u32[]', space=smem, size = 0x4, offset = 0x4, fixed_abs, tag = 'smem constant byte address 0x4 - core index']
  #allocation1 [shape = 'u32[72,128]{1,0:T(1,128)}', space=vmem, size = 0x9000, scoped, tag = 'internal scratch']
  %s0 = inlined_call_operand.vmem [shape: bf16[2,62,32,62], index: 0, kind: input, shape index: {}]
  %s1 = inlined_call_operand.vmem [shape: bf16[64,288], index: 1, kind: input, shape index: {}]
  %s2 = inlined_call_operand.vmem [shape: f32[64,1], index: 2, kind: input, shape index: {}]
  %s3 = inlined_call_operand.vmem [shape: bf16[2,30,64,60], index: 3, kind: output, shape index: {}]
  %s4 = sld [smem:[#allocation0]]
  $region52: #{my_model_forward.7} parent=0
    _
  %s6 = ssub.s32 1, %s4
  %s7 = scalar_select 0, %s6, %s4
  loop: start=0, step=1, limit=4
  $region2: #{my_model_forward.7} parent=0 // loop_pre_header
    _
  $region3: #{my_model_forward.7} parent=0 // loop_header
    %s9 = sphi 0, %s13
    %p10 = scmp.ge.s32.totalorder %s9, 4
    %s19 = sphi 0, %s21
    %s22 = sphi 0, %s19
    %s23 = sphi 0, %s22
    %s39 = sphi 0, %s23
    %s43 = sphi 0, %s43
    %s45 = sphi 0, %s43
    %s46 = sphi 0, %s45
    %s60 = sphi 0, %s46
    %s64 = sphi 0, %s64
    %s66 = sphi 0, %s64
    %s67 = sphi 0, %s66
    %s81 = sphi 0, %s67
    %s87 = sphi 0, %s89
    %s90 = sphi 0, %s87
    %s91 = sphi 0, %s90
    %s107 = sphi 0, %s91
  $region4: #{my_model_forward.7} parent=0 // loop_header_branch
    %12 = sbr.rel (%p10) target = $region8
  $region5: #{my_model_forward.7} parent=0 // loop_body
    %s14 = ssub.s32 %s9, 1
    %s15 = ssub.s32 %s9, 2
    %s16 = sadd.s32 %s9, 1
    %s17 = ssub.s32 %s9, %s16
    %p18 = scmp.eq.s32.totalorder %s17, 0
    %s20 = sadd.s32 %s19, 1
    %s21 = scalar_select %p18, %s19, %s20
    %p24 = pneg %p18
    %p25 = scmp.eq.s32.totalorder %s9, 1
    %p26 = por %p24, %p25
    %p27 = scmp.ne.s32.totalorder %s19, %s22
    %p28 = scmp.eq.s32.totalorder %s9, 0
    %p29 = por %p27, %p28
    %p30 = scmp.ne.s32.totalorder %s19, %s22
    %p31 = scmp.eq.s32.totalorder %s14, 1
    %p32 = por %p30, %p31
    %p33 = scmp.ne.s32.totalorder %s22, %s23
    %p34 = scmp.eq.s32.totalorder %s14, 0
    %p35 = por %p33, %p34
    %p36 = scmp.ne.s32.totalorder %s22, %s23
    %p37 = scmp.eq.s32.totalorder %s15, 1
    %p38 = por %p36, %p37
    %p40 = scmp.ne.s32.totalorder %s23, %s39
    %p41 = scmp.eq.s32.totalorder %s15, 0
    %p42 = por %p40, %p41
    %s44 = sadd.s32 %s43, 1
    %p47 = scmp.eq.s32.totalorder %s9, 1
    %p48 = scmp.ne.s32.totalorder %s43, %s45
    %p49 = scmp.eq.s32.totalorder %s9, 0
    %p50 = por %p48, %p49
    %p51 = scmp.ne.s32.totalorder %s43, %s45
    %p52 = scmp.eq.s32.totalorder %s14, 1
    %p53 = por %p51, %p52
    %p54 = scmp.ne.s32.totalorder %s45, %s46
    %p55 = scmp.eq.s32.totalorder %s14, 0
    %p56 = por %p54, %p55
    %p57 = scmp.ne.s32.totalorder %s45, %s46
    %p58 = scmp.eq.s32.totalorder %s15, 1
    %p59 = por %p57, %p58
    %p61 = scmp.ne.s32.totalorder %s46, %s60
    %p62 = scmp.eq.s32.totalorder %s15, 0
    %p63 = por %p61, %p62
    %s65 = sadd.s32 %s64, 1
    %p68 = scmp.eq.s32.totalorder %s9, 1
    %p69 = scmp.ne.s32.totalorder %s64, %s66
    %p70 = scmp.eq.s32.totalorder %s9, 0
    %p71 = por %p69, %p70
    %p72 = scmp.ne.s32.totalorder %s64, %s66
    %p73 = scmp.eq.s32.totalorder %s14, 1
    %p74 = por %p72, %p73
    %p75 = scmp.ne.s32.totalorder %s66, %s67
    %p76 = scmp.eq.s32.totalorder %s14, 0
    %p77 = por %p75, %p76
    %p78 = scmp.ne.s32.totalorder %s66, %s67
    %p79 = scmp.eq.s32.totalorder %s15, 1
    %p80 = por %p78, %p79
    %p82 = scmp.ne.s32.totalorder %s67, %s81
    %p83 = scmp.eq.s32.totalorder %s15, 0
    %p84 = por %p82, %p83
    %s85 = ssub.s32 %s9, %s16
    %p86 = scmp.eq.s32.totalorder %s85, 0
    %s88 = sadd.s32 %s87, 1
    %s89 = scalar_select %p86, %s87, %s88
    %p92 = pneg %p86
    %p93 = scmp.eq.s32.totalorder %s9, 1
    %p94 = por %p92, %p93
    %p95 = scmp.ne.s32.totalorder %s87, %s90
    %p96 = scmp.eq.s32.totalorder %s9, 0
    %p97 = por %p95, %p96
    %p98 = scmp.ne.s32.totalorder %s87, %s90
    %p99 = scmp.eq.s32.totalorder %s14, 1
    %p100 = por %p98, %p99
    %p101 = scmp.ne.s32.totalorder %s90, %s91
    %p102 = scmp.eq.s32.totalorder %s14, 0
    %p103 = por %p101, %p102
    %p104 = scmp.ne.s32.totalorder %s90, %s91
    %p105 = scmp.eq.s32.totalorder %s15, 1
    %p106 = por %p104, %p105
    %p108 = scmp.ne.s32.totalorder %s91, %s107
    %p109 = scmp.eq.s32.totalorder %s15, 0
    %p110 = por %p108, %p109
    %p111 = scmp.le.s32.totalorder 1, %s9
    %p112 = scmp.lt.s32.totalorder %s9, 3
    %p113 = pnand %p111, %p112
    %p114 = pneg %p113
    // Predicated region
    $region9: #{my_model_forward.7} parent=5 // pred_check
      _
    $region10: #{my_model_forward.7} parent=5 // pred_check_branch
      %116 = sbr.rel (%p113) target = $region12
    $region11: #{my_model_forward.7} parent=5 // pred_region
      %s117 = ssub.s32 %s9, 1
      // Predicated region
      $region13: #{my_model_forward.7} parent=11 // pred_check
        %p118 = pneg %p56
      $region14: #{my_model_forward.7} parent=11 // pred_check_branch
        %120 = sbr.rel (%p118) target = $region16
      $region15: #{my_model_forward.7} parent=11 // pred_region
        _
      $region16: #{my_model_forward.7} parent=11 // pred_fallthru
        _
      // Predicated region
      $region17: #{my_model_forward.7} parent=11 // pred_check
        %p121 = pneg %p77
      $region18: #{my_model_forward.7} parent=11 // pred_check_branch
        %123 = sbr.rel (%p121) target = $region20
      $region19: #{my_model_forward.7} parent=11 // pred_region
        _
      $region20: #{my_model_forward.7} parent=11 // pred_fallthru
        _
    $region12: #{my_model_forward.7} parent=5 // pred_fallthru
      _
    %p124 = scmp.lt.s32.totalorder %s9, 2
    // Predicated region
    $region21: #{my_model_forward.7} parent=5 // pred_check
      %p125 = pneg %p124
    $region22: #{my_model_forward.7} parent=5 // pred_check_branch
      %127 = sbr.rel (%p125) target = $region24
    $region23: #{my_model_forward.7} parent=5 // pred_region
      // Predicated region
      $region25: #{my_model_forward.7} parent=23 // pred_check
        %p128 = pneg %p29
      $region26: #{my_model_forward.7} parent=23 // pred_check_branch
        %130 = sbr.rel (%p128) target = $region28
      $region27: #{my_model_forward.7} parent=23 // pred_region
        %p131 = scmp.lt.s32.totalorder %s9, 1
        %s132 = scalar_select %p131, %s9, 1
        %s133 = smul.addr %s132, 248
        %s134 = smul.addr %s133, 4
        %s135 = scalar_lea.vmem %s0, %s134
      $region28: #{my_model_forward.7} parent=23 // pred_fallthru
        _
    $region24: #{my_model_forward.7} parent=5 // pred_fallthru
      _
    %p136 = scmp.le.s32.totalorder 1, %s9
    %p137 = scmp.lt.s32.totalorder %s9, 3
    %p138 = pnand %p136, %p137
    %p139 = pneg %p138
    // Predicated region
    $region29: #{my_model_forward.7} parent=5 // pred_check
      _
    $region30: #{my_model_forward.7} parent=5 // pred_check_branch
      %141 = sbr.rel (%p138) target = $region32
    $region31: #{my_model_forward.7} parent=5 // pred_region
      %s142 = ssub.s32 %s9, 1
      %p143 = scmp.lt.s32.totalorder %s14, 1
      %s144 = scalar_select %p143, %s14, 1
      %s145 = smul.addr %s144, 248
      %s146 = smul.addr %s145, 4
      %s147 = scalar_lea.vmem %s0, %s146
      %p148 = pneg %p35
      %p149 = pneg %p32
      %p150 = pneg %p56
      %p151 = pneg %p53
      %p152 = pneg %p77
      %p153 = pneg %p74
      %p154 = pneg %p103
      %p155 = pneg %p100
      %p156 = scmp.lt.s32.totalorder %s14, 1
      %s157 = scalar_select %p156, %s14, 1
      %s158 = smul.addr %s157, 240
      %s159 = smul.addr %s158, 4
      %s160 = scalar_lea.vmem %s3, %s159
      %p161 = scmp.lt.s32.totalorder %s14, 1
      %s162 = scalar_select %p161, %s14, 1
      %s163 = smul.addr %s162, 248
      %s164 = smul.addr %s163, 4
      %s165 = scalar_lea.vmem %s0, %s164
      %p166 = scmp.lt.s32.totalorder %s14, 1
      %s167 = scalar_select %p166, %s14, 1
      %s168 = smul.addr %s167, 240
      %s169 = smul.addr %s168, 4
      %s170 = scalar_lea.vmem %s3, %s169
      %v172 = vld [vmem:[%s1] sm:$0xff]
      %v173 = vld [vmem:[%s1 + $0x8] sm:$0xf]
      %v174 = vld [vmem:[%s1 + $0xc] sm:$0xff]
      %v175 = vld [vmem:[%s1 + $0x14] sm:$0xf]
      %v176 = vld [vmem:[%s1 + $0x18] sm:$0xff]
      %v177 = vld [vmem:[%s1 + $0x20] sm:$0xf]
      %v178 = vld [vmem:[%s1 + $0x24] sm:$0xff]
      %v179 = vld [vmem:[%s1 + $0x2c] sm:$0xf]
      %v180 = vld [vmem:[%s1 + $0x30] sm:$0xff]
      %v181 = vld [vmem:[%s1 + $0x38] sm:$0xf]
      %v182 = vld [vmem:[%s1 + $0x3c] sm:$0xff]
      %v183 = vld [vmem:[%s1 + $0x44] sm:$0xf]
      %v184 = vld [vmem:[%s1 + $0x48] sm:$0xff]
      %v185 = vld [vmem:[%s1 + $0x50] sm:$0xf]
      %v186 = vld [vmem:[%s1 + $0x54] sm:$0xff]
      %v187 = vld [vmem:[%s1 + $0x5c] sm:$0xf]
      %v188 = vld [vmem:[%s2] sm:$0xff]
      %v189 = vld [vmem:[%s2 + $0x8] sm:$0xff]
      %v190 = vld [vmem:[%s2 + $0x10] sm:$0xff]
      %v191 = vld [vmem:[%s2 + $0x18] sm:$0xff]
      %v192 = vld [vmem:[%s2 + $0x20] sm:$0xff]
      %v193 = vld [vmem:[%s2 + $0x28] sm:$0xff]
      %v194 = vld [vmem:[%s2 + $0x30] sm:$0xff]
      %v195 = vld [vmem:[%s2 + $0x38] sm:$0xff]
      loop: start=0, step=1, limit=30
      $region33: #{my_model_forward.7} parent=31 // loop_pre_header
        _
      $region34: #{my_model_forward.7} parent=31 // loop_header
        %s197 = sphi 0, %s201
        %p198 = scmp.ge.s32.totalorder %s197, 30
      $region35: #{my_model_forward.7} parent=31 // loop_header_branch
        %200 = sbr.rel (%p198) target = $region39
      $region36: #{my_model_forward.7} parent=31 // loop_body
        %s202 = smul.u32 %s197, 2
        %s203 = smul.u32 %s202, 4
        %s204 = smul.addr %s203, 4
        %s205 = scalar_lea.vmem %s165, %s204
        %v206 = vld [vmem:[%s205] sm:$0xf]
        %v207 = vld [vmem:[%s205 + $0x4] sm:$0xf]
        %v208 = vld [vmem:[%s205 + $0x8] sm:$0xf]
        %v209 = vld [vmem:[%s205 + $0xc] sm:$0xf]
        %s210 = sadd.s32 %s202, 1
        %s211 = smul.u32 %s210, 4
        %s212 = smul.addr %s211, 4
        %s213 = scalar_lea.vmem %s165, %s212
        %v214 = vld [vmem:[%s213] sm:$0xf]
        %v215 = vld [vmem:[%s213 + $0x4] sm:$0xf]
        %v216 = vld [vmem:[%s213 + $0x8] sm:$0xf]
        %v217 = vld [vmem:[%s213 + $0xc] sm:$0xf]
        %s218 = sadd.s32 %s202, 2
        %s219 = smul.u32 %s218, 4
        %s220 = smul.addr %s219, 4
        %s221 = scalar_lea.vmem %s165, %s220
        %v222 = vld [vmem:[%s221] sm:$0xf]
        %v223 = vld [vmem:[%s221 + $0x4] sm:$0xf]
        %v224 = vld [vmem:[%s221 + $0x8] sm:$0xf]
        %v225 = vld [vmem:[%s221 + $0xc] sm:$0xf]
        %s226 = sadd.s32 %s202, 3
        %s227 = smul.u32 %s226, 4
        %s228 = smul.addr %s227, 4
        %s229 = scalar_lea.vmem %s165, %s228
        %v230 = vld [vmem:[%s229] sm:$0xf]
        %v231 = vld [vmem:[%s229 + $0x4] sm:$0xf]
        %v232 = vld [vmem:[%s229 + $0x8] sm:$0xf]
        %v233 = vld [vmem:[%s229 + $0xc] sm:$0xf]
        %v238 = vunpack.c.l.b16 %v206
        %v239 = vunpack.c.l.b16 %v207
        %v240 = vunpack.c.l.b16 %v208
        %v241 = vunpack.c.l.b16 %v209
        %v242 = vpack.c.b16 %v239, %v238
        %v243 = vpack.c.b16 %v241, %v240
        %246 = vrot.lane.b32.xlu0 %v242, 127
        %v247 = vpop.permute.xlu0 %246
        %248 = vrot.lane.b32.xlu0 %v243, 127
        %v249 = vpop.permute.xlu0 %248
        %252 = vrot.lane.b32.xlu0 %v242, 126
        %v253 = vpop.permute.xlu0 %252
        %254 = vrot.lane.b32.xlu0 %v243, 126
        %v255 = vpop.permute.xlu0 %254
        %v262 = vunpack.c.l.b16 %v214
        %v263 = vunpack.c.l.b16 %v215
        %v264 = vunpack.c.l.b16 %v216
        %v265 = vunpack.c.l.b16 %v217
        %v266 = vpack.c.b16 %v263, %v262
        %v267 = vpack.c.b16 %v265, %v264
        %270 = vrot.lane.b32.xlu0 %v266, 127
        %v271 = vpop.permute.xlu0 %270
        %272 = vrot.lane.b32.xlu0 %v267, 127
        %v273 = vpop.permute.xlu0 %272
        %276 = vrot.lane.b32.xlu0 %v266, 126
        %v277 = vpop.permute.xlu0 %276
        %278 = vrot.lane.b32.xlu0 %v267, 126
        %v279 = vpop.permute.xlu0 %278
        %v286 = vunpack.c.l.b16 %v222
        %v287 = vunpack.c.l.b16 %v223
        %v288 = vunpack.c.l.b16 %v224
        %v289 = vunpack.c.l.b16 %v225
        %v290 = vpack.c.b16 %v287, %v286
        %v291 = vpack.c.b16 %v289, %v288
        %294 = vrot.lane.b32.xlu0 %v290, 127
        %v295 = vpop.permute.xlu0 %294
        %296 = vrot.lane.b32.xlu0 %v291, 127
        %v297 = vpop.permute.xlu0 %296
        %300 = vrot.lane.b32.xlu0 %v290, 126
        %v301 = vpop.permute.xlu0 %300
        %302 = vrot.lane.b32.xlu0 %v291, 126
        %v303 = vpop.permute.xlu0 %302
        %307 = vset.pattern.permute.xlu0 0
        %308 = vperm.xlu0 %307, %v188
        %v309 = vpop.permute.xlu0 %308
        %312 = vset.pattern.permute.xlu0 0
        %313 = vperm.xlu0 %312, %v189
        %v314 = vpop.permute.xlu0 %313
        %317 = vset.pattern.permute.xlu0 0
        %318 = vperm.xlu0 %317, %v190
        %v319 = vpop.permute.xlu0 %318
        %322 = vset.pattern.permute.xlu0 0
        %323 = vperm.xlu0 %322, %v191
        %v324 = vpop.permute.xlu0 %323
        %327 = vset.pattern.permute.xlu0 0
        %328 = vperm.xlu0 %327, %v192
        %v329 = vpop.permute.xlu0 %328
        %332 = vset.pattern.permute.xlu0 0
        %333 = vperm.xlu0 %332, %v193
        %v334 = vpop.permute.xlu0 %333
        %337 = vset.pattern.permute.xlu0 0
        %338 = vperm.xlu0 %337, %v194
        %v339 = vpop.permute.xlu0 %338
        %342 = vset.pattern.permute.xlu0 0
        %343 = vperm.xlu0 %342, %v195
        %v344 = vpop.permute.xlu0 %343
        %v362 = vunpack.c.l.b16 %v172
        %v363 = vunpack.c.h.b16 %v172
        %v364 = vunpack.c.l.b16 %v173
        %v365 = vunpack.c.l.b16 %v174
        %v366 = vunpack.c.h.b16 %v174
        %v367 = vunpack.c.l.b16 %v175
        %v368 = vunpack.c.l.b16 %v176
        %v369 = vunpack.c.h.b16 %v176
        %v370 = vunpack.c.l.b16 %v177
        %v371 = vunpack.c.l.b16 %v178
        %v372 = vunpack.c.h.b16 %v178
        %v373 = vunpack.c.l.b16 %v179
        %v374 = vunpack.c.l.b16 %v180
        %v375 = vunpack.c.h.b16 %v180
        %v376 = vunpack.c.l.b16 %v181
        %v377 = vunpack.c.l.b16 %v182
        %v378 = vunpack.c.h.b16 %v182
        %v379 = vunpack.c.l.b16 %v183
        %v380 = vunpack.c.l.b16 %v184
        %v381 = vunpack.c.h.b16 %v184
        %v382 = vunpack.c.l.b16 %v185
        %v383 = vunpack.c.l.b16 %v186
        %v384 = vunpack.c.h.b16 %v186
        %v385 = vunpack.c.l.b16 %v187
        %v386 = vpack.c.b16 %v365, %v362
        %v387 = vpack.c.b16 %v366, %v363
        %v388 = vpack.c.b16 %v367, %v364
        %v389 = vpack.c.b16 %v371, %v368
        %v390 = vpack.c.b16 %v372, %v369
        %v391 = vpack.c.b16 %v373, %v370
        %v392 = vpack.c.b16 %v377, %v374
        %v393 = vpack.c.b16 %v378, %v375
        %v394 = vpack.c.b16 %v379, %v376
        %v395 = vpack.c.b16 %v383, %v380
        %v396 = vpack.c.b16 %v384, %v381
        %v397 = vpack.c.b16 %v385, %v382
        %vm406 = vcmask 261120
        %v408 = vsel %vm406, %v388, 0
        %v411 = vsel %vm406, %v391, 0
        %v414 = vsel %vm406, %v394, 0
        %v417 = vsel %vm406, %v397, 0
        %419 = vmatpush.bf16.msra.mxu0 %v267
        %420 = vmatpush.bf16.msra.mxu0 %v266
        %421 = vmatpush.bf16.msra.mxu0 %v255
        %422 = vmatpush.bf16.msra.mxu0 %v253
        %423 = vmatpush.bf16.msra.mxu0 %v249
        %424 = vmatpush.bf16.msra.mxu0 %v247
        %425 = vmatpush.bf16.msra.mxu0 %v243
        %426 = vmatpush.bf16.msra.mxu0 %v242
        %427 = vmatmul.bf16.gmra.mxu0 %v386
        %v428 = vpop.f32.mrf.mxu0
        %v429 = vadd.f32 %v309, %v428
        %v430 = vpop.f32.mrf.mxu0
        %v431 = vadd.f32 %v314, %v430
        %432 = vmatmul.bf16.gmra.mxu0 %v389
        %v433 = vpop.f32.mrf.mxu0
        %v434 = vadd.f32 %v319, %v433
        %v435 = vpop.f32.mrf.mxu0
        %v436 = vadd.f32 %v324, %v435
        %437 = vmatmul.bf16.gmra.mxu0 %v392
        %v438 = vpop.f32.mrf.mxu0
        %v439 = vadd.f32 %v329, %v438
        %v440 = vpop.f32.mrf.mxu0
        %v441 = vadd.f32 %v334, %v440
        %442 = vmatmul.bf16.gmra.mxu0 %v395
        %v443 = vpop.f32.mrf.mxu0
        %v444 = vadd.f32 %v339, %v443
        %v445 = vpop.f32.mrf.mxu0
        %v446 = vadd.f32 %v344, %v445
        %447 = vdwg.mxu0
        %448 = vmatpush.bf16.msra.mxu0 %v297
        %449 = vmatpush.bf16.msra.mxu0 %v295
        %450 = vmatpush.bf16.msra.mxu0 %v291
        %451 = vmatpush.bf16.msra.mxu0 %v290
        %452 = vmatpush.bf16.msra.mxu0 %v279
        %453 = vmatpush.bf16.msra.mxu0 %v277
        %454 = vmatpush.bf16.msra.mxu0 %v273
        %455 = vmatpush.bf16.msra.mxu0 %v271
        %456 = vmatmul.bf16.gmra.mxu0 %v387
        %v457 = vpop.f32.mrf.mxu0
        %v458 = vadd.f32 %v429, %v457
        %v459 = vpop.f32.mrf.mxu0
        %v460 = vadd.f32 %v431, %v459
        %461 = vmatmul.bf16.gmra.mxu0 %v390
        %v462 = vpop.f32.mrf.mxu0
        %v463 = vadd.f32 %v434, %v462
        %v464 = vpop.f32.mrf.mxu0
        %v465 = vadd.f32 %v436, %v464
        %466 = vmatmul.bf16.gmra.mxu0 %v393
        %v467 = vpop.f32.mrf.mxu0
        %v468 = vadd.f32 %v439, %v467
        %v469 = vpop.f32.mrf.mxu0
        %v470 = vadd.f32 %v441, %v469
        %471 = vmatmul.bf16.gmra.mxu0 %v396
        %v472 = vpop.f32.mrf.mxu0
        %v473 = vadd.f32 %v444, %v472
        %v474 = vpop.f32.mrf.mxu0
        %v475 = vadd.f32 %v446, %v474
        %476 = vdwg.mxu0
        %477 = vmatpush.bf16.msra.mxu0 0
        %478 = vmatpush.bf16.msra.mxu0 0
        %479 = vmatpush.bf16.msra.mxu0 0
        %480 = vmatpush.bf16.msra.mxu0 0
        %481 = vmatpush.bf16.msra.mxu0 0
        %482 = vmatpush.bf16.msra.mxu0 0
        %483 = vmatpush.bf16.msra.mxu0 %v303
        %484 = vmatpush.bf16.msra.mxu0 %v301
        %485 = vmatmul.bf16.gmra.mxu0 %v408
        %v486 = vpop.f32.mrf.mxu0
        %v487 = vadd.f32 %v458, %v486
        %v488 = vpop.f32.mrf.mxu0
        %v489 = vadd.f32 %v460, %v488
        %490 = vmatmul.bf16.gmra.mxu0 %v411
        %v491 = vpop.f32.mrf.mxu0
        %v492 = vadd.f32 %v463, %v491
        %v493 = vpop.f32.mrf.mxu0
        %v494 = vadd.f32 %v465, %v493
        %495 = vmatmul.bf16.gmra.mxu0 %v414
        %v496 = vpop.f32.mrf.mxu0
        %v497 = vadd.f32 %v468, %v496
        %v498 = vpop.f32.mrf.mxu0
        %v499 = vadd.f32 %v470, %v498
        %500 = vmatmul.bf16.gmra.mxu0 %v417
        %v501 = vpop.f32.mrf.mxu0
        %v502 = vadd.f32 %v473, %v501
        %v503 = vpop.f32.mrf.mxu0
        %v504 = vadd.f32 %v475, %v503
        %505 = vdwg.mxu0
        %v506 = vmax.f32 %v487, 0.0
        %v507 = vmax.f32 %v489, 0.0
        %v508 = vmax.f32 %v492, 0.0
        %v509 = vmax.f32 %v494, 0.0
        %v510 = vmax.f32 %v497, 0.0
        %v511 = vmax.f32 %v499, 0.0
        %v512 = vmax.f32 %v502, 0.0
        %v513 = vmax.f32 %v504, 0.0
        %v518 = vunpack.c.l.b16 %v230
        %v519 = vunpack.c.l.b16 %v231
        %v520 = vunpack.c.l.b16 %v232
        %v521 = vunpack.c.l.b16 %v233
        %v522 = vpack.c.b16 %v519, %v518
        %v523 = vpack.c.b16 %v521, %v520
        %526 = vrot.lane.b32.xlu0 %v522, 127
        %v527 = vpop.permute.xlu0 %526
        %528 = vrot.lane.b32.xlu0 %v523, 127
        %v529 = vpop.permute.xlu0 %528
        %532 = vrot.lane.b32.xlu0 %v522, 126
        %v533 = vpop.permute.xlu0 %532
        %534 = vrot.lane.b32.xlu0 %v523, 126
        %v535 = vpop.permute.xlu0 %534
        %538 = vmatpush.bf16.msra.mxu0 %v291
        %539 = vmatpush.bf16.msra.mxu0 %v290
        %540 = vmatpush.bf16.msra.mxu0 %v279
        %541 = vmatpush.bf16.msra.mxu0 %v277
        %542 = vmatpush.bf16.msra.mxu0 %v273
        %543 = vmatpush.bf16.msra.mxu0 %v271
        %544 = vmatpush.bf16.msra.mxu0 %v267
        %545 = vmatpush.bf16.msra.mxu0 %v266
        %546 = vmatmul.bf16.gmra.mxu0 %v386
        %v547 = vpop.f32.mrf.mxu0
        %v548 = vadd.f32 %v309, %v547
        %v549 = vpop.f32.mrf.mxu0
        %v550 = vadd.f32 %v314, %v549
        %551 = vmatmul.bf16.gmra.mxu0 %v389
        %v552 = vpop.f32.mrf.mxu0
        %v553 = vadd.f32 %v319, %v552
        %v554 = vpop.f32.mrf.mxu0
        %v555 = vadd.f32 %v324, %v554
        %556 = vmatmul.bf16.gmra.mxu0 %v392
        %v557 = vpop.f32.mrf.mxu0
        %v558 = vadd.f32 %v329, %v557
        %v559 = vpop.f32.mrf.mxu0
        %v560 = vadd.f32 %v334, %v559
        %561 = vmatmul.bf16.gmra.mxu0 %v395
        %v562 = vpop.f32.mrf.mxu0
        %v563 = vadd.f32 %v339, %v562
        %v564 = vpop.f32.mrf.mxu0
        %v565 = vadd.f32 %v344, %v564
        %566 = vdwg.mxu0
        %567 = vmatpush.bf16.msra.mxu0 %v529
        %568 = vmatpush.bf16.msra.mxu0 %v527
        %569 = vmatpush.bf16.msra.mxu0 %v523
        %570 = vmatpush.bf16.msra.mxu0 %v522
        %571 = vmatpush.bf16.msra.mxu0 %v303
        %572 = vmatpush.bf16.msra.mxu0 %v301
        %573 = vmatpush.bf16.msra.mxu0 %v297
        %574 = vmatpush.bf16.msra.mxu0 %v295
        %575 = vmatmul.bf16.gmra.mxu0 %v387
        %v576 = vpop.f32.mrf.mxu0
        %v577 = vadd.f32 %v548, %v576
        %v578 = vpop.f32.mrf.mxu0
        %v579 = vadd.f32 %v550, %v578
        %580 = vmatmul.bf16.gmra.mxu0 %v390
        %v581 = vpop.f32.mrf.mxu0
        %v582 = vadd.f32 %v553, %v581
        %v583 = vpop.f32.mrf.mxu0
        %v584 = vadd.f32 %v555, %v583
        %585 = vmatmul.bf16.gmra.mxu0 %v393
        %v586 = vpop.f32.mrf.mxu0
        %v587 = vadd.f32 %v558, %v586
        %v588 = vpop.f32.mrf.mxu0
        %v589 = vadd.f32 %v560, %v588
        %590 = vmatmul.bf16.gmra.mxu0 %v396
        %v591 = vpop.f32.mrf.mxu0
        %v592 = vadd.f32 %v563, %v591
        %v593 = vpop.f32.mrf.mxu0
        %v594 = vadd.f32 %v565, %v593
        %595 = vdwg.mxu0
        %596 = vmatpush.bf16.msra.mxu0 0
        %597 = vmatpush.bf16.msra.mxu0 0
        %598 = vmatpush.bf16.msra.mxu0 0
        %599 = vmatpush.bf16.msra.mxu0 0
        %600 = vmatpush.bf16.msra.mxu0 0
        %601 = vmatpush.bf16.msra.mxu0 0
        %602 = vmatpush.bf16.msra.mxu0 %v535
        %603 = vmatpush.bf16.msra.mxu0 %v533
        %604 = vmatmul.bf16.gmra.mxu0 %v408
        %v605 = vpop.f32.mrf.mxu0
        %v606 = vadd.f32 %v577, %v605
        %v607 = vpop.f32.mrf.mxu0
        %v608 = vadd.f32 %v579, %v607
        %609 = vmatmul.bf16.gmra.mxu0 %v411
        %v610 = vpop.f32.mrf.mxu0
        %v611 = vadd.f32 %v582, %v610
        %v612 = vpop.f32.mrf.mxu0
        %v613 = vadd.f32 %v584, %v612
        %614 = vmatmul.bf16.gmra.mxu0 %v414
        %v615 = vpop.f32.mrf.mxu0
        %v616 = vadd.f32 %v587, %v615
        %v617 = vpop.f32.mrf.mxu0
        %v618 = vadd.f32 %v589, %v617
        %619 = vmatmul.bf16.gmra.mxu0 %v417
        %v620 = vpop.f32.mrf.mxu0
        %v621 = vadd.f32 %v592, %v620
        %v622 = vpop.f32.mrf.mxu0
        %v623 = vadd.f32 %v594, %v622
        %624 = vdwg.mxu0
        %v625 = vmax.f32 %v606, 0.0
        %v626 = vmax.f32 %v608, 0.0
        %v627 = vmax.f32 %v611, 0.0
        %v628 = vmax.f32 %v613, 0.0
        %v629 = vmax.f32 %v616, 0.0
        %v630 = vmax.f32 %v618, 0.0
        %v631 = vmax.f32 %v621, 0.0
        %v632 = vmax.f32 %v623, 0.0
        %v633 = vmax.f32 %v506, %v625
        %v634 = vmax.f32 %v507, %v626
        %v635 = vmax.f32 %v508, %v627
        %v636 = vmax.f32 %v509, %v628
        %v637 = vmax.f32 %v510, %v629
        %v638 = vmax.f32 %v511, %v630
        %v639 = vmax.f32 %v512, %v631
        %v640 = vmax.f32 %v513, %v632
        %v641 = vpack.c.bf16 %v633, %v633
        %v642 = vpack.c.bf16 %v634, %v634
        %v643 = vpack.c.bf16 %v635, %v635
        %v644 = vpack.c.bf16 %v636, %v636
        %v645 = vpack.c.bf16 %v637, %v637
        %v646 = vpack.c.bf16 %v638, %v638
        %v647 = vpack.c.bf16 %v639, %v639
        %v648 = vpack.c.bf16 %v640, %v640
        %s649 = smul.u32 %s197, 8
        %s650 = smul.addr %s649, 4
        %s651 = scalar_lea.vmem %s170, %s650
        %vm652 = vcmask 486400
        %653 = vst.msk [vmem:[%s651] sm:$0xf] %vm652, %v641
        %654 = vst.msk [vmem:[%s651 + $0x4] sm:$0xf] %vm652, %v642
        %655 = vst.msk [vmem:[%s651 + $0x8] sm:$0xf] %vm652, %v643
        %656 = vst.msk [vmem:[%s651 + $0xc] sm:$0xf] %vm652, %v644
        %657 = vst.msk [vmem:[%s651 + $0x10] sm:$0xf] %vm652, %v645
        %658 = vst.msk [vmem:[%s651 + $0x14] sm:$0xf] %vm652, %v646
        %659 = vst.msk [vmem:[%s651 + $0x18] sm:$0xf] %vm652, %v647
        %660 = vst.msk [vmem:[%s651 + $0x1c] sm:$0xf] %vm652, %v648
      $region37: #{my_model_forward.7} parent=31 // loop_footer
        %s201 = sadd.s32 1, %s197
      $region38: #{my_model_forward.7} parent=31 // loop_footer_branch
        %196 = sbr.rel target = $region34
      $region39: #{my_model_forward.7} parent=31 // loop_exit
        _
      %p661 = scmp.lt.s32.totalorder %s14, 1
      %s662 = scalar_select %p661, %s14, 1
      %s663 = smul.addr %s662, 240
      %s664 = smul.addr %s663, 4
      %s665 = scalar_lea.vmem %s3, %s664
      // Predicated region
      $region40: #{my_model_forward.7} parent=31 // pred_check
        %p666 = pneg %p100
      $region41: #{my_model_forward.7} parent=31 // pred_check_branch
        %668 = sbr.rel (%p666) target = $region43
      $region42: #{my_model_forward.7} parent=31 // pred_region
        _
      $region43: #{my_model_forward.7} parent=31 // pred_fallthru
        _
    $region32: #{my_model_forward.7} parent=5 // pred_fallthru
      _
    %p669 = scmp.le.s32.totalorder 2, %s9
    // Predicated region
    $region44: #{my_model_forward.7} parent=5 // pred_check
      %p670 = pneg %p669
    $region45: #{my_model_forward.7} parent=5 // pred_check_branch
      %672 = sbr.rel (%p670) target = $region47
    $region46: #{my_model_forward.7} parent=5 // pred_region
      %s673 = ssub.s32 %s9, 2
      // Predicated region
      $region48: #{my_model_forward.7} parent=46 // pred_check
        %p674 = pneg %p106
      $region49: #{my_model_forward.7} parent=46 // pred_check_branch
        %676 = sbr.rel (%p674) target = $region51
      $region50: #{my_model_forward.7} parent=46 // pred_region
        %p677 = scmp.lt.s32.totalorder %s15, 1
        %s678 = scalar_select %p677, %s15, 1
        %s679 = smul.addr %s678, 240
        %s680 = smul.addr %s679, 4
        %s681 = scalar_lea.vmem %s3, %s680
      $region51: #{my_model_forward.7} parent=46 // pred_fallthru
        _
    $region47: #{my_model_forward.7} parent=5 // pred_fallthru
      _
  $region6: #{my_model_forward.7} parent=0 // loop_footer
    %s13 = sadd.s32 1, %s9
  $region7: #{my_model_forward.7} parent=0 // loop_footer_branch
    %8 = sbr.rel target = $region3
  $region8: #{my_model_forward.7} parent=0 // loop_exit
    _

// kernel: my_model_forward.9
$region0: #{my_model_forward.9}
  #allocation0 [shape = 'u32[]', space=smem, size = 0x4, offset = 0x4, fixed_abs, tag = 'smem constant byte address 0x4 - core index']
  #allocation1 [shape = 'u32[72,128]{1,0:T(1,128)}', space=vmem, size = 0x9000, scoped, tag = 'internal scratch']
  %s0 = inlined_call_operand.vmem [shape: f32[2,128], index: 0, kind: input, shape index: {}]
  %s1 = inlined_call_operand.vmem [shape: f32[128,2], index: 1, kind: input, shape index: {}]
  %s2 = inlined_call_operand.vmem [shape: f32[1,2], index: 2, kind: input, shape index: {}]
  %s3 = inlined_call_operand.hbm [shape: f32[2,2], index: 3, kind: output, shape index: {}]
  %s4 = sld [smem:[#allocation0]]
  $region22: #{my_model_forward.9} parent=0
    _
  %s6 = ssub.s32 1, %s4
  %s7 = scalar_select 0, %s6, %s4
  $region1: #{my_model_forward.9} parent=0
    #allocation2 [shape = 'u8[1024]{0}', space=vmem, size = 0x400, scoped, tag = 'output window, operand 0, single buffered']
    #allocation3 [shape = 's32[1]{0}', space=sflag, size = 0x4, scoped, tag = 'scoped memory for my_model_forward.9']
    %8 = vsyncpa [#allocation3], 0
    // Predicated region
    $region2: #{my_model_forward.9} parent=1 // pred_check
      _
    $region3: #{my_model_forward.9} parent=1 // pred_check_branch
      %10 = sbr.rel (0) target = $region5
    $region4: #{my_model_forward.9} parent=1 // pred_region
      _
    $region5: #{my_model_forward.9} parent=1 // pred_fallthru
      _
    // Predicated region
    $region6: #{my_model_forward.9} parent=1 // pred_check
      _
    $region7: #{my_model_forward.9} parent=1 // pred_check_branch
      %12 = sbr.rel (0) target = $region9
    $region8: #{my_model_forward.9} parent=1 // pred_region
      _
    $region9: #{my_model_forward.9} parent=1 // pred_fallthru
      _
    // Predicated region
    $region10: #{my_model_forward.9} parent=1 // pred_check
      _
    $region11: #{my_model_forward.9} parent=1 // pred_check_branch
      %14 = sbr.rel (0) target = $region13
    $region12: #{my_model_forward.9} parent=1 // pred_region
      _
    $region13: #{my_model_forward.9} parent=1 // pred_fallthru
      _
    %v15 = vld [vmem:[%s0] sm:$0x3]
    %v16 = vld [vmem:[%s1] sm:$0xff]
    %v17 = vld [vmem:[%s1 + $0x8] sm:$0xff]
    %v18 = vld [vmem:[%s1 + $0x10] sm:$0xff]
    %v19 = vld [vmem:[%s1 + $0x18] sm:$0xff]
    %v20 = vld [vmem:[%s1 + $0x20] sm:$0xff]
    %v21 = vld [vmem:[%s1 + $0x28] sm:$0xff]
    %v22 = vld [vmem:[%s1 + $0x30] sm:$0xff]
    %v23 = vld [vmem:[%s1 + $0x38] sm:$0xff]
    %v24 = vld [vmem:[%s1 + $0x40] sm:$0xff]
    %v25 = vld [vmem:[%s1 + $0x48] sm:$0xff]
    %v26 = vld [vmem:[%s1 + $0x50] sm:$0xff]
    %v27 = vld [vmem:[%s1 + $0x58] sm:$0xff]
    %v28 = vld [vmem:[%s1 + $0x60] sm:$0xff]
    %v29 = vld [vmem:[%s1 + $0x68] sm:$0xff]
    %v30 = vld [vmem:[%s1 + $0x70] sm:$0xff]
    %v31 = vld [vmem:[%s1 + $0x78] sm:$0xff]
    %v32 = vld [vmem:[%s2] sm:$0x1]
    %v34 = vperm.slane %v32, 0
    %36 = vmatpush.msra.mxu0 %v31
    %37 = vmatpush.msra.mxu0 %v30
    %38 = vmatpush.msra.mxu0 %v29
    %39 = vmatpush.msra.mxu0 %v28
    %40 = vmatpush.msra.mxu0 %v27
    %41 = vmatpush.msra.mxu0 %v26
    %42 = vmatpush.msra.mxu0 %v25
    %43 = vmatpush.msra.mxu0 %v24
    %44 = vmatpush.msra.mxu0 %v23
    %45 = vmatpush.msra.mxu0 %v22
    %46 = vmatpush.msra.mxu0 %v21
    %47 = vmatpush.msra.mxu0 %v20
    %48 = vmatpush.msra.mxu0 %v19
    %49 = vmatpush.msra.mxu0 %v18
    %50 = vmatpush.msra.mxu0 %v17
    %51 = vmatpush.msra.mxu0 %v16
    %52 = vmatmul.f32.gmra.mxu0 %v15
    %v53 = vpop.f32.mrf.mxu0
    %v54 = vadd.f32 %v34, %v53
    %55 = vdwg.mxu0
    %vm56 = vcmask 9216
    %v57 = vsel %vm56, %v54, -inf
    %58 = vmax.xlane.f32.xlu0 %v57
    %v59 = vpop.xlane.xlu0 %58
    %v60 = vsub.f32 %v54, %v59
    %v61 = vmul.f32 %v60, 1.442695
    %v62 = vpow.pop %v61
    %v63 = vsel %vm56, %v62, 0.0
    %64 = vadd.xlane.f32.xlu0 %v63
    %v65 = vpop.xlane.xlu0 %64
    %v66 = vrcp.pop %v65
    %v67 = vmul.f32 %v65, %v66
    %v68 = vsub.f32 1.0, %v67
    %v69 = vmul.f32 %v66, %v68
    %v70 = vadd.f32 %v66, %v69
    %vm71 = vweird.f32 %v65
    %vm72 = vweird.f32 %v66
    %vm73 = vmor %vm71, %vm72
    %v74 = vsel %vm73, %v66, %v70
    %v75 = vand.u32 2147483647, %v65
    %vm76 = vcmp.eq.f32.partialorder %v75, 8.507059e+37
    %v77 = vand.u32 %v65, 2147483648
    %v78 = vor.u32 1.1754944e-38, %v77
    %v79 = vsel %vm76, %v78, %v74
    %v80 = vmul.f32 %v62, %v79
    %81 = vst.msk [vmem:[#allocation2] sm:$0x3] %vm56, %v80
    // Predicated region
    $region14: #{my_model_forward.9} parent=1 // pred_check
      _
    $region15: #{my_model_forward.9} parent=1 // pred_check_branch
      %83 = sbr.rel (0) target = $region17
    $region16: #{my_model_forward.9} parent=1 // pred_region
      %85 = vsyncadd [#allocation3], 0
      %s87 = sshll.u32 [#allocation2], 4
      %s88 = int_to_ptr.vmem [resolvable:$true] %s87
      %s89 = sshll.u32 %s3, 4
      %s90 = int_to_ptr.hbm [resolvable:$true] %s89
      %92 = dma.vmem_to_hbm [thread:$0]  %s88, 32, %s90, [#allocation3]
    $region17: #{my_model_forward.9} parent=1 // pred_fallthru
      _
    // Predicated region
    $region18: #{my_model_forward.9} parent=1 // pred_check
      _
    $region19: #{my_model_forward.9} parent=1 // pred_check_branch
      %94 = sbr.rel (0) target = $region21
    $region20: #{my_model_forward.9} parent=1 // pred_region
      %96 = dma.done [#allocation3], 32
    $region21: #{my_model_forward.9} parent=1 // pred_fallthru
      _
    %97 = vsyncpa [#allocation3], 1

// kernel: my_model_forward.8
$region0: #{my_model_forward.8}
  #allocation0 [shape = 'u32[]', space=smem, size = 0x4, offset = 0x4, fixed_abs, tag = 'smem constant byte address 0x4 - core index']
  #allocation1 [shape = 'u32[72,128]{1,0:T(1,128)}', space=vmem, size = 0x9000, scoped, tag = 'internal scratch']
  #allocation2 [shape = 'f32[2,128]{1,0:T(2,128)}', space=vmem, size = 0x400, scoped, tag = 'scratch operand']
  %s0 = inlined_call_operand.vmem [shape: bf16[2,57600], index: 0, kind: input, shape index: {}]
  %s1 = inlined_call_operand.vmem [shape: bf16[57600,128], index: 1, kind: input, shape index: {}]
  %s2 = inlined_call_operand.vmem [shape: f32[2,2,128], index: 2, kind: output, shape index: {}]
  %s3 = sld [smem:[#allocation0]]
  $region49: #{my_model_forward.8} parent=0
    _
  %s5 = ssub.s32 1, %s3
  %s6 = scalar_select 0, %s5, %s3
  loop: start=0, step=1, limit=8
  $region2: #{my_model_forward.8} parent=0 // loop_pre_header
    _
  $region3: #{my_model_forward.8} parent=0 // loop_header
    %s8 = sphi 0, %s12
    %p9 = scmp.ge.s32.totalorder %s8, 8
    %s15 = sphi 0, %s27
    %s16 = sphi 0, %s23
    %s17 = sphi 0, %s15
    %s18 = sphi 0, %s16
    %s19 = sphi 0, %s17
    %s20 = sphi 0, %s18
    %s34 = sphi 0, %s36
    %s37 = sphi 0, %s34
    %s38 = sphi 0, %s37
    %s54 = sphi 0, %s38
    %s64 = sphi 0, %s66
    %s67 = sphi 0, %s64
    %s68 = sphi 0, %s67
    %s84 = sphi 0, %s68
    %s90 = sphi 0, %s92
    %s93 = sphi 0, %s90
    %s94 = sphi 0, %s93
    %s110 = sphi 0, %s94
  $region4: #{my_model_forward.8} parent=0 // loop_header_branch
    %11 = sbr.rel (%p9) target = $region8
  $region5: #{my_model_forward.8} parent=0 // loop_body
    %s13 = ssub.s32 %s8, 1
    %s14 = ssub.s32 %s8, 2
    %s21 = sadd.s32 1, %s16
    %p22 = scmp.ge.s32.totalorder %s21, 3
    %s23 = scalar_select %p22, 0, %s21
    %s24 = sadd.s32 1, %s15
    %s25 = scalar_select %p22, %s24, %s15
    %p26 = scmp.ge.s32.totalorder %s25, 2
    %s27 = scalar_select %p26, 0, %s25
    %s28 = smul.u32 %s15, 3
    %s29 = sadd.s32 %s28, %s16
    %s30 = smul.u32 %s27, 3
    %s31 = sadd.s32 %s30, %s23
    %s32 = ssub.s32 %s29, %s31
    %p33 = scmp.eq.s32.totalorder %s32, 0
    %s35 = sadd.s32 %s34, 1
    %s36 = scalar_select %p33, %s34, %s35
    %p39 = pneg %p33
    %p40 = scmp.eq.s32.totalorder %s8, 5
    %p41 = por %p39, %p40
    %p42 = scmp.ne.s32.totalorder %s34, %s37
    %p43 = scmp.eq.s32.totalorder %s8, 0
    %p44 = por %p42, %p43
    %p45 = scmp.ne.s32.totalorder %s34, %s37
    %p46 = scmp.eq.s32.totalorder %s13, 5
    %p47 = por %p45, %p46
    %p48 = scmp.ne.s32.totalorder %s37, %s38
    %p49 = scmp.eq.s32.totalorder %s13, 0
    %p50 = por %p48, %p49
    %p51 = scmp.ne.s32.totalorder %s37, %s38
    %p52 = scmp.eq.s32.totalorder %s14, 5
    %p53 = por %p51, %p52
    %p55 = scmp.ne.s32.totalorder %s38, %s54
    %p56 = scmp.eq.s32.totalorder %s14, 0
    %p57 = por %p55, %p56
    %s58 = smul.u32 %s15, 3
    %s59 = sadd.s32 %s58, %s16
    %s60 = smul.u32 %s27, 3
    %s61 = sadd.s32 %s60, %s23
    %s62 = ssub.s32 %s59, %s61
    %p63 = scmp.eq.s32.totalorder %s62, 0
    %s65 = sadd.s32 %s64, 1
    %s66 = scalar_select %p63, %s64, %s65
    %p69 = pneg %p63
    %p70 = scmp.eq.s32.totalorder %s8, 5
    %p71 = por %p69, %p70
    %p72 = scmp.ne.s32.totalorder %s64, %s67
    %p73 = scmp.eq.s32.totalorder %s8, 0
    %p74 = por %p72, %p73
    %p75 = scmp.ne.s32.totalorder %s64, %s67
    %p76 = scmp.eq.s32.totalorder %s13, 5
    %p77 = por %p75, %p76
    %p78 = scmp.ne.s32.totalorder %s67, %s68
    %p79 = scmp.eq.s32.totalorder %s13, 0
    %p80 = por %p78, %p79
    %p81 = scmp.ne.s32.totalorder %s67, %s68
    %p82 = scmp.eq.s32.totalorder %s14, 5
    %p83 = por %p81, %p82
    %p85 = scmp.ne.s32.totalorder %s68, %s84
    %p86 = scmp.eq.s32.totalorder %s14, 0
    %p87 = por %p85, %p86
    %s88 = ssub.s32 %s15, %s27
    %p89 = scmp.eq.s32.totalorder %s88, 0
    %s91 = sadd.s32 %s90, 1
    %s92 = scalar_select %p89, %s90, %s91
    %p95 = pneg %p89
    %p96 = scmp.eq.s32.totalorder %s8, 5
    %p97 = por %p95, %p96
    %p98 = scmp.ne.s32.totalorder %s90, %s93
    %p99 = scmp.eq.s32.totalorder %s8, 0
    %p100 = por %p98, %p99
    %p101 = scmp.ne.s32.totalorder %s90, %s93
    %p102 = scmp.eq.s32.totalorder %s13, 5
    %p103 = por %p101, %p102
    %p104 = scmp.ne.s32.totalorder %s93, %s94
    %p105 = scmp.eq.s32.totalorder %s13, 0
    %p106 = por %p104, %p105
    %p107 = scmp.ne.s32.totalorder %s93, %s94
    %p108 = scmp.eq.s32.totalorder %s14, 5
    %p109 = por %p107, %p108
    %p111 = scmp.ne.s32.totalorder %s94, %s110
    %p112 = scmp.eq.s32.totalorder %s14, 0
    %p113 = por %p111, %p112
    %p114 = scmp.le.s32.totalorder 1, %s8
    %p115 = scmp.lt.s32.totalorder %s8, 7
    %p116 = pnand %p114, %p115
    %p117 = pneg %p116
    // Predicated region
    $region9: #{my_model_forward.8} parent=5 // pred_check
      _
    $region10: #{my_model_forward.8} parent=5 // pred_check_branch
      %119 = sbr.rel (%p116) target = $region12
    $region11: #{my_model_forward.8} parent=5 // pred_region
      %s120 = ssub.s32 %s8, 1
    $region12: #{my_model_forward.8} parent=5 // pred_fallthru
      _
    %p121 = scmp.lt.s32.totalorder %s8, 6
    // Predicated region
    $region13: #{my_model_forward.8} parent=5 // pred_check
      %p122 = pneg %p121
    $region14: #{my_model_forward.8} parent=5 // pred_check_branch
      %124 = sbr.rel (%p122) target = $region16
    $region15: #{my_model_forward.8} parent=5 // pred_region
      // Predicated region
      $region17: #{my_model_forward.8} parent=15 // pred_check
        %p125 = pneg %p44
      $region18: #{my_model_forward.8} parent=15 // pred_check_branch
        %127 = sbr.rel (%p125) target = $region20
      $region19: #{my_model_forward.8} parent=15 // pred_region
        %s128 = smul.u32 %s15, 3
        %s129 = sadd.s32 %s128, %s16
        %s130 = smul.u32 75, %s129
        %p131 = scmp.lt.s32.totalorder %s130, 449
        %s132 = scalar_select %p131, %s130, 449
        %s133 = scalar_lea.vmem %s0, %s132
        %s134 = smul.u32 %s15, 3
        %s135 = sadd.s32 %s134, %s16
        %s136 = smul.u32 75, %s135
      $region20: #{my_model_forward.8} parent=15 // pred_fallthru
        _
      // Predicated region
      $region21: #{my_model_forward.8} parent=15 // pred_check
        %p137 = pneg %p74
      $region22: #{my_model_forward.8} parent=15 // pred_check_branch
        %139 = sbr.rel (%p137) target = $region24
      $region23: #{my_model_forward.8} parent=15 // pred_region
        %s140 = smul.u32 %s15, 3
        %s141 = sadd.s32 %s140, %s16
        %s142 = smul.u32 1200, %s141
        %p143 = scmp.lt.s32.totalorder %s142, 7199
        %s144 = scalar_select %p143, %s142, 7199
        %s145 = smul.addr %s144, 4
        %s146 = scalar_lea.vmem %s1, %s145
        %s147 = smul.u32 %s15, 3
        %s148 = sadd.s32 %s147, %s16
        %s149 = smul.u32 1200, %s148
      $region24: #{my_model_forward.8} parent=15 // pred_fallthru
        _
    $region16: #{my_model_forward.8} parent=5 // pred_fallthru
      _
    %p150 = scmp.le.s32.totalorder 1, %s8
    %p151 = scmp.lt.s32.totalorder %s8, 7
    %p152 = pnand %p150, %p151
    %p153 = pneg %p152
    // Predicated region
    $region25: #{my_model_forward.8} parent=5 // pred_check
      _
    $region26: #{my_model_forward.8} parent=5 // pred_check_branch
      %155 = sbr.rel (%p152) target = $region28
    $region27: #{my_model_forward.8} parent=5 // pred_region
      %s156 = ssub.s32 %s8, 1
      %s157 = smul.u32 %s17, 3
      %s158 = sadd.s32 %s157, %s18
      %s159 = smul.u32 75, %s158
      %p160 = scmp.lt.s32.totalorder %s159, 449
      %s161 = scalar_select %p160, %s159, 449
      %s162 = scalar_lea.vmem %s0, %s161
      %p163 = pneg %p50
      %p164 = pneg %p47
      %s165 = smul.u32 %s17, 3
      %s166 = sadd.s32 %s165, %s18
      %s167 = smul.u32 1200, %s166
      %p168 = scmp.lt.s32.totalorder %s167, 7199
      %s169 = scalar_select %p168, %s167, 7199
      %s170 = smul.addr %s169, 4
      %s171 = scalar_lea.vmem %s1, %s170
      %p172 = pneg %p80
      %p173 = pneg %p77
      %p174 = pneg %p106
      %p175 = pneg %p103
      %p176 = scmp.lt.s32.totalorder %s17, 1
      %s177 = scalar_select %p176, %s17, 1
      %s178 = smul.addr %s177, 2
      %s179 = scalar_lea.vmem %s2, %s178
      %s180 = smul.u32 %s17, 3
      %s181 = sadd.s32 %s180, %s18
      %s182 = smul.u32 75, %s181
      %p183 = scmp.lt.s32.totalorder %s182, 449
      %s184 = scalar_select %p183, %s182, 449
      %s185 = scalar_lea.vmem %s0, %s184
      %s186 = smul.u32 %s17, 3
      %s187 = sadd.s32 %s186, %s18
      %s188 = smul.u32 75, %s187
      %s189 = smul.u32 %s17, 3
      %s190 = sadd.s32 %s189, %s18
      %s191 = smul.u32 1200, %s190
      %p192 = scmp.lt.s32.totalorder %s191, 7199
      %s193 = scalar_select %p192, %s191, 7199
      %s194 = smul.addr %s193, 4
      %s195 = scalar_lea.vmem %s1, %s194
      %s196 = smul.u32 %s17, 3
      %s197 = sadd.s32 %s196, %s18
      %s198 = smul.u32 1200, %s197
      %p199 = scmp.lt.s32.totalorder %s17, 1
      %s200 = scalar_select %p199, %s17, 1
      %s201 = smul.addr %s200, 2
      %s202 = scalar_lea.vmem %s2, %s201
      %p203 = scmp.eq.s32.totalorder %s18, 0
      // Predicated region
      $region29: #{my_model_forward.8} parent=27 // pred_check
        %p204 = pneg %p203
      $region30: #{my_model_forward.8} parent=27 // pred_check_branch
        %206 = sbr.rel (%p204) target = $region32
      $region31: #{my_model_forward.8} parent=27 // pred_region
        %207 = vst [vmem:[#allocation2] sm:$0x3] 0.0
      $region32: #{my_model_forward.8} parent=27 // pred_fallthru
        _
      %v208 = vld [vmem:[#allocation2] sm:$0x3]
      %v209 = vld [vmem:[%s185] sm:$0xff]
      %v210 = vld [vmem:[%s185 + $0x8] sm:$0xff]
      %v211 = vld [vmem:[%s185 + $0x10] sm:$0xff]
      %v212 = vld [vmem:[%s185 + $0x18] sm:$0xff]
      %v213 = vld [vmem:[%s185 + $0x20] sm:$0xff]
      %v214 = vld [vmem:[%s185 + $0x28] sm:$0xff]
      %v215 = vld [vmem:[%s185 + $0x30] sm:$0xff]
      %v216 = vld [vmem:[%s185 + $0x38] sm:$0xff]
      %v217 = vld [vmem:[%s185 + $0x40] sm:$0xff]
      %v218 = vld [vmem:[%s185 + $0x48] sm:$0x7]
      %v219 = vld [vmem:[%s195] sm:$0xf]
      %v220 = vld [vmem:[%s195 + $0x4] sm:$0xf]
      %v221 = vld [vmem:[%s195 + $0x8] sm:$0xf]
      %v222 = vld [vmem:[%s195 + $0xc] sm:$0xf]
      %v223 = vld [vmem:[%s195 + $0x10] sm:$0xf]
      %v224 = vld [vmem:[%s195 + $0x14] sm:$0xf]
      %v225 = vld [vmem:[%s195 + $0x18] sm:$0xf]
      %v226 = vld [vmem:[%s195 + $0x1c] sm:$0xf]
      %v227 = vld [vmem:[%s195 + $0x20] sm:$0xf]
      %v228 = vld [vmem:[%s195 + $0x24] sm:$0xf]
      %v229 = vld [vmem:[%s195 + $0x28] sm:$0xf]
      %v230 = vld [vmem:[%s195 + $0x2c] sm:$0xf]
      %v231 = vld [vmem:[%s195 + $0x30] sm:$0xf]
      %v232 = vld [vmem:[%s195 + $0x34] sm:$0xf]
      %v233 = vld [vmem:[%s195 + $0x38] sm:$0xf]
      %v234 = vld [vmem:[%s195 + $0x3c] sm:$0xf]
      %v235 = vld [vmem:[%s195 + $0x40] sm:$0xf]
      %v236 = vld [vmem:[%s195 + $0x44] sm:$0xf]
      %v237 = vld [vmem:[%s195 + $0x48] sm:$0xf]
      %v238 = vld [vmem:[%s195 + $0x4c] sm:$0xf]
      %v239 = vld [vmem:[%s195 + $0x50] sm:$0xf]
      %v240 = vld [vmem:[%s195 + $0x54] sm:$0xf]
      %v241 = vld [vmem:[%s195 + $0x58] sm:$0xf]
      %v242 = vld [vmem:[%s195 + $0x5c] sm:$0xf]
      %v243 = vld [vmem:[%s195 + $0x60] sm:$0xf]
      %v244 = vld [vmem:[%s195 + $0x64] sm:$0xf]
      %v245 = vld [vmem:[%s195 + $0x68] sm:$0xf]
      %v246 = vld [vmem:[%s195 + $0x6c] sm:$0xf]
      %v247 = vld [vmem:[%s195 + $0x70] sm:$0xf]
      %v248 = vld [vmem:[%s195 + $0x74] sm:$0xf]
      %v249 = vld [vmem:[%s195 + $0x78] sm:$0xf]
      %v250 = vld [vmem:[%s195 + $0x7c] sm:$0xf]
      %v251 = vld [vmem:[%s195 + $0x80] sm:$0xf]
      %v252 = vld [vmem:[%s195 + $0x84] sm:$0xf]
      %v253 = vld [vmem:[%s195 + $0x88] sm:$0xf]
      %v254 = vld [vmem:[%s195 + $0x8c] sm:$0xf]
      %v255 = vld [vmem:[%s195 + $0x90] sm:$0xf]
      %v256 = vld [vmem:[%s195 + $0x94] sm:$0xf]
      %v257 = vld [vmem:[%s195 + $0x98] sm:$0xf]
      %v258 = vld [vmem:[%s195 + $0x9c] sm:$0xf]
      %v259 = vld [vmem:[%s195 + $0xa0] sm:$0xf]
      %v260 = vld [vmem:[%s195 + $0xa4] sm:$0xf]
      %v261 = vld [vmem:[%s195 + $0xa8] sm:$0xf]
      %v262 = vld [vmem:[%s195 + $0xac] sm:$0xf]
      %v263 = vld [vmem:[%s195 + $0xb0] sm:$0xf]
      %v264 = vld [vmem:[%s195 + $0xb4] sm:$0xf]
      %v265 = vld [vmem:[%s195 + $0xb8] sm:$0xf]
      %v266 = vld [vmem:[%s195 + $0xbc] sm:$0xf]
      %v267 = vld [vmem:[%s195 + $0xc0] sm:$0xf]
      %v268 = vld [vmem:[%s195 + $0xc4] sm:$0xf]
      %v269 = vld [vmem:[%s195 + $0xc8] sm:$0xf]
      %v270 = vld [vmem:[%s195 + $0xcc] sm:$0xf]
      %v271 = vld [vmem:[%s195 + $0xd0] sm:$0xf]
      %v272 = vld [vmem:[%s195 + $0xd4] sm:$0xf]
      %v273 = vld [vmem:[%s195 + $0xd8] sm:$0xf]
      %v274 = vld [vmem:[%s195 + $0xdc] sm:$0xf]
      %v275 = vld [vmem:[%s195 + $0xe0] sm:$0xf]
      %v276 = vld [vmem:[%s195 + $0xe4] sm:$0xf]
      %v277 = vld [vmem:[%s195 + $0xe8] sm:$0xf]
      %v278 = vld [vmem:[%s195 + $0xec] sm:$0xf]
      %v279 = vld [vmem:[%s195 + $0xf0] sm:$0xf]
      %v280 = vld [vmem:[%s195 + $0xf4] sm:$0xf]
      %v281 = vld [vmem:[%s195 + $0xf8] sm:$0xf]
      %v282 = vld [vmem:[%s195 + $0xfc] sm:$0xf]
      %v283 = vld [vmem:[%s195 + $0x100] sm:$0xf]
      %v284 = vld [vmem:[%s195 + $0x104] sm:$0xf]
      %v285 = vld [vmem:[%s195 + $0x108] sm:$0xf]
      %v286 = vld [vmem:[%s195 + $0x10c] sm:$0xf]
      %v287 = vld [vmem:[%s195 + $0x110] sm:$0xf]
      %v288 = vld [vmem:[%s195 + $0x114] sm:$0xf]
      %v289 = vld [vmem:[%s195 + $0x118] sm:$0xf]
      %v290 = vld [vmem:[%s195 + $0x11c] sm:$0xf]
      %v291 = vld [vmem:[%s195 + $0x120] sm:$0xf]
      %v292 = vld [vmem:[%s195 + $0x124] sm:$0xf]
      %v293 = vld [vmem:[%s195 + $0x128] sm:$0xf]
      %v294 = vld [vmem:[%s195 + $0x12c] sm:$0xf]
      %v295 = vld [vmem:[%s195 + $0x130] sm:$0xf]
      %v296 = vld [vmem:[%s195 + $0x134] sm:$0xf]
      %v297 = vld [vmem:[%s195 + $0x138] sm:$0xf]
      %v298 = vld [vmem:[%s195 + $0x13c] sm:$0xf]
      %v299 = vld [vmem:[%s195 + $0x140] sm:$0xf]
      %v300 = vld [vmem:[%s195 + $0x144] sm:$0xf]
      %v301 = vld [vmem:[%s195 + $0x148] sm:$0xf]
      %v302 = vld [vmem:[%s195 + $0x14c] sm:$0xf]
      %v303 = vld [vmem:[%s195 + $0x150] sm:$0xf]
      %v304 = vld [vmem:[%s195 + $0x154] sm:$0xf]
      %v305 = vld [vmem:[%s195 + $0x158] sm:$0xf]
      %v306 = vld [vmem:[%s195 + $0x15c] sm:$0xf]
      %v307 = vld [vmem:[%s195 + $0x160] sm:$0xf]
      %v308 = vld [vmem:[%s195 + $0x164] sm:$0xf]
      %v309 = vld [vmem:[%s195 + $0x168] sm:$0xf]
      %v310 = vld [vmem:[%s195 + $0x16c] sm:$0xf]
      %v311 = vld [vmem:[%s195 + $0x170] sm:$0xf]
      %v312 = vld [vmem:[%s195 + $0x174] sm:$0xf]
      %v313 = vld [vmem:[%s195 + $0x178] sm:$0xf]
      %v314 = vld [vmem:[%s195 + $0x17c] sm:$0xf]
      %v315 = vld [vmem:[%s195 + $0x180] sm:$0xf]
      %v316 = vld [vmem:[%s195 + $0x184] sm:$0xf]
      %v317 = vld [vmem:[%s195 + $0x188] sm:$0xf]
      %v318 = vld [vmem:[%s195 + $0x18c] sm:$0xf]
      %v319 = vld [vmem:[%s195 + $0x190] sm:$0xf]
      %v320 = vld [vmem:[%s195 + $0x194] sm:$0xf]
      %v321 = vld [vmem:[%s195 + $0x198] sm:$0xf]
      %v322 = vld [vmem:[%s195 + $0x19c] sm:$0xf]
      %v323 = vld [vmem:[%s195 + $0x1a0] sm:$0xf]
      %v324 = vld [vmem:[%s195 + $0x1a4] sm:$0xf]
      %v325 = vld [vmem:[%s195 + $0x1a8] sm:$0xf]
      %v326 = vld [vmem:[%s195 + $0x1ac] sm:$0xf]
      %v327 = vld [vmem:[%s195 + $0x1b0] sm:$0xf]
      %v328 = vld [vmem:[%s195 + $0x1b4] sm:$0xf]
      %v329 = vld [vmem:[%s195 + $0x1b8] sm:$0xf]
      %v330 = vld [vmem:[%s195 + $0x1bc] sm:$0xf]
      %v331 = vld [vmem:[%s195 + $0x1c0] sm:$0xf]
      %v332 = vld [vmem:[%s195 + $0x1c4] sm:$0xf]
      %v333 = vld [vmem:[%s195 + $0x1c8] sm:$0xf]
      %v334 = vld [vmem:[%s195 + $0x1cc] sm:$0xf]
      %v335 = vld [vmem:[%s195 + $0x1d0] sm:$0xf]
      %v336 = vld [vmem:[%s195 + $0x1d4] sm:$0xf]
      %v337 = vld [vmem:[%s195 + $0x1d8] sm:$0xf]
      %v338 = vld [vmem:[%s195 + $0x1dc] sm:$0xf]
      %v339 = vld [vmem:[%s195 + $0x1e0] sm:$0xf]
      %v340 = vld [vmem:[%s195 + $0x1e4] sm:$0xf]
      %v341 = vld [vmem:[%s195 + $0x1e8] sm:$0xf]
      %v342 = vld [vmem:[%s195 + $0x1ec] sm:$0xf]
      %v343 = vld [vmem:[%s195 + $0x1f0] sm:$0xf]
      %v344 = vld [vmem:[%s195 + $0x1f4] sm:$0xf]
      %v345 = vld [vmem:[%s195 + $0x1f8] sm:$0xf]
      %v346 = vld [vmem:[%s195 + $0x1fc] sm:$0xf]
      %v347 = vld [vmem:[%s195 + $0x200] sm:$0xf]
      %v348 = vld [vmem:[%s195 + $0x204] sm:$0xf]
      %v349 = vld [vmem:[%s195 + $0x208] sm:$0xf]
      %v350 = vld [vmem:[%s195 + $0x20c] sm:$0xf]
      %v351 = vld [vmem:[%s195 + $0x210] sm:$0xf]
      %v352 = vld [vmem:[%s195 + $0x214] sm:$0xf]
      %v353 = vld [vmem:[%s195 + $0x218] sm:$0xf]
      %v354 = vld [vmem:[%s195 + $0x21c] sm:$0xf]
      %v355 = vld [vmem:[%s195 + $0x220] sm:$0xf]
      %v356 = vld [vmem:[%s195 + $0x224] sm:$0xf]
      %v357 = vld [vmem:[%s195 + $0x228] sm:$0xf]
      %v358 = vld [vmem:[%s195 + $0x22c] sm:$0xf]
      %v359 = vld [vmem:[%s195 + $0x230] sm:$0xf]
      %v360 = vld [vmem:[%s195 + $0x234] sm:$0xf]
      %v361 = vld [vmem:[%s195 + $0x238] sm:$0xf]
      %v362 = vld [vmem:[%s195 + $0x23c] sm:$0xf]
      %v363 = vld [vmem:[%s195 + $0x240] sm:$0xf]
      %v364 = vld [vmem:[%s195 + $0x244] sm:$0xf]
      %v365 = vld [vmem:[%s195 + $0x248] sm:$0xf]
      %v366 = vld [vmem:[%s195 + $0x24c] sm:$0xf]
      %v367 = vld [vmem:[%s195 + $0x250] sm:$0xf]
      %v368 = vld [vmem:[%s195 + $0x254] sm:$0xf]
      %v369 = vld [vmem:[%s195 + $0x258] sm:$0xf]
      %v370 = vld [vmem:[%s195 + $0x25c] sm:$0xf]
      %v371 = vld [vmem:[%s195 + $0x260] sm:$0xf]
      %v372 = vld [vmem:[%s195 + $0x264] sm:$0xf]
      %v373 = vld [vmem:[%s195 + $0x268] sm:$0xf]
      %v374 = vld [vmem:[%s195 + $0x26c] sm:$0xf]
      %v375 = vld [vmem:[%s195 + $0x270] sm:$0xf]
      %v376 = vld [vmem:[%s195 + $0x274] sm:$0xf]
      %v377 = vld [vmem:[%s195 + $0x278] sm:$0xf]
      %v378 = vld [vmem:[%s195 + $0x27c] sm:$0xf]
      %v379 = vld [vmem:[%s195 + $0x280] sm:$0xf]
      %v380 = vld [vmem:[%s195 + $0x284] sm:$0xf]
      %v381 = vld [vmem:[%s195 + $0x288] sm:$0xf]
      %v382 = vld [vmem:[%s195 + $0x28c] sm:$0xf]
      %v383 = vld [vmem:[%s195 + $0x290] sm:$0xf]
      %v384 = vld [vmem:[%s195 + $0x294] sm:$0xf]
      %v385 = vld [vmem:[%s195 + $0x298] sm:$0xf]
      %v386 = vld [vmem:[%s195 + $0x29c] sm:$0xf]
      %v387 = vld [vmem:[%s195 + $0x2a0] sm:$0xf]
      %v388 = vld [vmem:[%s195 + $0x2a4] sm:$0xf]
      %v389 = vld [vmem:[%s195 + $0x2a8] sm:$0xf]
      %v390 = vld [vmem:[%s195 + $0x2ac] sm:$0xf]
      %v391 = vld [vmem:[%s195 + $0x2b0] sm:$0xf]
      %v392 = vld [vmem:[%s195 + $0x2b4] sm:$0xf]
      %v393 = vld [vmem:[%s195 + $0x2b8] sm:$0xf]
      %v394 = vld [vmem:[%s195 + $0x2bc] sm:$0xf]
      %v395 = vld [vmem:[%s195 + $0x2c0] sm:$0xf]
      %v396 = vld [vmem:[%s195 + $0x2c4] sm:$0xf]
      %v397 = vld [vmem:[%s195 + $0x2c8] sm:$0xf]
      %v398 = vld [vmem:[%s195 + $0x2cc] sm:$0xf]
      %v399 = vld [vmem:[%s195 + $0x2d0] sm:$0xf]
      %v400 = vld [vmem:[%s195 + $0x2d4] sm:$0xf]
      %v401 = vld [vmem:[%s195 + $0x2d8] sm:$0xf]
      %v402 = vld [vmem:[%s195 + $0x2dc] sm:$0xf]
      %v403 = vld [vmem:[%s195 + $0x2e0] sm:$0xf]
      %v404 = vld [vmem:[%s195 + $0x2e4] sm:$0xf]
      %v405 = vld [vmem:[%s195 + $0x2e8] sm:$0xf]
      %v406 = vld [vmem:[%s195 + $0x2ec] sm:$0xf]
      %v407 = vld [vmem:[%s195 + $0x2f0] sm:$0xf]
      %v408 = vld [vmem:[%s195 + $0x2f4] sm:$0xf]
      %v409 = vld [vmem:[%s195 + $0x2f8] sm:$0xf]
      %v410 = vld [vmem:[%s195 + $0x2fc] sm:$0xf]
      %v411 = vld [vmem:[%s195 + $0x300] sm:$0xf]
      %v412 = vld [vmem:[%s195 + $0x304] sm:$0xf]
      %v413 = vld [vmem:[%s195 + $0x308] sm:$0xf]
      %v414 = vld [vmem:[%s195 + $0x30c] sm:$0xf]
      %v415 = vld [vmem:[%s195 + $0x310] sm:$0xf]
      %v416 = vld [vmem:[%s195 + $0x314] sm:$0xf]
      %v417 = vld [vmem:[%s195 + $0x318] sm:$0xf]
      %v418 = vld [vmem:[%s195 + $0x31c] sm:$0xf]
      %v419 = vld [vmem:[%s195 + $0x320] sm:$0xf]
      %v420 = vld [vmem:[%s195 + $0x324] sm:$0xf]
      %v421 = vld [vmem:[%s195 + $0x328] sm:$0xf]
      %v422 = vld [vmem:[%s195 + $0x32c] sm:$0xf]
      %v423 = vld [vmem:[%s195 + $0x330] sm:$0xf]
      %v424 = vld [vmem:[%s195 + $0x334] sm:$0xf]
      %v425 = vld [vmem:[%s195 + $0x338] sm:$0xf]
      %v426 = vld [vmem:[%s195 + $0x33c] sm:$0xf]
      %v427 = vld [vmem:[%s195 + $0x340] sm:$0xf]
      %v428 = vld [vmem:[%s195 + $0x344] sm:$0xf]
      %v429 = vld [vmem:[%s195 + $0x348] sm:$0xf]
      %v430 = vld [vmem:[%s195 + $0x34c] sm:$0xf]
      %v431 = vld [vmem:[%s195 + $0x350] sm:$0xf]
      %v432 = vld [vmem:[%s195 + $0x354] sm:$0xf]
      %v433 = vld [vmem:[%s195 + $0x358] sm:$0xf]
      %v434 = vld [vmem:[%s195 + $0x35c] sm:$0xf]
      %v435 = vld [vmem:[%s195 + $0x360] sm:$0xf]
      %v436 = vld [vmem:[%s195 + $0x364] sm:$0xf]
      %v437 = vld [vmem:[%s195 + $0x368] sm:$0xf]
      %v438 = vld [vmem:[%s195 + $0x36c] sm:$0xf]
      %v439 = vld [vmem:[%s195 + $0x370] sm:$0xf]
      %v440 = vld [vmem:[%s195 + $0x374] sm:$0xf]
      %v441 = vld [vmem:[%s195 + $0x378] sm:$0xf]
      %v442 = vld [vmem:[%s195 + $0x37c] sm:$0xf]
      %v443 = vld [vmem:[%s195 + $0x380] sm:$0xf]
      %v444 = vld [vmem:[%s195 + $0x384] sm:$0xf]
      %v445 = vld [vmem:[%s195 + $0x388] sm:$0xf]
      %v446 = vld [vmem:[%s195 + $0x38c] sm:$0xf]
      %v447 = vld [vmem:[%s195 + $0x390] sm:$0xf]
      %v448 = vld [vmem:[%s195 + $0x394] sm:$0xf]
      %v449 = vld [vmem:[%s195 + $0x398] sm:$0xf]
      %v450 = vld [vmem:[%s195 + $0x39c] sm:$0xf]
      %v451 = vld [vmem:[%s195 + $0x3a0] sm:$0xf]
      %v452 = vld [vmem:[%s195 + $0x3a4] sm:$0xf]
      %v453 = vld [vmem:[%s195 + $0x3a8] sm:$0xf]
      %v454 = vld [vmem:[%s195 + $0x3ac] sm:$0xf]
      %v455 = vld [vmem:[%s195 + $0x3b0] sm:$0xf]
      %v456 = vld [vmem:[%s195 + $0x3b4] sm:$0xf]
      %v457 = vld [vmem:[%s195 + $0x3b8] sm:$0xf]
      %v458 = vld [vmem:[%s195 + $0x3bc] sm:$0xf]
      %v459 = vld [vmem:[%s195 + $0x3c0] sm:$0xf]
      %v460 = vld [vmem:[%s195 + $0x3c4] sm:$0xf]
      %v461 = vld [vmem:[%s195 + $0x3c8] sm:$0xf]
      %v462 = vld [vmem:[%s195 + $0x3cc] sm:$0xf]
      %v463 = vld [vmem:[%s195 + $0x3d0] sm:$0xf]
      %v464 = vld [vmem:[%s195 + $0x3d4] sm:$0xf]
      %v465 = vld [vmem:[%s195 + $0x3d8] sm:$0xf]
      %v466 = vld [vmem:[%s195 + $0x3dc] sm:$0xf]
      %v467 = vld [vmem:[%s195 + $0x3e0] sm:$0xf]
      %v468 = vld [vmem:[%s195 + $0x3e4] sm:$0xf]
      %v469 = vld [vmem:[%s195 + $0x3e8] sm:$0xf]
      %v470 = vld [vmem:[%s195 + $0x3ec] sm:$0xf]
      %v471 = vld [vmem:[%s195 + $0x3f0] sm:$0xf]
      %v472 = vld [vmem:[%s195 + $0x3f4] sm:$0xf]
      %v473 = vld [vmem:[%s195 + $0x3f8] sm:$0xf]
      %v474 = vld [vmem:[%s195 + $0x3fc] sm:$0xf]
      %v475 = vld [vmem:[%s195 + $0x400] sm:$0xf]
      %v476 = vld [vmem:[%s195 + $0x404] sm:$0xf]
      %v477 = vld [vmem:[%s195 + $0x408] sm:$0xf]
      %v478 = vld [vmem:[%s195 + $0x40c] sm:$0xf]
      %v479 = vld [vmem:[%s195 + $0x410] sm:$0xf]
      %v480 = vld [vmem:[%s195 + $0x414] sm:$0xf]
      %v481 = vld [vmem:[%s195 + $0x418] sm:$0xf]
      %v482 = vld [vmem:[%s195 + $0x41c] sm:$0xf]
      %v483 = vld [vmem:[%s195 + $0x420] sm:$0xf]
      %v484 = vld [vmem:[%s195 + $0x424] sm:$0xf]
      %v485 = vld [vmem:[%s195 + $0x428] sm:$0xf]
      %v486 = vld [vmem:[%s195 + $0x42c] sm:$0xf]
      %v487 = vld [vmem:[%s195 + $0x430] sm:$0xf]
      %v488 = vld [vmem:[%s195 + $0x434] sm:$0xf]
      %v489 = vld [vmem:[%s195 + $0x438] sm:$0xf]
      %v490 = vld [vmem:[%s195 + $0x43c] sm:$0xf]
      %v491 = vld [vmem:[%s195 + $0x440] sm:$0xf]
      %v492 = vld [vmem:[%s195 + $0x444] sm:$0xf]
      %v493 = vld [vmem:[%s195 + $0x448] sm:$0xf]
      %v494 = vld [vmem:[%s195 + $0x44c] sm:$0xf]
      %v495 = vld [vmem:[%s195 + $0x450] sm:$0xf]
      %v496 = vld [vmem:[%s195 + $0x454] sm:$0xf]
      %v497 = vld [vmem:[%s195 + $0x458] sm:$0xf]
      %v498 = vld [vmem:[%s195 + $0x45c] sm:$0xf]
      %v499 = vld [vmem:[%s195 + $0x460] sm:$0xf]
      %v500 = vld [vmem:[%s195 + $0x464] sm:$0xf]
      %v501 = vld [vmem:[%s195 + $0x468] sm:$0xf]
      %v502 = vld [vmem:[%s195 + $0x46c] sm:$0xf]
      %v503 = vld [vmem:[%s195 + $0x470] sm:$0xf]
      %v504 = vld [vmem:[%s195 + $0x474] sm:$0xf]
      %v505 = vld [vmem:[%s195 + $0x478] sm:$0xf]
      %v506 = vld [vmem:[%s195 + $0x47c] sm:$0xf]
      %v507 = vld [vmem:[%s195 + $0x480] sm:$0xf]
      %v508 = vld [vmem:[%s195 + $0x484] sm:$0xf]
      %v509 = vld [vmem:[%s195 + $0x488] sm:$0xf]
      %v510 = vld [vmem:[%s195 + $0x48c] sm:$0xf]
      %v511 = vld [vmem:[%s195 + $0x490] sm:$0xf]
      %v512 = vld [vmem:[%s195 + $0x494] sm:$0xf]
      %v513 = vld [vmem:[%s195 + $0x498] sm:$0xf]
      %v514 = vld [vmem:[%s195 + $0x49c] sm:$0xf]
      %v515 = vld [vmem:[%s195 + $0x4a0] sm:$0xf]
      %v516 = vld [vmem:[%s195 + $0x4a4] sm:$0xf]
      %v517 = vld [vmem:[%s195 + $0x4a8] sm:$0xf]
      %v518 = vld [vmem:[%s195 + $0x4ac] sm:$0xf]
      %v519 = vld [vmem:[%s195 + $0x4b0] sm:$0xf]
      %v520 = vld [vmem:[%s195 + $0x4b4] sm:$0xf]
      %v521 = vld [vmem:[%s195 + $0x4b8] sm:$0xf]
      %v522 = vld [vmem:[%s195 + $0x4bc] sm:$0xf]
      %v523 = vld [vmem:[%s195 + $0x4c0] sm:$0xf]
      %v524 = vld [vmem:[%s195 + $0x4c4] sm:$0xf]
      %v525 = vld [vmem:[%s195 + $0x4c8] sm:$0xf]
      %v526 = vld [vmem:[%s195 + $0x4cc] sm:$0xf]
      %v527 = vld [vmem:[%s195 + $0x4d0] sm:$0xf]
      %v528 = vld [vmem:[%s195 + $0x4d4] sm:$0xf]
      %v529 = vld [vmem:[%s195 + $0x4d8] sm:$0xf]
      %v530 = vld [vmem:[%s195 + $0x4dc] sm:$0xf]
      %v531 = vld [vmem:[%s195 + $0x4e0] sm:$0xf]
      %v532 = vld [vmem:[%s195 + $0x4e4] sm:$0xf]
      %v533 = vld [vmem:[%s195 + $0x4e8] sm:$0xf]
      %v534 = vld [vmem:[%s195 + $0x4ec] sm:$0xf]
      %v535 = vld [vmem:[%s195 + $0x4f0] sm:$0xf]
      %v536 = vld [vmem:[%s195 + $0x4f4] sm:$0xf]
      %v537 = vld [vmem:[%s195 + $0x4f8] sm:$0xf]
      %v538 = vld [vmem:[%s195 + $0x4fc] sm:$0xf]
      %v539 = vld [vmem:[%s195 + $0x500] sm:$0xf]
      %v540 = vld [vmem:[%s195 + $0x504] sm:$0xf]
      %v541 = vld [vmem:[%s195 + $0x508] sm:$0xf]
      %v542 = vld [vmem:[%s195 + $0x50c] sm:$0xf]
      %v543 = vld [vmem:[%s195 + $0x510] sm:$0xf]
      %v544 = vld [vmem:[%s195 + $0x514] sm:$0xf]
      %v545 = vld [vmem:[%s195 + $0x518] sm:$0xf]
      %v546 = vld [vmem:[%s195 + $0x51c] sm:$0xf]
      %v547 = vld [vmem:[%s195 + $0x520] sm:$0xf]
      %v548 = vld [vmem:[%s195 + $0x524] sm:$0xf]
      %v549 = vld [vmem:[%s195 + $0x528] sm:$0xf]
      %v550 = vld [vmem:[%s195 + $0x52c] sm:$0xf]
      %v551 = vld [vmem:[%s195 + $0x530] sm:$0xf]
      %v552 = vld [vmem:[%s195 + $0x534] sm:$0xf]
      %v553 = vld [vmem:[%s195 + $0x538] sm:$0xf]
      %v554 = vld [vmem:[%s195 + $0x53c] sm:$0xf]
      %v555 = vld [vmem:[%s195 + $0x540] sm:$0xf]
      %v556 = vld [vmem:[%s195 + $0x544] sm:$0xf]
      %v557 = vld [vmem:[%s195 + $0x548] sm:$0xf]
      %v558 = vld [vmem:[%s195 + $0x54c] sm:$0xf]
      %v559 = vld [vmem:[%s195 + $0x550] sm:$0xf]
      %v560 = vld [vmem:[%s195 + $0x554] sm:$0xf]
      %v561 = vld [vmem:[%s195 + $0x558] sm:$0xf]
      %v562 = vld [vmem:[%s195 + $0x55c] sm:$0xf]
      %v563 = vld [vmem:[%s195 + $0x560] sm:$0xf]
      %v564 = vld [vmem:[%s195 + $0x564] sm:$0xf]
      %v565 = vld [vmem:[%s195 + $0x568] sm:$0xf]
      %v566 = vld [vmem:[%s195 + $0x56c] sm:$0xf]
      %v567 = vld [vmem:[%s195 + $0x570] sm:$0xf]
      %v568 = vld [vmem:[%s195 + $0x574] sm:$0xf]
      %v569 = vld [vmem:[%s195 + $0x578] sm:$0xf]
      %v570 = vld [vmem:[%s195 + $0x57c] sm:$0xf]
      %v571 = vld [vmem:[%s195 + $0x580] sm:$0xf]
      %v572 = vld [vmem:[%s195 + $0x584] sm:$0xf]
      %v573 = vld [vmem:[%s195 + $0x588] sm:$0xf]
      %v574 = vld [vmem:[%s195 + $0x58c] sm:$0xf]
      %v575 = vld [vmem:[%s195 + $0x590] sm:$0xf]
      %v576 = vld [vmem:[%s195 + $0x594] sm:$0xf]
      %v577 = vld [vmem:[%s195 + $0x598] sm:$0xf]
      %v578 = vld [vmem:[%s195 + $0x59c] sm:$0xf]
      %v579 = vld [vmem:[%s195 + $0x5a0] sm:$0xf]
      %v580 = vld [vmem:[%s195 + $0x5a4] sm:$0xf]
      %v581 = vld [vmem:[%s195 + $0x5a8] sm:$0xf]
      %v582 = vld [vmem:[%s195 + $0x5ac] sm:$0xf]
      %v583 = vld [vmem:[%s195 + $0x5b0] sm:$0xf]
      %v584 = vld [vmem:[%s195 + $0x5b4] sm:$0xf]
      %v585 = vld [vmem:[%s195 + $0x5b8] sm:$0xf]
      %v586 = vld [vmem:[%s195 + $0x5bc] sm:$0xf]
      %v587 = vld [vmem:[%s195 + $0x5c0] sm:$0xf]
      %v588 = vld [vmem:[%s195 + $0x5c4] sm:$0xf]
      %v589 = vld [vmem:[%s195 + $0x5c8] sm:$0xf]
      %v590 = vld [vmem:[%s195 + $0x5cc] sm:$0xf]
      %v591 = vld [vmem:[%s195 + $0x5d0] sm:$0xf]
      %v592 = vld [vmem:[%s195 + $0x5d4] sm:$0xf]
      %v593 = vld [vmem:[%s195 + $0x5d8] sm:$0xf]
      %v594 = vld [vmem:[%s195 + $0x5dc] sm:$0xf]
      %v595 = vld [vmem:[%s195 + $0x5e0] sm:$0xf]
      %v596 = vld [vmem:[%s195 + $0x5e4] sm:$0xf]
      %v597 = vld [vmem:[%s195 + $0x5e8] sm:$0xf]
      %v598 = vld [vmem:[%s195 + $0x5ec] sm:$0xf]
      %v599 = vld [vmem:[%s195 + $0x5f0] sm:$0xf]
      %v600 = vld [vmem:[%s195 + $0x5f4] sm:$0xf]
      %v601 = vld [vmem:[%s195 + $0x5f8] sm:$0xf]
      %v602 = vld [vmem:[%s195 + $0x5fc] sm:$0xf]
      %v603 = vld [vmem:[%s195 + $0x600] sm:$0xf]
      %v604 = vld [vmem:[%s195 + $0x604] sm:$0xf]
      %v605 = vld [vmem:[%s195 + $0x608] sm:$0xf]
      %v606 = vld [vmem:[%s195 + $0x60c] sm:$0xf]
      %v607 = vld [vmem:[%s195 + $0x610] sm:$0xf]
      %v608 = vld [vmem:[%s195 + $0x614] sm:$0xf]
      %v609 = vld [vmem:[%s195 + $0x618] sm:$0xf]
      %v610 = vld [vmem:[%s195 + $0x61c] sm:$0xf]
      %v611 = vld [vmem:[%s195 + $0x620] sm:$0xf]
      %v612 = vld [vmem:[%s195 + $0x624] sm:$0xf]
      %v613 = vld [vmem:[%s195 + $0x628] sm:$0xf]
      %v614 = vld [vmem:[%s195 + $0x62c] sm:$0xf]
      %v615 = vld [vmem:[%s195 + $0x630] sm:$0xf]
      %v616 = vld [vmem:[%s195 + $0x634] sm:$0xf]
      %v617 = vld [vmem:[%s195 + $0x638] sm:$0xf]
      %v618 = vld [vmem:[%s195 + $0x63c] sm:$0xf]
      %v619 = vld [vmem:[%s195 + $0x640] sm:$0xf]
      %v620 = vld [vmem:[%s195 + $0x644] sm:$0xf]
      %v621 = vld [vmem:[%s195 + $0x648] sm:$0xf]
      %v622 = vld [vmem:[%s195 + $0x64c] sm:$0xf]
      %v623 = vld [vmem:[%s195 + $0x650] sm:$0xf]
      %v624 = vld [vmem:[%s195 + $0x654] sm:$0xf]
      %v625 = vld [vmem:[%s195 + $0x658] sm:$0xf]
      %v626 = vld [vmem:[%s195 + $0x65c] sm:$0xf]
      %v627 = vld [vmem:[%s195 + $0x660] sm:$0xf]
      %v628 = vld [vmem:[%s195 + $0x664] sm:$0xf]
      %v629 = vld [vmem:[%s195 + $0x668] sm:$0xf]
      %v630 = vld [vmem:[%s195 + $0x66c] sm:$0xf]
      %v631 = vld [vmem:[%s195 + $0x670] sm:$0xf]
      %v632 = vld [vmem:[%s195 + $0x674] sm:$0xf]
      %v633 = vld [vmem:[%s195 + $0x678] sm:$0xf]
      %v634 = vld [vmem:[%s195 + $0x67c] sm:$0xf]
      %v635 = vld [vmem:[%s195 + $0x680] sm:$0xf]
      %v636 = vld [vmem:[%s195 + $0x684] sm:$0xf]
      %v637 = vld [vmem:[%s195 + $0x688] sm:$0xf]
      %v638 = vld [vmem:[%s195 + $0x68c] sm:$0xf]
      %v639 = vld [vmem:[%s195 + $0x690] sm:$0xf]
      %v640 = vld [vmem:[%s195 + $0x694] sm:$0xf]
      %v641 = vld [vmem:[%s195 + $0x698] sm:$0xf]
      %v642 = vld [vmem:[%s195 + $0x69c] sm:$0xf]
      %v643 = vld [vmem:[%s195 + $0x6a0] sm:$0xf]
      %v644 = vld [vmem:[%s195 + $0x6a4] sm:$0xf]
      %v645 = vld [vmem:[%s195 + $0x6a8] sm:$0xf]
      %v646 = vld [vmem:[%s195 + $0x6ac] sm:$0xf]
      %v647 = vld [vmem:[%s195 + $0x6b0] sm:$0xf]
      %v648 = vld [vmem:[%s195 + $0x6b4] sm:$0xf]
      %v649 = vld [vmem:[%s195 + $0x6b8] sm:$0xf]
      %v650 = vld [vmem:[%s195 + $0x6bc] sm:$0xf]
      %v651 = vld [vmem:[%s195 + $0x6c0] sm:$0xf]
      %v652 = vld [vmem:[%s195 + $0x6c4] sm:$0xf]
      %v653 = vld [vmem:[%s195 + $0x6c8] sm:$0xf]
      %v654 = vld [vmem:[%s195 + $0x6cc] sm:$0xf]
      %v655 = vld [vmem:[%s195 + $0x6d0] sm:$0xf]
      %v656 = vld [vmem:[%s195 + $0x6d4] sm:$0xf]
      %v657 = vld [vmem:[%s195 + $0x6d8] sm:$0xf]
      %v658 = vld [vmem:[%s195 + $0x6dc] sm:$0xf]
      %v659 = vld [vmem:[%s195 + $0x6e0] sm:$0xf]
      %v660 = vld [vmem:[%s195 + $0x6e4] sm:$0xf]
      %v661 = vld [vmem:[%s195 + $0x6e8] sm:$0xf]
      %v662 = vld [vmem:[%s195 + $0x6ec] sm:$0xf]
      %v663 = vld [vmem:[%s195 + $0x6f0] sm:$0xf]
      %v664 = vld [vmem:[%s195 + $0x6f4] sm:$0xf]
      %v665 = vld [vmem:[%s195 + $0x6f8] sm:$0xf]
      %v666 = vld [vmem:[%s195 + $0x6fc] sm:$0xf]
      %v667 = vld [vmem:[%s195 + $0x700] sm:$0xf]
      %v668 = vld [vmem:[%s195 + $0x704] sm:$0xf]
      %v669 = vld [vmem:[%s195 + $0x708] sm:$0xf]
      %v670 = vld [vmem:[%s195 + $0x70c] sm:$0xf]
      %v671 = vld [vmem:[%s195 + $0x710] sm:$0xf]
      %v672 = vld [vmem:[%s195 + $0x714] sm:$0xf]
      %v673 = vld [vmem:[%s195 + $0x718] sm:$0xf]
      %v674 = vld [vmem:[%s195 + $0x71c] sm:$0xf]
      %v675 = vld [vmem:[%s195 + $0x720] sm:$0xf]
      %v676 = vld [vmem:[%s195 + $0x724] sm:$0xf]
      %v677 = vld [vmem:[%s195 + $0x728] sm:$0xf]
      %v678 = vld [vmem:[%s195 + $0x72c] sm:$0xf]
      %v679 = vld [vmem:[%s195 + $0x730] sm:$0xf]
      %v680 = vld [vmem:[%s195 + $0x734] sm:$0xf]
      %v681 = vld [vmem:[%s195 + $0x738] sm:$0xf]
      %v682 = vld [vmem:[%s195 + $0x73c] sm:$0xf]
      %v683 = vld [vmem:[%s195 + $0x740] sm:$0xf]
      %v684 = vld [vmem:[%s195 + $0x744] sm:$0xf]
      %v685 = vld [vmem:[%s195 + $0x748] sm:$0xf]
      %v686 = vld [vmem:[%s195 + $0x74c] sm:$0xf]
      %v687 = vld [vmem:[%s195 + $0x750] sm:$0xf]
      %v688 = vld [vmem:[%s195 + $0x754] sm:$0xf]
      %v689 = vld [vmem:[%s195 + $0x758] sm:$0xf]
      %v690 = vld [vmem:[%s195 + $0x75c] sm:$0xf]
      %v691 = vld [vmem:[%s195 + $0x760] sm:$0xf]
      %v692 = vld [vmem:[%s195 + $0x764] sm:$0xf]
      %v693 = vld [vmem:[%s195 + $0x768] sm:$0xf]
      %v694 = vld [vmem:[%s195 + $0x76c] sm:$0xf]
      %v695 = vld [vmem:[%s195 + $0x770] sm:$0xf]
      %v696 = vld [vmem:[%s195 + $0x774] sm:$0xf]
      %v697 = vld [vmem:[%s195 + $0x778] sm:$0xf]
      %v698 = vld [vmem:[%s195 + $0x77c] sm:$0xf]
      %v699 = vld [vmem:[%s195 + $0x780] sm:$0xf]
      %v700 = vld [vmem:[%s195 + $0x784] sm:$0xf]
      %v701 = vld [vmem:[%s195 + $0x788] sm:$0xf]
      %v702 = vld [vmem:[%s195 + $0x78c] sm:$0xf]
      %v703 = vld [vmem:[%s195 + $0x790] sm:$0xf]
      %v704 = vld [vmem:[%s195 + $0x794] sm:$0xf]
      %v705 = vld [vmem:[%s195 + $0x798] sm:$0xf]
      %v706 = vld [vmem:[%s195 + $0x79c] sm:$0xf]
      %v707 = vld [vmem:[%s195 + $0x7a0] sm:$0xf]
      %v708 = vld [vmem:[%s195 + $0x7a4] sm:$0xf]
      %v709 = vld [vmem:[%s195 + $0x7a8] sm:$0xf]
      %v710 = vld [vmem:[%s195 + $0x7ac] sm:$0xf]
      %v711 = vld [vmem:[%s195 + $0x7b0] sm:$0xf]
      %v712 = vld [vmem:[%s195 + $0x7b4] sm:$0xf]
      %v713 = vld [vmem:[%s195 + $0x7b8] sm:$0xf]
      %v714 = vld [vmem:[%s195 + $0x7bc] sm:$0xf]
      %v715 = vld [vmem:[%s195 + $0x7c0] sm:$0xf]
      %v716 = vld [vmem:[%s195 + $0x7c4] sm:$0xf]
      %v717 = vld [vmem:[%s195 + $0x7c8] sm:$0xf]
      %v718 = vld [vmem:[%s195 + $0x7cc] sm:$0xf]
      %v719 = vld [vmem:[%s195 + $0x7d0] sm:$0xf]
      %v720 = vld [vmem:[%s195 + $0x7d4] sm:$0xf]
      %v721 = vld [vmem:[%s195 + $0x7d8] sm:$0xf]
      %v722 = vld [vmem:[%s195 + $0x7dc] sm:$0xf]
      %v723 = vld [vmem:[%s195 + $0x7e0] sm:$0xf]
      %v724 = vld [vmem:[%s195 + $0x7e4] sm:$0xf]
      %v725 = vld [vmem:[%s195 + $0x7e8] sm:$0xf]
      %v726 = vld [vmem:[%s195 + $0x7ec] sm:$0xf]
      %v727 = vld [vmem:[%s195 + $0x7f0] sm:$0xf]
      %v728 = vld [vmem:[%s195 + $0x7f4] sm:$0xf]
      %v729 = vld [vmem:[%s195 + $0x7f8] sm:$0xf]
      %v730 = vld [vmem:[%s195 + $0x7fc] sm:$0xf]
      %v731 = vld [vmem:[%s195 + $0x800] sm:$0xf]
      %v732 = vld [vmem:[%s195 + $0x804] sm:$0xf]
      %v733 = vld [vmem:[%s195 + $0x808] sm:$0xf]
      %v734 = vld [vmem:[%s195 + $0x80c] sm:$0xf]
      %v735 = vld [vmem:[%s195 + $0x810] sm:$0xf]
      %v736 = vld [vmem:[%s195 + $0x814] sm:$0xf]
      %v737 = vld [vmem:[%s195 + $0x818] sm:$0xf]
      %v738 = vld [vmem:[%s195 + $0x81c] sm:$0xf]
      %v739 = vld [vmem:[%s195 + $0x820] sm:$0xf]
      %v740 = vld [vmem:[%s195 + $0x824] sm:$0xf]
      %v741 = vld [vmem:[%s195 + $0x828] sm:$0xf]
      %v742 = vld [vmem:[%s195 + $0x82c] sm:$0xf]
      %v743 = vld [vmem:[%s195 + $0x830] sm:$0xf]
      %v744 = vld [vmem:[%s195 + $0x834] sm:$0xf]
      %v745 = vld [vmem:[%s195 + $0x838] sm:$0xf]
      %v746 = vld [vmem:[%s195 + $0x83c] sm:$0xf]
      %v747 = vld [vmem:[%s195 + $0x840] sm:$0xf]
      %v748 = vld [vmem:[%s195 + $0x844] sm:$0xf]
      %v749 = vld [vmem:[%s195 + $0x848] sm:$0xf]
      %v750 = vld [vmem:[%s195 + $0x84c] sm:$0xf]
      %v751 = vld [vmem:[%s195 + $0x850] sm:$0xf]
      %v752 = vld [vmem:[%s195 + $0x854] sm:$0xf]
      %v753 = vld [vmem:[%s195 + $0x858] sm:$0xf]
      %v754 = vld [vmem:[%s195 + $0x85c] sm:$0xf]
      %v755 = vld [vmem:[%s195 + $0x860] sm:$0xf]
      %v756 = vld [vmem:[%s195 + $0x864] sm:$0xf]
      %v757 = vld [vmem:[%s195 + $0x868] sm:$0xf]
      %v758 = vld [vmem:[%s195 + $0x86c] sm:$0xf]
      %v759 = vld [vmem:[%s195 + $0x870] sm:$0xf]
      %v760 = vld [vmem:[%s195 + $0x874] sm:$0xf]
      %v761 = vld [vmem:[%s195 + $0x878] sm:$0xf]
      %v762 = vld [vmem:[%s195 + $0x87c] sm:$0xf]
      %v763 = vld [vmem:[%s195 + $0x880] sm:$0xf]
      %v764 = vld [vmem:[%s195 + $0x884] sm:$0xf]
      %v765 = vld [vmem:[%s195 + $0x888] sm:$0xf]
      %v766 = vld [vmem:[%s195 + $0x88c] sm:$0xf]
      %v767 = vld [vmem:[%s195 + $0x890] sm:$0xf]
      %v768 = vld [vmem:[%s195 + $0x894] sm:$0xf]
      %v769 = vld [vmem:[%s195 + $0x898] sm:$0xf]
      %v770 = vld [vmem:[%s195 + $0x89c] sm:$0xf]
      %v771 = vld [vmem:[%s195 + $0x8a0] sm:$0xf]
      %v772 = vld [vmem:[%s195 + $0x8a4] sm:$0xf]
      %v773 = vld [vmem:[%s195 + $0x8a8] sm:$0xf]
      %v774 = vld [vmem:[%s195 + $0x8ac] sm:$0xf]
      %v775 = vld [vmem:[%s195 + $0x8b0] sm:$0xf]
      %v776 = vld [vmem:[%s195 + $0x8b4] sm:$0xf]
      %v777 = vld [vmem:[%s195 + $0x8b8] sm:$0xf]
      %v778 = vld [vmem:[%s195 + $0x8bc] sm:$0xf]
      %v779 = vld [vmem:[%s195 + $0x8c0] sm:$0xf]
      %v780 = vld [vmem:[%s195 + $0x8c4] sm:$0xf]
      %v781 = vld [vmem:[%s195 + $0x8c8] sm:$0xf]
      %v782 = vld [vmem:[%s195 + $0x8cc] sm:$0xf]
      %v783 = vld [vmem:[%s195 + $0x8d0] sm:$0xf]
      %v784 = vld [vmem:[%s195 + $0x8d4] sm:$0xf]
      %v785 = vld [vmem:[%s195 + $0x8d8] sm:$0xf]
      %v786 = vld [vmem:[%s195 + $0x8dc] sm:$0xf]
      %v787 = vld [vmem:[%s195 + $0x8e0] sm:$0xf]
      %v788 = vld [vmem:[%s195 + $0x8e4] sm:$0xf]
      %v789 = vld [vmem:[%s195 + $0x8e8] sm:$0xf]
      %v790 = vld [vmem:[%s195 + $0x8ec] sm:$0xf]
      %v791 = vld [vmem:[%s195 + $0x8f0] sm:$0xf]
      %v792 = vld [vmem:[%s195 + $0x8f4] sm:$0xf]
      %v793 = vld [vmem:[%s195 + $0x8f8] sm:$0xf]
      %v794 = vld [vmem:[%s195 + $0x8fc] sm:$0xf]
      %v795 = vld [vmem:[%s195 + $0x900] sm:$0xf]
      %v796 = vld [vmem:[%s195 + $0x904] sm:$0xf]
      %v797 = vld [vmem:[%s195 + $0x908] sm:$0xf]
      %v798 = vld [vmem:[%s195 + $0x90c] sm:$0xf]
      %v799 = vld [vmem:[%s195 + $0x910] sm:$0xf]
      %v800 = vld [vmem:[%s195 + $0x914] sm:$0xf]
      %v801 = vld [vmem:[%s195 + $0x918] sm:$0xf]
      %v802 = vld [vmem:[%s195 + $0x91c] sm:$0xf]
      %v803 = vld [vmem:[%s195 + $0x920] sm:$0xf]
      %v804 = vld [vmem:[%s195 + $0x924] sm:$0xf]
      %v805 = vld [vmem:[%s195 + $0x928] sm:$0xf]
      %v806 = vld [vmem:[%s195 + $0x92c] sm:$0xf]
      %v807 = vld [vmem:[%s195 + $0x930] sm:$0xf]
      %v808 = vld [vmem:[%s195 + $0x934] sm:$0xf]
      %v809 = vld [vmem:[%s195 + $0x938] sm:$0xf]
      %v810 = vld [vmem:[%s195 + $0x93c] sm:$0xf]
      %v811 = vld [vmem:[%s195 + $0x940] sm:$0xf]
      %v812 = vld [vmem:[%s195 + $0x944] sm:$0xf]
      %v813 = vld [vmem:[%s195 + $0x948] sm:$0xf]
      %v814 = vld [vmem:[%s195 + $0x94c] sm:$0xf]
      %v815 = vld [vmem:[%s195 + $0x950] sm:$0xf]
      %v816 = vld [vmem:[%s195 + $0x954] sm:$0xf]
      %v817 = vld [vmem:[%s195 + $0x958] sm:$0xf]
      %v818 = vld [vmem:[%s195 + $0x95c] sm:$0xf]
      %v819 = vld [vmem:[%s195 + $0x960] sm:$0xf]
      %v820 = vld [vmem:[%s195 + $0x964] sm:$0xf]
      %v821 = vld [vmem:[%s195 + $0x968] sm:$0xf]
      %v822 = vld [vmem:[%s195 + $0x96c] sm:$0xf]
      %v823 = vld [vmem:[%s195 + $0x970] sm:$0xf]
      %v824 = vld [vmem:[%s195 + $0x974] sm:$0xf]
      %v825 = vld [vmem:[%s195 + $0x978] sm:$0xf]
      %v826 = vld [vmem:[%s195 + $0x97c] sm:$0xf]
      %v827 = vld [vmem:[%s195 + $0x980] sm:$0xf]
      %v828 = vld [vmem:[%s195 + $0x984] sm:$0xf]
      %v829 = vld [vmem:[%s195 + $0x988] sm:$0xf]
      %v830 = vld [vmem:[%s195 + $0x98c] sm:$0xf]
      %v831 = vld [vmem:[%s195 + $0x990] sm:$0xf]
      %v832 = vld [vmem:[%s195 + $0x994] sm:$0xf]
      %v833 = vld [vmem:[%s195 + $0x998] sm:$0xf]
      %v834 = vld [vmem:[%s195 + $0x99c] sm:$0xf]
      %v835 = vld [vmem:[%s195 + $0x9a0] sm:$0xf]
      %v836 = vld [vmem:[%s195 + $0x9a4] sm:$0xf]
      %v837 = vld [vmem:[%s195 + $0x9a8] sm:$0xf]
      %v838 = vld [vmem:[%s195 + $0x9ac] sm:$0xf]
      %v839 = vld [vmem:[%s195 + $0x9b0] sm:$0xf]
      %v840 = vld [vmem:[%s195 + $0x9b4] sm:$0xf]
      %v841 = vld [vmem:[%s195 + $0x9b8] sm:$0xf]
      %v842 = vld [vmem:[%s195 + $0x9bc] sm:$0xf]
      %v843 = vld [vmem:[%s195 + $0x9c0] sm:$0xf]
      %v844 = vld [vmem:[%s195 + $0x9c4] sm:$0xf]
      %v845 = vld [vmem:[%s195 + $0x9c8] sm:$0xf]
      %v846 = vld [vmem:[%s195 + $0x9cc] sm:$0xf]
      %v847 = vld [vmem:[%s195 + $0x9d0] sm:$0xf]
      %v848 = vld [vmem:[%s195 + $0x9d4] sm:$0xf]
      %v849 = vld [vmem:[%s195 + $0x9d8] sm:$0xf]
      %v850 = vld [vmem:[%s195 + $0x9dc] sm:$0xf]
      %v851 = vld [vmem:[%s195 + $0x9e0] sm:$0xf]
      %v852 = vld [vmem:[%s195 + $0x9e4] sm:$0xf]
      %v853 = vld [vmem:[%s195 + $0x9e8] sm:$0xf]
      %v854 = vld [vmem:[%s195 + $0x9ec] sm:$0xf]
      %v855 = vld [vmem:[%s195 + $0x9f0] sm:$0xf]
      %v856 = vld [vmem:[%s195 + $0x9f4] sm:$0xf]
      %v857 = vld [vmem:[%s195 + $0x9f8] sm:$0xf]
      %v858 = vld [vmem:[%s195 + $0x9fc] sm:$0xf]
      %v859 = vld [vmem:[%s195 + $0xa00] sm:$0xf]
      %v860 = vld [vmem:[%s195 + $0xa04] sm:$0xf]
      %v861 = vld [vmem:[%s195 + $0xa08] sm:$0xf]
      %v862 = vld [vmem:[%s195 + $0xa0c] sm:$0xf]
      %v863 = vld [vmem:[%s195 + $0xa10] sm:$0xf]
      %v864 = vld [vmem:[%s195 + $0xa14] sm:$0xf]
      %v865 = vld [vmem:[%s195 + $0xa18] sm:$0xf]
      %v866 = vld [vmem:[%s195 + $0xa1c] sm:$0xf]
      %v867 = vld [vmem:[%s195 + $0xa20] sm:$0xf]
      %v868 = vld [vmem:[%s195 + $0xa24] sm:$0xf]
      %v869 = vld [vmem:[%s195 + $0xa28] sm:$0xf]
      %v870 = vld [vmem:[%s195 + $0xa2c] sm:$0xf]
      %v871 = vld [vmem:[%s195 + $0xa30] sm:$0xf]
      %v872 = vld [vmem:[%s195 + $0xa34] sm:$0xf]
      %v873 = vld [vmem:[%s195 + $0xa38] sm:$0xf]
      %v874 = vld [vmem:[%s195 + $0xa3c] sm:$0xf]
      %v875 = vld [vmem:[%s195 + $0xa40] sm:$0xf]
      %v876 = vld [vmem:[%s195 + $0xa44] sm:$0xf]
      %v877 = vld [vmem:[%s195 + $0xa48] sm:$0xf]
      %v878 = vld [vmem:[%s195 + $0xa4c] sm:$0xf]
      %v879 = vld [vmem:[%s195 + $0xa50] sm:$0xf]
      %v880 = vld [vmem:[%s195 + $0xa54] sm:$0xf]
      %v881 = vld [vmem:[%s195 + $0xa58] sm:$0xf]
      %v882 = vld [vmem:[%s195 + $0xa5c] sm:$0xf]
      %v883 = vld [vmem:[%s195 + $0xa60] sm:$0xf]
      %v884 = vld [vmem:[%s195 + $0xa64] sm:$0xf]
      %v885 = vld [vmem:[%s195 + $0xa68] sm:$0xf]
      %v886 = vld [vmem:[%s195 + $0xa6c] sm:$0xf]
      %v887 = vld [vmem:[%s195 + $0xa70] sm:$0xf]
      %v888 = vld [vmem:[%s195 + $0xa74] sm:$0xf]
      %v889 = vld [vmem:[%s195 + $0xa78] sm:$0xf]
      %v890 = vld [vmem:[%s195 + $0xa7c] sm:$0xf]
      %v891 = vld [vmem:[%s195 + $0xa80] sm:$0xf]
      %v892 = vld [vmem:[%s195 + $0xa84] sm:$0xf]
      %v893 = vld [vmem:[%s195 + $0xa88] sm:$0xf]
      %v894 = vld [vmem:[%s195 + $0xa8c] sm:$0xf]
      %v895 = vld [vmem:[%s195 + $0xa90] sm:$0xf]
      %v896 = vld [vmem:[%s195 + $0xa94] sm:$0xf]
      %v897 = vld [vmem:[%s195 + $0xa98] sm:$0xf]
      %v898 = vld [vmem:[%s195 + $0xa9c] sm:$0xf]
      %v899 = vld [vmem:[%s195 + $0xaa0] sm:$0xf]
      %v900 = vld [vmem:[%s195 + $0xaa4] sm:$0xf]
      %v901 = vld [vmem:[%s195 + $0xaa8] sm:$0xf]
      %v902 = vld [vmem:[%s195 + $0xaac] sm:$0xf]
      %v903 = vld [vmem:[%s195 + $0xab0] sm:$0xf]
      %v904 = vld [vmem:[%s195 + $0xab4] sm:$0xf]
      %v905 = vld [vmem:[%s195 + $0xab8] sm:$0xf]
      %v906 = vld [vmem:[%s195 + $0xabc] sm:$0xf]
      %v907 = vld [vmem:[%s195 + $0xac0] sm:$0xf]
      %v908 = vld [vmem:[%s195 + $0xac4] sm:$0xf]
      %v909 = vld [vmem:[%s195 + $0xac8] sm:$0xf]
      %v910 = vld [vmem:[%s195 + $0xacc] sm:$0xf]
      %v911 = vld [vmem:[%s195 + $0xad0] sm:$0xf]
      %v912 = vld [vmem:[%s195 + $0xad4] sm:$0xf]
      %v913 = vld [vmem:[%s195 + $0xad8] sm:$0xf]
      %v914 = vld [vmem:[%s195 + $0xadc] sm:$0xf]
      %v915 = vld [vmem:[%s195 + $0xae0] sm:$0xf]
      %v916 = vld [vmem:[%s195 + $0xae4] sm:$0xf]
      %v917 = vld [vmem:[%s195 + $0xae8] sm:$0xf]
      %v918 = vld [vmem:[%s195 + $0xaec] sm:$0xf]
      %v919 = vld [vmem:[%s195 + $0xaf0] sm:$0xf]
      %v920 = vld [vmem:[%s195 + $0xaf4] sm:$0xf]
      %v921 = vld [vmem:[%s195 + $0xaf8] sm:$0xf]
      %v922 = vld [vmem:[%s195 + $0xafc] sm:$0xf]
      %v923 = vld [vmem:[%s195 + $0xb00] sm:$0xf]
      %v924 = vld [vmem:[%s195 + $0xb04] sm:$0xf]
      %v925 = vld [vmem:[%s195 + $0xb08] sm:$0xf]
      %v926 = vld [vmem:[%s195 + $0xb0c] sm:$0xf]
      %v927 = vld [vmem:[%s195 + $0xb10] sm:$0xf]
      %v928 = vld [vmem:[%s195 + $0xb14] sm:$0xf]
      %v929 = vld [vmem:[%s195 + $0xb18] sm:$0xf]
      %v930 = vld [vmem:[%s195 + $0xb1c] sm:$0xf]
      %v931 = vld [vmem:[%s195 + $0xb20] sm:$0xf]
      %v932 = vld [vmem:[%s195 + $0xb24] sm:$0xf]
      %v933 = vld [vmem:[%s195 + $0xb28] sm:$0xf]
      %v934 = vld [vmem:[%s195 + $0xb2c] sm:$0xf]
      %v935 = vld [vmem:[%s195 + $0xb30] sm:$0xf]
      %v936 = vld [vmem:[%s195 + $0xb34] sm:$0xf]
      %v937 = vld [vmem:[%s195 + $0xb38] sm:$0xf]
      %v938 = vld [vmem:[%s195 + $0xb3c] sm:$0xf]
      %v939 = vld [vmem:[%s195 + $0xb40] sm:$0xf]
      %v940 = vld [vmem:[%s195 + $0xb44] sm:$0xf]
      %v941 = vld [vmem:[%s195 + $0xb48] sm:$0xf]
      %v942 = vld [vmem:[%s195 + $0xb4c] sm:$0xf]
      %v943 = vld [vmem:[%s195 + $0xb50] sm:$0xf]
      %v944 = vld [vmem:[%s195 + $0xb54] sm:$0xf]
      %v945 = vld [vmem:[%s195 + $0xb58] sm:$0xf]
      %v946 = vld [vmem:[%s195 + $0xb5c] sm:$0xf]
      %v947 = vld [vmem:[%s195 + $0xb60] sm:$0xf]
      %v948 = vld [vmem:[%s195 + $0xb64] sm:$0xf]
      %v949 = vld [vmem:[%s195 + $0xb68] sm:$0xf]
      %v950 = vld [vmem:[%s195 + $0xb6c] sm:$0xf]
      %v951 = vld [vmem:[%s195 + $0xb70] sm:$0xf]
      %v952 = vld [vmem:[%s195 + $0xb74] sm:$0xf]
      %v953 = vld [vmem:[%s195 + $0xb78] sm:$0xf]
      %v954 = vld [vmem:[%s195 + $0xb7c] sm:$0xf]
      %v955 = vld [vmem:[%s195 + $0xb80] sm:$0xf]
      %v956 = vld [vmem:[%s195 + $0xb84] sm:$0xf]
      %v957 = vld [vmem:[%s195 + $0xb88] sm:$0xf]
      %v958 = vld [vmem:[%s195 + $0xb8c] sm:$0xf]
      %v959 = vld [vmem:[%s195 + $0xb90] sm:$0xf]
      %v960 = vld [vmem:[%s195 + $0xb94] sm:$0xf]
      %v961 = vld [vmem:[%s195 + $0xb98] sm:$0xf]
      %v962 = vld [vmem:[%s195 + $0xb9c] sm:$0xf]
      %v963 = vld [vmem:[%s195 + $0xba0] sm:$0xf]
      %v964 = vld [vmem:[%s195 + $0xba4] sm:$0xf]
      %v965 = vld [vmem:[%s195 + $0xba8] sm:$0xf]
      %v966 = vld [vmem:[%s195 + $0xbac] sm:$0xf]
      %v967 = vld [vmem:[%s195 + $0xbb0] sm:$0xf]
      %v968 = vld [vmem:[%s195 + $0xbb4] sm:$0xf]
      %v969 = vld [vmem:[%s195 + $0xbb8] sm:$0xf]
      %v970 = vld [vmem:[%s195 + $0xbbc] sm:$0xf]
      %v971 = vld [vmem:[%s195 + $0xbc0] sm:$0xf]
      %v972 = vld [vmem:[%s195 + $0xbc4] sm:$0xf]
      %v973 = vld [vmem:[%s195 + $0xbc8] sm:$0xf]
      %v974 = vld [vmem:[%s195 + $0xbcc] sm:$0xf]
      %v975 = vld [vmem:[%s195 + $0xbd0] sm:$0xf]
      %v976 = vld [vmem:[%s195 + $0xbd4] sm:$0xf]
      %v977 = vld [vmem:[%s195 + $0xbd8] sm:$0xf]
      %v978 = vld [vmem:[%s195 + $0xbdc] sm:$0xf]
      %v979 = vld [vmem:[%s195 + $0xbe0] sm:$0xf]
      %v980 = vld [vmem:[%s195 + $0xbe4] sm:$0xf]
      %v981 = vld [vmem:[%s195 + $0xbe8] sm:$0xf]
      %v982 = vld [vmem:[%s195 + $0xbec] sm:$0xf]
      %v983 = vld [vmem:[%s195 + $0xbf0] sm:$0xf]
      %v984 = vld [vmem:[%s195 + $0xbf4] sm:$0xf]
      %v985 = vld [vmem:[%s195 + $0xbf8] sm:$0xf]
      %v986 = vld [vmem:[%s195 + $0xbfc] sm:$0xf]
      %v987 = vld [vmem:[%s195 + $0xc00] sm:$0xf]
      %v988 = vld [vmem:[%s195 + $0xc04] sm:$0xf]
      %v989 = vld [vmem:[%s195 + $0xc08] sm:$0xf]
      %v990 = vld [vmem:[%s195 + $0xc0c] sm:$0xf]
      %v991 = vld [vmem:[%s195 + $0xc10] sm:$0xf]
      %v992 = vld [vmem:[%s195 + $0xc14] sm:$0xf]
      %v993 = vld [vmem:[%s195 + $0xc18] sm:$0xf]
      %v994 = vld [vmem:[%s195 + $0xc1c] sm:$0xf]
      %v995 = vld [vmem:[%s195 + $0xc20] sm:$0xf]
      %v996 = vld [vmem:[%s195 + $0xc24] sm:$0xf]
      %v997 = vld [vmem:[%s195 + $0xc28] sm:$0xf]
      %v998 = vld [vmem:[%s195 + $0xc2c] sm:$0xf]
      %v999 = vld [vmem:[%s195 + $0xc30] sm:$0xf]
      %v1000 = vld [vmem:[%s195 + $0xc34] sm:$0xf]
      %v1001 = vld [vmem:[%s195 + $0xc38] sm:$0xf]
      %v1002 = vld [vmem:[%s195 + $0xc3c] sm:$0xf]
      %v1003 = vld [vmem:[%s195 + $0xc40] sm:$0xf]
      %v1004 = vld [vmem:[%s195 + $0xc44] sm:$0xf]
      %v1005 = vld [vmem:[%s195 + $0xc48] sm:$0xf]
      %v1006 = vld [vmem:[%s195 + $0xc4c] sm:$0xf]
      %v1007 = vld [vmem:[%s195 + $0xc50] sm:$0xf]
      %v1008 = vld [vmem:[%s195 + $0xc54] sm:$0xf]
      %v1009 = vld [vmem:[%s195 + $0xc58] sm:$0xf]
      %v1010 = vld [vmem:[%s195 + $0xc5c] sm:$0xf]
      %v1011 = vld [vmem:[%s195 + $0xc60] sm:$0xf]
      %v1012 = vld [vmem:[%s195 + $0xc64] sm:$0xf]
      %v1013 = vld [vmem:[%s195 + $0xc68] sm:$0xf]
      %v1014 = vld [vmem:[%s195 + $0xc6c] sm:$0xf]
      %v1015 = vld [vmem:[%s195 + $0xc70] sm:$0xf]
      %v1016 = vld [vmem:[%s195 + $0xc74] sm:$0xf]
      %v1017 = vld [vmem:[%s195 + $0xc78] sm:$0xf]
      %v1018 = vld [vmem:[%s195 + $0xc7c] sm:$0xf]
      %v1019 = vld [vmem:[%s195 + $0xc80] sm:$0xf]
      %v1020 = vld [vmem:[%s195 + $0xc84] sm:$0xf]
      %v1021 = vld [vmem:[%s195 + $0xc88] sm:$0xf]
      %v1022 = vld [vmem:[%s195 + $0xc8c] sm:$0xf]
      %v1023 = vld [vmem:[%s195 + $0xc90] sm:$0xf]
      %v1024 = vld [vmem:[%s195 + $0xc94] sm:$0xf]
      %v1025 = vld [vmem:[%s195 + $0xc98] sm:$0xf]
      %v1026 = vld [vmem:[%s195 + $0xc9c] sm:$0xf]
      %v1027 = vld [vmem:[%s195 + $0xca0] sm:$0xf]
      %v1028 = vld [vmem:[%s195 + $0xca4] sm:$0xf]
      %v1029 = vld [vmem:[%s195 + $0xca8] sm:$0xf]
      %v1030 = vld [vmem:[%s195 + $0xcac] sm:$0xf]
      %v1031 = vld [vmem:[%s195 + $0xcb0] sm:$0xf]
      %v1032 = vld [vmem:[%s195 + $0xcb4] sm:$0xf]
      %v1033 = vld [vmem:[%s195 + $0xcb8] sm:$0xf]
      %v1034 = vld [vmem:[%s195 + $0xcbc] sm:$0xf]
      %v1035 = vld [vmem:[%s195 + $0xcc0] sm:$0xf]
      %v1036 = vld [vmem:[%s195 + $0xcc4] sm:$0xf]
      %v1037 = vld [vmem:[%s195 + $0xcc8] sm:$0xf]
      %v1038 = vld [vmem:[%s195 + $0xccc] sm:$0xf]
      %v1039 = vld [vmem:[%s195 + $0xcd0] sm:$0xf]
      %v1040 = vld [vmem:[%s195 + $0xcd4] sm:$0xf]
      %v1041 = vld [vmem:[%s195 + $0xcd8] sm:$0xf]
      %v1042 = vld [vmem:[%s195 + $0xcdc] sm:$0xf]
      %v1043 = vld [vmem:[%s195 + $0xce0] sm:$0xf]
      %v1044 = vld [vmem:[%s195 + $0xce4] sm:$0xf]
      %v1045 = vld [vmem:[%s195 + $0xce8] sm:$0xf]
      %v1046 = vld [vmem:[%s195 + $0xcec] sm:$0xf]
      %v1047 = vld [vmem:[%s195 + $0xcf0] sm:$0xf]
      %v1048 = vld [vmem:[%s195 + $0xcf4] sm:$0xf]
      %v1049 = vld [vmem:[%s195 + $0xcf8] sm:$0xf]
      %v1050 = vld [vmem:[%s195 + $0xcfc] sm:$0xf]
      %v1051 = vld [vmem:[%s195 + $0xd00] sm:$0xf]
      %v1052 = vld [vmem:[%s195 + $0xd04] sm:$0xf]
      %v1053 = vld [vmem:[%s195 + $0xd08] sm:$0xf]
      %v1054 = vld [vmem:[%s195 + $0xd0c] sm:$0xf]
      %v1055 = vld [vmem:[%s195 + $0xd10] sm:$0xf]
      %v1056 = vld [vmem:[%s195 + $0xd14] sm:$0xf]
      %v1057 = vld [vmem:[%s195 + $0xd18] sm:$0xf]
      %v1058 = vld [vmem:[%s195 + $0xd1c] sm:$0xf]
      %v1059 = vld [vmem:[%s195 + $0xd20] sm:$0xf]
      %v1060 = vld [vmem:[%s195 + $0xd24] sm:$0xf]
      %v1061 = vld [vmem:[%s195 + $0xd28] sm:$0xf]
      %v1062 = vld [vmem:[%s195 + $0xd2c] sm:$0xf]
      %v1063 = vld [vmem:[%s195 + $0xd30] sm:$0xf]
      %v1064 = vld [vmem:[%s195 + $0xd34] sm:$0xf]
      %v1065 = vld [vmem:[%s195 + $0xd38] sm:$0xf]
      %v1066 = vld [vmem:[%s195 + $0xd3c] sm:$0xf]
      %v1067 = vld [vmem:[%s195 + $0xd40] sm:$0xf]
      %v1068 = vld [vmem:[%s195 + $0xd44] sm:$0xf]
      %v1069 = vld [vmem:[%s195 + $0xd48] sm:$0xf]
      %v1070 = vld [vmem:[%s195 + $0xd4c] sm:$0xf]
      %v1071 = vld [vmem:[%s195 + $0xd50] sm:$0xf]
      %v1072 = vld [vmem:[%s195 + $0xd54] sm:$0xf]
      %v1073 = vld [vmem:[%s195 + $0xd58] sm:$0xf]
      %v1074 = vld [vmem:[%s195 + $0xd5c] sm:$0xf]
      %v1075 = vld [vmem:[%s195 + $0xd60] sm:$0xf]
      %v1076 = vld [vmem:[%s195 + $0xd64] sm:$0xf]
      %v1077 = vld [vmem:[%s195 + $0xd68] sm:$0xf]
      %v1078 = vld [vmem:[%s195 + $0xd6c] sm:$0xf]
      %v1079 = vld [vmem:[%s195 + $0xd70] sm:$0xf]
      %v1080 = vld [vmem:[%s195 + $0xd74] sm:$0xf]
      %v1081 = vld [vmem:[%s195 + $0xd78] sm:$0xf]
      %v1082 = vld [vmem:[%s195 + $0xd7c] sm:$0xf]
      %v1083 = vld [vmem:[%s195 + $0xd80] sm:$0xf]
      %v1084 = vld [vmem:[%s195 + $0xd84] sm:$0xf]
      %v1085 = vld [vmem:[%s195 + $0xd88] sm:$0xf]
      %v1086 = vld [vmem:[%s195 + $0xd8c] sm:$0xf]
      %v1087 = vld [vmem:[%s195 + $0xd90] sm:$0xf]
      %v1088 = vld [vmem:[%s195 + $0xd94] sm:$0xf]
      %v1089 = vld [vmem:[%s195 + $0xd98] sm:$0xf]
      %v1090 = vld [vmem:[%s195 + $0xd9c] sm:$0xf]
      %v1091 = vld [vmem:[%s195 + $0xda0] sm:$0xf]
      %v1092 = vld [vmem:[%s195 + $0xda4] sm:$0xf]
      %v1093 = vld [vmem:[%s195 + $0xda8] sm:$0xf]
      %v1094 = vld [vmem:[%s195 + $0xdac] sm:$0xf]
      %v1095 = vld [vmem:[%s195 + $0xdb0] sm:$0xf]
      %v1096 = vld [vmem:[%s195 + $0xdb4] sm:$0xf]
      %v1097 = vld [vmem:[%s195 + $0xdb8] sm:$0xf]
      %v1098 = vld [vmem:[%s195 + $0xdbc] sm:$0xf]
      %v1099 = vld [vmem:[%s195 + $0xdc0] sm:$0xf]
      %v1100 = vld [vmem:[%s195 + $0xdc4] sm:$0xf]
      %v1101 = vld [vmem:[%s195 + $0xdc8] sm:$0xf]
      %v1102 = vld [vmem:[%s195 + $0xdcc] sm:$0xf]
      %v1103 = vld [vmem:[%s195 + $0xdd0] sm:$0xf]
      %v1104 = vld [vmem:[%s195 + $0xdd4] sm:$0xf]
      %v1105 = vld [vmem:[%s195 + $0xdd8] sm:$0xf]
      %v1106 = vld [vmem:[%s195 + $0xddc] sm:$0xf]
      %v1107 = vld [vmem:[%s195 + $0xde0] sm:$0xf]
      %v1108 = vld [vmem:[%s195 + $0xde4] sm:$0xf]
      %v1109 = vld [vmem:[%s195 + $0xde8] sm:$0xf]
      %v1110 = vld [vmem:[%s195 + $0xdec] sm:$0xf]
      %v1111 = vld [vmem:[%s195 + $0xdf0] sm:$0xf]
      %v1112 = vld [vmem:[%s195 + $0xdf4] sm:$0xf]
      %v1113 = vld [vmem:[%s195 + $0xdf8] sm:$0xf]
      %v1114 = vld [vmem:[%s195 + $0xdfc] sm:$0xf]
      %v1115 = vld [vmem:[%s195 + $0xe00] sm:$0xf]
      %v1116 = vld [vmem:[%s195 + $0xe04] sm:$0xf]
      %v1117 = vld [vmem:[%s195 + $0xe08] sm:$0xf]
      %v1118 = vld [vmem:[%s195 + $0xe0c] sm:$0xf]
      %v1119 = vld [vmem:[%s195 + $0xe10] sm:$0xf]
      %v1120 = vld [vmem:[%s195 + $0xe14] sm:$0xf]
      %v1121 = vld [vmem:[%s195 + $0xe18] sm:$0xf]
      %v1122 = vld [vmem:[%s195 + $0xe1c] sm:$0xf]
      %v1123 = vld [vmem:[%s195 + $0xe20] sm:$0xf]
      %v1124 = vld [vmem:[%s195 + $0xe24] sm:$0xf]
      %v1125 = vld [vmem:[%s195 + $0xe28] sm:$0xf]
      %v1126 = vld [vmem:[%s195 + $0xe2c] sm:$0xf]
      %v1127 = vld [vmem:[%s195 + $0xe30] sm:$0xf]
      %v1128 = vld [vmem:[%s195 + $0xe34] sm:$0xf]
      %v1129 = vld [vmem:[%s195 + $0xe38] sm:$0xf]
      %v1130 = vld [vmem:[%s195 + $0xe3c] sm:$0xf]
      %v1131 = vld [vmem:[%s195 + $0xe40] sm:$0xf]
      %v1132 = vld [vmem:[%s195 + $0xe44] sm:$0xf]
      %v1133 = vld [vmem:[%s195 + $0xe48] sm:$0xf]
      %v1134 = vld [vmem:[%s195 + $0xe4c] sm:$0xf]
      %v1135 = vld [vmem:[%s195 + $0xe50] sm:$0xf]
      %v1136 = vld [vmem:[%s195 + $0xe54] sm:$0xf]
      %v1137 = vld [vmem:[%s195 + $0xe58] sm:$0xf]
      %v1138 = vld [vmem:[%s195 + $0xe5c] sm:$0xf]
      %v1139 = vld [vmem:[%s195 + $0xe60] sm:$0xf]
      %v1140 = vld [vmem:[%s195 + $0xe64] sm:$0xf]
      %v1141 = vld [vmem:[%s195 + $0xe68] sm:$0xf]
      %v1142 = vld [vmem:[%s195 + $0xe6c] sm:$0xf]
      %v1143 = vld [vmem:[%s195 + $0xe70] sm:$0xf]
      %v1144 = vld [vmem:[%s195 + $0xe74] sm:$0xf]
      %v1145 = vld [vmem:[%s195 + $0xe78] sm:$0xf]
      %v1146 = vld [vmem:[%s195 + $0xe7c] sm:$0xf]
      %v1147 = vld [vmem:[%s195 + $0xe80] sm:$0xf]
      %v1148 = vld [vmem:[%s195 + $0xe84] sm:$0xf]
      %v1149 = vld [vmem:[%s195 + $0xe88] sm:$0xf]
      %v1150 = vld [vmem:[%s195 + $0xe8c] sm:$0xf]
      %v1151 = vld [vmem:[%s195 + $0xe90] sm:$0xf]
      %v1152 = vld [vmem:[%s195 + $0xe94] sm:$0xf]
      %v1153 = vld [vmem:[%s195 + $0xe98] sm:$0xf]
      %v1154 = vld [vmem:[%s195 + $0xe9c] sm:$0xf]
      %v1155 = vld [vmem:[%s195 + $0xea0] sm:$0xf]
      %v1156 = vld [vmem:[%s195 + $0xea4] sm:$0xf]
      %v1157 = vld [vmem:[%s195 + $0xea8] sm:$0xf]
      %v1158 = vld [vmem:[%s195 + $0xeac] sm:$0xf]
      %v1159 = vld [vmem:[%s195 + $0xeb0] sm:$0xf]
      %v1160 = vld [vmem:[%s195 + $0xeb4] sm:$0xf]
      %v1161 = vld [vmem:[%s195 + $0xeb8] sm:$0xf]
      %v1162 = vld [vmem:[%s195 + $0xebc] sm:$0xf]
      %v1163 = vld [vmem:[%s195 + $0xec0] sm:$0xf]
      %v1164 = vld [vmem:[%s195 + $0xec4] sm:$0xf]
      %v1165 = vld [vmem:[%s195 + $0xec8] sm:$0xf]
      %v1166 = vld [vmem:[%s195 + $0xecc] sm:$0xf]
      %v1167 = vld [vmem:[%s195 + $0xed0] sm:$0xf]
      %v1168 = vld [vmem:[%s195 + $0xed4] sm:$0xf]
      %v1169 = vld [vmem:[%s195 + $0xed8] sm:$0xf]
      %v1170 = vld [vmem:[%s195 + $0xedc] sm:$0xf]
      %v1171 = vld [vmem:[%s195 + $0xee0] sm:$0xf]
      %v1172 = vld [vmem:[%s195 + $0xee4] sm:$0xf]
      %v1173 = vld [vmem:[%s195 + $0xee8] sm:$0xf]
      %v1174 = vld [vmem:[%s195 + $0xeec] sm:$0xf]
      %v1175 = vld [vmem:[%s195 + $0xef0] sm:$0xf]
      %v1176 = vld [vmem:[%s195 + $0xef4] sm:$0xf]
      %v1177 = vld [vmem:[%s195 + $0xef8] sm:$0xf]
      %v1178 = vld [vmem:[%s195 + $0xefc] sm:$0xf]
      %v1179 = vld [vmem:[%s195 + $0xf00] sm:$0xf]
      %v1180 = vld [vmem:[%s195 + $0xf04] sm:$0xf]
      %v1181 = vld [vmem:[%s195 + $0xf08] sm:$0xf]
      %v1182 = vld [vmem:[%s195 + $0xf0c] sm:$0xf]
      %v1183 = vld [vmem:[%s195 + $0xf10] sm:$0xf]
      %v1184 = vld [vmem:[%s195 + $0xf14] sm:$0xf]
      %v1185 = vld [vmem:[%s195 + $0xf18] sm:$0xf]
      %v1186 = vld [vmem:[%s195 + $0xf1c] sm:$0xf]
      %v1187 = vld [vmem:[%s195 + $0xf20] sm:$0xf]
      %v1188 = vld [vmem:[%s195 + $0xf24] sm:$0xf]
      %v1189 = vld [vmem:[%s195 + $0xf28] sm:$0xf]
      %v1190 = vld [vmem:[%s195 + $0xf2c] sm:$0xf]
      %v1191 = vld [vmem:[%s195 + $0xf30] sm:$0xf]
      %v1192 = vld [vmem:[%s195 + $0xf34] sm:$0xf]
      %v1193 = vld [vmem:[%s195 + $0xf38] sm:$0xf]
      %v1194 = vld [vmem:[%s195 + $0xf3c] sm:$0xf]
      %v1195 = vld [vmem:[%s195 + $0xf40] sm:$0xf]
      %v1196 = vld [vmem:[%s195 + $0xf44] sm:$0xf]
      %v1197 = vld [vmem:[%s195 + $0xf48] sm:$0xf]
      %v1198 = vld [vmem:[%s195 + $0xf4c] sm:$0xf]
      %v1199 = vld [vmem:[%s195 + $0xf50] sm:$0xf]
      %v1200 = vld [vmem:[%s195 + $0xf54] sm:$0xf]
      %v1201 = vld [vmem:[%s195 + $0xf58] sm:$0xf]
      %v1202 = vld [vmem:[%s195 + $0xf5c] sm:$0xf]
      %v1203 = vld [vmem:[%s195 + $0xf60] sm:$0xf]
      %v1204 = vld [vmem:[%s195 + $0xf64] sm:$0xf]
      %v1205 = vld [vmem:[%s195 + $0xf68] sm:$0xf]
      %v1206 = vld [vmem:[%s195 + $0xf6c] sm:$0xf]
      %v1207 = vld [vmem:[%s195 + $0xf70] sm:$0xf]
      %v1208 = vld [vmem:[%s195 + $0xf74] sm:$0xf]
      %v1209 = vld [vmem:[%s195 + $0xf78] sm:$0xf]
      %v1210 = vld [vmem:[%s195 + $0xf7c] sm:$0xf]
      %v1211 = vld [vmem:[%s195 + $0xf80] sm:$0xf]
      %v1212 = vld [vmem:[%s195 + $0xf84] sm:$0xf]
      %v1213 = vld [vmem:[%s195 + $0xf88] sm:$0xf]
      %v1214 = vld [vmem:[%s195 + $0xf8c] sm:$0xf]
      %v1215 = vld [vmem:[%s195 + $0xf90] sm:$0xf]
      %v1216 = vld [vmem:[%s195 + $0xf94] sm:$0xf]
      %v1217 = vld [vmem:[%s195 + $0xf98] sm:$0xf]
      %v1218 = vld [vmem:[%s195 + $0xf9c] sm:$0xf]
      %v1219 = vld [vmem:[%s195 + $0xfa0] sm:$0xf]
      %v1220 = vld [vmem:[%s195 + $0xfa4] sm:$0xf]
      %v1221 = vld [vmem:[%s195 + $0xfa8] sm:$0xf]
      %v1222 = vld [vmem:[%s195 + $0xfac] sm:$0xf]
      %v1223 = vld [vmem:[%s195 + $0xfb0] sm:$0xf]
      %v1224 = vld [vmem:[%s195 + $0xfb4] sm:$0xf]
      %v1225 = vld [vmem:[%s195 + $0xfb8] sm:$0xf]
      %v1226 = vld [vmem:[%s195 + $0xfbc] sm:$0xf]
      %v1227 = vld [vmem:[%s195 + $0xfc0] sm:$0xf]
      %v1228 = vld [vmem:[%s195 + $0xfc4] sm:$0xf]
      %v1229 = vld [vmem:[%s195 + $0xfc8] sm:$0xf]
      %v1230 = vld [vmem:[%s195 + $0xfcc] sm:$0xf]
      %v1231 = vld [vmem:[%s195 + $0xfd0] sm:$0xf]
      %v1232 = vld [vmem:[%s195 + $0xfd4] sm:$0xf]
      %v1233 = vld [vmem:[%s195 + $0xfd8] sm:$0xf]
      %v1234 = vld [vmem:[%s195 + $0xfdc] sm:$0xf]
      %v1235 = vld [vmem:[%s195 + $0xfe0] sm:$0xf]
      %v1236 = vld [vmem:[%s195 + $0xfe4] sm:$0xf]
      %v1237 = vld [vmem:[%s195 + $0xfe8] sm:$0xf]
      %v1238 = vld [vmem:[%s195 + $0xfec] sm:$0xf]
      %v1239 = vld [vmem:[%s195 + $0xff0] sm:$0xf]
      %v1240 = vld [vmem:[%s195 + $0xff4] sm:$0xf]
      %v1241 = vld [vmem:[%s195 + $0xff8] sm:$0xf]
      %v1242 = vld [vmem:[%s195 + $0xffc] sm:$0xf]
      %v1243 = vld [vmem:[%s195 + $0x1000] sm:$0xf]
      %v1244 = vld [vmem:[%s195 + $0x1004] sm:$0xf]
      %v1245 = vld [vmem:[%s195 + $0x1008] sm:$0xf]
      %v1246 = vld [vmem:[%s195 + $0x100c] sm:$0xf]
      %v1247 = vld [vmem:[%s195 + $0x1010] sm:$0xf]
      %v1248 = vld [vmem:[%s195 + $0x1014] sm:$0xf]
      %v1249 = vld [vmem:[%s195 + $0x1018] sm:$0xf]
      %v1250 = vld [vmem:[%s195 + $0x101c] sm:$0xf]
      %v1251 = vld [vmem:[%s195 + $0x1020] sm:$0xf]
      %v1252 = vld [vmem:[%s195 + $0x1024] sm:$0xf]
      %v1253 = vld [vmem:[%s195 + $0x1028] sm:$0xf]
      %v1254 = vld [vmem:[%s195 + $0x102c] sm:$0xf]
      %v1255 = vld [vmem:[%s195 + $0x1030] sm:$0xf]
      %v1256 = vld [vmem:[%s195 + $0x1034] sm:$0xf]
      %v1257 = vld [vmem:[%s195 + $0x1038] sm:$0xf]
      %v1258 = vld [vmem:[%s195 + $0x103c] sm:$0xf]
      %v1259 = vld [vmem:[%s195 + $0x1040] sm:$0xf]
      %v1260 = vld [vmem:[%s195 + $0x1044] sm:$0xf]
      %v1261 = vld [vmem:[%s195 + $0x1048] sm:$0xf]
      %v1262 = vld [vmem:[%s195 + $0x104c] sm:$0xf]
      %v1263 = vld [vmem:[%s195 + $0x1050] sm:$0xf]
      %v1264 = vld [vmem:[%s195 + $0x1054] sm:$0xf]
      %v1265 = vld [vmem:[%s195 + $0x1058] sm:$0xf]
      %v1266 = vld [vmem:[%s195 + $0x105c] sm:$0xf]
      %v1267 = vld [vmem:[%s195 + $0x1060] sm:$0xf]
      %v1268 = vld [vmem:[%s195 + $0x1064] sm:$0xf]
      %v1269 = vld [vmem:[%s195 + $0x1068] sm:$0xf]
      %v1270 = vld [vmem:[%s195 + $0x106c] sm:$0xf]
      %v1271 = vld [vmem:[%s195 + $0x1070] sm:$0xf]
      %v1272 = vld [vmem:[%s195 + $0x1074] sm:$0xf]
      %v1273 = vld [vmem:[%s195 + $0x1078] sm:$0xf]
      %v1274 = vld [vmem:[%s195 + $0x107c] sm:$0xf]
      %v1275 = vld [vmem:[%s195 + $0x1080] sm:$0xf]
      %v1276 = vld [vmem:[%s195 + $0x1084] sm:$0xf]
      %v1277 = vld [vmem:[%s195 + $0x1088] sm:$0xf]
      %v1278 = vld [vmem:[%s195 + $0x108c] sm:$0xf]
      %v1279 = vld [vmem:[%s195 + $0x1090] sm:$0xf]
      %v1280 = vld [vmem:[%s195 + $0x1094] sm:$0xf]
      %v1281 = vld [vmem:[%s195 + $0x1098] sm:$0xf]
      %v1282 = vld [vmem:[%s195 + $0x109c] sm:$0xf]
      %v1283 = vld [vmem:[%s195 + $0x10a0] sm:$0xf]
      %v1284 = vld [vmem:[%s195 + $0x10a4] sm:$0xf]
      %v1285 = vld [vmem:[%s195 + $0x10a8] sm:$0xf]
      %v1286 = vld [vmem:[%s195 + $0x10ac] sm:$0xf]
      %v1287 = vld [vmem:[%s195 + $0x10b0] sm:$0xf]
      %v1288 = vld [vmem:[%s195 + $0x10b4] sm:$0xf]
      %v1289 = vld [vmem:[%s195 + $0x10b8] sm:$0xf]
      %v1290 = vld [vmem:[%s195 + $0x10bc] sm:$0xf]
      %v1291 = vld [vmem:[%s195 + $0x10c0] sm:$0xf]
      %v1292 = vld [vmem:[%s195 + $0x10c4] sm:$0xf]
      %v1293 = vld [vmem:[%s195 + $0x10c8] sm:$0xf]
      %v1294 = vld [vmem:[%s195 + $0x10cc] sm:$0xf]
      %v1295 = vld [vmem:[%s195 + $0x10d0] sm:$0xf]
      %v1296 = vld [vmem:[%s195 + $0x10d4] sm:$0xf]
      %v1297 = vld [vmem:[%s195 + $0x10d8] sm:$0xf]
      %v1298 = vld [vmem:[%s195 + $0x10dc] sm:$0xf]
      %v1299 = vld [vmem:[%s195 + $0x10e0] sm:$0xf]
      %v1300 = vld [vmem:[%s195 + $0x10e4] sm:$0xf]
      %v1301 = vld [vmem:[%s195 + $0x10e8] sm:$0xf]
      %v1302 = vld [vmem:[%s195 + $0x10ec] sm:$0xf]
      %v1303 = vld [vmem:[%s195 + $0x10f0] sm:$0xf]
      %v1304 = vld [vmem:[%s195 + $0x10f4] sm:$0xf]
      %v1305 = vld [vmem:[%s195 + $0x10f8] sm:$0xf]
      %v1306 = vld [vmem:[%s195 + $0x10fc] sm:$0xf]
      %v1307 = vld [vmem:[%s195 + $0x1100] sm:$0xf]
      %v1308 = vld [vmem:[%s195 + $0x1104] sm:$0xf]
      %v1309 = vld [vmem:[%s195 + $0x1108] sm:$0xf]
      %v1310 = vld [vmem:[%s195 + $0x110c] sm:$0xf]
      %v1311 = vld [vmem:[%s195 + $0x1110] sm:$0xf]
      %v1312 = vld [vmem:[%s195 + $0x1114] sm:$0xf]
      %v1313 = vld [vmem:[%s195 + $0x1118] sm:$0xf]
      %v1314 = vld [vmem:[%s195 + $0x111c] sm:$0xf]
      %v1315 = vld [vmem:[%s195 + $0x1120] sm:$0xf]
      %v1316 = vld [vmem:[%s195 + $0x1124] sm:$0xf]
      %v1317 = vld [vmem:[%s195 + $0x1128] sm:$0xf]
      %v1318 = vld [vmem:[%s195 + $0x112c] sm:$0xf]
      %v1319 = vld [vmem:[%s195 + $0x1130] sm:$0xf]
      %v1320 = vld [vmem:[%s195 + $0x1134] sm:$0xf]
      %v1321 = vld [vmem:[%s195 + $0x1138] sm:$0xf]
      %v1322 = vld [vmem:[%s195 + $0x113c] sm:$0xf]
      %v1323 = vld [vmem:[%s195 + $0x1140] sm:$0xf]
      %v1324 = vld [vmem:[%s195 + $0x1144] sm:$0xf]
      %v1325 = vld [vmem:[%s195 + $0x1148] sm:$0xf]
      %v1326 = vld [vmem:[%s195 + $0x114c] sm:$0xf]
      %v1327 = vld [vmem:[%s195 + $0x1150] sm:$0xf]
      %v1328 = vld [vmem:[%s195 + $0x1154] sm:$0xf]
      %v1329 = vld [vmem:[%s195 + $0x1158] sm:$0xf]
      %v1330 = vld [vmem:[%s195 + $0x115c] sm:$0xf]
      %v1331 = vld [vmem:[%s195 + $0x1160] sm:$0xf]
      %v1332 = vld [vmem:[%s195 + $0x1164] sm:$0xf]
      %v1333 = vld [vmem:[%s195 + $0x1168] sm:$0xf]
      %v1334 = vld [vmem:[%s195 + $0x116c] sm:$0xf]
      %v1335 = vld [vmem:[%s195 + $0x1170] sm:$0xf]
      %v1336 = vld [vmem:[%s195 + $0x1174] sm:$0xf]
      %v1337 = vld [vmem:[%s195 + $0x1178] sm:$0xf]
      %v1338 = vld [vmem:[%s195 + $0x117c] sm:$0xf]
      %v1339 = vld [vmem:[%s195 + $0x1180] sm:$0xf]
      %v1340 = vld [vmem:[%s195 + $0x1184] sm:$0xf]
      %v1341 = vld [vmem:[%s195 + $0x1188] sm:$0xf]
      %v1342 = vld [vmem:[%s195 + $0x118c] sm:$0xf]
      %v1343 = vld [vmem:[%s195 + $0x1190] sm:$0xf]
      %v1344 = vld [vmem:[%s195 + $0x1194] sm:$0xf]
      %v1345 = vld [vmem:[%s195 + $0x1198] sm:$0xf]
      %v1346 = vld [vmem:[%s195 + $0x119c] sm:$0xf]
      %v1347 = vld [vmem:[%s195 + $0x11a0] sm:$0xf]
      %v1348 = vld [vmem:[%s195 + $0x11a4] sm:$0xf]
      %v1349 = vld [vmem:[%s195 + $0x11a8] sm:$0xf]
      %v1350 = vld [vmem:[%s195 + $0x11ac] sm:$0xf]
      %v1351 = vld [vmem:[%s195 + $0x11b0] sm:$0xf]
      %v1352 = vld [vmem:[%s195 + $0x11b4] sm:$0xf]
      %v1353 = vld [vmem:[%s195 + $0x11b8] sm:$0xf]
      %v1354 = vld [vmem:[%s195 + $0x11bc] sm:$0xf]
      %v1355 = vld [vmem:[%s195 + $0x11c0] sm:$0xf]
      %v1356 = vld [vmem:[%s195 + $0x11c4] sm:$0xf]
      %v1357 = vld [vmem:[%s195 + $0x11c8] sm:$0xf]
      %v1358 = vld [vmem:[%s195 + $0x11cc] sm:$0xf]
      %v1359 = vld [vmem:[%s195 + $0x11d0] sm:$0xf]
      %v1360 = vld [vmem:[%s195 + $0x11d4] sm:$0xf]
      %v1361 = vld [vmem:[%s195 + $0x11d8] sm:$0xf]
      %v1362 = vld [vmem:[%s195 + $0x11dc] sm:$0xf]
      %v1363 = vld [vmem:[%s195 + $0x11e0] sm:$0xf]
      %v1364 = vld [vmem:[%s195 + $0x11e4] sm:$0xf]
      %v1365 = vld [vmem:[%s195 + $0x11e8] sm:$0xf]
      %v1366 = vld [vmem:[%s195 + $0x11ec] sm:$0xf]
      %v1367 = vld [vmem:[%s195 + $0x11f0] sm:$0xf]
      %v1368 = vld [vmem:[%s195 + $0x11f4] sm:$0xf]
      %v1369 = vld [vmem:[%s195 + $0x11f8] sm:$0xf]
      %v1370 = vld [vmem:[%s195 + $0x11fc] sm:$0xf]
      %v1371 = vld [vmem:[%s195 + $0x1200] sm:$0xf]
      %v1372 = vld [vmem:[%s195 + $0x1204] sm:$0xf]
      %v1373 = vld [vmem:[%s195 + $0x1208] sm:$0xf]
      %v1374 = vld [vmem:[%s195 + $0x120c] sm:$0xf]
      %v1375 = vld [vmem:[%s195 + $0x1210] sm:$0xf]
      %v1376 = vld [vmem:[%s195 + $0x1214] sm:$0xf]
      %v1377 = vld [vmem:[%s195 + $0x1218] sm:$0xf]
      %v1378 = vld [vmem:[%s195 + $0x121c] sm:$0xf]
      %v1379 = vld [vmem:[%s195 + $0x1220] sm:$0xf]
      %v1380 = vld [vmem:[%s195 + $0x1224] sm:$0xf]
      %v1381 = vld [vmem:[%s195 + $0x1228] sm:$0xf]
      %v1382 = vld [vmem:[%s195 + $0x122c] sm:$0xf]
      %v1383 = vld [vmem:[%s195 + $0x1230] sm:$0xf]
      %v1384 = vld [vmem:[%s195 + $0x1234] sm:$0xf]
      %v1385 = vld [vmem:[%s195 + $0x1238] sm:$0xf]
      %v1386 = vld [vmem:[%s195 + $0x123c] sm:$0xf]
      %v1387 = vld [vmem:[%s195 + $0x1240] sm:$0xf]
      %v1388 = vld [vmem:[%s195 + $0x1244] sm:$0xf]
      %v1389 = vld [vmem:[%s195 + $0x1248] sm:$0xf]
      %v1390 = vld [vmem:[%s195 + $0x124c] sm:$0xf]
      %v1391 = vld [vmem:[%s195 + $0x1250] sm:$0xf]
      %v1392 = vld [vmem:[%s195 + $0x1254] sm:$0xf]
      %v1393 = vld [vmem:[%s195 + $0x1258] sm:$0xf]
      %v1394 = vld [vmem:[%s195 + $0x125c] sm:$0xf]
      %v1395 = vld [vmem:[%s195 + $0x1260] sm:$0xf]
      %v1396 = vld [vmem:[%s195 + $0x1264] sm:$0xf]
      %v1397 = vld [vmem:[%s195 + $0x1268] sm:$0xf]
      %v1398 = vld [vmem:[%s195 + $0x126c] sm:$0xf]
      %v1399 = vld [vmem:[%s195 + $0x1270] sm:$0xf]
      %v1400 = vld [vmem:[%s195 + $0x1274] sm:$0xf]
      %v1401 = vld [vmem:[%s195 + $0x1278] sm:$0xf]
      %v1402 = vld [vmem:[%s195 + $0x127c] sm:$0xf]
      %v1403 = vld [vmem:[%s195 + $0x1280] sm:$0xf]
      %v1404 = vld [vmem:[%s195 + $0x1284] sm:$0xf]
      %v1405 = vld [vmem:[%s195 + $0x1288] sm:$0xf]
      %v1406 = vld [vmem:[%s195 + $0x128c] sm:$0xf]
      %v1407 = vld [vmem:[%s195 + $0x1290] sm:$0xf]
      %v1408 = vld [vmem:[%s195 + $0x1294] sm:$0xf]
      %v1409 = vld [vmem:[%s195 + $0x1298] sm:$0xf]
      %v1410 = vld [vmem:[%s195 + $0x129c] sm:$0xf]
      %v1411 = vld [vmem:[%s195 + $0x12a0] sm:$0xf]
      %v1412 = vld [vmem:[%s195 + $0x12a4] sm:$0xf]
      %v1413 = vld [vmem:[%s195 + $0x12a8] sm:$0xf]
      %v1414 = vld [vmem:[%s195 + $0x12ac] sm:$0xf]
      %v1415 = vld [vmem:[%s195 + $0x12b0] sm:$0xf]
      %v1416 = vld [vmem:[%s195 + $0x12b4] sm:$0xf]
      %v1417 = vld [vmem:[%s195 + $0x12b8] sm:$0xf]
      %v1418 = vld [vmem:[%s195 + $0x12bc] sm:$0xf]
      %1420 = vst [vmem:[#allocation1] ss:$9 sm:$0xff] %v209
      %v1421 = vld [vmem:[#allocation1] sm:$0xff]
      %v1422 = vld [vmem:[#allocation1 + $0x9] sm:$0xff]
      %v1423 = vld [vmem:[#allocation1 + $0x12] sm:$0xff]
      %v1424 = vld [vmem:[#allocation1 + $0x1b] sm:$0xff]
      %v1425 = vld [vmem:[#allocation1 + $0x24] sm:$0xff]
      %v1426 = vld [vmem:[#allocation1 + $0x2d] sm:$0xff]
      %v1427 = vld [vmem:[#allocation1 + $0x36] sm:$0xff]
      %v1428 = vld [vmem:[#allocation1 + $0x3f] sm:$0xff]
      %1430 = vst [vmem:[#allocation1] ss:$9 sm:$0xff] %v210
      %v1431 = vld [vmem:[#allocation1] sm:$0xff]
      %v1432 = vld [vmem:[#allocation1 + $0x9] sm:$0xff]
      %v1433 = vld [vmem:[#allocation1 + $0x12] sm:$0xff]
      %v1434 = vld [vmem:[#allocation1 + $0x1b] sm:$0xff]
      %v1435 = vld [vmem:[#allocation1 + $0x24] sm:$0xff]
      %v1436 = vld [vmem:[#allocation1 + $0x2d] sm:$0xff]
      %v1437 = vld [vmem:[#allocation1 + $0x36] sm:$0xff]
      %v1438 = vld [vmem:[#allocation1 + $0x3f] sm:$0xff]
      %1440 = vst [vmem:[#allocation1] ss:$9 sm:$0xff] %v211
      %v1441 = vld [vmem:[#allocation1] sm:$0xff]
      %v1442 = vld [vmem:[#allocation1 + $0x9] sm:$0xff]
      %v1443 = vld [vmem:[#allocation1 + $0x12] sm:$0xff]
      %v1444 = vld [vmem:[#allocation1 + $0x1b] sm:$0xff]
      %v1445 = vld [vmem:[#allocation1 + $0x24] sm:$0xff]
      %v1446 = vld [vmem:[#allocation1 + $0x2d] sm:$0xff]
      %v1447 = vld [vmem:[#allocation1 + $0x36] sm:$0xff]
      %v1448 = vld [vmem:[#allocation1 + $0x3f] sm:$0xff]
      %1450 = vst [vmem:[#allocation1] ss:$9 sm:$0xff] %v212
      %v1451 = vld [vmem:[#allocation1] sm:$0xff]
      %v1452 = vld [vmem:[#allocation1 + $0x9] sm:$0xff]
      %v1453 = vld [vmem:[#allocation1 + $0x12] sm:$0xff]
      %v1454 = vld [vmem:[#allocation1 + $0x1b] sm:$0xff]
      %v1455 = vld [vmem:[#allocation1 + $0x24] sm:$0xff]
      %v1456 = vld [vmem:[#allocation1 + $0x2d] sm:$0xff]
      %v1457 = vld [vmem:[#allocation1 + $0x36] sm:$0xff]
      %v1458 = vld [vmem:[#allocation1 + $0x3f] sm:$0xff]
      %1460 = vst [vmem:[#allocation1] ss:$9 sm:$0xff] %v213
      %v1461 = vld [vmem:[#allocation1] sm:$0xff]
      %v1462 = vld [vmem:[#allocation1 + $0x9] sm:$0xff]
      %v1463 = vld [vmem:[#allocation1 + $0x12] sm:$0xff]
      %v1464 = vld [vmem:[#allocation1 + $0x1b] sm:$0xff]
      %v1465 = vld [vmem:[#allocation1 + $0x24] sm:$0xff]
      %v1466 = vld [vmem:[#allocation1 + $0x2d] sm:$0xff]
      %v1467 = vld [vmem:[#allocation1 + $0x36] sm:$0xff]
      %v1468 = vld [vmem:[#allocation1 + $0x3f] sm:$0xff]
      %1470 = vst [vmem:[#allocation1] ss:$9 sm:$0xff] %v214
      %v1471 = vld [vmem:[#allocation1] sm:$0xff]
      %v1472 = vld [vmem:[#allocation1 + $0x9] sm:$0xff]
      %v1473 = vld [vmem:[#allocation1 + $0x12] sm:$0xff]
      %v1474 = vld [vmem:[#allocation1 + $0x1b] sm:$0xff]
      %v1475 = vld [vmem:[#allocation1 + $0x24] sm:$0xff]
      %v1476 = vld [vmem:[#allocation1 + $0x2d] sm:$0xff]
      %v1477 = vld [vmem:[#allocation1 + $0x36] sm:$0xff]
      %v1478 = vld [vmem:[#allocation1 + $0x3f] sm:$0xff]
      %1480 = vst [vmem:[#allocation1] ss:$9 sm:$0xff] %v215
      %v1481 = vld [vmem:[#allocation1] sm:$0xff]
      %v1482 = vld [vmem:[#allocation1 + $0x9] sm:$0xff]
      %v1483 = vld [vmem:[#allocation1 + $0x12] sm:$0xff]
      %v1484 = vld [vmem:[#allocation1 + $0x1b] sm:$0xff]
      %v1485 = vld [vmem:[#allocation1 + $0x24] sm:$0xff]
      %v1486 = vld [vmem:[#allocation1 + $0x2d] sm:$0xff]
      %v1487 = vld [vmem:[#allocation1 + $0x36] sm:$0xff]
      %v1488 = vld [vmem:[#allocation1 + $0x3f] sm:$0xff]
      %1490 = vst [vmem:[#allocation1] ss:$9 sm:$0xff] %v216
      %v1491 = vld [vmem:[#allocation1] sm:$0xff]
      %v1492 = vld [vmem:[#allocation1 + $0x9] sm:$0xff]
      %v1493 = vld [vmem:[#allocation1 + $0x12] sm:$0xff]
      %v1494 = vld [vmem:[#allocation1 + $0x1b] sm:$0xff]
      %v1495 = vld [vmem:[#allocation1 + $0x24] sm:$0xff]
      %v1496 = vld [vmem:[#allocation1 + $0x2d] sm:$0xff]
      %v1497 = vld [vmem:[#allocation1 + $0x36] sm:$0xff]
      %v1498 = vld [vmem:[#allocation1 + $0x3f] sm:$0xff]
      %1500 = vst [vmem:[#allocation1] ss:$9 sm:$0xff] %v217
      %v1501 = vld [vmem:[#allocation1] sm:$0xff]
      %v1502 = vld [vmem:[#allocation1 + $0x9] sm:$0xff]
      %v1503 = vld [vmem:[#allocation1 + $0x12] sm:$0xff]
      %v1504 = vld [vmem:[#allocation1 + $0x1b] sm:$0xff]
      %v1505 = vld [vmem:[#allocation1 + $0x24] sm:$0xff]
      %v1506 = vld [vmem:[#allocation1 + $0x2d] sm:$0xff]
      %v1507 = vld [vmem:[#allocation1 + $0x36] sm:$0xff]
      %v1508 = vld [vmem:[#allocation1 + $0x3f] sm:$0xff]
      %1510 = vst [vmem:[#allocation1] ss:$9 sm:$0xff] %v218
      %v1511 = vld [vmem:[#allocation1] sm:$0xff]
      %v1512 = vld [vmem:[#allocation1 + $0x9] sm:$0xff]
      %v1513 = vld [vmem:[#allocation1 + $0x12] sm:$0xff]
      %v2789 = vunpack.c.l.b16 %v219
      %v2790 = vunpack.c.l.b16 %v220
      %v2791 = vunpack.c.l.b16 %v221
      %v2792 = vunpack.c.l.b16 %v222
      %v2793 = vunpack.c.l.b16 %v223
      %v2794 = vunpack.c.l.b16 %v224
      %v2795 = vunpack.c.l.b16 %v225
      %v2796 = vunpack.c.l.b16 %v226
      %v2797 = vunpack.c.l.b16 %v227
      %v2798 = vunpack.c.l.b16 %v228
      %v2799 = vunpack.c.l.b16 %v229
      %v2800 = vunpack.c.l.b16 %v230
      %v2801 = vunpack.c.l.b16 %v231
      %v2802 = vunpack.c.l.b16 %v232
      %v2803 = vunpack.c.l.b16 %v233
      %v2804 = vunpack.c.l.b16 %v234
      %v2805 = vunpack.c.l.b16 %v235
      %v2806 = vunpack.c.l.b16 %v236
      %v2807 = vunpack.c.l.b16 %v237
      %v2808 = vunpack.c.l.b16 %v238
      %v2809 = vunpack.c.l.b16 %v239
      %v2810 = vunpack.c.l.b16 %v240
      %v2811 = vunpack.c.l.b16 %v241
      %v2812 = vunpack.c.l.b16 %v242
      %v2813 = vunpack.c.l.b16 %v243
      %v2814 = vunpack.c.l.b16 %v244
      %v2815 = vunpack.c.l.b16 %v245
      %v2816 = vunpack.c.l.b16 %v246
      %v2817 = vunpack.c.l.b16 %v247
      %v2818 = vunpack.c.l.b16 %v248
      %v2819 = vunpack.c.l.b16 %v249
      %v2820 = vunpack.c.l.b16 %v250
      %v2821 = vunpack.c.l.b16 %v251
      %v2822 = vunpack.c.l.b16 %v252
      %v2823 = vunpack.c.l.b16 %v253
      %v2824 = vunpack.c.l.b16 %v254
      %v2825 = vunpack.c.l.b16 %v255
      %v2826 = vunpack.c.l.b16 %v256
      %v2827 = vunpack.c.l.b16 %v257
      %v2828 = vunpack.c.l.b16 %v258
      %v2829 = vunpack.c.l.b16 %v259
      %v2830 = vunpack.c.l.b16 %v260
      %v2831 = vunpack.c.l.b16 %v261
      %v2832 = vunpack.c.l.b16 %v262
      %v2833 = vunpack.c.l.b16 %v263
      %v2834 = vunpack.c.l.b16 %v264
      %v2835 = vunpack.c.l.b16 %v265
      %v2836 = vunpack.c.l.b16 %v266
      %v2837 = vunpack.c.l.b16 %v267
      %v2838 = vunpack.c.l.b16 %v268
      %v2839 = vunpack.c.l.b16 %v269
      %v2840 = vunpack.c.l.b16 %v270
      %v2841 = vunpack.c.l.b16 %v271
      %v2842 = vunpack.c.l.b16 %v272
      %v2843 = vunpack.c.l.b16 %v273
      %v2844 = vunpack.c.l.b16 %v274
      %v2845 = vunpack.c.l.b16 %v275
      %v2846 = vunpack.c.l.b16 %v276
      %v2847 = vunpack.c.l.b16 %v277
      %v2848 = vunpack.c.l.b16 %v278
      %v2849 = vunpack.c.l.b16 %v279
      %v2850 = vunpack.c.l.b16 %v280
      %v2851 = vunpack.c.l.b16 %v281
      %v2852 = vunpack.c.l.b16 %v282
      %v2853 = vunpack.c.l.b16 %v283
      %v2854 = vunpack.c.l.b16 %v284
      %v2855 = vunpack.c.l.b16 %v285
      %v2856 = vunpack.c.l.b16 %v286
      %v2857 = vunpack.c.l.b16 %v287
      %v2858 = vunpack.c.l.b16 %v288
      %v2859 = vunpack.c.l.b16 %v289
      %v2860 = vunpack.c.l.b16 %v290
      %v2861 = vunpack.c.l.b16 %v291
      %v2862 = vunpack.c.l.b16 %v292
      %v2863 = vunpack.c.l.b16 %v293
      %v2864 = vunpack.c.l.b16 %v294
      %v2865 = vunpack.c.l.b16 %v295
      %v2866 = vunpack.c.l.b16 %v296
      %v2867 = vunpack.c.l.b16 %v297
      %v2868 = vunpack.c.l.b16 %v298
      %v2869 = vunpack.c.l.b16 %v299
      %v2870 = vunpack.c.l.b16 %v300
      %v2871 = vunpack.c.l.b16 %v301
      %v2872 = vunpack.c.l.b16 %v302
      %v2873 = vunpack.c.l.b16 %v303
      %v2874 = vunpack.c.l.b16 %v304
      %v2875 = vunpack.c.l.b16 %v305
      %v2876 = vunpack.c.l.b16 %v306
      %v2877 = vunpack.c.l.b16 %v307
      %v2878 = vunpack.c.l.b16 %v308
      %v2879 = vunpack.c.l.b16 %v309
      %v2880 = vunpack.c.l.b16 %v310
      %v2881 = vunpack.c.l.b16 %v311
      %v2882 = vunpack.c.l.b16 %v312
      %v2883 = vunpack.c.l.b16 %v313
      %v2884 = vunpack.c.l.b16 %v314
      %v2885 = vunpack.c.l.b16 %v315
      %v2886 = vunpack.c.l.b16 %v316
      %v2887 = vunpack.c.l.b16 %v317
      %v2888 = vunpack.c.l.b16 %v318
      %v2889 = vunpack.c.l.b16 %v319
      %v2890 = vunpack.c.l.b16 %v320
      %v2891 = vunpack.c.l.b16 %v321
      %v2892 = vunpack.c.l.b16 %v322
      %v2893 = vunpack.c.l.b16 %v323
      %v2894 = vunpack.c.l.b16 %v324
      %v2895 = vunpack.c.l.b16 %v325
      %v2896 = vunpack.c.l.b16 %v326
      %v2897 = vunpack.c.l.b16 %v327
      %v2898 = vunpack.c.l.b16 %v328
      %v2899 = vunpack.c.l.b16 %v329
      %v2900 = vunpack.c.l.b16 %v330
      %v2901 = vunpack.c.l.b16 %v331
      %v2902 = vunpack.c.l.b16 %v332
      %v2903 = vunpack.c.l.b16 %v333
      %v2904 = vunpack.c.l.b16 %v334
      %v2905 = vunpack.c.l.b16 %v335
      %v2906 = vunpack.c.l.b16 %v336
      %v2907 = vunpack.c.l.b16 %v337
      %v2908 = vunpack.c.l.b16 %v338
      %v2909 = vunpack.c.l.b16 %v339
      %v2910 = vunpack.c.l.b16 %v340
      %v2911 = vunpack.c.l.b16 %v341
      %v2912 = vunpack.c.l.b16 %v342
      %v2913 = vunpack.c.l.b16 %v343
      %v2914 = vunpack.c.l.b16 %v344
      %v2915 = vunpack.c.l.b16 %v345
      %v2916 = vunpack.c.l.b16 %v346
      %v2917 = vunpack.c.l.b16 %v347
      %v2918 = vunpack.c.l.b16 %v348
      %v2919 = vunpack.c.l.b16 %v349
      %v2920 = vunpack.c.l.b16 %v350
      %v2921 = vunpack.c.l.b16 %v351
      %v2922 = vunpack.c.l.b16 %v352
      %v2923 = vunpack.c.l.b16 %v353
      %v2924 = vunpack.c.l.b16 %v354
      %v2925 = vunpack.c.l.b16 %v355
      %v2926 = vunpack.c.l.b16 %v356
      %v2927 = vunpack.c.l.b16 %v357
      %v2928 = vunpack.c.l.b16 %v358
      %v2929 = vunpack.c.l.b16 %v359
      %v2930 = vunpack.c.l.b16 %v360
      %v2931 = vunpack.c.l.b16 %v361
      %v2932 = vunpack.c.l.b16 %v362
      %v2933 = vunpack.c.l.b16 %v363
      %v2934 = vunpack.c.l.b16 %v364
      %v2935 = vunpack.c.l.b16 %v365
      %v2936 = vunpack.c.l.b16 %v366
      %v2937 = vunpack.c.l.b16 %v367
      %v2938 = vunpack.c.l.b16 %v368
      %v2939 = vunpack.c.l.b16 %v369
      %v2940 = vunpack.c.l.b16 %v370
      %v2941 = vunpack.c.l.b16 %v371
      %v2942 = vunpack.c.l.b16 %v372
      %v2943 = vunpack.c.l.b16 %v373
      %v2944 = vunpack.c.l.b16 %v374
      %v2945 = vunpack.c.l.b16 %v375
      %v2946 = vunpack.c.l.b16 %v376
      %v2947 = vunpack.c.l.b16 %v377
      %v2948 = vunpack.c.l.b16 %v378
      %v2949 = vunpack.c.l.b16 %v379
      %v2950 = vunpack.c.l.b16 %v380
      %v2951 = vunpack.c.l.b16 %v381
      %v2952 = vunpack.c.l.b16 %v382
      %v2953 = vunpack.c.l.b16 %v383
      %v2954 = vunpack.c.l.b16 %v384
      %v2955 = vunpack.c.l.b16 %v385
      %v2956 = vunpack.c.l.b16 %v386
      %v2957 = vunpack.c.l.b16 %v387
      %v2958 = vunpack.c.l.b16 %v388
      %v2959 = vunpack.c.l.b16 %v389
      %v2960 = vunpack.c.l.b16 %v390
      %v2961 = vunpack.c.l.b16 %v391
      %v2962 = vunpack.c.l.b16 %v392
      %v2963 = vunpack.c.l.b16 %v393
      %v2964 = vunpack.c.l.b16 %v394
      %v2965 = vunpack.c.l.b16 %v395
      %v2966 = vunpack.c.l.b16 %v396
      %v2967 = vunpack.c.l.b16 %v397
      %v2968 = vunpack.c.l.b16 %v398
      %v2969 = vunpack.c.l.b16 %v399
      %v2970 = vunpack.c.l.b16 %v400
      %v2971 = vunpack.c.l.b16 %v401
      %v2972 = vunpack.c.l.b16 %v402
      %v2973 = vunpack.c.l.b16 %v403
      %v2974 = vunpack.c.l.b16 %v404
      %v2975 = vunpack.c.l.b16 %v405
      %v2976 = vunpack.c.l.b16 %v406
      %v2977 = vunpack.c.l.b16 %v407
      %v2978 = vunpack.c.l.b16 %v408
      %v2979 = vunpack.c.l.b16 %v409
      %v2980 = vunpack.c.l.b16 %v410
      %v2981 = vunpack.c.l.b16 %v411
      %v2982 = vunpack.c.l.b16 %v412
      %v2983 = vunpack.c.l.b16 %v413
      %v2984 = vunpack.c.l.b16 %v414
      %v2985 = vunpack.c.l.b16 %v415
      %v2986 = vunpack.c.l.b16 %v416
      %v2987 = vunpack.c.l.b16 %v417
      %v2988 = vunpack.c.l.b16 %v418
      %v2989 = vunpack.c.l.b16 %v419
      %v2990 = vunpack.c.l.b16 %v420
      %v2991 = vunpack.c.l.b16 %v421
      %v2992 = vunpack.c.l.b16 %v422
      %v2993 = vunpack.c.l.b16 %v423
      %v2994 = vunpack.c.l.b16 %v424
      %v2995 = vunpack.c.l.b16 %v425
      %v2996 = vunpack.c.l.b16 %v426
      %v2997 = vunpack.c.l.b16 %v427
      %v2998 = vunpack.c.l.b16 %v428
      %v2999 = vunpack.c.l.b16 %v429
      %v3000 = vunpack.c.l.b16 %v430
      %v3001 = vunpack.c.l.b16 %v431
      %v3002 = vunpack.c.l.b16 %v432
      %v3003 = vunpack.c.l.b16 %v433
      %v3004 = vunpack.c.l.b16 %v434
      %v3005 = vunpack.c.l.b16 %v435
      %v3006 = vunpack.c.l.b16 %v436
      %v3007 = vunpack.c.l.b16 %v437
      %v3008 = vunpack.c.l.b16 %v438
      %v3009 = vunpack.c.l.b16 %v439
      %v3010 = vunpack.c.l.b16 %v440
      %v3011 = vunpack.c.l.b16 %v441
      %v3012 = vunpack.c.l.b16 %v442
      %v3013 = vunpack.c.l.b16 %v443
      %v3014 = vunpack.c.l.b16 %v444
      %v3015 = vunpack.c.l.b16 %v445
      %v3016 = vunpack.c.l.b16 %v446
      %v3017 = vunpack.c.l.b16 %v447
      %v3018 = vunpack.c.l.b16 %v448
      %v3019 = vunpack.c.l.b16 %v449
      %v3020 = vunpack.c.l.b16 %v450
      %v3021 = vunpack.c.l.b16 %v451
      %v3022 = vunpack.c.l.b16 %v452
      %v3023 = vunpack.c.l.b16 %v453
      %v3024 = vunpack.c.l.b16 %v454
      %v3025 = vunpack.c.l.b16 %v455
      %v3026 = vunpack.c.l.b16 %v456
      %v3027 = vunpack.c.l.b16 %v457
      %v3028 = vunpack.c.l.b16 %v458
      %v3029 = vunpack.c.l.b16 %v459
      %v3030 = vunpack.c.l.b16 %v460
      %v3031 = vunpack.c.l.b16 %v461
      %v3032 = vunpack.c.l.b16 %v462
      %v3033 = vunpack.c.l.b16 %v463
      %v3034 = vunpack.c.l.b16 %v464
      %v3035 = vunpack.c.l.b16 %v465
      %v3036 = vunpack.c.l.b16 %v466
      %v3037 = vunpack.c.l.b16 %v467
      %v3038 = vunpack.c.l.b16 %v468
      %v3039 = vunpack.c.l.b16 %v469
      %v3040 = vunpack.c.l.b16 %v470
      %v3041 = vunpack.c.l.b16 %v471
      %v3042 = vunpack.c.l.b16 %v472
      %v3043 = vunpack.c.l.b16 %v473
      %v3044 = vunpack.c.l.b16 %v474
      %v3045 = vunpack.c.l.b16 %v475
      %v3046 = vunpack.c.l.b16 %v476
      %v3047 = vunpack.c.l.b16 %v477
      %v3048 = vunpack.c.l.b16 %v478
      %v3049 = vunpack.c.l.b16 %v479
      %v3050 = vunpack.c.l.b16 %v480
      %v3051 = vunpack.c.l.b16 %v481
      %v3052 = vunpack.c.l.b16 %v482
      %v3053 = vunpack.c.l.b16 %v483
      %v3054 = vunpack.c.l.b16 %v484
      %v3055 = vunpack.c.l.b16 %v485
      %v3056 = vunpack.c.l.b16 %v486
      %v3057 = vunpack.c.l.b16 %v487
      %v3058 = vunpack.c.l.b16 %v488
      %v3059 = vunpack.c.l.b16 %v489
      %v3060 = vunpack.c.l.b16 %v490
      %v3061 = vunpack.c.l.b16 %v491
      %v3062 = vunpack.c.l.b16 %v492
      %v3063 = vunpack.c.l.b16 %v493
      %v3064 = vunpack.c.l.b16 %v494
      %v3065 = vunpack.c.l.b16 %v495
      %v3066 = vunpack.c.l.b16 %v496
      %v3067 = vunpack.c.l.b16 %v497
      %v3068 = vunpack.c.l.b16 %v498
      %v3069 = vunpack.c.l.b16 %v499
      %v3070 = vunpack.c.l.b16 %v500
      %v3071 = vunpack.c.l.b16 %v501
      %v3072 = vunpack.c.l.b16 %v502
      %v3073 = vunpack.c.l.b16 %v503
      %v3074 = vunpack.c.l.b16 %v504
      %v3075 = vunpack.c.l.b16 %v505
      %v3076 = vunpack.c.l.b16 %v506
      %v3077 = vunpack.c.l.b16 %v507
      %v3078 = vunpack.c.l.b16 %v508
      %v3079 = vunpack.c.l.b16 %v509
      %v3080 = vunpack.c.l.b16 %v510
      %v3081 = vunpack.c.l.b16 %v511
      %v3082 = vunpack.c.l.b16 %v512
      %v3083 = vunpack.c.l.b16 %v513
      %v3084 = vunpack.c.l.b16 %v514
      %v3085 = vunpack.c.l.b16 %v515
      %v3086 = vunpack.c.l.b16 %v516
      %v3087 = vunpack.c.l.b16 %v517
      %v3088 = vunpack.c.l.b16 %v518
      %v3089 = vunpack.c.l.b16 %v519
      %v3090 = vunpack.c.l.b16 %v520
      %v3091 = vunpack.c.l.b16 %v521
      %v3092 = vunpack.c.l.b16 %v522
      %v3093 = vunpack.c.l.b16 %v523
      %v3094 = vunpack.c.l.b16 %v524
      %v3095 = vunpack.c.l.b16 %v525
      %v3096 = vunpack.c.l.b16 %v526
      %v3097 = vunpack.c.l.b16 %v527
      %v3098 = vunpack.c.l.b16 %v528
      %v3099 = vunpack.c.l.b16 %v529
      %v3100 = vunpack.c.l.b16 %v530
      %v3101 = vunpack.c.l.b16 %v531
      %v3102 = vunpack.c.l.b16 %v532
      %v3103 = vunpack.c.l.b16 %v533
      %v3104 = vunpack.c.l.b16 %v534
      %v3105 = vunpack.c.l.b16 %v535
      %v3106 = vunpack.c.l.b16 %v536
      %v3107 = vunpack.c.l.b16 %v537
      %v3108 = vunpack.c.l.b16 %v538
      %v3109 = vunpack.c.l.b16 %v539
      %v3110 = vunpack.c.l.b16 %v540
      %v3111 = vunpack.c.l.b16 %v541
      %v3112 = vunpack.c.l.b16 %v542
      %v3113 = vunpack.c.l.b16 %v543
      %v3114 = vunpack.c.l.b16 %v544
      %v3115 = vunpack.c.l.b16 %v545
      %v3116 = vunpack.c.l.b16 %v546
      %v3117 = vunpack.c.l.b16 %v547
      %v3118 = vunpack.c.l.b16 %v548
      %v3119 = vunpack.c.l.b16 %v549
      %v3120 = vunpack.c.l.b16 %v550
      %v3121 = vunpack.c.l.b16 %v551
      %v3122 = vunpack.c.l.b16 %v552
      %v3123 = vunpack.c.l.b16 %v553
      %v3124 = vunpack.c.l.b16 %v554
      %v3125 = vunpack.c.l.b16 %v555
      %v3126 = vunpack.c.l.b16 %v556
      %v3127 = vunpack.c.l.b16 %v557
      %v3128 = vunpack.c.l.b16 %v558
      %v3129 = vunpack.c.l.b16 %v559
      %v3130 = vunpack.c.l.b16 %v560
      %v3131 = vunpack.c.l.b16 %v561
      %v3132 = vunpack.c.l.b16 %v562
      %v3133 = vunpack.c.l.b16 %v563
      %v3134 = vunpack.c.l.b16 %v564
      %v3135 = vunpack.c.l.b16 %v565
      %v3136 = vunpack.c.l.b16 %v566
      %v3137 = vunpack.c.l.b16 %v567
      %v3138 = vunpack.c.l.b16 %v568
      %v3139 = vunpack.c.l.b16 %v569
      %v3140 = vunpack.c.l.b16 %v570
      %v3141 = vunpack.c.l.b16 %v571
      %v3142 = vunpack.c.l.b16 %v572
      %v3143 = vunpack.c.l.b16 %v573
      %v3144 = vunpack.c.l.b16 %v574
      %v3145 = vunpack.c.l.b16 %v575
      %v3146 = vunpack.c.l.b16 %v576
      %v3147 = vunpack.c.l.b16 %v577
      %v3148 = vunpack.c.l.b16 %v578
      %v3149 = vunpack.c.l.b16 %v579
      %v3150 = vunpack.c.l.b16 %v580
      %v3151 = vunpack.c.l.b16 %v581
      %v3152 = vunpack.c.l.b16 %v582
      %v3153 = vunpack.c.l.b16 %v583
      %v3154 = vunpack.c.l.b16 %v584
      %v3155 = vunpack.c.l.b16 %v585
      %v3156 = vunpack.c.l.b16 %v586
      %v3157 = vunpack.c.l.b16 %v587
      %v3158 = vunpack.c.l.b16 %v588
      %v3159 = vunpack.c.l.b16 %v589
      %v3160 = vunpack.c.l.b16 %v590
      %v3161 = vunpack.c.l.b16 %v591
      %v3162 = vunpack.c.l.b16 %v592
      %v3163 = vunpack.c.l.b16 %v593
      %v3164 = vunpack.c.l.b16 %v594
      %v3165 = vunpack.c.l.b16 %v595
      %v3166 = vunpack.c.l.b16 %v596
      %v3167 = vunpack.c.l.b16 %v597
      %v3168 = vunpack.c.l.b16 %v598
      %v3169 = vunpack.c.l.b16 %v599
      %v3170 = vunpack.c.l.b16 %v600
      %v3171 = vunpack.c.l.b16 %v601
      %v3172 = vunpack.c.l.b16 %v602
      %v3173 = vunpack.c.l.b16 %v603
      %v3174 = vunpack.c.l.b16 %v604
      %v3175 = vunpack.c.l.b16 %v605
      %v3176 = vunpack.c.l.b16 %v606
      %v3177 = vunpack.c.l.b16 %v607
      %v3178 = vunpack.c.l.b16 %v608
      %v3179 = vunpack.c.l.b16 %v609
      %v3180 = vunpack.c.l.b16 %v610
      %v3181 = vunpack.c.l.b16 %v611
      %v3182 = vunpack.c.l.b16 %v612
      %v3183 = vunpack.c.l.b16 %v613
      %v3184 = vunpack.c.l.b16 %v614
      %v3185 = vunpack.c.l.b16 %v615
      %v3186 = vunpack.c.l.b16 %v616
      %v3187 = vunpack.c.l.b16 %v617
      %v3188 = vunpack.c.l.b16 %v618
      %v3189 = vunpack.c.l.b16 %v619
      %v3190 = vunpack.c.l.b16 %v620
      %v3191 = vunpack.c.l.b16 %v621
      %v3192 = vunpack.c.l.b16 %v622
      %v3193 = vunpack.c.l.b16 %v623
      %v3194 = vunpack.c.l.b16 %v624
      %v3195 = vunpack.c.l.b16 %v625
      %v3196 = vunpack.c.l.b16 %v626
      %v3197 = vunpack.c.l.b16 %v627
      %v3198 = vunpack.c.l.b16 %v628
      %v3199 = vunpack.c.l.b16 %v629
      %v3200 = vunpack.c.l.b16 %v630
      %v3201 = vunpack.c.l.b16 %v631
      %v3202 = vunpack.c.l.b16 %v632
      %v3203 = vunpack.c.l.b16 %v633
      %v3204 = vunpack.c.l.b16 %v634
      %v3205 = vunpack.c.l.b16 %v635
      %v3206 = vunpack.c.l.b16 %v636
      %v3207 = vunpack.c.l.b16 %v637
      %v3208 = vunpack.c.l.b16 %v638
      %v3209 = vunpack.c.l.b16 %v639
      %v3210 = vunpack.c.l.b16 %v640
      %v3211 = vunpack.c.l.b16 %v641
      %v3212 = vunpack.c.l.b16 %v642
      %v3213 = vunpack.c.l.b16 %v643
      %v3214 = vunpack.c.l.b16 %v644
      %v3215 = vunpack.c.l.b16 %v645
      %v3216 = vunpack.c.l.b16 %v646
      %v3217 = vunpack.c.l.b16 %v647
      %v3218 = vunpack.c.l.b16 %v648
      %v3219 = vunpack.c.l.b16 %v649
      %v3220 = vunpack.c.l.b16 %v650
      %v3221 = vunpack.c.l.b16 %v651
      %v3222 = vunpack.c.l.b16 %v652
      %v3223 = vunpack.c.l.b16 %v653
      %v3224 = vunpack.c.l.b16 %v654
      %v3225 = vunpack.c.l.b16 %v655
      %v3226 = vunpack.c.l.b16 %v656
      %v3227 = vunpack.c.l.b16 %v657
      %v3228 = vunpack.c.l.b16 %v658
      %v3229 = vunpack.c.l.b16 %v659
      %v3230 = vunpack.c.l.b16 %v660
      %v3231 = vunpack.c.l.b16 %v661
      %v3232 = vunpack.c.l.b16 %v662
      %v3233 = vunpack.c.l.b16 %v663
      %v3234 = vunpack.c.l.b16 %v664
      %v3235 = vunpack.c.l.b16 %v665
      %v3236 = vunpack.c.l.b16 %v666
      %v3237 = vunpack.c.l.b16 %v667
      %v3238 = vunpack.c.l.b16 %v668
      %v3239 = vunpack.c.l.b16 %v669
      %v3240 = vunpack.c.l.b16 %v670
      %v3241 = vunpack.c.l.b16 %v671
      %v3242 = vunpack.c.l.b16 %v672
      %v3243 = vunpack.c.l.b16 %v673
      %v3244 = vunpack.c.l.b16 %v674
      %v3245 = vunpack.c.l.b16 %v675
      %v3246 = vunpack.c.l.b16 %v676
      %v3247 = vunpack.c.l.b16 %v677
      %v3248 = vunpack.c.l.b16 %v678
      %v3249 = vunpack.c.l.b16 %v679
      %v3250 = vunpack.c.l.b16 %v680
      %v3251 = vunpack.c.l.b16 %v681
      %v3252 = vunpack.c.l.b16 %v682
      %v3253 = vunpack.c.l.b16 %v683
      %v3254 = vunpack.c.l.b16 %v684
      %v3255 = vunpack.c.l.b16 %v685
      %v3256 = vunpack.c.l.b16 %v686
      %v3257 = vunpack.c.l.b16 %v687
      %v3258 = vunpack.c.l.b16 %v688
      %v3259 = vunpack.c.l.b16 %v689
      %v3260 = vunpack.c.l.b16 %v690
      %v3261 = vunpack.c.l.b16 %v691
      %v3262 = vunpack.c.l.b16 %v692
      %v3263 = vunpack.c.l.b16 %v693
      %v3264 = vunpack.c.l.b16 %v694
      %v3265 = vunpack.c.l.b16 %v695
      %v3266 = vunpack.c.l.b16 %v696
      %v3267 = vunpack.c.l.b16 %v697
      %v3268 = vunpack.c.l.b16 %v698
      %v3269 = vunpack.c.l.b16 %v699
      %v3270 = vunpack.c.l.b16 %v700
      %v3271 = vunpack.c.l.b16 %v701
      %v3272 = vunpack.c.l.b16 %v702
      %v3273 = vunpack.c.l.b16 %v703
      %v3274 = vunpack.c.l.b16 %v704
      %v3275 = vunpack.c.l.b16 %v705
      %v3276 = vunpack.c.l.b16 %v706
      %v3277 = vunpack.c.l.b16 %v707
      %v3278 = vunpack.c.l.b16 %v708
      %v3279 = vunpack.c.l.b16 %v709
      %v3280 = vunpack.c.l.b16 %v710
      %v3281 = vunpack.c.l.b16 %v711
      %v3282 = vunpack.c.l.b16 %v712
      %v3283 = vunpack.c.l.b16 %v713
      %v3284 = vunpack.c.l.b16 %v714
      %v3285 = vunpack.c.l.b16 %v715
      %v3286 = vunpack.c.l.b16 %v716
      %v3287 = vunpack.c.l.b16 %v717
      %v3288 = vunpack.c.l.b16 %v718
      %v3289 = vunpack.c.l.b16 %v719
      %v3290 = vunpack.c.l.b16 %v720
      %v3291 = vunpack.c.l.b16 %v721
      %v3292 = vunpack.c.l.b16 %v722
      %v3293 = vunpack.c.l.b16 %v723
      %v3294 = vunpack.c.l.b16 %v724
      %v3295 = vunpack.c.l.b16 %v725
      %v3296 = vunpack.c.l.b16 %v726
      %v3297 = vunpack.c.l.b16 %v727
      %v3298 = vunpack.c.l.b16 %v728
      %v3299 = vunpack.c.l.b16 %v729
      %v3300 = vunpack.c.l.b16 %v730
      %v3301 = vunpack.c.l.b16 %v731
      %v3302 = vunpack.c.l.b16 %v732
      %v3303 = vunpack.c.l.b16 %v733
      %v3304 = vunpack.c.l.b16 %v734
      %v3305 = vunpack.c.l.b16 %v735
      %v3306 = vunpack.c.l.b16 %v736
      %v3307 = vunpack.c.l.b16 %v737
      %v3308 = vunpack.c.l.b16 %v738
      %v3309 = vunpack.c.l.b16 %v739
      %v3310 = vunpack.c.l.b16 %v740
      %v3311 = vunpack.c.l.b16 %v741
      %v3312 = vunpack.c.l.b16 %v742
      %v3313 = vunpack.c.l.b16 %v743
      %v3314 = vunpack.c.l.b16 %v744
      %v3315 = vunpack.c.l.b16 %v745
      %v3316 = vunpack.c.l.b16 %v746
      %v3317 = vunpack.c.l.b16 %v747
      %v3318 = vunpack.c.l.b16 %v748
      %v3319 = vunpack.c.l.b16 %v749
      %v3320 = vunpack.c.l.b16 %v750
      %v3321 = vunpack.c.l.b16 %v751
      %v3322 = vunpack.c.l.b16 %v752
      %v3323 = vunpack.c.l.b16 %v753
      %v3324 = vunpack.c.l.b16 %v754
      %v3325 = vunpack.c.l.b16 %v755
      %v3326 = vunpack.c.l.b16 %v756
      %v3327 = vunpack.c.l.b16 %v757
      %v3328 = vunpack.c.l.b16 %v758
      %v3329 = vunpack.c.l.b16 %v759
      %v3330 = vunpack.c.l.b16 %v760
      %v3331 = vunpack.c.l.b16 %v761
      %v3332 = vunpack.c.l.b16 %v762
      %v3333 = vunpack.c.l.b16 %v763
      %v3334 = vunpack.c.l.b16 %v764
      %v3335 = vunpack.c.l.b16 %v765
      %v3336 = vunpack.c.l.b16 %v766
      %v3337 = vunpack.c.l.b16 %v767
      %v3338 = vunpack.c.l.b16 %v768
      %v3339 = vunpack.c.l.b16 %v769
      %v3340 = vunpack.c.l.b16 %v770
      %v3341 = vunpack.c.l.b16 %v771
      %v3342 = vunpack.c.l.b16 %v772
      %v3343 = vunpack.c.l.b16 %v773
      %v3344 = vunpack.c.l.b16 %v774
      %v3345 = vunpack.c.l.b16 %v775
      %v3346 = vunpack.c.l.b16 %v776
      %v3347 = vunpack.c.l.b16 %v777
      %v3348 = vunpack.c.l.b16 %v778
      %v3349 = vunpack.c.l.b16 %v779
      %v3350 = vunpack.c.l.b16 %v780
      %v3351 = vunpack.c.l.b16 %v781
      %v3352 = vunpack.c.l.b16 %v782
      %v3353 = vunpack.c.l.b16 %v783
      %v3354 = vunpack.c.l.b16 %v784
      %v3355 = vunpack.c.l.b16 %v785
      %v3356 = vunpack.c.l.b16 %v786
      %v3357 = vunpack.c.l.b16 %v787
      %v3358 = vunpack.c.l.b16 %v788
      %v3359 = vunpack.c.l.b16 %v789
      %v3360 = vunpack.c.l.b16 %v790
      %v3361 = vunpack.c.l.b16 %v791
      %v3362 = vunpack.c.l.b16 %v792
      %v3363 = vunpack.c.l.b16 %v793
      %v3364 = vunpack.c.l.b16 %v794
      %v3365 = vunpack.c.l.b16 %v795
      %v3366 = vunpack.c.l.b16 %v796
      %v3367 = vunpack.c.l.b16 %v797
      %v3368 = vunpack.c.l.b16 %v798
      %v3369 = vunpack.c.l.b16 %v799
      %v3370 = vunpack.c.l.b16 %v800
      %v3371 = vunpack.c.l.b16 %v801
      %v3372 = vunpack.c.l.b16 %v802
      %v3373 = vunpack.c.l.b16 %v803
      %v3374 = vunpack.c.l.b16 %v804
      %v3375 = vunpack.c.l.b16 %v805
      %v3376 = vunpack.c.l.b16 %v806
      %v3377 = vunpack.c.l.b16 %v807
      %v3378 = vunpack.c.l.b16 %v808
      %v3379 = vunpack.c.l.b16 %v809
      %v3380 = vunpack.c.l.b16 %v810
      %v3381 = vunpack.c.l.b16 %v811
      %v3382 = vunpack.c.l.b16 %v812
      %v3383 = vunpack.c.l.b16 %v813
      %v3384 = vunpack.c.l.b16 %v814
      %v3385 = vunpack.c.l.b16 %v815
      %v3386 = vunpack.c.l.b16 %v816
      %v3387 = vunpack.c.l.b16 %v817
      %v3388 = vunpack.c.l.b16 %v818
      %v3389 = vunpack.c.l.b16 %v819
      %v3390 = vunpack.c.l.b16 %v820
      %v3391 = vunpack.c.l.b16 %v821
      %v3392 = vunpack.c.l.b16 %v822
      %v3393 = vunpack.c.l.b16 %v823
      %v3394 = vunpack.c.l.b16 %v824
      %v3395 = vunpack.c.l.b16 %v825
      %v3396 = vunpack.c.l.b16 %v826
      %v3397 = vunpack.c.l.b16 %v827
      %v3398 = vunpack.c.l.b16 %v828
      %v3399 = vunpack.c.l.b16 %v829
      %v3400 = vunpack.c.l.b16 %v830
      %v3401 = vunpack.c.l.b16 %v831
      %v3402 = vunpack.c.l.b16 %v832
      %v3403 = vunpack.c.l.b16 %v833
      %v3404 = vunpack.c.l.b16 %v834
      %v3405 = vunpack.c.l.b16 %v835
      %v3406 = vunpack.c.l.b16 %v836
      %v3407 = vunpack.c.l.b16 %v837
      %v3408 = vunpack.c.l.b16 %v838
      %v3409 = vunpack.c.l.b16 %v839
      %v3410 = vunpack.c.l.b16 %v840
      %v3411 = vunpack.c.l.b16 %v841
      %v3412 = vunpack.c.l.b16 %v842
      %v3413 = vunpack.c.l.b16 %v843
      %v3414 = vunpack.c.l.b16 %v844
      %v3415 = vunpack.c.l.b16 %v845
      %v3416 = vunpack.c.l.b16 %v846
      %v3417 = vunpack.c.l.b16 %v847
      %v3418 = vunpack.c.l.b16 %v848
      %v3419 = vunpack.c.l.b16 %v849
      %v3420 = vunpack.c.l.b16 %v850
      %v3421 = vunpack.c.l.b16 %v851
      %v3422 = vunpack.c.l.b16 %v852
      %v3423 = vunpack.c.l.b16 %v853
      %v3424 = vunpack.c.l.b16 %v854
      %v3425 = vunpack.c.l.b16 %v855
      %v3426 = vunpack.c.l.b16 %v856
      %v3427 = vunpack.c.l.b16 %v857
      %v3428 = vunpack.c.l.b16 %v858
      %v3429 = vunpack.c.l.b16 %v859
      %v3430 = vunpack.c.l.b16 %v860
      %v3431 = vunpack.c.l.b16 %v861
      %v3432 = vunpack.c.l.b16 %v862
      %v3433 = vunpack.c.l.b16 %v863
      %v3434 = vunpack.c.l.b16 %v864
      %v3435 = vunpack.c.l.b16 %v865
      %v3436 = vunpack.c.l.b16 %v866
      %v3437 = vunpack.c.l.b16 %v867
      %v3438 = vunpack.c.l.b16 %v868
      %v3439 = vunpack.c.l.b16 %v869
      %v3440 = vunpack.c.l.b16 %v870
      %v3441 = vunpack.c.l.b16 %v871
      %v3442 = vunpack.c.l.b16 %v872
      %v3443 = vunpack.c.l.b16 %v873
      %v3444 = vunpack.c.l.b16 %v874
      %v3445 = vunpack.c.l.b16 %v875
      %v3446 = vunpack.c.l.b16 %v876
      %v3447 = vunpack.c.l.b16 %v877
      %v3448 = vunpack.c.l.b16 %v878
      %v3449 = vunpack.c.l.b16 %v879
      %v3450 = vunpack.c.l.b16 %v880
      %v3451 = vunpack.c.l.b16 %v881
      %v3452 = vunpack.c.l.b16 %v882
      %v3453 = vunpack.c.l.b16 %v883
      %v3454 = vunpack.c.l.b16 %v884
      %v3455 = vunpack.c.l.b16 %v885
      %v3456 = vunpack.c.l.b16 %v886
      %v3457 = vunpack.c.l.b16 %v887
      %v3458 = vunpack.c.l.b16 %v888
      %v3459 = vunpack.c.l.b16 %v889
      %v3460 = vunpack.c.l.b16 %v890
      %v3461 = vunpack.c.l.b16 %v891
      %v3462 = vunpack.c.l.b16 %v892
      %v3463 = vunpack.c.l.b16 %v893
      %v3464 = vunpack.c.l.b16 %v894
      %v3465 = vunpack.c.l.b16 %v895
      %v3466 = vunpack.c.l.b16 %v896
      %v3467 = vunpack.c.l.b16 %v897
      %v3468 = vunpack.c.l.b16 %v898
      %v3469 = vunpack.c.l.b16 %v899
      %v3470 = vunpack.c.l.b16 %v900
      %v3471 = vunpack.c.l.b16 %v901
      %v3472 = vunpack.c.l.b16 %v902
      %v3473 = vunpack.c.l.b16 %v903
      %v3474 = vunpack.c.l.b16 %v904
      %v3475 = vunpack.c.l.b16 %v905
      %v3476 = vunpack.c.l.b16 %v906
      %v3477 = vunpack.c.l.b16 %v907
      %v3478 = vunpack.c.l.b16 %v908
      %v3479 = vunpack.c.l.b16 %v909
      %v3480 = vunpack.c.l.b16 %v910
      %v3481 = vunpack.c.l.b16 %v911
      %v3482 = vunpack.c.l.b16 %v912
      %v3483 = vunpack.c.l.b16 %v913
      %v3484 = vunpack.c.l.b16 %v914
      %v3485 = vunpack.c.l.b16 %v915
      %v3486 = vunpack.c.l.b16 %v916
      %v3487 = vunpack.c.l.b16 %v917
      %v3488 = vunpack.c.l.b16 %v918
      %v3489 = vunpack.c.l.b16 %v919
      %v3490 = vunpack.c.l.b16 %v920
      %v3491 = vunpack.c.l.b16 %v921
      %v3492 = vunpack.c.l.b16 %v922
      %v3493 = vunpack.c.l.b16 %v923
      %v3494 = vunpack.c.l.b16 %v924
      %v3495 = vunpack.c.l.b16 %v925
      %v3496 = vunpack.c.l.b16 %v926
      %v3497 = vunpack.c.l.b16 %v927
      %v3498 = vunpack.c.l.b16 %v928
      %v3499 = vunpack.c.l.b16 %v929
      %v3500 = vunpack.c.l.b16 %v930
      %v3501 = vunpack.c.l.b16 %v931
      %v3502 = vunpack.c.l.b16 %v932
      %v3503 = vunpack.c.l.b16 %v933
      %v3504 = vunpack.c.l.b16 %v934
      %v3505 = vunpack.c.l.b16 %v935
      %v3506 = vunpack.c.l.b16 %v936
      %v3507 = vunpack.c.l.b16 %v937
      %v3508 = vunpack.c.l.b16 %v938
      %v3509 = vunpack.c.l.b16 %v939
      %v3510 = vunpack.c.l.b16 %v940
      %v3511 = vunpack.c.l.b16 %v941
      %v3512 = vunpack.c.l.b16 %v942
      %v3513 = vunpack.c.l.b16 %v943
      %v3514 = vunpack.c.l.b16 %v944
      %v3515 = vunpack.c.l.b16 %v945
      %v3516 = vunpack.c.l.b16 %v946
      %v3517 = vunpack.c.l.b16 %v947
      %v3518 = vunpack.c.l.b16 %v948
      %v3519 = vunpack.c.l.b16 %v949
      %v3520 = vunpack.c.l.b16 %v950
      %v3521 = vunpack.c.l.b16 %v951
      %v3522 = vunpack.c.l.b16 %v952
      %v3523 = vunpack.c.l.b16 %v953
      %v3524 = vunpack.c.l.b16 %v954
      %v3525 = vunpack.c.l.b16 %v955
      %v3526 = vunpack.c.l.b16 %v956
      %v3527 = vunpack.c.l.b16 %v957
      %v3528 = vunpack.c.l.b16 %v958
      %v3529 = vunpack.c.l.b16 %v959
      %v3530 = vunpack.c.l.b16 %v960
      %v3531 = vunpack.c.l.b16 %v961
      %v3532 = vunpack.c.l.b16 %v962
      %v3533 = vunpack.c.l.b16 %v963
      %v3534 = vunpack.c.l.b16 %v964
      %v3535 = vunpack.c.l.b16 %v965
      %v3536 = vunpack.c.l.b16 %v966
      %v3537 = vunpack.c.l.b16 %v967
      %v3538 = vunpack.c.l.b16 %v968
      %v3539 = vunpack.c.l.b16 %v969
      %v3540 = vunpack.c.l.b16 %v970
      %v3541 = vunpack.c.l.b16 %v971
      %v3542 = vunpack.c.l.b16 %v972
      %v3543 = vunpack.c.l.b16 %v973
      %v3544 = vunpack.c.l.b16 %v974
      %v3545 = vunpack.c.l.b16 %v975
      %v3546 = vunpack.c.l.b16 %v976
      %v3547 = vunpack.c.l.b16 %v977
      %v3548 = vunpack.c.l.b16 %v978
      %v3549 = vunpack.c.l.b16 %v979
      %v3550 = vunpack.c.l.b16 %v980
      %v3551 = vunpack.c.l.b16 %v981
      %v3552 = vunpack.c.l.b16 %v982
      %v3553 = vunpack.c.l.b16 %v983
      %v3554 = vunpack.c.l.b16 %v984
      %v3555 = vunpack.c.l.b16 %v985
      %v3556 = vunpack.c.l.b16 %v986
      %v3557 = vunpack.c.l.b16 %v987
      %v3558 = vunpack.c.l.b16 %v988
      %v3559 = vunpack.c.l.b16 %v989
      %v3560 = vunpack.c.l.b16 %v990
      %v3561 = vunpack.c.l.b16 %v991
      %v3562 = vunpack.c.l.b16 %v992
      %v3563 = vunpack.c.l.b16 %v993
      %v3564 = vunpack.c.l.b16 %v994
      %v3565 = vunpack.c.l.b16 %v995
      %v3566 = vunpack.c.l.b16 %v996
      %v3567 = vunpack.c.l.b16 %v997
      %v3568 = vunpack.c.l.b16 %v998
      %v3569 = vunpack.c.l.b16 %v999
      %v3570 = vunpack.c.l.b16 %v1000
      %v3571 = vunpack.c.l.b16 %v1001
      %v3572 = vunpack.c.l.b16 %v1002
      %v3573 = vunpack.c.l.b16 %v1003
      %v3574 = vunpack.c.l.b16 %v1004
      %v3575 = vunpack.c.l.b16 %v1005
      %v3576 = vunpack.c.l.b16 %v1006
      %v3577 = vunpack.c.l.b16 %v1007
      %v3578 = vunpack.c.l.b16 %v1008
      %v3579 = vunpack.c.l.b16 %v1009
      %v3580 = vunpack.c.l.b16 %v1010
      %v3581 = vunpack.c.l.b16 %v1011
      %v3582 = vunpack.c.l.b16 %v1012
      %v3583 = vunpack.c.l.b16 %v1013
      %v3584 = vunpack.c.l.b16 %v1014
      %v3585 = vunpack.c.l.b16 %v1015
      %v3586 = vunpack.c.l.b16 %v1016
      %v3587 = vunpack.c.l.b16 %v1017
      %v3588 = vunpack.c.l.b16 %v1018
      %v3589 = vunpack.c.l.b16 %v1019
      %v3590 = vunpack.c.l.b16 %v1020
      %v3591 = vunpack.c.l.b16 %v1021
      %v3592 = vunpack.c.l.b16 %v1022
      %v3593 = vunpack.c.l.b16 %v1023
      %v3594 = vunpack.c.l.b16 %v1024
      %v3595 = vunpack.c.l.b16 %v1025
      %v3596 = vunpack.c.l.b16 %v1026
      %v3597 = vunpack.c.l.b16 %v1027
      %v3598 = vunpack.c.l.b16 %v1028
      %v3599 = vunpack.c.l.b16 %v1029
      %v3600 = vunpack.c.l.b16 %v1030
      %v3601 = vunpack.c.l.b16 %v1031
      %v3602 = vunpack.c.l.b16 %v1032
      %v3603 = vunpack.c.l.b16 %v1033
      %v3604 = vunpack.c.l.b16 %v1034
      %v3605 = vunpack.c.l.b16 %v1035
      %v3606 = vunpack.c.l.b16 %v1036
      %v3607 = vunpack.c.l.b16 %v1037
      %v3608 = vunpack.c.l.b16 %v1038
      %v3609 = vunpack.c.l.b16 %v1039
      %v3610 = vunpack.c.l.b16 %v1040
      %v3611 = vunpack.c.l.b16 %v1041
      %v3612 = vunpack.c.l.b16 %v1042
      %v3613 = vunpack.c.l.b16 %v1043
      %v3614 = vunpack.c.l.b16 %v1044
      %v3615 = vunpack.c.l.b16 %v1045
      %v3616 = vunpack.c.l.b16 %v1046
      %v3617 = vunpack.c.l.b16 %v1047
      %v3618 = vunpack.c.l.b16 %v1048
      %v3619 = vunpack.c.l.b16 %v1049
      %v3620 = vunpack.c.l.b16 %v1050
      %v3621 = vunpack.c.l.b16 %v1051
      %v3622 = vunpack.c.l.b16 %v1052
      %v3623 = vunpack.c.l.b16 %v1053
      %v3624 = vunpack.c.l.b16 %v1054
      %v3625 = vunpack.c.l.b16 %v1055
      %v3626 = vunpack.c.l.b16 %v1056
      %v3627 = vunpack.c.l.b16 %v1057
      %v3628 = vunpack.c.l.b16 %v1058
      %v3629 = vunpack.c.l.b16 %v1059
      %v3630 = vunpack.c.l.b16 %v1060
      %v3631 = vunpack.c.l.b16 %v1061
      %v3632 = vunpack.c.l.b16 %v1062
      %v3633 = vunpack.c.l.b16 %v1063
      %v3634 = vunpack.c.l.b16 %v1064
      %v3635 = vunpack.c.l.b16 %v1065
      %v3636 = vunpack.c.l.b16 %v1066
      %v3637 = vunpack.c.l.b16 %v1067
      %v3638 = vunpack.c.l.b16 %v1068
      %v3639 = vunpack.c.l.b16 %v1069
      %v3640 = vunpack.c.l.b16 %v1070
      %v3641 = vunpack.c.l.b16 %v1071
      %v3642 = vunpack.c.l.b16 %v1072
      %v3643 = vunpack.c.l.b16 %v1073
      %v3644 = vunpack.c.l.b16 %v1074
      %v3645 = vunpack.c.l.b16 %v1075
      %v3646 = vunpack.c.l.b16 %v1076
      %v3647 = vunpack.c.l.b16 %v1077
      %v3648 = vunpack.c.l.b16 %v1078
      %v3649 = vunpack.c.l.b16 %v1079
      %v3650 = vunpack.c.l.b16 %v1080
      %v3651 = vunpack.c.l.b16 %v1081
      %v3652 = vunpack.c.l.b16 %v1082
      %v3653 = vunpack.c.l.b16 %v1083
      %v3654 = vunpack.c.l.b16 %v1084
      %v3655 = vunpack.c.l.b16 %v1085
      %v3656 = vunpack.c.l.b16 %v1086
      %v3657 = vunpack.c.l.b16 %v1087
      %v3658 = vunpack.c.l.b16 %v1088
      %v3659 = vunpack.c.l.b16 %v1089
      %v3660 = vunpack.c.l.b16 %v1090
      %v3661 = vunpack.c.l.b16 %v1091
      %v3662 = vunpack.c.l.b16 %v1092
      %v3663 = vunpack.c.l.b16 %v1093
      %v3664 = vunpack.c.l.b16 %v1094
      %v3665 = vunpack.c.l.b16 %v1095
      %v3666 = vunpack.c.l.b16 %v1096
      %v3667 = vunpack.c.l.b16 %v1097
      %v3668 = vunpack.c.l.b16 %v1098
      %v3669 = vunpack.c.l.b16 %v1099
      %v3670 = vunpack.c.l.b16 %v1100
      %v3671 = vunpack.c.l.b16 %v1101
      %v3672 = vunpack.c.l.b16 %v1102
      %v3673 = vunpack.c.l.b16 %v1103
      %v3674 = vunpack.c.l.b16 %v1104
      %v3675 = vunpack.c.l.b16 %v1105
      %v3676 = vunpack.c.l.b16 %v1106
      %v3677 = vunpack.c.l.b16 %v1107
      %v3678 = vunpack.c.l.b16 %v1108
      %v3679 = vunpack.c.l.b16 %v1109
      %v3680 = vunpack.c.l.b16 %v1110
      %v3681 = vunpack.c.l.b16 %v1111
      %v3682 = vunpack.c.l.b16 %v1112
      %v3683 = vunpack.c.l.b16 %v1113
      %v3684 = vunpack.c.l.b16 %v1114
      %v3685 = vunpack.c.l.b16 %v1115
      %v3686 = vunpack.c.l.b16 %v1116
      %v3687 = vunpack.c.l.b16 %v1117
      %v3688 = vunpack.c.l.b16 %v1118
      %v3689 = vunpack.c.l.b16 %v1119
      %v3690 = vunpack.c.l.b16 %v1120
      %v3691 = vunpack.c.l.b16 %v1121
      %v3692 = vunpack.c.l.b16 %v1122
      %v3693 = vunpack.c.l.b16 %v1123
      %v3694 = vunpack.c.l.b16 %v1124
      %v3695 = vunpack.c.l.b16 %v1125
      %v3696 = vunpack.c.l.b16 %v1126
      %v3697 = vunpack.c.l.b16 %v1127
      %v3698 = vunpack.c.l.b16 %v1128
      %v3699 = vunpack.c.l.b16 %v1129
      %v3700 = vunpack.c.l.b16 %v1130
      %v3701 = vunpack.c.l.b16 %v1131
      %v3702 = vunpack.c.l.b16 %v1132
      %v3703 = vunpack.c.l.b16 %v1133
      %v3704 = vunpack.c.l.b16 %v1134
      %v3705 = vunpack.c.l.b16 %v1135
      %v3706 = vunpack.c.l.b16 %v1136
      %v3707 = vunpack.c.l.b16 %v1137
      %v3708 = vunpack.c.l.b16 %v1138
      %v3709 = vunpack.c.l.b16 %v1139
      %v3710 = vunpack.c.l.b16 %v1140
      %v3711 = vunpack.c.l.b16 %v1141
      %v3712 = vunpack.c.l.b16 %v1142
      %v3713 = vunpack.c.l.b16 %v1143
      %v3714 = vunpack.c.l.b16 %v1144
      %v3715 = vunpack.c.l.b16 %v1145
      %v3716 = vunpack.c.l.b16 %v1146
      %v3717 = vunpack.c.l.b16 %v1147
      %v3718 = vunpack.c.l.b16 %v1148
      %v3719 = vunpack.c.l.b16 %v1149
      %v3720 = vunpack.c.l.b16 %v1150
      %v3721 = vunpack.c.l.b16 %v1151
      %v3722 = vunpack.c.l.b16 %v1152
      %v3723 = vunpack.c.l.b16 %v1153
      %v3724 = vunpack.c.l.b16 %v1154
      %v3725 = vunpack.c.l.b16 %v1155
      %v3726 = vunpack.c.l.b16 %v1156
      %v3727 = vunpack.c.l.b16 %v1157
      %v3728 = vunpack.c.l.b16 %v1158
      %v3729 = vunpack.c.l.b16 %v1159
      %v3730 = vunpack.c.l.b16 %v1160
      %v3731 = vunpack.c.l.b16 %v1161
      %v3732 = vunpack.c.l.b16 %v1162
      %v3733 = vunpack.c.l.b16 %v1163
      %v3734 = vunpack.c.l.b16 %v1164
      %v3735 = vunpack.c.l.b16 %v1165
      %v3736 = vunpack.c.l.b16 %v1166
      %v3737 = vunpack.c.l.b16 %v1167
      %v3738 = vunpack.c.l.b16 %v1168
      %v3739 = vunpack.c.l.b16 %v1169
      %v3740 = vunpack.c.l.b16 %v1170
      %v3741 = vunpack.c.l.b16 %v1171
      %v3742 = vunpack.c.l.b16 %v1172
      %v3743 = vunpack.c.l.b16 %v1173
      %v3744 = vunpack.c.l.b16 %v1174
      %v3745 = vunpack.c.l.b16 %v1175
      %v3746 = vunpack.c.l.b16 %v1176
      %v3747 = vunpack.c.l.b16 %v1177
      %v3748 = vunpack.c.l.b16 %v1178
      %v3749 = vunpack.c.l.b16 %v1179
      %v3750 = vunpack.c.l.b16 %v1180
      %v3751 = vunpack.c.l.b16 %v1181
      %v3752 = vunpack.c.l.b16 %v1182
      %v3753 = vunpack.c.l.b16 %v1183
      %v3754 = vunpack.c.l.b16 %v1184
      %v3755 = vunpack.c.l.b16 %v1185
      %v3756 = vunpack.c.l.b16 %v1186
      %v3757 = vunpack.c.l.b16 %v1187
      %v3758 = vunpack.c.l.b16 %v1188
      %v3759 = vunpack.c.l.b16 %v1189
      %v3760 = vunpack.c.l.b16 %v1190
      %v3761 = vunpack.c.l.b16 %v1191
      %v3762 = vunpack.c.l.b16 %v1192
      %v3763 = vunpack.c.l.b16 %v1193
      %v3764 = vunpack.c.l.b16 %v1194
      %v3765 = vunpack.c.l.b16 %v1195
      %v3766 = vunpack.c.l.b16 %v1196
      %v3767 = vunpack.c.l.b16 %v1197
      %v3768 = vunpack.c.l.b16 %v1198
      %v3769 = vunpack.c.l.b16 %v1199
      %v3770 = vunpack.c.l.b16 %v1200
      %v3771 = vunpack.c.l.b16 %v1201
      %v3772 = vunpack.c.l.b16 %v1202
      %v3773 = vunpack.c.l.b16 %v1203
      %v3774 = vunpack.c.l.b16 %v1204
      %v3775 = vunpack.c.l.b16 %v1205
      %v3776 = vunpack.c.l.b16 %v1206
      %v3777 = vunpack.c.l.b16 %v1207
      %v3778 = vunpack.c.l.b16 %v1208
      %v3779 = vunpack.c.l.b16 %v1209
      %v3780 = vunpack.c.l.b16 %v1210
      %v3781 = vunpack.c.l.b16 %v1211
      %v3782 = vunpack.c.l.b16 %v1212
      %v3783 = vunpack.c.l.b16 %v1213
      %v3784 = vunpack.c.l.b16 %v1214
      %v3785 = vunpack.c.l.b16 %v1215
      %v3786 = vunpack.c.l.b16 %v1216
      %v3787 = vunpack.c.l.b16 %v1217
      %v3788 = vunpack.c.l.b16 %v1218
      %v3789 = vunpack.c.l.b16 %v1219
      %v3790 = vunpack.c.l.b16 %v1220
      %v3791 = vunpack.c.l.b16 %v1221
      %v3792 = vunpack.c.l.b16 %v1222
      %v3793 = vunpack.c.l.b16 %v1223
      %v3794 = vunpack.c.l.b16 %v1224
      %v3795 = vunpack.c.l.b16 %v1225
      %v3796 = vunpack.c.l.b16 %v1226
      %v3797 = vunpack.c.l.b16 %v1227
      %v3798 = vunpack.c.l.b16 %v1228
      %v3799 = vunpack.c.l.b16 %v1229
      %v3800 = vunpack.c.l.b16 %v1230
      %v3801 = vunpack.c.l.b16 %v1231
      %v3802 = vunpack.c.l.b16 %v1232
      %v3803 = vunpack.c.l.b16 %v1233
      %v3804 = vunpack.c.l.b16 %v1234
      %v3805 = vunpack.c.l.b16 %v1235
      %v3806 = vunpack.c.l.b16 %v1236
      %v3807 = vunpack.c.l.b16 %v1237
      %v3808 = vunpack.c.l.b16 %v1238
      %v3809 = vunpack.c.l.b16 %v1239
      %v3810 = vunpack.c.l.b16 %v1240
      %v3811 = vunpack.c.l.b16 %v1241
      %v3812 = vunpack.c.l.b16 %v1242
      %v3813 = vunpack.c.l.b16 %v1243
      %v3814 = vunpack.c.l.b16 %v1244
      %v3815 = vunpack.c.l.b16 %v1245
      %v3816 = vunpack.c.l.b16 %v1246
      %v3817 = vunpack.c.l.b16 %v1247
      %v3818 = vunpack.c.l.b16 %v1248
      %v3819 = vunpack.c.l.b16 %v1249
      %v3820 = vunpack.c.l.b16 %v1250
      %v3821 = vunpack.c.l.b16 %v1251
      %v3822 = vunpack.c.l.b16 %v1252
      %v3823 = vunpack.c.l.b16 %v1253
      %v3824 = vunpack.c.l.b16 %v1254
      %v3825 = vunpack.c.l.b16 %v1255
      %v3826 = vunpack.c.l.b16 %v1256
      %v3827 = vunpack.c.l.b16 %v1257
      %v3828 = vunpack.c.l.b16 %v1258
      %v3829 = vunpack.c.l.b16 %v1259
      %v3830 = vunpack.c.l.b16 %v1260
      %v3831 = vunpack.c.l.b16 %v1261
      %v3832 = vunpack.c.l.b16 %v1262
      %v3833 = vunpack.c.l.b16 %v1263
      %v3834 = vunpack.c.l.b16 %v1264
      %v3835 = vunpack.c.l.b16 %v1265
      %v3836 = vunpack.c.l.b16 %v1266
      %v3837 = vunpack.c.l.b16 %v1267
      %v3838 = vunpack.c.l.b16 %v1268
      %v3839 = vunpack.c.l.b16 %v1269
      %v3840 = vunpack.c.l.b16 %v1270
      %v3841 = vunpack.c.l.b16 %v1271
      %v3842 = vunpack.c.l.b16 %v1272
      %v3843 = vunpack.c.l.b16 %v1273
      %v3844 = vunpack.c.l.b16 %v1274
      %v3845 = vunpack.c.l.b16 %v1275
      %v3846 = vunpack.c.l.b16 %v1276
      %v3847 = vunpack.c.l.b16 %v1277
      %v3848 = vunpack.c.l.b16 %v1278
      %v3849 = vunpack.c.l.b16 %v1279
      %v3850 = vunpack.c.l.b16 %v1280
      %v3851 = vunpack.c.l.b16 %v1281
      %v3852 = vunpack.c.l.b16 %v1282
      %v3853 = vunpack.c.l.b16 %v1283
      %v3854 = vunpack.c.l.b16 %v1284
      %v3855 = vunpack.c.l.b16 %v1285
      %v3856 = vunpack.c.l.b16 %v1286
      %v3857 = vunpack.c.l.b16 %v1287
      %v3858 = vunpack.c.l.b16 %v1288
      %v3859 = vunpack.c.l.b16 %v1289
      %v3860 = vunpack.c.l.b16 %v1290
      %v3861 = vunpack.c.l.b16 %v1291
      %v3862 = vunpack.c.l.b16 %v1292
      %v3863 = vunpack.c.l.b16 %v1293
      %v3864 = vunpack.c.l.b16 %v1294
      %v3865 = vunpack.c.l.b16 %v1295
      %v3866 = vunpack.c.l.b16 %v1296
      %v3867 = vunpack.c.l.b16 %v1297
      %v3868 = vunpack.c.l.b16 %v1298
      %v3869 = vunpack.c.l.b16 %v1299
      %v3870 = vunpack.c.l.b16 %v1300
      %v3871 = vunpack.c.l.b16 %v1301
      %v3872 = vunpack.c.l.b16 %v1302
      %v3873 = vunpack.c.l.b16 %v1303
      %v3874 = vunpack.c.l.b16 %v1304
      %v3875 = vunpack.c.l.b16 %v1305
      %v3876 = vunpack.c.l.b16 %v1306
      %v3877 = vunpack.c.l.b16 %v1307
      %v3878 = vunpack.c.l.b16 %v1308
      %v3879 = vunpack.c.l.b16 %v1309
      %v3880 = vunpack.c.l.b16 %v1310
      %v3881 = vunpack.c.l.b16 %v1311
      %v3882 = vunpack.c.l.b16 %v1312
      %v3883 = vunpack.c.l.b16 %v1313
      %v3884 = vunpack.c.l.b16 %v1314
      %v3885 = vunpack.c.l.b16 %v1315
      %v3886 = vunpack.c.l.b16 %v1316
      %v3887 = vunpack.c.l.b16 %v1317
      %v3888 = vunpack.c.l.b16 %v1318
      %v3889 = vunpack.c.l.b16 %v1319
      %v3890 = vunpack.c.l.b16 %v1320
      %v3891 = vunpack.c.l.b16 %v1321
      %v3892 = vunpack.c.l.b16 %v1322
      %v3893 = vunpack.c.l.b16 %v1323
      %v3894 = vunpack.c.l.b16 %v1324
      %v3895 = vunpack.c.l.b16 %v1325
      %v3896 = vunpack.c.l.b16 %v1326
      %v3897 = vunpack.c.l.b16 %v1327
      %v3898 = vunpack.c.l.b16 %v1328
      %v3899 = vunpack.c.l.b16 %v1329
      %v3900 = vunpack.c.l.b16 %v1330
      %v3901 = vunpack.c.l.b16 %v1331
      %v3902 = vunpack.c.l.b16 %v1332
      %v3903 = vunpack.c.l.b16 %v1333
      %v3904 = vunpack.c.l.b16 %v1334
      %v3905 = vunpack.c.l.b16 %v1335
      %v3906 = vunpack.c.l.b16 %v1336
      %v3907 = vunpack.c.l.b16 %v1337
      %v3908 = vunpack.c.l.b16 %v1338
      %v3909 = vunpack.c.l.b16 %v1339
      %v3910 = vunpack.c.l.b16 %v1340
      %v3911 = vunpack.c.l.b16 %v1341
      %v3912 = vunpack.c.l.b16 %v1342
      %v3913 = vunpack.c.l.b16 %v1343
      %v3914 = vunpack.c.l.b16 %v1344
      %v3915 = vunpack.c.l.b16 %v1345
      %v3916 = vunpack.c.l.b16 %v1346
      %v3917 = vunpack.c.l.b16 %v1347
      %v3918 = vunpack.c.l.b16 %v1348
      %v3919 = vunpack.c.l.b16 %v1349
      %v3920 = vunpack.c.l.b16 %v1350
      %v3921 = vunpack.c.l.b16 %v1351
      %v3922 = vunpack.c.l.b16 %v1352
      %v3923 = vunpack.c.l.b16 %v1353
      %v3924 = vunpack.c.l.b16 %v1354
      %v3925 = vunpack.c.l.b16 %v1355
      %v3926 = vunpack.c.l.b16 %v1356
      %v3927 = vunpack.c.l.b16 %v1357
      %v3928 = vunpack.c.l.b16 %v1358
      %v3929 = vunpack.c.l.b16 %v1359
      %v3930 = vunpack.c.l.b16 %v1360
      %v3931 = vunpack.c.l.b16 %v1361
      %v3932 = vunpack.c.l.b16 %v1362
      %v3933 = vunpack.c.l.b16 %v1363
      %v3934 = vunpack.c.l.b16 %v1364
      %v3935 = vunpack.c.l.b16 %v1365
      %v3936 = vunpack.c.l.b16 %v1366
      %v3937 = vunpack.c.l.b16 %v1367
      %v3938 = vunpack.c.l.b16 %v1368
      %v3939 = vunpack.c.l.b16 %v1369
      %v3940 = vunpack.c.l.b16 %v1370
      %v3941 = vunpack.c.l.b16 %v1371
      %v3942 = vunpack.c.l.b16 %v1372
      %v3943 = vunpack.c.l.b16 %v1373
      %v3944 = vunpack.c.l.b16 %v1374
      %v3945 = vunpack.c.l.b16 %v1375
      %v3946 = vunpack.c.l.b16 %v1376
      %v3947 = vunpack.c.l.b16 %v1377
      %v3948 = vunpack.c.l.b16 %v1378
      %v3949 = vunpack.c.l.b16 %v1379
      %v3950 = vunpack.c.l.b16 %v1380
      %v3951 = vunpack.c.l.b16 %v1381
      %v3952 = vunpack.c.l.b16 %v1382
      %v3953 = vunpack.c.l.b16 %v1383
      %v3954 = vunpack.c.l.b16 %v1384
      %v3955 = vunpack.c.l.b16 %v1385
      %v3956 = vunpack.c.l.b16 %v1386
      %v3957 = vunpack.c.l.b16 %v1387
      %v3958 = vunpack.c.l.b16 %v1388
      %v3959 = vunpack.c.l.b16 %v1389
      %v3960 = vunpack.c.l.b16 %v1390
      %v3961 = vunpack.c.l.b16 %v1391
      %v3962 = vunpack.c.l.b16 %v1392
      %v3963 = vunpack.c.l.b16 %v1393
      %v3964 = vunpack.c.l.b16 %v1394
      %v3965 = vunpack.c.l.b16 %v1395
      %v3966 = vunpack.c.l.b16 %v1396
      %v3967 = vunpack.c.l.b16 %v1397
      %v3968 = vunpack.c.l.b16 %v1398
      %v3969 = vunpack.c.l.b16 %v1399
      %v3970 = vunpack.c.l.b16 %v1400
      %v3971 = vunpack.c.l.b16 %v1401
      %v3972 = vunpack.c.l.b16 %v1402
      %v3973 = vunpack.c.l.b16 %v1403
      %v3974 = vunpack.c.l.b16 %v1404
      %v3975 = vunpack.c.l.b16 %v1405
      %v3976 = vunpack.c.l.b16 %v1406
      %v3977 = vunpack.c.l.b16 %v1407
      %v3978 = vunpack.c.l.b16 %v1408
      %v3979 = vunpack.c.l.b16 %v1409
      %v3980 = vunpack.c.l.b16 %v1410
      %v3981 = vunpack.c.l.b16 %v1411
      %v3982 = vunpack.c.l.b16 %v1412
      %v3983 = vunpack.c.l.b16 %v1413
      %v3984 = vunpack.c.l.b16 %v1414
      %v3985 = vunpack.c.l.b16 %v1415
      %v3986 = vunpack.c.l.b16 %v1416
      %v3987 = vunpack.c.l.b16 %v1417
      %v3988 = vunpack.c.l.b16 %v1418
      %v3989 = vpack.c.b16 %v2790, %v2789
      %v3990 = vpack.c.b16 %v2792, %v2791
      %v3991 = vpack.c.b16 %v2794, %v2793
      %v3992 = vpack.c.b16 %v2796, %v2795
      %v3993 = vpack.c.b16 %v2798, %v2797
      %v3994 = vpack.c.b16 %v2800, %v2799
      %v3995 = vpack.c.b16 %v2802, %v2801
      %v3996 = vpack.c.b16 %v2804, %v2803
      %v3997 = vpack.c.b16 %v2806, %v2805
      %v3998 = vpack.c.b16 %v2808, %v2807
      %v3999 = vpack.c.b16 %v2810, %v2809
      %v4000 = vpack.c.b16 %v2812, %v2811
      %v4001 = vpack.c.b16 %v2814, %v2813
      %v4002 = vpack.c.b16 %v2816, %v2815
      %v4003 = vpack.c.b16 %v2818, %v2817
      %v4004 = vpack.c.b16 %v2820, %v2819
      %v4005 = vpack.c.b16 %v2822, %v2821
      %v4006 = vpack.c.b16 %v2824, %v2823
      %v4007 = vpack.c.b16 %v2826, %v2825
      %v4008 = vpack.c.b16 %v2828, %v2827
      %v4009 = vpack.c.b16 %v2830, %v2829
      %v4010 = vpack.c.b16 %v2832, %v2831
      %v4011 = vpack.c.b16 %v2834, %v2833
      %v4012 = vpack.c.b16 %v2836, %v2835
      %v4013 = vpack.c.b16 %v2838, %v2837
      %v4014 = vpack.c.b16 %v2840, %v2839
      %v4015 = vpack.c.b16 %v2842, %v2841
      %v4016 = vpack.c.b16 %v2844, %v2843
      %v4017 = vpack.c.b16 %v2846, %v2845
      %v4018 = vpack.c.b16 %v2848, %v2847
      %v4019 = vpack.c.b16 %v2850, %v2849
      %v4020 = vpack.c.b16 %v2852, %v2851
      %v4021 = vpack.c.b16 %v2854, %v2853
      %v4022 = vpack.c.b16 %v2856, %v2855
      %v4023 = vpack.c.b16 %v2858, %v2857
      %v4024 = vpack.c.b16 %v2860, %v2859
      %v4025 = vpack.c.b16 %v2862, %v2861
      %v4026 = vpack.c.b16 %v2864, %v2863
      %v4027 = vpack.c.b16 %v2866, %v2865
      %v4028 = vpack.c.b16 %v2868, %v2867
      %v4029 = vpack.c.b16 %v2870, %v2869
      %v4030 = vpack.c.b16 %v2872, %v2871
      %v4031 = vpack.c.b16 %v2874, %v2873
      %v4032 = vpack.c.b16 %v2876, %v2875
      %v4033 = vpack.c.b16 %v2878, %v2877
      %v4034 = vpack.c.b16 %v2880, %v2879
      %v4035 = vpack.c.b16 %v2882, %v2881
      %v4036 = vpack.c.b16 %v2884, %v2883
      %v4037 = vpack.c.b16 %v2886, %v2885
      %v4038 = vpack.c.b16 %v2888, %v2887
      %v4039 = vpack.c.b16 %v2890, %v2889
      %v4040 = vpack.c.b16 %v2892, %v2891
      %v4041 = vpack.c.b16 %v2894, %v2893
      %v4042 = vpack.c.b16 %v2896, %v2895
      %v4043 = vpack.c.b16 %v2898, %v2897
      %v4044 = vpack.c.b16 %v2900, %v2899
      %v4045 = vpack.c.b16 %v2902, %v2901
      %v4046 = vpack.c.b16 %v2904, %v2903
      %v4047 = vpack.c.b16 %v2906, %v2905
      %v4048 = vpack.c.b16 %v2908, %v2907
      %v4049 = vpack.c.b16 %v2910, %v2909
      %v4050 = vpack.c.b16 %v2912, %v2911
      %v4051 = vpack.c.b16 %v2914, %v2913
      %v4052 = vpack.c.b16 %v2916, %v2915
      %v4053 = vpack.c.b16 %v2918, %v2917
      %v4054 = vpack.c.b16 %v2920, %v2919
      %v4055 = vpack.c.b16 %v2922, %v2921
      %v4056 = vpack.c.b16 %v2924, %v2923
      %v4057 = vpack.c.b16 %v2926, %v2925
      %v4058 = vpack.c.b16 %v2928, %v2927
      %v4059 = vpack.c.b16 %v2930, %v2929
      %v4060 = vpack.c.b16 %v2932, %v2931
      %v4061 = vpack.c.b16 %v2934, %v2933
      %v4062 = vpack.c.b16 %v2936, %v2935
      %v4063 = vpack.c.b16 %v2938, %v2937
      %v4064 = vpack.c.b16 %v2940, %v2939
      %v4065 = vpack.c.b16 %v2942, %v2941
      %v4066 = vpack.c.b16 %v2944, %v2943
      %v4067 = vpack.c.b16 %v2946, %v2945
      %v4068 = vpack.c.b16 %v2948, %v2947
      %v4069 = vpack.c.b16 %v2950, %v2949
      %v4070 = vpack.c.b16 %v2952, %v2951
      %v4071 = vpack.c.b16 %v2954, %v2953
      %v4072 = vpack.c.b16 %v2956, %v2955
      %v4073 = vpack.c.b16 %v2958, %v2957
      %v4074 = vpack.c.b16 %v2960, %v2959
      %v4075 = vpack.c.b16 %v2962, %v2961
      %v4076 = vpack.c.b16 %v2964, %v2963
      %v4077 = vpack.c.b16 %v2966, %v2965
      %v4078 = vpack.c.b16 %v2968, %v2967
      %v4079 = vpack.c.b16 %v2970, %v2969
      %v4080 = vpack.c.b16 %v2972, %v2971
      %v4081 = vpack.c.b16 %v2974, %v2973
      %v4082 = vpack.c.b16 %v2976, %v2975
      %v4083 = vpack.c.b16 %v2978, %v2977
      %v4084 = vpack.c.b16 %v2980, %v2979
      %v4085 = vpack.c.b16 %v2982, %v2981
      %v4086 = vpack.c.b16 %v2984, %v2983
      %v4087 = vpack.c.b16 %v2986, %v2985
      %v4088 = vpack.c.b16 %v2988, %v2987
      %v4089 = vpack.c.b16 %v2990, %v2989
      %v4090 = vpack.c.b16 %v2992, %v2991
      %v4091 = vpack.c.b16 %v2994, %v2993
      %v4092 = vpack.c.b16 %v2996, %v2995
      %v4093 = vpack.c.b16 %v2998, %v2997
      %v4094 = vpack.c.b16 %v3000, %v2999
      %v4095 = vpack.c.b16 %v3002, %v3001
      %v4096 = vpack.c.b16 %v3004, %v3003
      %v4097 = vpack.c.b16 %v3006, %v3005
      %v4098 = vpack.c.b16 %v3008, %v3007
      %v4099 = vpack.c.b16 %v3010, %v3009
      %v4100 = vpack.c.b16 %v3012, %v3011
      %v4101 = vpack.c.b16 %v3014, %v3013
      %v4102 = vpack.c.b16 %v3016, %v3015
      %v4103 = vpack.c.b16 %v3018, %v3017
      %v4104 = vpack.c.b16 %v3020, %v3019
      %v4105 = vpack.c.b16 %v3022, %v3021
      %v4106 = vpack.c.b16 %v3024, %v3023
      %v4107 = vpack.c.b16 %v3026, %v3025
      %v4108 = vpack.c.b16 %v3028, %v3027
      %v4109 = vpack.c.b16 %v3030, %v3029
      %v4110 = vpack.c.b16 %v3032, %v3031
      %v4111 = vpack.c.b16 %v3034, %v3033
      %v4112 = vpack.c.b16 %v3036, %v3035
      %v4113 = vpack.c.b16 %v3038, %v3037
      %v4114 = vpack.c.b16 %v3040, %v3039
      %v4115 = vpack.c.b16 %v3042, %v3041
      %v4116 = vpack.c.b16 %v3044, %v3043
      %v4117 = vpack.c.b16 %v3046, %v3045
      %v4118 = vpack.c.b16 %v3048, %v3047
      %v4119 = vpack.c.b16 %v3050, %v3049
      %v4120 = vpack.c.b16 %v3052, %v3051
      %v4121 = vpack.c.b16 %v3054, %v3053
      %v4122 = vpack.c.b16 %v3056, %v3055
      %v4123 = vpack.c.b16 %v3058, %v3057
      %v4124 = vpack.c.b16 %v3060, %v3059
      %v4125 = vpack.c.b16 %v3062, %v3061
      %v4126 = vpack.c.b16 %v3064, %v3063
      %v4127 = vpack.c.b16 %v3066, %v3065
      %v4128 = vpack.c.b16 %v3068, %v3067
      %v4129 = vpack.c.b16 %v3070, %v3069
      %v4130 = vpack.c.b16 %v3072, %v3071
      %v4131 = vpack.c.b16 %v3074, %v3073
      %v4132 = vpack.c.b16 %v3076, %v3075
      %v4133 = vpack.c.b16 %v3078, %v3077
      %v4134 = vpack.c.b16 %v3080, %v3079
      %v4135 = vpack.c.b16 %v3082, %v3081
      %v4136 = vpack.c.b16 %v3084, %v3083
      %v4137 = vpack.c.b16 %v3086, %v3085
      %v4138 = vpack.c.b16 %v3088, %v3087
      %v4139 = vpack.c.b16 %v3090, %v3089
      %v4140 = vpack.c.b16 %v3092, %v3091
      %v4141 = vpack.c.b16 %v3094, %v3093
      %v4142 = vpack.c.b16 %v3096, %v3095
      %v4143 = vpack.c.b16 %v3098, %v3097
      %v4144 = vpack.c.b16 %v3100, %v3099
      %v4145 = vpack.c.b16 %v3102, %v3101
      %v4146 = vpack.c.b16 %v3104, %v3103
      %v4147 = vpack.c.b16 %v3106, %v3105
      %v4148 = vpack.c.b16 %v3108, %v3107
      %v4149 = vpack.c.b16 %v3110, %v3109
      %v4150 = vpack.c.b16 %v3112, %v3111
      %v4151 = vpack.c.b16 %v3114, %v3113
      %v4152 = vpack.c.b16 %v3116, %v3115
      %v4153 = vpack.c.b16 %v3118, %v3117
      %v4154 = vpack.c.b16 %v3120, %v3119
      %v4155 = vpack.c.b16 %v3122, %v3121
      %v4156 = vpack.c.b16 %v3124, %v3123
      %v4157 = vpack.c.b16 %v3126, %v3125
      %v4158 = vpack.c.b16 %v3128, %v3127
      %v4159 = vpack.c.b16 %v3130, %v3129
      %v4160 = vpack.c.b16 %v3132, %v3131
      %v4161 = vpack.c.b16 %v3134, %v3133
      %v4162 = vpack.c.b16 %v3136, %v3135
      %v4163 = vpack.c.b16 %v3138, %v3137
      %v4164 = vpack.c.b16 %v3140, %v3139
      %v4165 = vpack.c.b16 %v3142, %v3141
      %v4166 = vpack.c.b16 %v3144, %v3143
      %v4167 = vpack.c.b16 %v3146, %v3145
      %v4168 = vpack.c.b16 %v3148, %v3147
      %v4169 = vpack.c.b16 %v3150, %v3149
      %v4170 = vpack.c.b16 %v3152, %v3151
      %v4171 = vpack.c.b16 %v3154, %v3153
      %v4172 = vpack.c.b16 %v3156, %v3155
      %v4173 = vpack.c.b16 %v3158, %v3157
      %v4174 = vpack.c.b16 %v3160, %v3159
      %v4175 = vpack.c.b16 %v3162, %v3161
      %v4176 = vpack.c.b16 %v3164, %v3163
      %v4177 = vpack.c.b16 %v3166, %v3165
      %v4178 = vpack.c.b16 %v3168, %v3167
      %v4179 = vpack.c.b16 %v3170, %v3169
      %v4180 = vpack.c.b16 %v3172, %v3171
      %v4181 = vpack.c.b16 %v3174, %v3173
      %v4182 = vpack.c.b16 %v3176, %v3175
      %v4183 = vpack.c.b16 %v3178, %v3177
      %v4184 = vpack.c.b16 %v3180, %v3179
      %v4185 = vpack.c.b16 %v3182, %v3181
      %v4186 = vpack.c.b16 %v3184, %v3183
      %v4187 = vpack.c.b16 %v3186, %v3185
      %v4188 = vpack.c.b16 %v3188, %v3187
      %v4189 = vpack.c.b16 %v3190, %v3189
      %v4190 = vpack.c.b16 %v3192, %v3191
      %v4191 = vpack.c.b16 %v3194, %v3193
      %v4192 = vpack.c.b16 %v3196, %v3195
      %v4193 = vpack.c.b16 %v3198, %v3197
      %v4194 = vpack.c.b16 %v3200, %v3199
      %v4195 = vpack.c.b16 %v3202, %v3201
      %v4196 = vpack.c.b16 %v3204, %v3203
      %v4197 = vpack.c.b16 %v3206, %v3205
      %v4198 = vpack.c.b16 %v3208, %v3207
      %v4199 = vpack.c.b16 %v3210, %v3209
      %v4200 = vpack.c.b16 %v3212, %v3211
      %v4201 = vpack.c.b16 %v3214, %v3213
      %v4202 = vpack.c.b16 %v3216, %v3215
      %v4203 = vpack.c.b16 %v3218, %v3217
      %v4204 = vpack.c.b16 %v3220, %v3219
      %v4205 = vpack.c.b16 %v3222, %v3221
      %v4206 = vpack.c.b16 %v3224, %v3223
      %v4207 = vpack.c.b16 %v3226, %v3225
      %v4208 = vpack.c.b16 %v3228, %v3227
      %v4209 = vpack.c.b16 %v3230, %v3229
      %v4210 = vpack.c.b16 %v3232, %v3231
      %v4211 = vpack.c.b16 %v3234, %v3233
      %v4212 = vpack.c.b16 %v3236, %v3235
      %v4213 = vpack.c.b16 %v3238, %v3237
      %v4214 = vpack.c.b16 %v3240, %v3239
      %v4215 = vpack.c.b16 %v3242, %v3241
      %v4216 = vpack.c.b16 %v3244, %v3243
      %v4217 = vpack.c.b16 %v3246, %v3245
      %v4218 = vpack.c.b16 %v3248, %v3247
      %v4219 = vpack.c.b16 %v3250, %v3249
      %v4220 = vpack.c.b16 %v3252, %v3251
      %v4221 = vpack.c.b16 %v3254, %v3253
      %v4222 = vpack.c.b16 %v3256, %v3255
      %v4223 = vpack.c.b16 %v3258, %v3257
      %v4224 = vpack.c.b16 %v3260, %v3259
      %v4225 = vpack.c.b16 %v3262, %v3261
      %v4226 = vpack.c.b16 %v3264, %v3263
      %v4227 = vpack.c.b16 %v3266, %v3265
      %v4228 = vpack.c.b16 %v3268, %v3267
      %v4229 = vpack.c.b16 %v3270, %v3269
      %v4230 = vpack.c.b16 %v3272, %v3271
      %v4231 = vpack.c.b16 %v3274, %v3273
      %v4232 = vpack.c.b16 %v3276, %v3275
      %v4233 = vpack.c.b16 %v3278, %v3277
      %v4234 = vpack.c.b16 %v3280, %v3279
      %v4235 = vpack.c.b16 %v3282, %v3281
      %v4236 = vpack.c.b16 %v3284, %v3283
      %v4237 = vpack.c.b16 %v3286, %v3285
      %v4238 = vpack.c.b16 %v3288, %v3287
      %v4239 = vpack.c.b16 %v3290, %v3289
      %v4240 = vpack.c.b16 %v3292, %v3291
      %v4241 = vpack.c.b16 %v3294, %v3293
      %v4242 = vpack.c.b16 %v3296, %v3295
      %v4243 = vpack.c.b16 %v3298, %v3297
      %v4244 = vpack.c.b16 %v3300, %v3299
      %v4245 = vpack.c.b16 %v3302, %v3301
      %v4246 = vpack.c.b16 %v3304, %v3303
      %v4247 = vpack.c.b16 %v3306, %v3305
      %v4248 = vpack.c.b16 %v3308, %v3307
      %v4249 = vpack.c.b16 %v3310, %v3309
      %v4250 = vpack.c.b16 %v3312, %v3311
      %v4251 = vpack.c.b16 %v3314, %v3313
      %v4252 = vpack.c.b16 %v3316, %v3315
      %v4253 = vpack.c.b16 %v3318, %v3317
      %v4254 = vpack.c.b16 %v3320, %v3319
      %v4255 = vpack.c.b16 %v3322, %v3321
      %v4256 = vpack.c.b16 %v3324, %v3323
      %v4257 = vpack.c.b16 %v3326, %v3325
      %v4258 = vpack.c.b16 %v3328, %v3327
      %v4259 = vpack.c.b16 %v3330, %v3329
      %v4260 = vpack.c.b16 %v3332, %v3331
      %v4261 = vpack.c.b16 %v3334, %v3333
      %v4262 = vpack.c.b16 %v3336, %v3335
      %v4263 = vpack.c.b16 %v3338, %v3337
      %v4264 = vpack.c.b16 %v3340, %v3339
      %v4265 = vpack.c.b16 %v3342, %v3341
      %v4266 = vpack.c.b16 %v3344, %v3343
      %v4267 = vpack.c.b16 %v3346, %v3345
      %v4268 = vpack.c.b16 %v3348, %v3347
      %v4269 = vpack.c.b16 %v3350, %v3349
      %v4270 = vpack.c.b16 %v3352, %v3351
      %v4271 = vpack.c.b16 %v3354, %v3353
      %v4272 = vpack.c.b16 %v3356, %v3355
      %v4273 = vpack.c.b16 %v3358, %v3357
      %v4274 = vpack.c.b16 %v3360, %v3359
      %v4275 = vpack.c.b16 %v3362, %v3361
      %v4276 = vpack.c.b16 %v3364, %v3363
      %v4277 = vpack.c.b16 %v3366, %v3365
      %v4278 = vpack.c.b16 %v3368, %v3367
      %v4279 = vpack.c.b16 %v3370, %v3369
      %v4280 = vpack.c.b16 %v3372, %v3371
      %v4281 = vpack.c.b16 %v3374, %v3373
      %v4282 = vpack.c.b16 %v3376, %v3375
      %v4283 = vpack.c.b16 %v3378, %v3377
      %v4284 = vpack.c.b16 %v3380, %v3379
      %v4285 = vpack.c.b16 %v3382, %v3381
      %v4286 = vpack.c.b16 %v3384, %v3383
      %v4287 = vpack.c.b16 %v3386, %v3385
      %v4288 = vpack.c.b16 %v3388, %v3387
      %v4289 = vpack.c.b16 %v3390, %v3389
      %v4290 = vpack.c.b16 %v3392, %v3391
      %v4291 = vpack.c.b16 %v3394, %v3393
      %v4292 = vpack.c.b16 %v3396, %v3395
      %v4293 = vpack.c.b16 %v3398, %v3397
      %v4294 = vpack.c.b16 %v3400, %v3399
      %v4295 = vpack.c.b16 %v3402, %v3401
      %v4296 = vpack.c.b16 %v3404, %v3403
      %v4297 = vpack.c.b16 %v3406, %v3405
      %v4298 = vpack.c.b16 %v3408, %v3407
      %v4299 = vpack.c.b16 %v3410, %v3409
      %v4300 = vpack.c.b16 %v3412, %v3411
      %v4301 = vpack.c.b16 %v3414, %v3413
      %v4302 = vpack.c.b16 %v3416, %v3415
      %v4303 = vpack.c.b16 %v3418, %v3417
      %v4304 = vpack.c.b16 %v3420, %v3419
      %v4305 = vpack.c.b16 %v3422, %v3421
      %v4306 = vpack.c.b16 %v3424, %v3423
      %v4307 = vpack.c.b16 %v3426, %v3425
      %v4308 = vpack.c.b16 %v3428, %v3427
      %v4309 = vpack.c.b16 %v3430, %v3429
      %v4310 = vpack.c.b16 %v3432, %v3431
      %v4311 = vpack.c.b16 %v3434, %v3433
      %v4312 = vpack.c.b16 %v3436, %v3435
      %v4313 = vpack.c.b16 %v3438, %v3437
      %v4314 = vpack.c.b16 %v3440, %v3439
      %v4315 = vpack.c.b16 %v3442, %v3441
      %v4316 = vpack.c.b16 %v3444, %v3443
      %v4317 = vpack.c.b16 %v3446, %v3445
      %v4318 = vpack.c.b16 %v3448, %v3447
      %v4319 = vpack.c.b16 %v3450, %v3449
      %v4320 = vpack.c.b16 %v3452, %v3451
      %v4321 = vpack.c.b16 %v3454, %v3453
      %v4322 = vpack.c.b16 %v3456, %v3455
      %v4323 = vpack.c.b16 %v3458, %v3457
      %v4324 = vpack.c.b16 %v3460, %v3459
      %v4325 = vpack.c.b16 %v3462, %v3461
      %v4326 = vpack.c.b16 %v3464, %v3463
      %v4327 = vpack.c.b16 %v3466, %v3465
      %v4328 = vpack.c.b16 %v3468, %v3467
      %v4329 = vpack.c.b16 %v3470, %v3469
      %v4330 = vpack.c.b16 %v3472, %v3471
      %v4331 = vpack.c.b16 %v3474, %v3473
      %v4332 = vpack.c.b16 %v3476, %v3475
      %v4333 = vpack.c.b16 %v3478, %v3477
      %v4334 = vpack.c.b16 %v3480, %v3479
      %v4335 = vpack.c.b16 %v3482, %v3481
      %v4336 = vpack.c.b16 %v3484, %v3483
      %v4337 = vpack.c.b16 %v3486, %v3485
      %v4338 = vpack.c.b16 %v3488, %v3487
      %v4339 = vpack.c.b16 %v3490, %v3489
      %v4340 = vpack.c.b16 %v3492, %v3491
      %v4341 = vpack.c.b16 %v3494, %v3493
      %v4342 = vpack.c.b16 %v3496, %v3495
      %v4343 = vpack.c.b16 %v3498, %v3497
      %v4344 = vpack.c.b16 %v3500, %v3499
      %v4345 = vpack.c.b16 %v3502, %v3501
      %v4346 = vpack.c.b16 %v3504, %v3503
      %v4347 = vpack.c.b16 %v3506, %v3505
      %v4348 = vpack.c.b16 %v3508, %v3507
      %v4349 = vpack.c.b16 %v3510, %v3509
      %v4350 = vpack.c.b16 %v3512, %v3511
      %v4351 = vpack.c.b16 %v3514, %v3513
      %v4352 = vpack.c.b16 %v3516, %v3515
      %v4353 = vpack.c.b16 %v3518, %v3517
      %v4354 = vpack.c.b16 %v3520, %v3519
      %v4355 = vpack.c.b16 %v3522, %v3521
      %v4356 = vpack.c.b16 %v3524, %v3523
      %v4357 = vpack.c.b16 %v3526, %v3525
      %v4358 = vpack.c.b16 %v3528, %v3527
      %v4359 = vpack.c.b16 %v3530, %v3529
      %v4360 = vpack.c.b16 %v3532, %v3531
      %v4361 = vpack.c.b16 %v3534, %v3533
      %v4362 = vpack.c.b16 %v3536, %v3535
      %v4363 = vpack.c.b16 %v3538, %v3537
      %v4364 = vpack.c.b16 %v3540, %v3539
      %v4365 = vpack.c.b16 %v3542, %v3541
      %v4366 = vpack.c.b16 %v3544, %v3543
      %v4367 = vpack.c.b16 %v3546, %v3545
      %v4368 = vpack.c.b16 %v3548, %v3547
      %v4369 = vpack.c.b16 %v3550, %v3549
      %v4370 = vpack.c.b16 %v3552, %v3551
      %v4371 = vpack.c.b16 %v3554, %v3553
      %v4372 = vpack.c.b16 %v3556, %v3555
      %v4373 = vpack.c.b16 %v3558, %v3557
      %v4374 = vpack.c.b16 %v3560, %v3559
      %v4375 = vpack.c.b16 %v3562, %v3561
      %v4376 = vpack.c.b16 %v3564, %v3563
      %v4377 = vpack.c.b16 %v3566, %v3565
      %v4378 = vpack.c.b16 %v3568, %v3567
      %v4379 = vpack.c.b16 %v3570, %v3569
      %v4380 = vpack.c.b16 %v3572, %v3571
      %v4381 = vpack.c.b16 %v3574, %v3573
      %v4382 = vpack.c.b16 %v3576, %v3575
      %v4383 = vpack.c.b16 %v3578, %v3577
      %v4384 = vpack.c.b16 %v3580, %v3579
      %v4385 = vpack.c.b16 %v3582, %v3581
      %v4386 = vpack.c.b16 %v3584, %v3583
      %v4387 = vpack.c.b16 %v3586, %v3585
      %v4388 = vpack.c.b16 %v3588, %v3587
      %v4389 = vpack.c.b16 %v3590, %v3589
      %v4390 = vpack.c.b16 %v3592, %v3591
      %v4391 = vpack.c.b16 %v3594, %v3593
      %v4392 = vpack.c.b16 %v3596, %v3595
      %v4393 = vpack.c.b16 %v3598, %v3597
      %v4394 = vpack.c.b16 %v3600, %v3599
      %v4395 = vpack.c.b16 %v3602, %v3601
      %v4396 = vpack.c.b16 %v3604, %v3603
      %v4397 = vpack.c.b16 %v3606, %v3605
      %v4398 = vpack.c.b16 %v3608, %v3607
      %v4399 = vpack.c.b16 %v3610, %v3609
      %v4400 = vpack.c.b16 %v3612, %v3611
      %v4401 = vpack.c.b16 %v3614, %v3613
      %v4402 = vpack.c.b16 %v3616, %v3615
      %v4403 = vpack.c.b16 %v3618, %v3617
      %v4404 = vpack.c.b16 %v3620, %v3619
      %v4405 = vpack.c.b16 %v3622, %v3621
      %v4406 = vpack.c.b16 %v3624, %v3623
      %v4407 = vpack.c.b16 %v3626, %v3625
      %v4408 = vpack.c.b16 %v3628, %v3627
      %v4409 = vpack.c.b16 %v3630, %v3629
      %v4410 = vpack.c.b16 %v3632, %v3631
      %v4411 = vpack.c.b16 %v3634, %v3633
      %v4412 = vpack.c.b16 %v3636, %v3635
      %v4413 = vpack.c.b16 %v3638, %v3637
      %v4414 = vpack.c.b16 %v3640, %v3639
      %v4415 = vpack.c.b16 %v3642, %v3641
      %v4416 = vpack.c.b16 %v3644, %v3643
      %v4417 = vpack.c.b16 %v3646, %v3645
      %v4418 = vpack.c.b16 %v3648, %v3647
      %v4419 = vpack.c.b16 %v3650, %v3649
      %v4420 = vpack.c.b16 %v3652, %v3651
      %v4421 = vpack.c.b16 %v3654, %v3653
      %v4422 = vpack.c.b16 %v3656, %v3655
      %v4423 = vpack.c.b16 %v3658, %v3657
      %v4424 = vpack.c.b16 %v3660, %v3659
      %v4425 = vpack.c.b16 %v3662, %v3661
      %v4426 = vpack.c.b16 %v3664, %v3663
      %v4427 = vpack.c.b16 %v3666, %v3665
      %v4428 = vpack.c.b16 %v3668, %v3667
      %v4429 = vpack.c.b16 %v3670, %v3669
      %v4430 = vpack.c.b16 %v3672, %v3671
      %v4431 = vpack.c.b16 %v3674, %v3673
      %v4432 = vpack.c.b16 %v3676, %v3675
      %v4433 = vpack.c.b16 %v3678, %v3677
      %v4434 = vpack.c.b16 %v3680, %v3679
      %v4435 = vpack.c.b16 %v3682, %v3681
      %v4436 = vpack.c.b16 %v3684, %v3683
      %v4437 = vpack.c.b16 %v3686, %v3685
      %v4438 = vpack.c.b16 %v3688, %v3687
      %v4439 = vpack.c.b16 %v3690, %v3689
      %v4440 = vpack.c.b16 %v3692, %v3691
      %v4441 = vpack.c.b16 %v3694, %v3693
      %v4442 = vpack.c.b16 %v3696, %v3695
      %v4443 = vpack.c.b16 %v3698, %v3697
      %v4444 = vpack.c.b16 %v3700, %v3699
      %v4445 = vpack.c.b16 %v3702, %v3701
      %v4446 = vpack.c.b16 %v3704, %v3703
      %v4447 = vpack.c.b16 %v3706, %v3705
      %v4448 = vpack.c.b16 %v3708, %v3707
      %v4449 = vpack.c.b16 %v3710, %v3709
      %v4450 = vpack.c.b16 %v3712, %v3711
      %v4451 = vpack.c.b16 %v3714, %v3713
      %v4452 = vpack.c.b16 %v3716, %v3715
      %v4453 = vpack.c.b16 %v3718, %v3717
      %v4454 = vpack.c.b16 %v3720, %v3719
      %v4455 = vpack.c.b16 %v3722, %v3721
      %v4456 = vpack.c.b16 %v3724, %v3723
      %v4457 = vpack.c.b16 %v3726, %v3725
      %v4458 = vpack.c.b16 %v3728, %v3727
      %v4459 = vpack.c.b16 %v3730, %v3729
      %v4460 = vpack.c.b16 %v3732, %v3731
      %v4461 = vpack.c.b16 %v3734, %v3733
      %v4462 = vpack.c.b16 %v3736, %v3735
      %v4463 = vpack.c.b16 %v3738, %v3737
      %v4464 = vpack.c.b16 %v3740, %v3739
      %v4465 = vpack.c.b16 %v3742, %v3741
      %v4466 = vpack.c.b16 %v3744, %v3743
      %v4467 = vpack.c.b16 %v3746, %v3745
      %v4468 = vpack.c.b16 %v3748, %v3747
      %v4469 = vpack.c.b16 %v3750, %v3749
      %v4470 = vpack.c.b16 %v3752, %v3751
      %v4471 = vpack.c.b16 %v3754, %v3753
      %v4472 = vpack.c.b16 %v3756, %v3755
      %v4473 = vpack.c.b16 %v3758, %v3757
      %v4474 = vpack.c.b16 %v3760, %v3759
      %v4475 = vpack.c.b16 %v3762, %v3761
      %v4476 = vpack.c.b16 %v3764, %v3763
      %v4477 = vpack.c.b16 %v3766, %v3765
      %v4478 = vpack.c.b16 %v3768, %v3767
      %v4479 = vpack.c.b16 %v3770, %v3769
      %v4480 = vpack.c.b16 %v3772, %v3771
      %v4481 = vpack.c.b16 %v3774, %v3773
      %v4482 = vpack.c.b16 %v3776, %v3775
      %v4483 = vpack.c.b16 %v3778, %v3777
      %v4484 = vpack.c.b16 %v3780, %v3779
      %v4485 = vpack.c.b16 %v3782, %v3781
      %v4486 = vpack.c.b16 %v3784, %v3783
      %v4487 = vpack.c.b16 %v3786, %v3785
      %v4488 = vpack.c.b16 %v3788, %v3787
      %v4489 = vpack.c.b16 %v3790, %v3789
      %v4490 = vpack.c.b16 %v3792, %v3791
      %v4491 = vpack.c.b16 %v3794, %v3793
      %v4492 = vpack.c.b16 %v3796, %v3795
      %v4493 = vpack.c.b16 %v3798, %v3797
      %v4494 = vpack.c.b16 %v3800, %v3799
      %v4495 = vpack.c.b16 %v3802, %v3801
      %v4496 = vpack.c.b16 %v3804, %v3803
      %v4497 = vpack.c.b16 %v3806, %v3805
      %v4498 = vpack.c.b16 %v3808, %v3807
      %v4499 = vpack.c.b16 %v3810, %v3809
      %v4500 = vpack.c.b16 %v3812, %v3811
      %v4501 = vpack.c.b16 %v3814, %v3813
      %v4502 = vpack.c.b16 %v3816, %v3815
      %v4503 = vpack.c.b16 %v3818, %v3817
      %v4504 = vpack.c.b16 %v3820, %v3819
      %v4505 = vpack.c.b16 %v3822, %v3821
      %v4506 = vpack.c.b16 %v3824, %v3823
      %v4507 = vpack.c.b16 %v3826, %v3825
      %v4508 = vpack.c.b16 %v3828, %v3827
      %v4509 = vpack.c.b16 %v3830, %v3829
      %v4510 = vpack.c.b16 %v3832, %v3831
      %v4511 = vpack.c.b16 %v3834, %v3833
      %v4512 = vpack.c.b16 %v3836, %v3835
      %v4513 = vpack.c.b16 %v3838, %v3837
      %v4514 = vpack.c.b16 %v3840, %v3839
      %v4515 = vpack.c.b16 %v3842, %v3841
      %v4516 = vpack.c.b16 %v3844, %v3843
      %v4517 = vpack.c.b16 %v3846, %v3845
      %v4518 = vpack.c.b16 %v3848, %v3847
      %v4519 = vpack.c.b16 %v3850, %v3849
      %v4520 = vpack.c.b16 %v3852, %v3851
      %v4521 = vpack.c.b16 %v3854, %v3853
      %v4522 = vpack.c.b16 %v3856, %v3855
      %v4523 = vpack.c.b16 %v3858, %v3857
      %v4524 = vpack.c.b16 %v3860, %v3859
      %v4525 = vpack.c.b16 %v3862, %v3861
      %v4526 = vpack.c.b16 %v3864, %v3863
      %v4527 = vpack.c.b16 %v3866, %v3865
      %v4528 = vpack.c.b16 %v3868, %v3867
      %v4529 = vpack.c.b16 %v3870, %v3869
      %v4530 = vpack.c.b16 %v3872, %v3871
      %v4531 = vpack.c.b16 %v3874, %v3873
      %v4532 = vpack.c.b16 %v3876, %v3875
      %v4533 = vpack.c.b16 %v3878, %v3877
      %v4534 = vpack.c.b16 %v3880, %v3879
      %v4535 = vpack.c.b16 %v3882, %v3881
      %v4536 = vpack.c.b16 %v3884, %v3883
      %v4537 = vpack.c.b16 %v3886, %v3885
      %v4538 = vpack.c.b16 %v3888, %v3887
      %v4539 = vpack.c.b16 %v3890, %v3889
      %v4540 = vpack.c.b16 %v3892, %v3891
      %v4541 = vpack.c.b16 %v3894, %v3893
      %v4542 = vpack.c.b16 %v3896, %v3895
      %v4543 = vpack.c.b16 %v3898, %v3897
      %v4544 = vpack.c.b16 %v3900, %v3899
      %v4545 = vpack.c.b16 %v3902, %v3901
      %v4546 = vpack.c.b16 %v3904, %v3903
      %v4547 = vpack.c.b16 %v3906, %v3905
      %v4548 = vpack.c.b16 %v3908, %v3907
      %v4549 = vpack.c.b16 %v3910, %v3909
      %v4550 = vpack.c.b16 %v3912, %v3911
      %v4551 = vpack.c.b16 %v3914, %v3913
      %v4552 = vpack.c.b16 %v3916, %v3915
      %v4553 = vpack.c.b16 %v3918, %v3917
      %v4554 = vpack.c.b16 %v3920, %v3919
      %v4555 = vpack.c.b16 %v3922, %v3921
      %v4556 = vpack.c.b16 %v3924, %v3923
      %v4557 = vpack.c.b16 %v3926, %v3925
      %v4558 = vpack.c.b16 %v3928, %v3927
      %v4559 = vpack.c.b16 %v3930, %v3929
      %v4560 = vpack.c.b16 %v3932, %v3931
      %v4561 = vpack.c.b16 %v3934, %v3933
      %v4562 = vpack.c.b16 %v3936, %v3935
      %v4563 = vpack.c.b16 %v3938, %v3937
      %v4564 = vpack.c.b16 %v3940, %v3939
      %v4565 = vpack.c.b16 %v3942, %v3941
      %v4566 = vpack.c.b16 %v3944, %v3943
      %v4567 = vpack.c.b16 %v3946, %v3945
      %v4568 = vpack.c.b16 %v3948, %v3947
      %v4569 = vpack.c.b16 %v3950, %v3949
      %v4570 = vpack.c.b16 %v3952, %v3951
      %v4571 = vpack.c.b16 %v3954, %v3953
      %v4572 = vpack.c.b16 %v3956, %v3955
      %v4573 = vpack.c.b16 %v3958, %v3957
      %v4574 = vpack.c.b16 %v3960, %v3959
      %v4575 = vpack.c.b16 %v3962, %v3961
      %v4576 = vpack.c.b16 %v3964, %v3963
      %v4577 = vpack.c.b16 %v3966, %v3965
      %v4578 = vpack.c.b16 %v3968, %v3967
      %v4579 = vpack.c.b16 %v3970, %v3969
      %v4580 = vpack.c.b16 %v3972, %v3971
      %v4581 = vpack.c.b16 %v3974, %v3973
      %v4582 = vpack.c.b16 %v3976, %v3975
      %v4583 = vpack.c.b16 %v3978, %v3977
      %v4584 = vpack.c.b16 %v3980, %v3979
      %v4585 = vpack.c.b16 %v3982, %v3981
      %v4586 = vpack.c.b16 %v3984, %v3983
      %v4587 = vpack.c.b16 %v3986, %v3985
      %v4588 = vpack.c.b16 %v3988, %v3987
      %5189 = vmatpush.bf16.msra.mxu0 %v3996
      %5190 = vmatpush.bf16.msra.mxu0 %v3995
      %5191 = vmatpush.bf16.msra.mxu0 %v3994
      %5192 = vmatpush.bf16.msra.mxu0 %v3993
      %5193 = vmatpush.bf16.msra.mxu0 %v3992
      %5194 = vmatpush.bf16.msra.mxu0 %v3991
      %5195 = vmatpush.bf16.msra.mxu0 %v3990
      %5196 = vmatpush.bf16.msra.mxu0 %v3989
      %5197 = vmatmul.bf16.gmra.mxu0 %v1421
      %v5198 = vpop.f32.mrf.mxu0
      %v5199 = vadd.f32 0.0, %v5198
      %v5200 = vpop.f32.mrf.mxu0
      %5201 = vdwg.mxu0
      %5202 = vmatpush.bf16.msra.mxu0 %v4004
      %5203 = vmatpush.bf16.msra.mxu0 %v4003
      %5204 = vmatpush.bf16.msra.mxu0 %v4002
      %5205 = vmatpush.bf16.msra.mxu0 %v4001
      %5206 = vmatpush.bf16.msra.mxu0 %v4000
      %5207 = vmatpush.bf16.msra.mxu0 %v3999
      %5208 = vmatpush.bf16.msra.mxu0 %v3998
      %5209 = vmatpush.bf16.msra.mxu0 %v3997
      %5210 = vmatmul.bf16.gmra.mxu0 %v1422
      %v5211 = vpop.f32.mrf.mxu0
      %v5212 = vadd.f32 %v5199, %v5211
      %v5213 = vpop.f32.mrf.mxu0
      %5214 = vdwg.mxu0
      %5215 = vmatpush.bf16.msra.mxu0 %v4012
      %5216 = vmatpush.bf16.msra.mxu0 %v4011
      %5217 = vmatpush.bf16.msra.mxu0 %v4010
      %5218 = vmatpush.bf16.msra.mxu0 %v4009
      %5219 = vmatpush.bf16.msra.mxu0 %v4008
      %5220 = vmatpush.bf16.msra.mxu0 %v4007
      %5221 = vmatpush.bf16.msra.mxu0 %v4006
      %5222 = vmatpush.bf16.msra.mxu0 %v4005
      %5223 = vmatmul.bf16.gmra.mxu0 %v1423
      %v5224 = vpop.f32.mrf.mxu0
      %v5225 = vadd.f32 %v5212, %v5224
      %v5226 = vpop.f32.mrf.mxu0
      %5227 = vdwg.mxu0
      %5228 = vmatpush.bf16.msra.mxu0 %v4020
      %5229 = vmatpush.bf16.msra.mxu0 %v4019
      %5230 = vmatpush.bf16.msra.mxu0 %v4018
      %5231 = vmatpush.bf16.msra.mxu0 %v4017
      %5232 = vmatpush.bf16.msra.mxu0 %v4016
      %5233 = vmatpush.bf16.msra.mxu0 %v4015
      %5234 = vmatpush.bf16.msra.mxu0 %v4014
      %5235 = vmatpush.bf16.msra.mxu0 %v4013
      %5236 = vmatmul.bf16.gmra.mxu0 %v1424
      %v5237 = vpop.f32.mrf.mxu0
      %v5238 = vadd.f32 %v5225, %v5237
      %v5239 = vpop.f32.mrf.mxu0
      %5240 = vdwg.mxu0
      %5241 = vmatpush.bf16.msra.mxu0 %v4028
      %5242 = vmatpush.bf16.msra.mxu0 %v4027
      %5243 = vmatpush.bf16.msra.mxu0 %v4026
      %5244 = vmatpush.bf16.msra.mxu0 %v4025
      %5245 = vmatpush.bf16.msra.mxu0 %v4024
      %5246 = vmatpush.bf16.msra.mxu0 %v4023
      %5247 = vmatpush.bf16.msra.mxu0 %v4022
      %5248 = vmatpush.bf16.msra.mxu0 %v4021
      %5249 = vmatmul.bf16.gmra.mxu0 %v1425
      %v5250 = vpop.f32.mrf.mxu0
      %v5251 = vadd.f32 %v5238, %v5250
      %v5252 = vpop.f32.mrf.mxu0
      %5253 = vdwg.mxu0
      %5254 = vmatpush.bf16.msra.mxu0 %v4036
      %5255 = vmatpush.bf16.msra.mxu0 %v4035
      %5256 = vmatpush.bf16.msra.mxu0 %v4034
      %5257 = vmatpush.bf16.msra.mxu0 %v4033
      %5258 = vmatpush.bf16.msra.mxu0 %v4032
      %5259 = vmatpush.bf16.msra.mxu0 %v4031
      %5260 = vmatpush.bf16.msra.mxu0 %v4030
      %5261 = vmatpush.bf16.msra.mxu0 %v4029
      %5262 = vmatmul.bf16.gmra.mxu0 %v1426
      %v5263 = vpop.f32.mrf.mxu0
      %v5264 = vadd.f32 %v5251, %v5263
      %v5265 = vpop.f32.mrf.mxu0
      %5266 = vdwg.mxu0
      %5267 = vmatpush.bf16.msra.mxu0 %v4044
      %5268 = vmatpush.bf16.msra.mxu0 %v4043
      %5269 = vmatpush.bf16.msra.mxu0 %v4042
      %5270 = vmatpush.bf16.msra.mxu0 %v4041
      %5271 = vmatpush.bf16.msra.mxu0 %v4040
      %5272 = vmatpush.bf16.msra.mxu0 %v4039
      %5273 = vmatpush.bf16.msra.mxu0 %v4038
      %5274 = vmatpush.bf16.msra.mxu0 %v4037
      %5275 = vmatmul.bf16.gmra.mxu0 %v1427
      %v5276 = vpop.f32.mrf.mxu0
      %v5277 = vadd.f32 %v5264, %v5276
      %v5278 = vpop.f32.mrf.mxu0
      %5279 = vdwg.mxu0
      %5280 = vmatpush.bf16.msra.mxu0 %v4052
      %5281 = vmatpush.bf16.msra.mxu0 %v4051
      %5282 = vmatpush.bf16.msra.mxu0 %v4050
      %5283 = vmatpush.bf16.msra.mxu0 %v4049
      %5284 = vmatpush.bf16.msra.mxu0 %v4048
      %5285 = vmatpush.bf16.msra.mxu0 %v4047
      %5286 = vmatpush.bf16.msra.mxu0 %v4046
      %5287 = vmatpush.bf16.msra.mxu0 %v4045
      %5288 = vmatmul.bf16.gmra.mxu0 %v1428
      %v5289 = vpop.f32.mrf.mxu0
      %v5290 = vadd.f32 %v5277, %v5289
      %v5291 = vpop.f32.mrf.mxu0
      %5292 = vdwg.mxu0
      %5293 = vmatpush.bf16.msra.mxu0 %v4060
      %5294 = vmatpush.bf16.msra.mxu0 %v4059
      %5295 = vmatpush.bf16.msra.mxu0 %v4058
      %5296 = vmatpush.bf16.msra.mxu0 %v4057
      %5297 = vmatpush.bf16.msra.mxu0 %v4056
      %5298 = vmatpush.bf16.msra.mxu0 %v4055
      %5299 = vmatpush.bf16.msra.mxu0 %v4054
      %5300 = vmatpush.bf16.msra.mxu0 %v4053
      %5301 = vmatmul.bf16.gmra.mxu0 %v1431
      %v5302 = vpop.f32.mrf.mxu0
      %v5303 = vadd.f32 %v5290, %v5302
      %v5304 = vpop.f32.mrf.mxu0
      %5305 = vdwg.mxu0
      %5306 = vmatpush.bf16.msra.mxu0 %v4068
      %5307 = vmatpush.bf16.msra.mxu0 %v4067
      %5308 = vmatpush.bf16.msra.mxu0 %v4066
      %5309 = vmatpush.bf16.msra.mxu0 %v4065
      %5310 = vmatpush.bf16.msra.mxu0 %v4064
      %5311 = vmatpush.bf16.msra.mxu0 %v4063
      %5312 = vmatpush.bf16.msra.mxu0 %v4062
      %5313 = vmatpush.bf16.msra.mxu0 %v4061
      %5314 = vmatmul.bf16.gmra.mxu0 %v1432
      %v5315 = vpop.f32.mrf.mxu0
      %v5316 = vadd.f32 %v5303, %v5315
      %v5317 = vpop.f32.mrf.mxu0
      %5318 = vdwg.mxu0
      %5319 = vmatpush.bf16.msra.mxu0 %v4076
      %5320 = vmatpush.bf16.msra.mxu0 %v4075
      %5321 = vmatpush.bf16.msra.mxu0 %v4074
      %5322 = vmatpush.bf16.msra.mxu0 %v4073
      %5323 = vmatpush.bf16.msra.mxu0 %v4072
      %5324 = vmatpush.bf16.msra.mxu0 %v4071
      %5325 = vmatpush.bf16.msra.mxu0 %v4070
      %5326 = vmatpush.bf16.msra.mxu0 %v4069
      %5327 = vmatmul.bf16.gmra.mxu0 %v1433
      %v5328 = vpop.f32.mrf.mxu0
      %v5329 = vadd.f32 %v5316, %v5328
      %v5330 = vpop.f32.mrf.mxu0
      %5331 = vdwg.mxu0
      %5332 = vmatpush.bf16.msra.mxu0 %v4084
      %5333 = vmatpush.bf16.msra.mxu0 %v4083
      %5334 = vmatpush.bf16.msra.mxu0 %v4082
      %5335 = vmatpush.bf16.msra.mxu0 %v4081
      %5336 = vmatpush.bf16.msra.mxu0 %v4080
      %5337 = vmatpush.bf16.msra.mxu0 %v4079
      %5338 = vmatpush.bf16.msra.mxu0 %v4078
      %5339 = vmatpush.bf16.msra.mxu0 %v4077
      %5340 = vmatmul.bf16.gmra.mxu0 %v1434
      %v5341 = vpop.f32.mrf.mxu0
      %v5342 = vadd.f32 %v5329, %v5341
      %v5343 = vpop.f32.mrf.mxu0
      %5344 = vdwg.mxu0
      %5345 = vmatpush.bf16.msra.mxu0 %v4092
      %5346 = vmatpush.bf16.msra.mxu0 %v4091
      %5347 = vmatpush.bf16.msra.mxu0 %v4090
      %5348 = vmatpush.bf16.msra.mxu0 %v4089
      %5349 = vmatpush.bf16.msra.mxu0 %v4088
      %5350 = vmatpush.bf16.msra.mxu0 %v4087
      %5351 = vmatpush.bf16.msra.mxu0 %v4086
      %5352 = vmatpush.bf16.msra.mxu0 %v4085
      %5353 = vmatmul.bf16.gmra.mxu0 %v1435
      %v5354 = vpop.f32.mrf.mxu0
      %v5355 = vadd.f32 %v5342, %v5354
      %v5356 = vpop.f32.mrf.mxu0
      %5357 = vdwg.mxu0
      %5358 = vmatpush.bf16.msra.mxu0 %v4100
      %5359 = vmatpush.bf16.msra.mxu0 %v4099
      %5360 = vmatpush.bf16.msra.mxu0 %v4098
      %5361 = vmatpush.bf16.msra.mxu0 %v4097
      %5362 = vmatpush.bf16.msra.mxu0 %v4096
      %5363 = vmatpush.bf16.msra.mxu0 %v4095
      %5364 = vmatpush.bf16.msra.mxu0 %v4094
      %5365 = vmatpush.bf16.msra.mxu0 %v4093
      %5366 = vmatmul.bf16.gmra.mxu0 %v1436
      %v5367 = vpop.f32.mrf.mxu0
      %v5368 = vadd.f32 %v5355, %v5367
      %v5369 = vpop.f32.mrf.mxu0
      %5370 = vdwg.mxu0
      %5371 = vmatpush.bf16.msra.mxu0 %v4108
      %5372 = vmatpush.bf16.msra.mxu0 %v4107
      %5373 = vmatpush.bf16.msra.mxu0 %v4106
      %5374 = vmatpush.bf16.msra.mxu0 %v4105
      %5375 = vmatpush.bf16.msra.mxu0 %v4104
      %5376 = vmatpush.bf16.msra.mxu0 %v4103
      %5377 = vmatpush.bf16.msra.mxu0 %v4102
      %5378 = vmatpush.bf16.msra.mxu0 %v4101
      %5379 = vmatmul.bf16.gmra.mxu0 %v1437
      %v5380 = vpop.f32.mrf.mxu0
      %v5381 = vadd.f32 %v5368, %v5380
      %v5382 = vpop.f32.mrf.mxu0
      %5383 = vdwg.mxu0
      %5384 = vmatpush.bf16.msra.mxu0 %v4116
      %5385 = vmatpush.bf16.msra.mxu0 %v4115
      %5386 = vmatpush.bf16.msra.mxu0 %v4114
      %5387 = vmatpush.bf16.msra.mxu0 %v4113
      %5388 = vmatpush.bf16.msra.mxu0 %v4112
      %5389 = vmatpush.bf16.msra.mxu0 %v4111
      %5390 = vmatpush.bf16.msra.mxu0 %v4110
      %5391 = vmatpush.bf16.msra.mxu0 %v4109
      %5392 = vmatmul.bf16.gmra.mxu0 %v1438
      %v5393 = vpop.f32.mrf.mxu0
      %v5394 = vadd.f32 %v5381, %v5393
      %v5395 = vpop.f32.mrf.mxu0
      %5396 = vdwg.mxu0
      %5397 = vmatpush.bf16.msra.mxu0 %v4124
      %5398 = vmatpush.bf16.msra.mxu0 %v4123
      %5399 = vmatpush.bf16.msra.mxu0 %v4122
      %5400 = vmatpush.bf16.msra.mxu0 %v4121
      %5401 = vmatpush.bf16.msra.mxu0 %v4120
      %5402 = vmatpush.bf16.msra.mxu0 %v4119
      %5403 = vmatpush.bf16.msra.mxu0 %v4118
      %5404 = vmatpush.bf16.msra.mxu0 %v4117
      %5405 = vmatmul.bf16.gmra.mxu0 %v1441
      %v5406 = vpop.f32.mrf.mxu0
      %v5407 = vadd.f32 %v5394, %v5406
      %v5408 = vpop.f32.mrf.mxu0
      %5409 = vdwg.mxu0
      %5410 = vmatpush.bf16.msra.mxu0 %v4132
      %5411 = vmatpush.bf16.msra.mxu0 %v4131
      %5412 = vmatpush.bf16.msra.mxu0 %v4130
      %5413 = vmatpush.bf16.msra.mxu0 %v4129
      %5414 = vmatpush.bf16.msra.mxu0 %v4128
      %5415 = vmatpush.bf16.msra.mxu0 %v4127
      %5416 = vmatpush.bf16.msra.mxu0 %v4126
      %5417 = vmatpush.bf16.msra.mxu0 %v4125
      %5418 = vmatmul.bf16.gmra.mxu0 %v1442
      %v5419 = vpop.f32.mrf.mxu0
      %v5420 = vadd.f32 %v5407, %v5419
      %v5421 = vpop.f32.mrf.mxu0
      %5422 = vdwg.mxu0
      %5423 = vmatpush.bf16.msra.mxu0 %v4140
      %5424 = vmatpush.bf16.msra.mxu0 %v4139
      %5425 = vmatpush.bf16.msra.mxu0 %v4138
      %5426 = vmatpush.bf16.msra.mxu0 %v4137
      %5427 = vmatpush.bf16.msra.mxu0 %v4136
      %5428 = vmatpush.bf16.msra.mxu0 %v4135
      %5429 = vmatpush.bf16.msra.mxu0 %v4134
      %5430 = vmatpush.bf16.msra.mxu0 %v4133
      %5431 = vmatmul.bf16.gmra.mxu0 %v1443
      %v5432 = vpop.f32.mrf.mxu0
      %v5433 = vadd.f32 %v5420, %v5432
      %v5434 = vpop.f32.mrf.mxu0
      %5435 = vdwg.mxu0
      %5436 = vmatpush.bf16.msra.mxu0 %v4148
      %5437 = vmatpush.bf16.msra.mxu0 %v4147
      %5438 = vmatpush.bf16.msra.mxu0 %v4146
      %5439 = vmatpush.bf16.msra.mxu0 %v4145
      %5440 = vmatpush.bf16.msra.mxu0 %v4144
      %5441 = vmatpush.bf16.msra.mxu0 %v4143
      %5442 = vmatpush.bf16.msra.mxu0 %v4142
      %5443 = vmatpush.bf16.msra.mxu0 %v4141
      %5444 = vmatmul.bf16.gmra.mxu0 %v1444
      %v5445 = vpop.f32.mrf.mxu0
      %v5446 = vadd.f32 %v5433, %v5445
      %v5447 = vpop.f32.mrf.mxu0
      %5448 = vdwg.mxu0
      %5449 = vmatpush.bf16.msra.mxu0 %v4156
      %5450 = vmatpush.bf16.msra.mxu0 %v4155
      %5451 = vmatpush.bf16.msra.mxu0 %v4154
      %5452 = vmatpush.bf16.msra.mxu0 %v4153
      %5453 = vmatpush.bf16.msra.mxu0 %v4152
      %5454 = vmatpush.bf16.msra.mxu0 %v4151
      %5455 = vmatpush.bf16.msra.mxu0 %v4150
      %5456 = vmatpush.bf16.msra.mxu0 %v4149
      %5457 = vmatmul.bf16.gmra.mxu0 %v1445
      %v5458 = vpop.f32.mrf.mxu0
      %v5459 = vadd.f32 %v5446, %v5458
      %v5460 = vpop.f32.mrf.mxu0
      %5461 = vdwg.mxu0
      %5462 = vmatpush.bf16.msra.mxu0 %v4164
      %5463 = vmatpush.bf16.msra.mxu0 %v4163
      %5464 = vmatpush.bf16.msra.mxu0 %v4162
      %5465 = vmatpush.bf16.msra.mxu0 %v4161
      %5466 = vmatpush.bf16.msra.mxu0 %v4160
      %5467 = vmatpush.bf16.msra.mxu0 %v4159
      %5468 = vmatpush.bf16.msra.mxu0 %v4158
      %5469 = vmatpush.bf16.msra.mxu0 %v4157
      %5470 = vmatmul.bf16.gmra.mxu0 %v1446
      %v5471 = vpop.f32.mrf.mxu0
      %v5472 = vadd.f32 %v5459, %v5471
      %v5473 = vpop.f32.mrf.mxu0
      %5474 = vdwg.mxu0
      %5475 = vmatpush.bf16.msra.mxu0 %v4172
      %5476 = vmatpush.bf16.msra.mxu0 %v4171
      %5477 = vmatpush.bf16.msra.mxu0 %v4170
      %5478 = vmatpush.bf16.msra.mxu0 %v4169
      %5479 = vmatpush.bf16.msra.mxu0 %v4168
      %5480 = vmatpush.bf16.msra.mxu0 %v4167
      %5481 = vmatpush.bf16.msra.mxu0 %v4166
      %5482 = vmatpush.bf16.msra.mxu0 %v4165
      %5483 = vmatmul.bf16.gmra.mxu0 %v1447
      %v5484 = vpop.f32.mrf.mxu0
      %v5485 = vadd.f32 %v5472, %v5484
      %v5486 = vpop.f32.mrf.mxu0
      %5487 = vdwg.mxu0
      %5488 = vmatpush.bf16.msra.mxu0 %v4180
      %5489 = vmatpush.bf16.msra.mxu0 %v4179
      %5490 = vmatpush.bf16.msra.mxu0 %v4178
      %5491 = vmatpush.bf16.msra.mxu0 %v4177
      %5492 = vmatpush.bf16.msra.mxu0 %v4176
      %5493 = vmatpush.bf16.msra.mxu0 %v4175
      %5494 = vmatpush.bf16.msra.mxu0 %v4174
      %5495 = vmatpush.bf16.msra.mxu0 %v4173
      %5496 = vmatmul.bf16.gmra.mxu0 %v1448
      %v5497 = vpop.f32.mrf.mxu0
      %v5498 = vadd.f32 %v5485, %v5497
      %v5499 = vpop.f32.mrf.mxu0
      %5500 = vdwg.mxu0
      %5501 = vmatpush.bf16.msra.mxu0 %v4188
      %5502 = vmatpush.bf16.msra.mxu0 %v4187
      %5503 = vmatpush.bf16.msra.mxu0 %v4186
      %5504 = vmatpush.bf16.msra.mxu0 %v4185
      %5505 = vmatpush.bf16.msra.mxu0 %v4184
      %5506 = vmatpush.bf16.msra.mxu0 %v4183
      %5507 = vmatpush.bf16.msra.mxu0 %v4182
      %5508 = vmatpush.bf16.msra.mxu0 %v4181
      %5509 = vmatmul.bf16.gmra.mxu0 %v1451
      %v5510 = vpop.f32.mrf.mxu0
      %v5511 = vadd.f32 %v5498, %v5510
      %v5512 = vpop.f32.mrf.mxu0
      %5513 = vdwg.mxu0
      %5514 = vmatpush.bf16.msra.mxu0 %v4196
      %5515 = vmatpush.bf16.msra.mxu0 %v4195
      %5516 = vmatpush.bf16.msra.mxu0 %v4194
      %5517 = vmatpush.bf16.msra.mxu0 %v4193
      %5518 = vmatpush.bf16.msra.mxu0 %v4192
      %5519 = vmatpush.bf16.msra.mxu0 %v4191
      %5520 = vmatpush.bf16.msra.mxu0 %v4190
      %5521 = vmatpush.bf16.msra.mxu0 %v4189
      %5522 = vmatmul.bf16.gmra.mxu0 %v1452
      %v5523 = vpop.f32.mrf.mxu0
      %v5524 = vadd.f32 %v5511, %v5523
      %v5525 = vpop.f32.mrf.mxu0
      %5526 = vdwg.mxu0
      %5527 = vmatpush.bf16.msra.mxu0 %v4204
      %5528 = vmatpush.bf16.msra.mxu0 %v4203
      %5529 = vmatpush.bf16.msra.mxu0 %v4202
      %5530 = vmatpush.bf16.msra.mxu0 %v4201
      %5531 = vmatpush.bf16.msra.mxu0 %v4200
      %5532 = vmatpush.bf16.msra.mxu0 %v4199
      %5533 = vmatpush.bf16.msra.mxu0 %v4198
      %5534 = vmatpush.bf16.msra.mxu0 %v4197
      %5535 = vmatmul.bf16.gmra.mxu0 %v1453
      %v5536 = vpop.f32.mrf.mxu0
      %v5537 = vadd.f32 %v5524, %v5536
      %v5538 = vpop.f32.mrf.mxu0
      %5539 = vdwg.mxu0
      %5540 = vmatpush.bf16.msra.mxu0 %v4212
      %5541 = vmatpush.bf16.msra.mxu0 %v4211
      %5542 = vmatpush.bf16.msra.mxu0 %v4210
      %5543 = vmatpush.bf16.msra.mxu0 %v4209
      %5544 = vmatpush.bf16.msra.mxu0 %v4208
      %5545 = vmatpush.bf16.msra.mxu0 %v4207
      %5546 = vmatpush.bf16.msra.mxu0 %v4206
      %5547 = vmatpush.bf16.msra.mxu0 %v4205
      %5548 = vmatmul.bf16.gmra.mxu0 %v1454
      %v5549 = vpop.f32.mrf.mxu0
      %v5550 = vadd.f32 %v5537, %v5549
      %v5551 = vpop.f32.mrf.mxu0
      %5552 = vdwg.mxu0
      %5553 = vmatpush.bf16.msra.mxu0 %v4220
      %5554 = vmatpush.bf16.msra.mxu0 %v4219
      %5555 = vmatpush.bf16.msra.mxu0 %v4218
      %5556 = vmatpush.bf16.msra.mxu0 %v4217
      %5557 = vmatpush.bf16.msra.mxu0 %v4216
      %5558 = vmatpush.bf16.msra.mxu0 %v4215
      %5559 = vmatpush.bf16.msra.mxu0 %v4214
      %5560 = vmatpush.bf16.msra.mxu0 %v4213
      %5561 = vmatmul.bf16.gmra.mxu0 %v1455
      %v5562 = vpop.f32.mrf.mxu0
      %v5563 = vadd.f32 %v5550, %v5562
      %v5564 = vpop.f32.mrf.mxu0
      %5565 = vdwg.mxu0
      %5566 = vmatpush.bf16.msra.mxu0 %v4228
      %5567 = vmatpush.bf16.msra.mxu0 %v4227
      %5568 = vmatpush.bf16.msra.mxu0 %v4226
      %5569 = vmatpush.bf16.msra.mxu0 %v4225
      %5570 = vmatpush.bf16.msra.mxu0 %v4224
      %5571 = vmatpush.bf16.msra.mxu0 %v4223
      %5572 = vmatpush.bf16.msra.mxu0 %v4222
      %5573 = vmatpush.bf16.msra.mxu0 %v4221
      %5574 = vmatmul.bf16.gmra.mxu0 %v1456
      %v5575 = vpop.f32.mrf.mxu0
      %v5576 = vadd.f32 %v5563, %v5575
      %v5577 = vpop.f32.mrf.mxu0
      %5578 = vdwg.mxu0
      %5579 = vmatpush.bf16.msra.mxu0 %v4236
      %5580 = vmatpush.bf16.msra.mxu0 %v4235
      %5581 = vmatpush.bf16.msra.mxu0 %v4234
      %5582 = vmatpush.bf16.msra.mxu0 %v4233
      %5583 = vmatpush.bf16.msra.mxu0 %v4232
      %5584 = vmatpush.bf16.msra.mxu0 %v4231
      %5585 = vmatpush.bf16.msra.mxu0 %v4230
      %5586 = vmatpush.bf16.msra.mxu0 %v4229
      %5587 = vmatmul.bf16.gmra.mxu0 %v1457
      %v5588 = vpop.f32.mrf.mxu0
      %v5589 = vadd.f32 %v5576, %v5588
      %v5590 = vpop.f32.mrf.mxu0
      %5591 = vdwg.mxu0
      %5592 = vmatpush.bf16.msra.mxu0 %v4244
      %5593 = vmatpush.bf16.msra.mxu0 %v4243
      %5594 = vmatpush.bf16.msra.mxu0 %v4242
      %5595 = vmatpush.bf16.msra.mxu0 %v4241
      %5596 = vmatpush.bf16.msra.mxu0 %v4240
      %5597 = vmatpush.bf16.msra.mxu0 %v4239
      %5598 = vmatpush.bf16.msra.mxu0 %v4238
      %5599 = vmatpush.bf16.msra.mxu0 %v4237
      %5600 = vmatmul.bf16.gmra.mxu0 %v1458
      %v5601 = vpop.f32.mrf.mxu0
      %v5602 = vadd.f32 %v5589, %v5601
      %v5603 = vpop.f32.mrf.mxu0
      %5604 = vdwg.mxu0
      %5605 = vmatpush.bf16.msra.mxu0 %v4252
      %5606 = vmatpush.bf16.msra.mxu0 %v4251
      %5607 = vmatpush.bf16.msra.mxu0 %v4250
      %5608 = vmatpush.bf16.msra.mxu0 %v4249
      %5609 = vmatpush.bf16.msra.mxu0 %v4248
      %5610 = vmatpush.bf16.msra.mxu0 %v4247
      %5611 = vmatpush.bf16.msra.mxu0 %v4246
      %5612 = vmatpush.bf16.msra.mxu0 %v4245
      %5613 = vmatmul.bf16.gmra.mxu0 %v1461
      %v5614 = vpop.f32.mrf.mxu0
      %v5615 = vadd.f32 %v5602, %v5614
      %v5616 = vpop.f32.mrf.mxu0
      %5617 = vdwg.mxu0
      %5618 = vmatpush.bf16.msra.mxu0 %v4260
      %5619 = vmatpush.bf16.msra.mxu0 %v4259
      %5620 = vmatpush.bf16.msra.mxu0 %v4258
      %5621 = vmatpush.bf16.msra.mxu0 %v4257
      %5622 = vmatpush.bf16.msra.mxu0 %v4256
      %5623 = vmatpush.bf16.msra.mxu0 %v4255
      %5624 = vmatpush.bf16.msra.mxu0 %v4254
      %5625 = vmatpush.bf16.msra.mxu0 %v4253
      %5626 = vmatmul.bf16.gmra.mxu0 %v1462
      %v5627 = vpop.f32.mrf.mxu0
      %v5628 = vadd.f32 %v5615, %v5627
      %v5629 = vpop.f32.mrf.mxu0
      %5630 = vdwg.mxu0
      %5631 = vmatpush.bf16.msra.mxu0 %v4268
      %5632 = vmatpush.bf16.msra.mxu0 %v4267
      %5633 = vmatpush.bf16.msra.mxu0 %v4266
      %5634 = vmatpush.bf16.msra.mxu0 %v4265
      %5635 = vmatpush.bf16.msra.mxu0 %v4264
      %5636 = vmatpush.bf16.msra.mxu0 %v4263
      %5637 = vmatpush.bf16.msra.mxu0 %v4262
      %5638 = vmatpush.bf16.msra.mxu0 %v4261
      %5639 = vmatmul.bf16.gmra.mxu0 %v1463
      %v5640 = vpop.f32.mrf.mxu0
      %v5641 = vadd.f32 %v5628, %v5640
      %v5642 = vpop.f32.mrf.mxu0
      %5643 = vdwg.mxu0
      %5644 = vmatpush.bf16.msra.mxu0 %v4276
      %5645 = vmatpush.bf16.msra.mxu0 %v4275
      %5646 = vmatpush.bf16.msra.mxu0 %v4274
      %5647 = vmatpush.bf16.msra.mxu0 %v4273
      %5648 = vmatpush.bf16.msra.mxu0 %v4272
      %5649 = vmatpush.bf16.msra.mxu0 %v4271
      %5650 = vmatpush.bf16.msra.mxu0 %v4270
      %5651 = vmatpush.bf16.msra.mxu0 %v4269
      %5652 = vmatmul.bf16.gmra.mxu0 %v1464
      %v5653 = vpop.f32.mrf.mxu0
      %v5654 = vadd.f32 %v5641, %v5653
      %v5655 = vpop.f32.mrf.mxu0
      %5656 = vdwg.mxu0
      %5657 = vmatpush.bf16.msra.mxu0 %v4284
      %5658 = vmatpush.bf16.msra.mxu0 %v4283
      %5659 = vmatpush.bf16.msra.mxu0 %v4282
      %5660 = vmatpush.bf16.msra.mxu0 %v4281
      %5661 = vmatpush.bf16.msra.mxu0 %v4280
      %5662 = vmatpush.bf16.msra.mxu0 %v4279
      %5663 = vmatpush.bf16.msra.mxu0 %v4278
      %5664 = vmatpush.bf16.msra.mxu0 %v4277
      %5665 = vmatmul.bf16.gmra.mxu0 %v1465
      %v5666 = vpop.f32.mrf.mxu0
      %v5667 = vadd.f32 %v5654, %v5666
      %v5668 = vpop.f32.mrf.mxu0
      %5669 = vdwg.mxu0
      %5670 = vmatpush.bf16.msra.mxu0 %v4292
      %5671 = vmatpush.bf16.msra.mxu0 %v4291
      %5672 = vmatpush.bf16.msra.mxu0 %v4290
      %5673 = vmatpush.bf16.msra.mxu0 %v4289
      %5674 = vmatpush.bf16.msra.mxu0 %v4288
      %5675 = vmatpush.bf16.msra.mxu0 %v4287
      %5676 = vmatpush.bf16.msra.mxu0 %v4286
      %5677 = vmatpush.bf16.msra.mxu0 %v4285
      %5678 = vmatmul.bf16.gmra.mxu0 %v1466
      %v5679 = vpop.f32.mrf.mxu0
      %v5680 = vadd.f32 %v5667, %v5679
      %v5681 = vpop.f32.mrf.mxu0
      %5682 = vdwg.mxu0
      %5683 = vmatpush.bf16.msra.mxu0 %v4300
      %5684 = vmatpush.bf16.msra.mxu0 %v4299
      %5685 = vmatpush.bf16.msra.mxu0 %v4298
      %5686 = vmatpush.bf16.msra.mxu0 %v4297
      %5687 = vmatpush.bf16.msra.mxu0 %v4296
      %5688 = vmatpush.bf16.msra.mxu0 %v4295
      %5689 = vmatpush.bf16.msra.mxu0 %v4294
      %5690 = vmatpush.bf16.msra.mxu0 %v4293
      %5691 = vmatmul.bf16.gmra.mxu0 %v1467
      %v5692 = vpop.f32.mrf.mxu0
      %v5693 = vadd.f32 %v5680, %v5692
      %v5694 = vpop.f32.mrf.mxu0
      %5695 = vdwg.mxu0
      %5696 = vmatpush.bf16.msra.mxu0 %v4308
      %5697 = vmatpush.bf16.msra.mxu0 %v4307
      %5698 = vmatpush.bf16.msra.mxu0 %v4306
      %5699 = vmatpush.bf16.msra.mxu0 %v4305
      %5700 = vmatpush.bf16.msra.mxu0 %v4304
      %5701 = vmatpush.bf16.msra.mxu0 %v4303
      %5702 = vmatpush.bf16.msra.mxu0 %v4302
      %5703 = vmatpush.bf16.msra.mxu0 %v4301
      %5704 = vmatmul.bf16.gmra.mxu0 %v1468
      %v5705 = vpop.f32.mrf.mxu0
      %v5706 = vadd.f32 %v5693, %v5705
      %v5707 = vpop.f32.mrf.mxu0
      %5708 = vdwg.mxu0
      %5709 = vmatpush.bf16.msra.mxu0 %v4316
      %5710 = vmatpush.bf16.msra.mxu0 %v4315
      %5711 = vmatpush.bf16.msra.mxu0 %v4314
      %5712 = vmatpush.bf16.msra.mxu0 %v4313
      %5713 = vmatpush.bf16.msra.mxu0 %v4312
      %5714 = vmatpush.bf16.msra.mxu0 %v4311
      %5715 = vmatpush.bf16.msra.mxu0 %v4310
      %5716 = vmatpush.bf16.msra.mxu0 %v4309
      %5717 = vmatmul.bf16.gmra.mxu0 %v1471
      %v5718 = vpop.f32.mrf.mxu0
      %v5719 = vadd.f32 %v5706, %v5718
      %v5720 = vpop.f32.mrf.mxu0
      %5721 = vdwg.mxu0
      %5722 = vmatpush.bf16.msra.mxu0 %v4324
      %5723 = vmatpush.bf16.msra.mxu0 %v4323
      %5724 = vmatpush.bf16.msra.mxu0 %v4322
      %5725 = vmatpush.bf16.msra.mxu0 %v4321
      %5726 = vmatpush.bf16.msra.mxu0 %v4320
      %5727 = vmatpush.bf16.msra.mxu0 %v4319
      %5728 = vmatpush.bf16.msra.mxu0 %v4318
      %5729 = vmatpush.bf16.msra.mxu0 %v4317
      %5730 = vmatmul.bf16.gmra.mxu0 %v1472
      %v5731 = vpop.f32.mrf.mxu0
      %v5732 = vadd.f32 %v5719, %v5731
      %v5733 = vpop.f32.mrf.mxu0
      %5734 = vdwg.mxu0
      %5735 = vmatpush.bf16.msra.mxu0 %v4332
      %5736 = vmatpush.bf16.msra.mxu0 %v4331
      %5737 = vmatpush.bf16.msra.mxu0 %v4330
      %5738 = vmatpush.bf16.msra.mxu0 %v4329
      %5739 = vmatpush.bf16.msra.mxu0 %v4328
      %5740 = vmatpush.bf16.msra.mxu0 %v4327
      %5741 = vmatpush.bf16.msra.mxu0 %v4326
      %5742 = vmatpush.bf16.msra.mxu0 %v4325
      %5743 = vmatmul.bf16.gmra.mxu0 %v1473
      %v5744 = vpop.f32.mrf.mxu0
      %v5745 = vadd.f32 %v5732, %v5744
      %v5746 = vpop.f32.mrf.mxu0
      %5747 = vdwg.mxu0
      %5748 = vmatpush.bf16.msra.mxu0 %v4340
      %5749 = vmatpush.bf16.msra.mxu0 %v4339
      %5750 = vmatpush.bf16.msra.mxu0 %v4338
      %5751 = vmatpush.bf16.msra.mxu0 %v4337
      %5752 = vmatpush.bf16.msra.mxu0 %v4336
      %5753 = vmatpush.bf16.msra.mxu0 %v4335
      %5754 = vmatpush.bf16.msra.mxu0 %v4334
      %5755 = vmatpush.bf16.msra.mxu0 %v4333
      %5756 = vmatmul.bf16.gmra.mxu0 %v1474
      %v5757 = vpop.f32.mrf.mxu0
      %v5758 = vadd.f32 %v5745, %v5757
      %v5759 = vpop.f32.mrf.mxu0
      %5760 = vdwg.mxu0
      %5761 = vmatpush.bf16.msra.mxu0 %v4348
      %5762 = vmatpush.bf16.msra.mxu0 %v4347
      %5763 = vmatpush.bf16.msra.mxu0 %v4346
      %5764 = vmatpush.bf16.msra.mxu0 %v4345
      %5765 = vmatpush.bf16.msra.mxu0 %v4344
      %5766 = vmatpush.bf16.msra.mxu0 %v4343
      %5767 = vmatpush.bf16.msra.mxu0 %v4342
      %5768 = vmatpush.bf16.msra.mxu0 %v4341
      %5769 = vmatmul.bf16.gmra.mxu0 %v1475
      %v5770 = vpop.f32.mrf.mxu0
      %v5771 = vadd.f32 %v5758, %v5770
      %v5772 = vpop.f32.mrf.mxu0
      %5773 = vdwg.mxu0
      %5774 = vmatpush.bf16.msra.mxu0 %v4356
      %5775 = vmatpush.bf16.msra.mxu0 %v4355
      %5776 = vmatpush.bf16.msra.mxu0 %v4354
      %5777 = vmatpush.bf16.msra.mxu0 %v4353
      %5778 = vmatpush.bf16.msra.mxu0 %v4352
      %5779 = vmatpush.bf16.msra.mxu0 %v4351
      %5780 = vmatpush.bf16.msra.mxu0 %v4350
      %5781 = vmatpush.bf16.msra.mxu0 %v4349
      %5782 = vmatmul.bf16.gmra.mxu0 %v1476
      %v5783 = vpop.f32.mrf.mxu0
      %v5784 = vadd.f32 %v5771, %v5783
      %v5785 = vpop.f32.mrf.mxu0
      %5786 = vdwg.mxu0
      %5787 = vmatpush.bf16.msra.mxu0 %v4364
      %5788 = vmatpush.bf16.msra.mxu0 %v4363
      %5789 = vmatpush.bf16.msra.mxu0 %v4362
      %5790 = vmatpush.bf16.msra.mxu0 %v4361
      %5791 = vmatpush.bf16.msra.mxu0 %v4360
      %5792 = vmatpush.bf16.msra.mxu0 %v4359
      %5793 = vmatpush.bf16.msra.mxu0 %v4358
      %5794 = vmatpush.bf16.msra.mxu0 %v4357
      %5795 = vmatmul.bf16.gmra.mxu0 %v1477
      %v5796 = vpop.f32.mrf.mxu0
      %v5797 = vadd.f32 %v5784, %v5796
      %v5798 = vpop.f32.mrf.mxu0
      %5799 = vdwg.mxu0
      %5800 = vmatpush.bf16.msra.mxu0 %v4372
      %5801 = vmatpush.bf16.msra.mxu0 %v4371
      %5802 = vmatpush.bf16.msra.mxu0 %v4370
      %5803 = vmatpush.bf16.msra.mxu0 %v4369
      %5804 = vmatpush.bf16.msra.mxu0 %v4368
      %5805 = vmatpush.bf16.msra.mxu0 %v4367
      %5806 = vmatpush.bf16.msra.mxu0 %v4366
      %5807 = vmatpush.bf16.msra.mxu0 %v4365
      %5808 = vmatmul.bf16.gmra.mxu0 %v1478
      %v5809 = vpop.f32.mrf.mxu0
      %v5810 = vadd.f32 %v5797, %v5809
      %v5811 = vpop.f32.mrf.mxu0
      %5812 = vdwg.mxu0
      %5813 = vmatpush.bf16.msra.mxu0 %v4380
      %5814 = vmatpush.bf16.msra.mxu0 %v4379
      %5815 = vmatpush.bf16.msra.mxu0 %v4378
      %5816 = vmatpush.bf16.msra.mxu0 %v4377
      %5817 = vmatpush.bf16.msra.mxu0 %v4376
      %5818 = vmatpush.bf16.msra.mxu0 %v4375
      %5819 = vmatpush.bf16.msra.mxu0 %v4374
      %5820 = vmatpush.bf16.msra.mxu0 %v4373
      %5821 = vmatmul.bf16.gmra.mxu0 %v1481
      %v5822 = vpop.f32.mrf.mxu0
      %v5823 = vadd.f32 %v5810, %v5822
      %v5824 = vpop.f32.mrf.mxu0
      %5825 = vdwg.mxu0
      %5826 = vmatpush.bf16.msra.mxu0 %v4388
      %5827 = vmatpush.bf16.msra.mxu0 %v4387
      %5828 = vmatpush.bf16.msra.mxu0 %v4386
      %5829 = vmatpush.bf16.msra.mxu0 %v4385
      %5830 = vmatpush.bf16.msra.mxu0 %v4384
      %5831 = vmatpush.bf16.msra.mxu0 %v4383
      %5832 = vmatpush.bf16.msra.mxu0 %v4382
      %5833 = vmatpush.bf16.msra.mxu0 %v4381
      %5834 = vmatmul.bf16.gmra.mxu0 %v1482
      %v5835 = vpop.f32.mrf.mxu0
      %v5836 = vadd.f32 %v5823, %v5835
      %v5837 = vpop.f32.mrf.mxu0
      %5838 = vdwg.mxu0
      %5839 = vmatpush.bf16.msra.mxu0 %v4396
      %5840 = vmatpush.bf16.msra.mxu0 %v4395
      %5841 = vmatpush.bf16.msra.mxu0 %v4394
      %5842 = vmatpush.bf16.msra.mxu0 %v4393
      %5843 = vmatpush.bf16.msra.mxu0 %v4392
      %5844 = vmatpush.bf16.msra.mxu0 %v4391
      %5845 = vmatpush.bf16.msra.mxu0 %v4390
      %5846 = vmatpush.bf16.msra.mxu0 %v4389
      %5847 = vmatmul.bf16.gmra.mxu0 %v1483
      %v5848 = vpop.f32.mrf.mxu0
      %v5849 = vadd.f32 %v5836, %v5848
      %v5850 = vpop.f32.mrf.mxu0
      %5851 = vdwg.mxu0
      %5852 = vmatpush.bf16.msra.mxu0 %v4404
      %5853 = vmatpush.bf16.msra.mxu0 %v4403
      %5854 = vmatpush.bf16.msra.mxu0 %v4402
      %5855 = vmatpush.bf16.msra.mxu0 %v4401
      %5856 = vmatpush.bf16.msra.mxu0 %v4400
      %5857 = vmatpush.bf16.msra.mxu0 %v4399
      %5858 = vmatpush.bf16.msra.mxu0 %v4398
      %5859 = vmatpush.bf16.msra.mxu0 %v4397
      %5860 = vmatmul.bf16.gmra.mxu0 %v1484
      %v5861 = vpop.f32.mrf.mxu0
      %v5862 = vadd.f32 %v5849, %v5861
      %v5863 = vpop.f32.mrf.mxu0
      %5864 = vdwg.mxu0
      %5865 = vmatpush.bf16.msra.mxu0 %v4412
      %5866 = vmatpush.bf16.msra.mxu0 %v4411
      %5867 = vmatpush.bf16.msra.mxu0 %v4410
      %5868 = vmatpush.bf16.msra.mxu0 %v4409
      %5869 = vmatpush.bf16.msra.mxu0 %v4408
      %5870 = vmatpush.bf16.msra.mxu0 %v4407
      %5871 = vmatpush.bf16.msra.mxu0 %v4406
      %5872 = vmatpush.bf16.msra.mxu0 %v4405
      %5873 = vmatmul.bf16.gmra.mxu0 %v1485
      %v5874 = vpop.f32.mrf.mxu0
      %v5875 = vadd.f32 %v5862, %v5874
      %v5876 = vpop.f32.mrf.mxu0
      %5877 = vdwg.mxu0
      %5878 = vmatpush.bf16.msra.mxu0 %v4420
      %5879 = vmatpush.bf16.msra.mxu0 %v4419
      %5880 = vmatpush.bf16.msra.mxu0 %v4418
      %5881 = vmatpush.bf16.msra.mxu0 %v4417
      %5882 = vmatpush.bf16.msra.mxu0 %v4416
      %5883 = vmatpush.bf16.msra.mxu0 %v4415
      %5884 = vmatpush.bf16.msra.mxu0 %v4414
      %5885 = vmatpush.bf16.msra.mxu0 %v4413
      %5886 = vmatmul.bf16.gmra.mxu0 %v1486
      %v5887 = vpop.f32.mrf.mxu0
      %v5888 = vadd.f32 %v5875, %v5887
      %v5889 = vpop.f32.mrf.mxu0
      %5890 = vdwg.mxu0
      %5891 = vmatpush.bf16.msra.mxu0 %v4428
      %5892 = vmatpush.bf16.msra.mxu0 %v4427
      %5893 = vmatpush.bf16.msra.mxu0 %v4426
      %5894 = vmatpush.bf16.msra.mxu0 %v4425
      %5895 = vmatpush.bf16.msra.mxu0 %v4424
      %5896 = vmatpush.bf16.msra.mxu0 %v4423
      %5897 = vmatpush.bf16.msra.mxu0 %v4422
      %5898 = vmatpush.bf16.msra.mxu0 %v4421
      %5899 = vmatmul.bf16.gmra.mxu0 %v1487
      %v5900 = vpop.f32.mrf.mxu0
      %v5901 = vadd.f32 %v5888, %v5900
      %v5902 = vpop.f32.mrf.mxu0
      %5903 = vdwg.mxu0
      %5904 = vmatpush.bf16.msra.mxu0 %v4436
      %5905 = vmatpush.bf16.msra.mxu0 %v4435
      %5906 = vmatpush.bf16.msra.mxu0 %v4434
      %5907 = vmatpush.bf16.msra.mxu0 %v4433
      %5908 = vmatpush.bf16.msra.mxu0 %v4432
      %5909 = vmatpush.bf16.msra.mxu0 %v4431
      %5910 = vmatpush.bf16.msra.mxu0 %v4430
      %5911 = vmatpush.bf16.msra.mxu0 %v4429
      %5912 = vmatmul.bf16.gmra.mxu0 %v1488
      %v5913 = vpop.f32.mrf.mxu0
      %v5914 = vadd.f32 %v5901, %v5913
      %v5915 = vpop.f32.mrf.mxu0
      %5916 = vdwg.mxu0
      %5917 = vmatpush.bf16.msra.mxu0 %v4444
      %5918 = vmatpush.bf16.msra.mxu0 %v4443
      %5919 = vmatpush.bf16.msra.mxu0 %v4442
      %5920 = vmatpush.bf16.msra.mxu0 %v4441
      %5921 = vmatpush.bf16.msra.mxu0 %v4440
      %5922 = vmatpush.bf16.msra.mxu0 %v4439
      %5923 = vmatpush.bf16.msra.mxu0 %v4438
      %5924 = vmatpush.bf16.msra.mxu0 %v4437
      %5925 = vmatmul.bf16.gmra.mxu0 %v1491
      %v5926 = vpop.f32.mrf.mxu0
      %v5927 = vadd.f32 %v5914, %v5926
      %v5928 = vpop.f32.mrf.mxu0
      %5929 = vdwg.mxu0
      %5930 = vmatpush.bf16.msra.mxu0 %v4452
      %5931 = vmatpush.bf16.msra.mxu0 %v4451
      %5932 = vmatpush.bf16.msra.mxu0 %v4450
      %5933 = vmatpush.bf16.msra.mxu0 %v4449
      %5934 = vmatpush.bf16.msra.mxu0 %v4448
      %5935 = vmatpush.bf16.msra.mxu0 %v4447
      %5936 = vmatpush.bf16.msra.mxu0 %v4446
      %5937 = vmatpush.bf16.msra.mxu0 %v4445
      %5938 = vmatmul.bf16.gmra.mxu0 %v1492
      %v5939 = vpop.f32.mrf.mxu0
      %v5940 = vadd.f32 %v5927, %v5939
      %v5941 = vpop.f32.mrf.mxu0
      %5942 = vdwg.mxu0
      %5943 = vmatpush.bf16.msra.mxu0 %v4460
      %5944 = vmatpush.bf16.msra.mxu0 %v4459
      %5945 = vmatpush.bf16.msra.mxu0 %v4458
      %5946 = vmatpush.bf16.msra.mxu0 %v4457
      %5947 = vmatpush.bf16.msra.mxu0 %v4456
      %5948 = vmatpush.bf16.msra.mxu0 %v4455
      %5949 = vmatpush.bf16.msra.mxu0 %v4454
      %5950 = vmatpush.bf16.msra.mxu0 %v4453
      %5951 = vmatmul.bf16.gmra.mxu0 %v1493
      %v5952 = vpop.f32.mrf.mxu0
      %v5953 = vadd.f32 %v5940, %v5952
      %v5954 = vpop.f32.mrf.mxu0
      %5955 = vdwg.mxu0
      %5956 = vmatpush.bf16.msra.mxu0 %v4468
      %5957 = vmatpush.bf16.msra.mxu0 %v4467
      %5958 = vmatpush.bf16.msra.mxu0 %v4466
      %5959 = vmatpush.bf16.msra.mxu0 %v4465
      %5960 = vmatpush.bf16.msra.mxu0 %v4464
      %5961 = vmatpush.bf16.msra.mxu0 %v4463
      %5962 = vmatpush.bf16.msra.mxu0 %v4462
      %5963 = vmatpush.bf16.msra.mxu0 %v4461
      %5964 = vmatmul.bf16.gmra.mxu0 %v1494
      %v5965 = vpop.f32.mrf.mxu0
      %v5966 = vadd.f32 %v5953, %v5965
      %v5967 = vpop.f32.mrf.mxu0
      %5968 = vdwg.mxu0
      %5969 = vmatpush.bf16.msra.mxu0 %v4476
      %5970 = vmatpush.bf16.msra.mxu0 %v4475
      %5971 = vmatpush.bf16.msra.mxu0 %v4474
      %5972 = vmatpush.bf16.msra.mxu0 %v4473
      %5973 = vmatpush.bf16.msra.mxu0 %v4472
      %5974 = vmatpush.bf16.msra.mxu0 %v4471
      %5975 = vmatpush.bf16.msra.mxu0 %v4470
      %5976 = vmatpush.bf16.msra.mxu0 %v4469
      %5977 = vmatmul.bf16.gmra.mxu0 %v1495
      %v5978 = vpop.f32.mrf.mxu0
      %v5979 = vadd.f32 %v5966, %v5978
      %v5980 = vpop.f32.mrf.mxu0
      %5981 = vdwg.mxu0
      %5982 = vmatpush.bf16.msra.mxu0 %v4484
      %5983 = vmatpush.bf16.msra.mxu0 %v4483
      %5984 = vmatpush.bf16.msra.mxu0 %v4482
      %5985 = vmatpush.bf16.msra.mxu0 %v4481
      %5986 = vmatpush.bf16.msra.mxu0 %v4480
      %5987 = vmatpush.bf16.msra.mxu0 %v4479
      %5988 = vmatpush.bf16.msra.mxu0 %v4478
      %5989 = vmatpush.bf16.msra.mxu0 %v4477
      %5990 = vmatmul.bf16.gmra.mxu0 %v1496
      %v5991 = vpop.f32.mrf.mxu0
      %v5992 = vadd.f32 %v5979, %v5991
      %v5993 = vpop.f32.mrf.mxu0
      %5994 = vdwg.mxu0
      %5995 = vmatpush.bf16.msra.mxu0 %v4492
      %5996 = vmatpush.bf16.msra.mxu0 %v4491
      %5997 = vmatpush.bf16.msra.mxu0 %v4490
      %5998 = vmatpush.bf16.msra.mxu0 %v4489
      %5999 = vmatpush.bf16.msra.mxu0 %v4488
      %6000 = vmatpush.bf16.msra.mxu0 %v4487
      %6001 = vmatpush.bf16.msra.mxu0 %v4486
      %6002 = vmatpush.bf16.msra.mxu0 %v4485
      %6003 = vmatmul.bf16.gmra.mxu0 %v1497
      %v6004 = vpop.f32.mrf.mxu0
      %v6005 = vadd.f32 %v5992, %v6004
      %v6006 = vpop.f32.mrf.mxu0
      %6007 = vdwg.mxu0
      %6008 = vmatpush.bf16.msra.mxu0 %v4500
      %6009 = vmatpush.bf16.msra.mxu0 %v4499
      %6010 = vmatpush.bf16.msra.mxu0 %v4498
      %6011 = vmatpush.bf16.msra.mxu0 %v4497
      %6012 = vmatpush.bf16.msra.mxu0 %v4496
      %6013 = vmatpush.bf16.msra.mxu0 %v4495
      %6014 = vmatpush.bf16.msra.mxu0 %v4494
      %6015 = vmatpush.bf16.msra.mxu0 %v4493
      %6016 = vmatmul.bf16.gmra.mxu0 %v1498
      %v6017 = vpop.f32.mrf.mxu0
      %v6018 = vadd.f32 %v6005, %v6017
      %v6019 = vpop.f32.mrf.mxu0
      %6020 = vdwg.mxu0
      %6021 = vmatpush.bf16.msra.mxu0 %v4508
      %6022 = vmatpush.bf16.msra.mxu0 %v4507
      %6023 = vmatpush.bf16.msra.mxu0 %v4506
      %6024 = vmatpush.bf16.msra.mxu0 %v4505
      %6025 = vmatpush.bf16.msra.mxu0 %v4504
      %6026 = vmatpush.bf16.msra.mxu0 %v4503
      %6027 = vmatpush.bf16.msra.mxu0 %v4502
      %6028 = vmatpush.bf16.msra.mxu0 %v4501
      %6029 = vmatmul.bf16.gmra.mxu0 %v1501
      %v6030 = vpop.f32.mrf.mxu0
      %v6031 = vadd.f32 %v6018, %v6030
      %v6032 = vpop.f32.mrf.mxu0
      %6033 = vdwg.mxu0
      %6034 = vmatpush.bf16.msra.mxu0 %v4516
      %6035 = vmatpush.bf16.msra.mxu0 %v4515
      %6036 = vmatpush.bf16.msra.mxu0 %v4514
      %6037 = vmatpush.bf16.msra.mxu0 %v4513
      %6038 = vmatpush.bf16.msra.mxu0 %v4512
      %6039 = vmatpush.bf16.msra.mxu0 %v4511
      %6040 = vmatpush.bf16.msra.mxu0 %v4510
      %6041 = vmatpush.bf16.msra.mxu0 %v4509
      %6042 = vmatmul.bf16.gmra.mxu0 %v1502
      %v6043 = vpop.f32.mrf.mxu0
      %v6044 = vadd.f32 %v6031, %v6043
      %v6045 = vpop.f32.mrf.mxu0
      %6046 = vdwg.mxu0
      %6047 = vmatpush.bf16.msra.mxu0 %v4524
      %6048 = vmatpush.bf16.msra.mxu0 %v4523
      %6049 = vmatpush.bf16.msra.mxu0 %v4522
      %6050 = vmatpush.bf16.msra.mxu0 %v4521
      %6051 = vmatpush.bf16.msra.mxu0 %v4520
      %6052 = vmatpush.bf16.msra.mxu0 %v4519
      %6053 = vmatpush.bf16.msra.mxu0 %v4518
      %6054 = vmatpush.bf16.msra.mxu0 %v4517
      %6055 = vmatmul.bf16.gmra.mxu0 %v1503
      %v6056 = vpop.f32.mrf.mxu0
      %v6057 = vadd.f32 %v6044, %v6056
      %v6058 = vpop.f32.mrf.mxu0
      %6059 = vdwg.mxu0
      %6060 = vmatpush.bf16.msra.mxu0 %v4532
      %6061 = vmatpush.bf16.msra.mxu0 %v4531
      %6062 = vmatpush.bf16.msra.mxu0 %v4530
      %6063 = vmatpush.bf16.msra.mxu0 %v4529
      %6064 = vmatpush.bf16.msra.mxu0 %v4528
      %6065 = vmatpush.bf16.msra.mxu0 %v4527
      %6066 = vmatpush.bf16.msra.mxu0 %v4526
      %6067 = vmatpush.bf16.msra.mxu0 %v4525
      %6068 = vmatmul.bf16.gmra.mxu0 %v1504
      %v6069 = vpop.f32.mrf.mxu0
      %v6070 = vadd.f32 %v6057, %v6069
      %v6071 = vpop.f32.mrf.mxu0
      %6072 = vdwg.mxu0
      %6073 = vmatpush.bf16.msra.mxu0 %v4540
      %6074 = vmatpush.bf16.msra.mxu0 %v4539
      %6075 = vmatpush.bf16.msra.mxu0 %v4538
      %6076 = vmatpush.bf16.msra.mxu0 %v4537
      %6077 = vmatpush.bf16.msra.mxu0 %v4536
      %6078 = vmatpush.bf16.msra.mxu0 %v4535
      %6079 = vmatpush.bf16.msra.mxu0 %v4534
      %6080 = vmatpush.bf16.msra.mxu0 %v4533
      %6081 = vmatmul.bf16.gmra.mxu0 %v1505
      %v6082 = vpop.f32.mrf.mxu0
      %v6083 = vadd.f32 %v6070, %v6082
      %v6084 = vpop.f32.mrf.mxu0
      %6085 = vdwg.mxu0
      %6086 = vmatpush.bf16.msra.mxu0 %v4548
      %6087 = vmatpush.bf16.msra.mxu0 %v4547
      %6088 = vmatpush.bf16.msra.mxu0 %v4546
      %6089 = vmatpush.bf16.msra.mxu0 %v4545
      %6090 = vmatpush.bf16.msra.mxu0 %v4544
      %6091 = vmatpush.bf16.msra.mxu0 %v4543
      %6092 = vmatpush.bf16.msra.mxu0 %v4542
      %6093 = vmatpush.bf16.msra.mxu0 %v4541
      %6094 = vmatmul.bf16.gmra.mxu0 %v1506
      %v6095 = vpop.f32.mrf.mxu0
      %v6096 = vadd.f32 %v6083, %v6095
      %v6097 = vpop.f32.mrf.mxu0
      %6098 = vdwg.mxu0
      %6099 = vmatpush.bf16.msra.mxu0 %v4556
      %6100 = vmatpush.bf16.msra.mxu0 %v4555
      %6101 = vmatpush.bf16.msra.mxu0 %v4554
      %6102 = vmatpush.bf16.msra.mxu0 %v4553
      %6103 = vmatpush.bf16.msra.mxu0 %v4552
      %6104 = vmatpush.bf16.msra.mxu0 %v4551
      %6105 = vmatpush.bf16.msra.mxu0 %v4550
      %6106 = vmatpush.bf16.msra.mxu0 %v4549
      %6107 = vmatmul.bf16.gmra.mxu0 %v1507
      %v6108 = vpop.f32.mrf.mxu0
      %v6109 = vadd.f32 %v6096, %v6108
      %v6110 = vpop.f32.mrf.mxu0
      %6111 = vdwg.mxu0
      %6112 = vmatpush.bf16.msra.mxu0 %v4564
      %6113 = vmatpush.bf16.msra.mxu0 %v4563
      %6114 = vmatpush.bf16.msra.mxu0 %v4562
      %6115 = vmatpush.bf16.msra.mxu0 %v4561
      %6116 = vmatpush.bf16.msra.mxu0 %v4560
      %6117 = vmatpush.bf16.msra.mxu0 %v4559
      %6118 = vmatpush.bf16.msra.mxu0 %v4558
      %6119 = vmatpush.bf16.msra.mxu0 %v4557
      %6120 = vmatmul.bf16.gmra.mxu0 %v1508
      %v6121 = vpop.f32.mrf.mxu0
      %v6122 = vadd.f32 %v6109, %v6121
      %v6123 = vpop.f32.mrf.mxu0
      %6124 = vdwg.mxu0
      %6125 = vmatpush.bf16.msra.mxu0 %v4572
      %6126 = vmatpush.bf16.msra.mxu0 %v4571
      %6127 = vmatpush.bf16.msra.mxu0 %v4570
      %6128 = vmatpush.bf16.msra.mxu0 %v4569
      %6129 = vmatpush.bf16.msra.mxu0 %v4568
      %6130 = vmatpush.bf16.msra.mxu0 %v4567
      %6131 = vmatpush.bf16.msra.mxu0 %v4566
      %6132 = vmatpush.bf16.msra.mxu0 %v4565
      %6133 = vmatmul.bf16.gmra.mxu0 %v1511
      %v6134 = vpop.f32.mrf.mxu0
      %v6135 = vadd.f32 %v6122, %v6134
      %v6136 = vpop.f32.mrf.mxu0
      %6137 = vdwg.mxu0
      %6138 = vmatpush.bf16.msra.mxu0 %v4580
      %6139 = vmatpush.bf16.msra.mxu0 %v4579
      %6140 = vmatpush.bf16.msra.mxu0 %v4578
      %6141 = vmatpush.bf16.msra.mxu0 %v4577
      %6142 = vmatpush.bf16.msra.mxu0 %v4576
      %6143 = vmatpush.bf16.msra.mxu0 %v4575
      %6144 = vmatpush.bf16.msra.mxu0 %v4574
      %6145 = vmatpush.bf16.msra.mxu0 %v4573
      %6146 = vmatmul.bf16.gmra.mxu0 %v1512
      %v6147 = vpop.f32.mrf.mxu0
      %v6148 = vadd.f32 %v6135, %v6147
      %v6149 = vpop.f32.mrf.mxu0
      %6150 = vdwg.mxu0
      %6151 = vmatpush.bf16.msra.mxu0 %v4588
      %6152 = vmatpush.bf16.msra.mxu0 %v4587
      %6153 = vmatpush.bf16.msra.mxu0 %v4586
      %6154 = vmatpush.bf16.msra.mxu0 %v4585
      %6155 = vmatpush.bf16.msra.mxu0 %v4584
      %6156 = vmatpush.bf16.msra.mxu0 %v4583
      %6157 = vmatpush.bf16.msra.mxu0 %v4582
      %6158 = vmatpush.bf16.msra.mxu0 %v4581
      %6159 = vmatmul.bf16.gmra.mxu0 %v1513
      %v6160 = vpop.f32.mrf.mxu0
      %v6161 = vadd.f32 %v6148, %v6160
      %v6162 = vpop.f32.mrf.mxu0
      %6163 = vdwg.mxu0
      %v6164 = vadd.f32 %v208, %v6161
      %6165 = vst [vmem:[#allocation2] sm:$0x3] %v6164
      %p6166 = scmp.eq.s32.totalorder %s18, 2
      // Predicated region
      $region33: #{my_model_forward.8} parent=27 // pred_check
        %p6167 = pneg %p6166
      $region34: #{my_model_forward.8} parent=27 // pred_check_branch
        %6169 = sbr.rel (%p6167) target = $region36
      $region35: #{my_model_forward.8} parent=27 // pred_region
        %v6170 = vld [vmem:[#allocation2] sm:$0x3]
        %6171 = vst [vmem:[%s202] sm:$0x3] %v6170
      $region36: #{my_model_forward.8} parent=27 // pred_fallthru
        _
      %p6172 = scmp.lt.s32.totalorder %s17, 1
      %s6173 = scalar_select %p6172, %s17, 1
      %s6174 = smul.addr %s6173, 2
      %s6175 = scalar_lea.vmem %s2, %s6174
      // Predicated region
      $region37: #{my_model_forward.8} parent=27 // pred_check
        %p6176 = pneg %p103
      $region38: #{my_model_forward.8} parent=27 // pred_check_branch
        %6178 = sbr.rel (%p6176) target = $region40
      $region39: #{my_model_forward.8} parent=27 // pred_region
        _
      $region40: #{my_model_forward.8} parent=27 // pred_fallthru
        _
    $region28: #{my_model_forward.8} parent=5 // pred_fallthru
      _
    %p6179 = scmp.le.s32.totalorder 2, %s8
    // Predicated region
    $region41: #{my_model_forward.8} parent=5 // pred_check
      %p6180 = pneg %p6179
    $region42: #{my_model_forward.8} parent=5 // pred_check_branch
      %6182 = sbr.rel (%p6180) target = $region44
    $region43: #{my_model_forward.8} parent=5 // pred_region
      %s6183 = ssub.s32 %s8, 2
      // Predicated region
      $region45: #{my_model_forward.8} parent=43 // pred_check
        %p6184 = pneg %p109
      $region46: #{my_model_forward.8} parent=43 // pred_check_branch
        %6186 = sbr.rel (%p6184) target = $region48
      $region47: #{my_model_forward.8} parent=43 // pred_region
        %p6187 = scmp.lt.s32.totalorder %s19, 1
        %s6188 = scalar_select %p6187, %s19, 1
        %s6189 = smul.addr %s6188, 2
        %s6190 = scalar_lea.vmem %s2, %s6189
      $region48: #{my_model_forward.8} parent=43 // pred_fallthru
        _
    $region44: #{my_model_forward.8} parent=5 // pred_fallthru
      _
  $region6: #{my_model_forward.8} parent=0 // loop_footer
    %s12 = sadd.s32 1, %s8
  $region7: #{my_model_forward.8} parent=0 // loop_footer_branch
    %7 = sbr.rel target = $region3
  $region8: #{my_model_forward.8} parent=0 // loop_exit
    _

</llo_original>
